<compile_context>
chip_gen: v7x
topology: tpu7x:2x2x1
jax: 0.10.0
libtpu: 0.0.40
codegen_flags: <defaults>
</compile_context>

<pallas_src>
import math
import functools

import jax
import jax.numpy as jnp
from jax.experimental import pallas as pl
from jax.experimental.pallas import tpu as pltpu

EPS = 1e-6  # Normalization() uses eps=1e-06 explicitly.


def _layernorm(x, g, b):
    mu = jnp.mean(x, axis=-1, keepdims=True)
    var = jnp.mean((x - mu) ** 2, axis=-1, keepdims=True)
    return (x - mu) * jax.lax.rsqrt(var + EPS) * g + b


def decoder_kernel(
    tgt_ref, mem_ref, vec_ref, b1_ref, wqkv_ref, wo_ref, w1_ref, w2_ref,
    out_ref, attn_ref,
    *, n_head: int,
):
    layer = pl.program_id(1)
    is_first = layer == 0
    is_last = layer == pl.num_programs(1) - 1

    Bb, Lq, E = tgt_ref.shape
    Lk = mem_ref.shape[1]
    dh = E // n_head
    BH = Bb * n_head
    scale = 1.0 / math.sqrt(dh)

    # Seed the layer-carried activation (out_ref stays resident in VMEM across
    # the "arbitrary" layer axis because its block index never changes).
    @pl.when(is_first)
    def _():
        out_ref[...] = tgt_ref[...]

    x2 = out_ref[...].reshape(Bb * Lq, E)        # (B*Lq, E) f32
    mem2 = mem_ref[...].reshape(Bb * Lk, E)      # (B*Lk, E) f32

    vec = vec_ref[0]                             # (9, E) f32
    ln1_g, ln1_b = vec[0:1], vec[1:2]
    bq, bk, bv, bo = vec[2:3], vec[3:4], vec[4:5], vec[5:6]
    ln2_g, ln2_b, b2 = vec[6:7], vec[7:8], vec[8:9]

    # Pre-norm (same LayerNorm params applied to tgt and memory, per module).
    xn = _layernorm(x2, ln1_g, ln1_b)
    mn = _layernorm(mem2, ln1_g, ln1_b)

    # Packed QKV projection weights (bf16).  Batch folded into matmul M.
    wqkv = wqkv_ref[0]                           # (E, 3E) bf16
    q = jnp.dot(xn.astype(jnp.bfloat16), wqkv[:, :E],
                preferred_element_type=jnp.float32) + bq
    q = q * scale
    kv = jnp.dot(mn.astype(jnp.bfloat16), wqkv[:, E:],
                 preferred_element_type=jnp.float32)
    k = kv[:, :E] + bk
    v = kv[:, E:] + bv

    # Head-batched attention: fold (batch, head) into one leading batch dim.
    q3 = (q.reshape(Bb, Lq, n_head, dh).transpose(0, 2, 1, 3)
           .reshape(BH, Lq, dh).astype(jnp.bfloat16))
    k3 = (k.reshape(Bb, Lk, n_head, dh).transpose(0, 2, 1, 3)
           .reshape(BH, Lk, dh).astype(jnp.bfloat16))
    v3 = (v.reshape(Bb, Lk, n_head, dh).transpose(0, 2, 1, 3)
           .reshape(BH, Lk, dh).astype(jnp.bfloat16))

    # One batched score matmul + ONE softmax chain over all heads.
    s = jnp.einsum('bqd,bkd->bqk', q3, k3,
                   preferred_element_type=jnp.float32)        # (BH, Lq, Lk) f32
    s = s - jnp.max(s, axis=-1, keepdims=True)
    p_exp = jnp.exp(s)
    den = jnp.sum(p_exp, axis=-1, keepdims=True)
    # Hot path: approximate reciprocal (EUP slot, effectively free).
    p = p_exp * pl.reciprocal(den, approx=True)

    # One batched PV matmul for all head contexts.
    ctx = jnp.einsum('bqk,bkd->bqd', p.astype(jnp.bfloat16), v3,
                     preferred_element_type=jnp.float32)      # (BH, Lq, dh) f32

    # Gather head contexts back to (B*Lq, E) and do ONE K=E out-projection.
    ctx2 = (ctx.reshape(Bb, n_head, Lq, dh).transpose(0, 2, 1, 3)
              .reshape(Bb * Lq, E).astype(jnp.bfloat16))
    wo = wo_ref[0]                               # (E, E) bf16
    h_attn = jnp.dot(ctx2, wo, preferred_element_type=jnp.float32)

    # Averaged attention weights (PyTorch average_attn_weights=True default);
    # only the last layer's weights are returned by Decoder.forward, so this
    # (and the exact division) costs nothing on non-last layers.
    @pl.when(is_last)
    def _():
        p_exact = (p_exp / den).reshape(Bb, n_head, Lq, Lk)
        attn_ref[...] = jnp.sum(p_exact, axis=1) * (1.0 / n_head)

    # Output projection bias + residual.
    h = x2 + h_attn + bo

    # Second LayerNorm + feed-forward (Linear->ReLU->Linear) + residual.
    h_n = _layernorm(h, ln2_g, ln2_b)
    ff = jnp.dot(h_n.astype(jnp.bfloat16), w1_ref[0],
                 preferred_element_type=jnp.float32) + b1_ref[0]
    ff = jnp.maximum(ff, 0.0)
    ff = jnp.dot(ff.astype(jnp.bfloat16), w2_ref[0],
                 preferred_element_type=jnp.float32) + b2

    out_ref[...] = (h + ff).reshape(Bb, Lq, E)


def pack_decoder_params(layer_params):
    """Stack per-layer params; pack small vectors; cast matmul weights to bf16."""
    vec = jnp.stack([
        jnp.stack([p["ln1_g"], p["ln1_b"], p["bq"], p["bk"], p["bv"],
                   p["bo"], p["ln2_g"], p["ln2_b"], p["b2"]], axis=0)
        for p in layer_params], axis=0).astype(jnp.float32)             # (L,9,E)
    b1 = jnp.stack([p["b1"][None, :] for p in layer_params],
                   axis=0).astype(jnp.float32)                          # (L,1,Dff)
    wqkv = jnp.stack([jnp.concatenate([p["wq"], p["wk"], p["wv"]], axis=1)
                      for p in layer_params], axis=0).astype(jnp.bfloat16)
    wo = jnp.stack([p["wo"] for p in layer_params], 0).astype(jnp.bfloat16)
    w1 = jnp.stack([p["w1"] for p in layer_params], 0).astype(jnp.bfloat16)
    w2 = jnp.stack([p["w2"] for p in layer_params], 0).astype(jnp.bfloat16)
    return {"vec": vec, "b1": b1, "wqkv": wqkv, "wo": wo, "w1": w1, "w2": w2}


def decoder_pallas(tgt, memory, packed, n_head, *, batch_block=None):
    """Full Decoder.forward in a single pallas_call (all layers fused)."""
    B, Lq, E = tgt.shape
    Lk = memory.shape[1]
    L = packed["wqkv"].shape[0]
    Dff = packed["w1"].shape[2]

    # batch_block: batch elements processed per grid step.  Default is the
    # whole batch on every generation: the kernel is weight-DMA bound, so
    # splitting the batch (e.g. across v7x's two TensorCores) would make each
    # core re-fetch every layer's weights — a net slowdown at small B.  Only
    # split once B*Lq is well past ~256 rows.
    if batch_block is None:
        batch_block = B
    assert B % batch_block == 0
    nb = B // batch_block

    in_specs = [
        pl.BlockSpec((batch_block, Lq, E), lambda b, l: (b, 0, 0)),   # tgt
        pl.BlockSpec((batch_block, Lk, E), lambda b, l: (b, 0, 0)),   # memory
        pl.BlockSpec((1, 9, E), lambda b, l: (l, 0, 0)),              # packed vectors
        pl.BlockSpec((1, 1, Dff), lambda b, l: (l, 0, 0)),            # b1
        pl.BlockSpec((1, E, 3 * E), lambda b, l: (l, 0, 0)),          # wq|wk|wv
        pl.BlockSpec((1, E, E), lambda b, l: (l, 0, 0)),              # wo
        pl.BlockSpec((1, E, Dff), lambda b, l: (l, 0, 0)),            # w1
        pl.BlockSpec((1, Dff, E), lambda b, l: (l, 0, 0)),            # w2
    ]
    out_specs = (
        pl.BlockSpec((batch_block, Lq, E), lambda b, l: (b, 0, 0)),   # activation / out
        pl.BlockSpec((batch_block, Lq, Lk), lambda b, l: (b, 0, 0)),  # attn (last layer)
    )
    out_shape = (
        jax.ShapeDtypeStruct((B, Lq, E), jnp.float32),
        jax.ShapeDtypeStruct((B, Lq, Lk), jnp.float32),
    )

    kernel = functools.partial(decoder_kernel, n_head=n_head)
    return pl.pallas_call(
        kernel,
        out_shape=out_shape,
        grid_spec=pltpu.PrefetchScalarGridSpec(
            num_scalar_prefetch=0,
            grid=(nb, L),
            in_specs=in_specs,
            out_specs=out_specs,
        ),
        compiler_params=pltpu.CompilerParams(
            # batch axis is independent; layer axis (innermost) carries state
            # in out_ref and writes attn only on its last iteration.
            dimension_semantics=("parallel", "arbitrary"),
        ),
    )(tgt, memory, packed["vec"], packed["b1"], packed["wqkv"],
      packed["wo"], packed["w1"], packed["w2"])


# ---------------- pure-JAX reference (uses the same bf16-stored weights) ------
def _ln_ref(x, g, b):
    mu = jnp.mean(x, axis=-1, keepdims=True)
    var = jnp.mean((x - mu) ** 2, axis=-1, keepdims=True)
    return (x - mu) / jnp.sqrt(var + EPS) * g + b


def decoder_ref(tgt, memory, packed, n_head):
    B, Lq, E = tgt.shape
    Lk = memory.shape[1]
    dh = E // n_head
    scale = 1.0 / math.sqrt(dh)
    L = packed["wqkv"].shape[0]
    x, attn = tgt, None
    for l in range(L):
        vec = packed["vec"][l]
        ln1_g, ln1_b = vec[0], vec[1]
        bq, bk, bv, bo = vec[2], vec[3], vec[4], vec[5]
        ln2_g, ln2_b, b2 = vec[6], vec[7], vec[8]
        wqkv = packed["wqkv"][l].astype(jnp.float32)
        wq, wk, wv = wqkv[:, :E], wqkv[:, E:2 * E], wqkv[:, 2 * E:]
        wo = packed["wo"][l].astype(jnp.float32)
        w1 = packed["w1"][l].astype(jnp.float32)
        w2 = packed["w2"][l].astype(jnp.float32)
        b1 = packed["b1"][l, 0]

        xn = _ln_ref(x, ln1_g, ln1_b)
        mn = _ln_ref(memory, ln1_g, ln1_b)
        q = xn @ wq + bq
        k = mn @ wk + bk
        v = mn @ wv + bv
        qh = q.reshape(B, Lq, n_head, dh).transpose(0, 2, 1, 3) * scale
        kh = k.reshape(B, Lk, n_head, dh).transpose(0, 2, 1, 3)
        vh = v.reshape(B, Lk, n_head, dh).transpose(0, 2, 1, 3)
        s = jnp.einsum("bhqd,bhkd->bhqk", qh, kh)
        p = jax.nn.softmax(s, axis=-1)
        ctx = jnp.einsum("bhqk,bhkd->bhqd", p, vh).transpose(0, 2, 1, 3).reshape(B, Lq, E)
        attn = jnp.mean(p, axis=1)
        h = x + ctx @ wo + bo
        hn = _ln_ref(h, ln2_g, ln2_b)
        ff = jnp.maximum(hn @ w1 + b1, 0.0) @ w2 + b2
        x = h + ff
    return x, attn


def make_params(key, E, Dff):
    ks = jax.random.split(key, 10)
    s = 1.0 / math.sqrt(E)
    s2 = 1.0 / math.sqrt(Dff)
    u = lambda k, shape, lim: jax.random.uniform(k, shape, jnp.float32, -lim, lim)
    return {
        "ln1_g": jnp.ones((E,), jnp.float32),
        "ln1_b": jnp.zeros((E,), jnp.float32),
        "wq": u(ks[0], (E, E), s),
        "wk": u(ks[1], (E, E), s),
        "wv": u(ks[2], (E, E), s),
        "bq": u(ks[3], (E,), s) * 0.1,
        "bk": jnp.zeros((E,), jnp.float32),
        "bv": jnp.zeros((E,), jnp.float32),
        "wo": u(ks[4], (E, E), s),
        "bo": u(ks[5], (E,), s),
        "ln2_g": jnp.ones((E,), jnp.float32),
        "ln2_b": jnp.zeros((E,), jnp.float32),
        "w1": u(ks[6], (E, Dff), s),
        "b1": u(ks[7], (Dff,), s),
        "w2": u(ks[8], (Dff, E), s2),
        "b2": u(ks[9], (E,), s2),
    }


if __name__ == "__main__":
    E, N_HEAD, N_LAYER, DFF = 128, 8, 2, 512
    B, LQ, LK = 2, 8, 16

    key = jax.random.PRNGKey(0)
    k_tgt, k_mem, k_par = jax.random.split(key, 3)
    tgt = jax.random.normal(k_tgt, (B, LQ, E), jnp.float32)
    memory = jax.random.normal(k_mem, (B, LK, E), jnp.float32)
    layer_params = [make_params(jax.random.fold_in(k_par, i), E, DFF)
                    for i in range(N_LAYER)]
    packed = pack_decoder_params(layer_params)

    out, attn = decoder_pallas(tgt, memory, packed, N_HEAD)
    out = jax.block_until_ready(out)
    attn = jax.block_until_ready(attn)

    ref_out, ref_attn = decoder_ref(tgt, memory, packed, N_HEAD)
    assert out.shape == (B, LQ, E) and attn.shape == (B, LQ, LK)
    # bf16 matmul operands + approx reciprocal on hidden path -> loosened
    # tolerances for the activation; returned attn uses exact reciprocal.
    assert jnp.allclose(out, ref_out, atol=3e-2, rtol=3e-2), \
        ("out mismatch", float(jnp.max(jnp.abs(out - ref_out))))
    assert jnp.allclose(attn, ref_attn, atol=1.5e-2, rtol=1.5e-2), \
        ("attn mismatch", float(jnp.max(jnp.abs(attn - ref_attn))))
    # Exact reciprocal on the returned attention -> rows sum to 1 tightly.
    assert jnp.allclose(jnp.sum(attn, axis=-1), 1.0, atol=1e-3)

    print("KERNEL_OK")
</pallas_src>

<mosaic_0001>
module attributes {stable_mosaic.version = 11 : i64} {
  func.func @decoder_kernel(%arg0: i32, %arg1: i32, %arg2: memref<2x8x128xf32, #tpu.memory_space<vmem>>, %arg3: memref<2x16x128xf32, #tpu.memory_space<vmem>>, %arg4: memref<1x9x128xf32, #tpu.memory_space<vmem>>, %arg5: memref<1x1x512xf32, #tpu.memory_space<vmem>>, %arg6: memref<1x128x384xbf16, #tpu.memory_space<vmem>>, %arg7: memref<1x128x128xbf16, #tpu.memory_space<vmem>>, %arg8: memref<1x128x512xbf16, #tpu.memory_space<vmem>>, %arg9: memref<1x512x128xbf16, #tpu.memory_space<vmem>>, %arg10: memref<2x8x128xf32, #tpu.memory_space<vmem>>, %arg11: memref<2x8x16xf32, #tpu.memory_space<vmem>>) attributes {dimension_semantics = [#tpu.dimension_semantics<parallel>, #tpu.dimension_semantics<arbitrary>], iteration_bounds = array<i64: 1, 2>, scalar_prefetch = 0 : i64, scratch_operands = 0 : i64, tpu.core_type = #tpu.core_type<tc>, window_params = [{transform_indices = @transform_0, window_bounds = array<i64: 2, 8, 128>}, {transform_indices = @transform_1, window_bounds = array<i64: 2, 16, 128>}, {transform_indices = @transform_2, window_bounds = array<i64: 1, 9, 128>}, {transform_indices = @transform_3, window_bounds = array<i64: 1, 1, 512>}, {transform_indices = @transform_4, window_bounds = array<i64: 1, 128, 384>}, {transform_indices = @transform_5, window_bounds = array<i64: 1, 128, 128>}, {transform_indices = @transform_6, window_bounds = array<i64: 1, 128, 512>}, {transform_indices = @transform_7, window_bounds = array<i64: 1, 512, 128>}, {transform_indices = @transform_8, window_bounds = array<i64: 2, 8, 128>}, {transform_indices = @transform_9, window_bounds = array<i64: 2, 8, 16>}]} {
    %c0_i32 = arith.constant 0 : i32
    %0 = arith.cmpi eq, %arg1, %c0_i32 : i32
    %c1_i32 = arith.constant 1 : i32
    %1 = arith.cmpi eq, %arg1, %c1_i32 : i32
    %2 = arith.extui %0 : i1 to i32
    %c0_i32_0 = arith.constant 0 : i32
    %3 = arith.cmpi ne, %2, %c0_i32_0 : i32
    scf.if %3 {
      %c0_53 = arith.constant 0 : index
      %c0_54 = arith.constant 0 : index
      %c0_55 = arith.constant 0 : index
      %159 = vector.load %arg2[%c0_53, %c0_54, %c0_55] : memref<2x8x128xf32, #tpu.memory_space<vmem>>, vector<2x8x128xf32>
      %c0_56 = arith.constant 0 : index
      %c0_57 = arith.constant 0 : index
      %c0_58 = arith.constant 0 : index
      %160 = vector.load %arg10[%c0_56, %c0_57, %c0_58] : memref<2x8x128xf32, #tpu.memory_space<vmem>>, vector<2x8x128xf32>
      tpu.vector_store %arg10[%c0_56, %c0_57, %c0_58], %159 {strides = array<i32>} : memref<2x8x128xf32, #tpu.memory_space<vmem>>, vector<2x8x128xf32>,
    } else {
    }
    %c0 = arith.constant 0 : index
    %c0_1 = arith.constant 0 : index
    %c0_2 = arith.constant 0 : index
    %4 = vector.load %arg10[%c0, %c0_1, %c0_2] : memref<2x8x128xf32, #tpu.memory_space<vmem>>, vector<2x8x128xf32>
    %5 = vector.shape_cast %4 : vector<2x8x128xf32> to vector<16x128xf32>
    %c0_3 = arith.constant 0 : index
    %c0_4 = arith.constant 0 : index
    %c0_5 = arith.constant 0 : index
    %6 = vector.load %arg3[%c0_3, %c0_4, %c0_5] : memref<2x16x128xf32, #tpu.memory_space<vmem>>, vector<2x16x128xf32>
    %7 = vector.shape_cast %6 : vector<2x16x128xf32> to vector<32x128xf32>
    %c0_6 = arith.constant 0 : index
    %c0_7 = arith.constant 0 : index
    %c0_8 = arith.constant 0 : index
    %8 = vector.load %arg4[%c0_6, %c0_7, %c0_8] : memref<1x9x128xf32, #tpu.memory_space<vmem>>, vector<1x9x128xf32>
    %9 = vector.shape_cast %8 : vector<1x9x128xf32> to vector<9x128xf32>
    %10 = vector.extract_strided_slice %9 {offsets = [0, 0], sizes = [1, 128], strides = [1, 1]} : vector<9x128xf32> to vector<1x128xf32>
    %11 = vector.extract_strided_slice %9 {offsets = [1, 0], sizes = [1, 128], strides = [1, 1]} : vector<9x128xf32> to vector<1x128xf32>
    %12 = vector.extract_strided_slice %9 {offsets = [2, 0], sizes = [1, 128], strides = [1, 1]} : vector<9x128xf32> to vector<1x128xf32>
    %13 = vector.extract_strided_slice %9 {offsets = [3, 0], sizes = [1, 128], strides = [1, 1]} : vector<9x128xf32> to vector<1x128xf32>
    %14 = vector.extract_strided_slice %9 {offsets = [4, 0], sizes = [1, 128], strides = [1, 1]} : vector<9x128xf32> to vector<1x128xf32>
    %15 = vector.extract_strided_slice %9 {offsets = [5, 0], sizes = [1, 128], strides = [1, 1]} : vector<9x128xf32> to vector<1x128xf32>
    %16 = vector.extract_strided_slice %9 {offsets = [6, 0], sizes = [1, 128], strides = [1, 1]} : vector<9x128xf32> to vector<1x128xf32>
    %17 = vector.extract_strided_slice %9 {offsets = [7, 0], sizes = [1, 128], strides = [1, 1]} : vector<9x128xf32> to vector<1x128xf32>
    %18 = vector.extract_strided_slice %9 {offsets = [8, 0], sizes = [1, 128], strides = [1, 1]} : vector<9x128xf32> to vector<1x128xf32>
    %cst = arith.constant dense<0.000000e+00> : vector<16xf32>
    %19 = vector.multi_reduction <add>, %5, %cst [1] : vector<16x128xf32> to vector<16xf32>
    %20 = vector.shape_cast %19 : vector<16xf32> to vector<16x1xf32>
    %cst_9 = arith.constant 1.280000e+02 : f32
    %21 = vector.broadcast %cst_9 : f32 to vector<16x1xf32>
    %22 = arith.divf %20, %21 : vector<16x1xf32>
    %23 = vector.broadcast %22 : vector<16x1xf32> to vector<16x128xf32>
    %24 = arith.subf %5, %23 : vector<16x128xf32>
    %25 = arith.mulf %24, %24 : vector<16x128xf32>
    %cst_10 = arith.constant dense<0.000000e+00> : vector<16xf32>
    %26 = vector.multi_reduction <add>, %25, %cst_10 [1] : vector<16x128xf32> to vector<16xf32>
    %27 = vector.shape_cast %26 : vector<16xf32> to vector<16x1xf32>
    %cst_11 = arith.constant 1.280000e+02 : f32
    %28 = vector.broadcast %cst_11 : f32 to vector<16x1xf32>
    %29 = arith.divf %27, %28 : vector<16x1xf32>
    %30 = vector.broadcast %22 : vector<16x1xf32> to vector<16x128xf32>
    %31 = arith.subf %5, %30 : vector<16x128xf32>
    %cst_12 = arith.constant 9.99999997E-7 : f32
    %32 = vector.broadcast %cst_12 : f32 to vector<16x1xf32>
    %33 = arith.addf %29, %32 : vector<16x1xf32>
    %34 = math.rsqrt %33 : vector<16x1xf32>
    %35 = vector.broadcast %34 : vector<16x1xf32> to vector<16x128xf32>
    %36 = arith.mulf %31, %35 : vector<16x128xf32>
    %37 = vector.broadcast %10 : vector<1x128xf32> to vector<16x128xf32>
    %38 = arith.mulf %36, %37 : vector<16x128xf32>
    %39 = vector.broadcast %11 : vector<1x128xf32> to vector<16x128xf32>
    %40 = arith.addf %38, %39 : vector<16x128xf32>
    %cst_13 = arith.constant dense<0.000000e+00> : vector<32xf32>
    %41 = vector.multi_reduction <add>, %7, %cst_13 [1] : vector<32x128xf32> to vector<32xf32>
    %42 = vector.shape_cast %41 : vector<32xf32> to vector<32x1xf32>
    %cst_14 = arith.constant 1.280000e+02 : f32
    %43 = vector.broadcast %cst_14 : f32 to vector<32x1xf32>
    %44 = arith.divf %42, %43 : vector<32x1xf32>
    %45 = vector.broadcast %44 : vector<32x1xf32> to vector<32x128xf32>
    %46 = arith.subf %7, %45 : vector<32x128xf32>
    %47 = arith.mulf %46, %46 : vector<32x128xf32>
    %cst_15 = arith.constant dense<0.000000e+00> : vector<32xf32>
    %48 = vector.multi_reduction <add>, %47, %cst_15 [1] : vector<32x128xf32> to vector<32xf32>
    %49 = vector.shape_cast %48 : vector<32xf32> to vector<32x1xf32>
    %cst_16 = arith.constant 1.280000e+02 : f32
    %50 = vector.broadcast %cst_16 : f32 to vector<32x1xf32>
    %51 = arith.divf %49, %50 : vector<32x1xf32>
    %52 = vector.broadcast %44 : vector<32x1xf32> to vector<32x128xf32>
    %53 = arith.subf %7, %52 : vector<32x128xf32>
    %cst_17 = arith.constant 9.99999997E-7 : f32
    %54 = vector.broadcast %cst_17 : f32 to vector<32x1xf32>
    %55 = arith.addf %51, %54 : vector<32x1xf32>
    %56 = math.rsqrt %55 : vector<32x1xf32>
    %57 = vector.broadcast %56 : vector<32x1xf32> to vector<32x128xf32>
    %58 = arith.mulf %53, %57 : vector<32x128xf32>
    %59 = vector.broadcast %10 : vector<1x128xf32> to vector<32x128xf32>
    %60 = arith.mulf %58, %59 : vector<32x128xf32>
    %61 = vector.broadcast %11 : vector<1x128xf32> to vector<32x128xf32>
    %62 = arith.addf %60, %61 : vector<32x128xf32>
    %c0_18 = arith.constant 0 : index
    %c0_19 = arith.constant 0 : index
    %c0_20 = arith.constant 0 : index
    %63 = vector.load %arg6[%c0_18, %c0_19, %c0_20] : memref<1x128x384xbf16, #tpu.memory_space<vmem>>, vector<1x128x384xbf16>
    %64 = vector.shape_cast %63 : vector<1x128x384xbf16> to vector<128x384xbf16>
    %65 = arith.truncf %40 : vector<16x128xf32> to vector<16x128xbf16>
    %66 = vector.extract_strided_slice %64 {offsets = [0, 0], sizes = [128, 128], strides = [1, 1]} : vector<128x384xbf16> to vector<128x128xbf16>
    %cst_21 = arith.constant dense<0.000000e+00> : vector<16x128xf32>
    %67 = tpu.matmul %65, %66, %cst_21 {dimension_numbers = #tpu.dot_dimension_numbers<[1], [0], [0], [1], [0, 0, 1, 1], [], []>} : vector<16x128xbf16>, vector<128x128xbf16>, vector<16x128xf32> -> vector<16x128xf32>
    %68 = vector.broadcast %12 : vector<1x128xf32> to vector<16x128xf32>
    %69 = arith.addf %67, %68 : vector<16x128xf32>
    %cst_22 = arith.constant 2.500000e-01 : f32
    %70 = vector.broadcast %cst_22 : f32 to vector<16x128xf32>
    %71 = arith.mulf %69, %70 : vector<16x128xf32>
    %72 = arith.truncf %62 : vector<32x128xf32> to vector<32x128xbf16>
    %73 = vector.extract_strided_slice %64 {offsets = [0, 128], sizes = [128, 256], strides = [1, 1]} : vector<128x384xbf16> to vector<128x256xbf16>
    %cst_23 = arith.constant dense<0.000000e+00> : vector<32x256xf32>
    %74 = tpu.matmul %72, %73, %cst_23 {dimension_numbers = #tpu.dot_dimension_numbers<[1], [0], [0], [1], [0, 0, 1, 1], [], []>} : vector<32x128xbf16>, vector<128x256xbf16>, vector<32x256xf32> -> vector<32x256xf32>
    %75 = vector.extract_strided_slice %74 {offsets = [0, 0], sizes = [32, 128], strides = [1, 1]} : vector<32x256xf32> to vector<32x128xf32>
    %76 = vector.broadcast %13 : vector<1x128xf32> to vector<32x128xf32>
    %77 = arith.addf %75, %76 : vector<32x128xf32>
    %78 = vector.extract_strided_slice %74 {offsets = [0, 128], sizes = [32, 128], strides = [1, 1]} : vector<32x256xf32> to vector<32x128xf32>
    %79 = vector.broadcast %14 : vector<1x128xf32> to vector<32x128xf32>
    %80 = arith.addf %78, %79 : vector<32x128xf32>
    %81 = vector.shape_cast %71 : vector<16x128xf32> to vector<2x8x8x16xf32>
    %82 = tpu.transpose %81, [0, 2, 1, 3] : vector<2x8x8x16xf32> -> vector<2x8x8x16xf32>
    %83 = vector.shape_cast %82 : vector<2x8x8x16xf32> to vector<16x8x16xf32>
    %84 = arith.truncf %83 : vector<16x8x16xf32> to vector<16x8x16xbf16>
    %85 = vector.shape_cast %77 : vector<32x128xf32> to vector<2x16x8x16xf32>
    %86 = tpu.transpose %85, [0, 2, 1, 3] : vector<2x16x8x16xf32> -> vector<2x8x16x16xf32>
    %87 = vector.shape_cast %86 : vector<2x8x16x16xf32> to vector<16x16x16xf32>
    %88 = arith.truncf %87 : vector<16x16x16xf32> to vector<16x16x16xbf16>
    %89 = vector.shape_cast %80 : vector<32x128xf32> to vector<2x16x8x16xf32>
    %90 = tpu.transpose %89, [0, 2, 1, 3] : vector<2x16x8x16xf32> -> vector<2x8x16x16xf32>
    %91 = vector.shape_cast %90 : vector<2x8x16x16xf32> to vector<16x16x16xf32>
    %92 = arith.truncf %91 : vector<16x16x16xf32> to vector<16x16x16xbf16>
    "tpu.trace_start"() <{level = 10 : i32, message = "bqd,bkd->bqk"}> : () -> ()
    %cst_24 = arith.constant dense<0.000000e+00> : vector<16x8x16xf32>
    %93 = tpu.matmul %84, %88, %cst_24 {dimension_numbers = #tpu.dot_dimension_numbers<[2], [2], [1], [1], [0, 0, 0, 1, 1, 1], [0], [0]>} : vector<16x8x16xbf16>, vector<16x16x16xbf16>, vector<16x8x16xf32> -> vector<16x8x16xf32>
    "tpu.trace_stop"() : () -> ()
    %cst_25 = arith.constant dense<0xFF800000> : vector<16x8xf32>
    %94 = vector.multi_reduction <maximumf>, %93, %cst_25 [2] : vector<16x8x16xf32> to vector<16x8xf32>
    %95 = vector.shape_cast %94 : vector<16x8xf32> to vector<16x8x1xf32>
    %96 = vector.broadcast %95 : vector<16x8x1xf32> to vector<16x8x16xf32>
    %97 = arith.subf %93, %96 : vector<16x8x16xf32>
    %98 = math.exp %97 : vector<16x8x16xf32>
    %cst_26 = arith.constant dense<0.000000e+00> : vector<16x8xf32>
    %99 = vector.multi_reduction <add>, %98, %cst_26 [2] : vector<16x8x16xf32> to vector<16x8xf32>
    %100 = vector.shape_cast %99 : vector<16x8xf32> to vector<16x8x1xf32>
    %101 = tpu.reciprocal %100 {approx = true} : vector<16x8x1xf32> -> vector<16x8x1xf32>
    %102 = vector.broadcast %101 : vector<16x8x1xf32> to vector<16x8x16xf32>
    %103 = arith.mulf %98, %102 : vector<16x8x16xf32>
    %104 = arith.truncf %103 : vector<16x8x16xf32> to vector<16x8x16xbf16>
    "tpu.trace_start"() <{level = 10 : i32, message = "bqk,bkd->bqd"}> : () -> ()
    %cst_27 = arith.constant dense<0.000000e+00> : vector<16x8x16xf32>
    %105 = tpu.matmul %104, %92, %cst_27 {dimension_numbers = #tpu.dot_dimension_numbers<[2], [1], [1], [2], [0, 0, 0, 1, 1, 2], [0], [0]>} : vector<16x8x16xbf16>, vector<16x16x16xbf16>, vector<16x8x16xf32> -> vector<16x8x16xf32>
    "tpu.trace_stop"() : () -> ()
    %106 = vector.shape_cast %105 : vector<16x8x16xf32> to vector<2x8x8x16xf32>
    %107 = tpu.transpose %106, [0, 2, 1, 3] : vector<2x8x8x16xf32> -> vector<2x8x8x16xf32>
    %108 = vector.shape_cast %107 : vector<2x8x8x16xf32> to vector<16x128xf32>
    %109 = arith.truncf %108 : vector<16x128xf32> to vector<16x128xbf16>
    %c0_28 = arith.constant 0 : index
    %c0_29 = arith.constant 0 : index
    %c0_30 = arith.constant 0 : index
    %110 = vector.load %arg7[%c0_28, %c0_29, %c0_30] : memref<1x128x128xbf16, #tpu.memory_space<vmem>>, vector<1x128x128xbf16>
    %111 = vector.shape_cast %110 : vector<1x128x128xbf16> to vector<128x128xbf16>
    %cst_31 = arith.constant dense<0.000000e+00> : vector<16x128xf32>
    %112 = tpu.matmul %109, %111, %cst_31 {dimension_numbers = #tpu.dot_dimension_numbers<[1], [0], [0], [1], [0, 0, 1, 1], [], []>} : vector<16x128xbf16>, vector<128x128xbf16>, vector<16x128xf32> -> vector<16x128xf32>
    %113 = arith.extui %1 : i1 to i32
    %c0_i32_32 = arith.constant 0 : i32
    %114 = arith.cmpi ne, %113, %c0_i32_32 : i32
    scf.if %114 {
      %159 = vector.broadcast %100 : vector<16x8x1xf32> to vector<16x8x16xf32>
      %160 = arith.divf %98, %159 : vector<16x8x16xf32>
      %161 = vector.shape_cast %160 : vector<16x8x16xf32> to vector<2x8x8x16xf32>
      %cst_53 = arith.constant dense<0.000000e+00> : vector<2x8x16xf32>
      %162 = vector.multi_reduction <add>, %161, %cst_53 [1] : vector<2x8x8x16xf32> to vector<2x8x16xf32>
      %cst_54 = arith.constant 1.250000e-01 : f32
      %163 = vector.broadcast %cst_54 : f32 to vector<2x8x16xf32>
      %164 = arith.mulf %162, %163 : vector<2x8x16xf32>
      %c0_55 = arith.constant 0 : index
      %c0_56 = arith.constant 0 : index
      %c0_57 = arith.constant 0 : index
      %165 = vector.load %arg11[%c0_55, %c0_56, %c0_57] : memref<2x8x16xf32, #tpu.memory_space<vmem>>, vector<2x8x16xf32>
      tpu.vector_store %arg11[%c0_55, %c0_56, %c0_57], %164 {strides = array<i32>} : memref<2x8x16xf32, #tpu.memory_space<vmem>>, vector<2x8x16xf32>,
    } else {
    }
    %115 = arith.addf %5, %112 : vector<16x128xf32>
    %116 = vector.broadcast %15 : vector<1x128xf32> to vector<16x128xf32>
    %117 = arith.addf %115, %116 : vector<16x128xf32>
    %cst_33 = arith.constant dense<0.000000e+00> : vector<16xf32>
    %118 = vector.multi_reduction <add>, %117, %cst_33 [1] : vector<16x128xf32> to vector<16xf32>
    %119 = vector.shape_cast %118 : vector<16xf32> to vector<16x1xf32>
    %cst_34 = arith.constant 1.280000e+02 : f32
    %120 = vector.broadcast %cst_34 : f32 to vector<16x1xf32>
    %121 = arith.divf %119, %120 : vector<16x1xf32>
    %122 = vector.broadcast %121 : vector<16x1xf32> to vector<16x128xf32>
    %123 = arith.subf %117, %122 : vector<16x128xf32>
    %124 = arith.mulf %123, %123 : vector<16x128xf32>
    %cst_35 = arith.constant dense<0.000000e+00> : vector<16xf32>
    %125 = vector.multi_reduction <add>, %124, %cst_35 [1] : vector<16x128xf32> to vector<16xf32>
    %126 = vector.shape_cast %125 : vector<16xf32> to vector<16x1xf32>
    %cst_36 = arith.constant 1.280000e+02 : f32
    %127 = vector.broadcast %cst_36 : f32 to vector<16x1xf32>
    %128 = arith.divf %126, %127 : vector<16x1xf32>
    %129 = vector.broadcast %121 : vector<16x1xf32> to vector<16x128xf32>
    %130 = arith.subf %117, %129 : vector<16x128xf32>
    %cst_37 = arith.constant 9.99999997E-7 : f32
    %131 = vector.broadcast %cst_37 : f32 to vector<16x1xf32>
    %132 = arith.addf %128, %131 : vector<16x1xf32>
    %133 = math.rsqrt %132 : vector<16x1xf32>
    %134 = vector.broadcast %133 : vector<16x1xf32> to vector<16x128xf32>
    %135 = arith.mulf %130, %134 : vector<16x128xf32>
    %136 = vector.broadcast %16 : vector<1x128xf32> to vector<16x128xf32>
    %137 = arith.mulf %135, %136 : vector<16x128xf32>
    %138 = vector.broadcast %17 : vector<1x128xf32> to vector<16x128xf32>
    %139 = arith.addf %137, %138 : vector<16x128xf32>
    %140 = arith.truncf %139 : vector<16x128xf32> to vector<16x128xbf16>
    %c0_38 = arith.constant 0 : index
    %c0_39 = arith.constant 0 : index
    %c0_40 = arith.constant 0 : index
    %141 = vector.load %arg8[%c0_38, %c0_39, %c0_40] : memref<1x128x512xbf16, #tpu.memory_space<vmem>>, vector<1x128x512xbf16>
    %142 = vector.shape_cast %141 : vector<1x128x512xbf16> to vector<128x512xbf16>
    %cst_41 = arith.constant dense<0.000000e+00> : vector<16x512xf32>
    %143 = tpu.matmul %140, %142, %cst_41 {dimension_numbers = #tpu.dot_dimension_numbers<[1], [0], [0], [1], [0, 0, 1, 1], [], []>} : vector<16x128xbf16>, vector<128x512xbf16>, vector<16x512xf32> -> vector<16x512xf32>
    %c0_42 = arith.constant 0 : index
    %c0_43 = arith.constant 0 : index
    %c0_44 = arith.constant 0 : index
    %144 = vector.load %arg5[%c0_42, %c0_43, %c0_44] : memref<1x1x512xf32, #tpu.memory_space<vmem>>, vector<1x1x512xf32>
    %145 = vector.shape_cast %144 : vector<1x1x512xf32> to vector<1x512xf32>
    %146 = vector.broadcast %145 : vector<1x512xf32> to vector<16x512xf32>
    %147 = arith.addf %143, %146 : vector<16x512xf32>
    %cst_45 = arith.constant 0.000000e+00 : f32
    %148 = vector.broadcast %cst_45 : f32 to vector<16x512xf32>
    %149 = arith.maximumf %147, %148 : vector<16x512xf32>
    %150 = arith.truncf %149 : vector<16x512xf32> to vector<16x512xbf16>
    %c0_46 = arith.constant 0 : index
    %c0_47 = arith.constant 0 : index
    %c0_48 = arith.constant 0 : index
    %151 = vector.load %arg9[%c0_46, %c0_47, %c0_48] : memref<1x512x128xbf16, #tpu.memory_space<vmem>>, vector<1x512x128xbf16>
    %152 = vector.shape_cast %151 : vector<1x512x128xbf16> to vector<512x128xbf16>
    %cst_49 = arith.constant dense<0.000000e+00> : vector<16x128xf32>
    %153 = tpu.matmul %150, %152, %cst_49 {dimension_numbers = #tpu.dot_dimension_numbers<[1], [0], [0], [1], [0, 0, 1, 1], [], []>} : vector<16x512xbf16>, vector<512x128xbf16>, vector<16x128xf32> -> vector<16x128xf32>
    %154 = vector.broadcast %18 : vector<1x128xf32> to vector<16x128xf32>
    %155 = arith.addf %153, %154 : vector<16x128xf32>
    %156 = arith.addf %117, %155 : vector<16x128xf32>
    %157 = vector.shape_cast %156 : vector<16x128xf32> to vector<2x8x128xf32>
    %c0_50 = arith.constant 0 : index
    %c0_51 = arith.constant 0 : index
    %c0_52 = arith.constant 0 : index
    %158 = vector.load %arg10[%c0_50, %c0_51, %c0_52] : memref<2x8x128xf32, #tpu.memory_space<vmem>>, vector<2x8x128xf32>
    tpu.vector_store %arg10[%c0_50, %c0_51, %c0_52], %157 {strides = array<i32>} : memref<2x8x128xf32, #tpu.memory_space<vmem>>, vector<2x8x128xf32>,
    return
  }
  func.func @transform_0(%arg0: i32, %arg1: i32) -> (i32, i32, i32) {
    %c0_i32 = arith.constant 0 : i32
    %c0_i32_0 = arith.constant 0 : i32
    %c0_i32_1 = arith.constant 0 : i32
    return %arg0, %c0_i32, %c0_i32_0 : i32, i32, i32
  }
  func.func @transform_1(%arg0: i32, %arg1: i32) -> (i32, i32, i32) {
    %c0_i32 = arith.constant 0 : i32
    %c0_i32_0 = arith.constant 0 : i32
    %c0_i32_1 = arith.constant 0 : i32
    return %arg0, %c0_i32, %c0_i32_0 : i32, i32, i32
  }
  func.func @transform_2(%arg0: i32, %arg1: i32) -> (i32, i32, i32) {
    %c0_i32 = arith.constant 0 : i32
    %c0_i32_0 = arith.constant 0 : i32
    %c0_i32_1 = arith.constant 0 : i32
    return %arg1, %c0_i32, %c0_i32_0 : i32, i32, i32
  }
  func.func @transform_3(%arg0: i32, %arg1: i32) -> (i32, i32, i32) {
    %c0_i32 = arith.constant 0 : i32
    %c0_i32_0 = arith.constant 0 : i32
    %c0_i32_1 = arith.constant 0 : i32
    return %arg1, %c0_i32, %c0_i32_0 : i32, i32, i32
  }
  func.func @transform_4(%arg0: i32, %arg1: i32) -> (i32, i32, i32) {
    %c0_i32 = arith.constant 0 : i32
    %c0_i32_0 = arith.constant 0 : i32
    %c0_i32_1 = arith.constant 0 : i32
    return %arg1, %c0_i32, %c0_i32_0 : i32, i32, i32
  }
  func.func @transform_5(%arg0: i32, %arg1: i32) -> (i32, i32, i32) {
    %c0_i32 = arith.constant 0 : i32
    %c0_i32_0 = arith.constant 0 : i32
    %c0_i32_1 = arith.constant 0 : i32
    return %arg1, %c0_i32, %c0_i32_0 : i32, i32, i32
  }
  func.func @transform_6(%arg0: i32, %arg1: i32) -> (i32, i32, i32) {
    %c0_i32 = arith.constant 0 : i32
    %c0_i32_0 = arith.constant 0 : i32
    %c0_i32_1 = arith.constant 0 : i32
    return %arg1, %c0_i32, %c0_i32_0 : i32, i32, i32
  }
  func.func @transform_7(%arg0: i32, %arg1: i32) -> (i32, i32, i32) {
    %c0_i32 = arith.constant 0 : i32
    %c0_i32_0 = arith.constant 0 : i32
    %c0_i32_1 = arith.constant 0 : i32
    return %arg1, %c0_i32, %c0_i32_0 : i32, i32, i32
  }
  func.func @transform_8(%arg0: i32, %arg1: i32) -> (i32, i32, i32) {
    %c0_i32 = arith.constant 0 : i32
    %c0_i32_0 = arith.constant 0 : i32
    %c0_i32_1 = arith.constant 0 : i32
    return %arg0, %c0_i32, %c0_i32_0 : i32, i32, i32
  }
  func.func @transform_9(%arg0: i32, %arg1: i32) -> (i32, i32, i32) {
    %c0_i32 = arith.constant 0 : i32
    %c0_i32_0 = arith.constant 0 : i32
    %c0_i32_1 = arith.constant 0 : i32
    return %arg0, %c0_i32, %c0_i32_0 : i32, i32, i32
  }
}

</mosaic_0001>

<llo_original>
// kernel: tpu_custom_call.1
$region0: #{tpu_custom_call.1}
  #allocation0 [shape = 'u32[]', space=smem, size = 0x4, offset = 0x4, fixed_abs, tag = 'smem constant byte address 0x4 - core index']
  #allocation1 [shape = 'u32[144,128]{1,0:T(1,128)}', space=vmem, size = 0x12000, scoped, tag = 'internal scratch']
  %s0 = inlined_call_operand.vmem [shape: f32[2,8,128], index: 0, kind: input, shape index: {}]
  %s1 = inlined_call_operand.vmem [shape: f32[2,16,128], index: 1, kind: input, shape index: {}]
  %s2 = inlined_call_operand.vmem [shape: f32[2,9,128], index: 2, kind: input, shape index: {}]
  %s3 = inlined_call_operand.vmem [shape: f32[2,1,512], index: 3, kind: input, shape index: {}]
  %s4 = inlined_call_operand.hbm [shape: bf16[2,128,384], index: 4, kind: input, shape index: {}]
  %s5 = inlined_call_operand.hbm [shape: bf16[2,128,128], index: 5, kind: input, shape index: {}]
  %s6 = inlined_call_operand.hbm [shape: bf16[2,128,512], index: 6, kind: input, shape index: {}]
  %s7 = inlined_call_operand.hbm [shape: bf16[2,512,128], index: 7, kind: input, shape index: {}]
  %s8 = inlined_call_operand.hbm [shape: f32[2,8,128], index: 8, kind: output, shape index: {0}]
  %s9 = inlined_call_operand.hbm [shape: f32[2,8,16], index: 9, kind: output, shape index: {1}]
  %10 = xla_tuple %s8, %s9
  %s11 = sld [smem:[#allocation0]]
  $region97: #{tpu_custom_call.1} parent=0
    _
  %s13 = ssub.s32 1, %s11
  %s14 = scalar_select 0, %s13, %s11
  $region1: #{tpu_custom_call.1} parent=0
    #allocation2 [shape = 'u8[196608]{0}', space=vmem, size = 0x30000, scoped, tag = 'input window, operand 4']
    #allocation3 [shape = 's32[2]{0}', space=sflag, size = 0x8, scoped, tag = 'scoped memory for tpu_custom_call.1']
    #allocation4 [shape = 's32[2]{0}', space=sflag, size = 0x8, scoped, tag = 'scoped memory for tpu_custom_call.1']
    #allocation5 [shape = 'u8[65536]{0}', space=vmem, size = 0x10000, scoped, tag = 'input window, operand 5']
    #allocation6 [shape = 's32[2]{0}', space=sflag, size = 0x8, scoped, tag = 'scoped memory for tpu_custom_call.1']
    #allocation7 [shape = 'u8[262144]{0}', space=vmem, size = 0x40000, scoped, tag = 'input window, operand 6']
    #allocation8 [shape = 'u8[262144]{0}', space=vmem, size = 0x40000, scoped, tag = 'input window, operand 7']
    #allocation9 [shape = 's32[2]{0}', space=sflag, size = 0x8, scoped, tag = 'scoped memory for tpu_custom_call.1']
    #allocation10 [shape = 'u8[8192]{0}', space=vmem, size = 0x2000, scoped, tag = 'output window, operand 0, single buffered']
    #allocation11 [shape = 'u8[8192]{0}', space=vmem, size = 0x2000, scoped, tag = 'output window, operand 1, single buffered']
    #allocation12 [shape = 's32[1]{0}', space=sflag, size = 0x4, scoped, tag = 'scoped memory for tpu_custom_call.1']
    %15 = vsyncpa [#allocation3], 0
    %s16 = scalar_lea.sflag [#allocation3], 1
    %17 = vsyncpa %s16, 0
    %18 = vsyncpa [#allocation6], 0
    %s19 = scalar_lea.sflag [#allocation6], 1
    %20 = vsyncpa %s19, 0
    %21 = vsyncpa [#allocation9], 0
    %s22 = scalar_lea.sflag [#allocation9], 1
    %23 = vsyncpa %s22, 0
    %24 = vsyncpa [#allocation4], 0
    %25 = vsyncpa [#allocation12], 0
    loop: start=0, step=1, limit=4
    $region2: #{tpu_custom_call.1} parent=1 // loop_pre_header
      _
    $region3: #{tpu_custom_call.1} parent=1 // loop_header
      %s27 = sphi 0, %s31
      %p28 = scmp.ge.s32.totalorder %s27, 4
      %s34 = sphi 0, %s46
      %s35 = sphi 0, %s42
      %s36 = sphi 0, %s34
      %s37 = sphi 0, %s35
      %s38 = sphi 0, %s36
      %s39 = sphi 0, %s37
      %s49 = sphi 0, %s51
      %s52 = sphi 0, %s49
      %s53 = sphi 0, %s52
      %s69 = sphi 0, %s53
      %s75 = sphi 0, %s77
      %s78 = sphi 0, %s75
      %s79 = sphi 0, %s78
      %s95 = sphi 0, %s79
      %s101 = sphi 0, %s103
      %s104 = sphi 0, %s101
      %s105 = sphi 0, %s104
      %s121 = sphi 0, %s105
      %s127 = sphi 0, %s129
      %s130 = sphi 0, %s127
      %s131 = sphi 0, %s130
      %s147 = sphi 0, %s131
      %s153 = sphi 0, %s155
      %s156 = sphi 0, %s153
      %s157 = sphi 0, %s156
      %s173 = sphi 0, %s157
      %s179 = sphi 0, %s181
      %s182 = sphi 0, %s179
      %s183 = sphi 0, %s182
      %s199 = sphi 0, %s183
      %s205 = sphi 0, %s207
      %s208 = sphi 0, %s205
      %s209 = sphi 0, %s208
      %s225 = sphi 0, %s209
      %s231 = sphi 0, %s233
      %s234 = sphi 0, %s231
      %s235 = sphi 0, %s234
      %s251 = sphi 0, %s235
      %s257 = sphi 0, %s259
      %s260 = sphi 0, %s257
      %s261 = sphi 0, %s260
      %s277 = sphi 0, %s261
      %s283 = sphi 0, %s285
      %s286 = sphi 0, %s283
      %s287 = sphi 0, %s286
      %s303 = sphi 0, %s287
    $region4: #{tpu_custom_call.1} parent=1 // loop_header_branch
      %30 = sbr.rel (%p28) target = $region8
    $region5: #{tpu_custom_call.1} parent=1 // loop_body
      %s32 = ssub.s32 %s27, 1
      %s33 = ssub.s32 %s27, 2
      %s40 = sadd.s32 1, %s35
      %p41 = scmp.ge.s32.totalorder %s40, 2
      %s42 = scalar_select %p41, 0, %s40
      %s43 = sadd.s32 1, %s34
      %s44 = scalar_select %p41, %s43, %s34
      %p45 = scmp.ge.s32.totalorder %s44, 1
      %s46 = scalar_select %p45, 0, %s44
      %s47 = ssub.s32 %s34, %s46
      %p48 = scmp.eq.s32.totalorder %s47, 0
      %s50 = sadd.s32 %s49, 1
      %s51 = scalar_select %p48, %s49, %s50
      %p54 = pneg %p48
      %p55 = scmp.eq.s32.totalorder %s27, 1
      %p56 = por %p54, %p55
      %p57 = scmp.ne.s32.totalorder %s49, %s52
      %p58 = scmp.eq.s32.totalorder %s27, 0
      %p59 = por %p57, %p58
      %p60 = scmp.ne.s32.totalorder %s49, %s52
      %p61 = scmp.eq.s32.totalorder %s32, 1
      %p62 = por %p60, %p61
      %p63 = scmp.ne.s32.totalorder %s52, %s53
      %p64 = scmp.eq.s32.totalorder %s32, 0
      %p65 = por %p63, %p64
      %p66 = scmp.ne.s32.totalorder %s52, %s53
      %p67 = scmp.eq.s32.totalorder %s33, 1
      %p68 = por %p66, %p67
      %p70 = scmp.ne.s32.totalorder %s53, %s69
      %p71 = scmp.eq.s32.totalorder %s33, 0
      %p72 = por %p70, %p71
      %s73 = ssub.s32 %s34, %s46
      %p74 = scmp.eq.s32.totalorder %s73, 0
      %s76 = sadd.s32 %s75, 1
      %s77 = scalar_select %p74, %s75, %s76
      %p80 = pneg %p74
      %p81 = scmp.eq.s32.totalorder %s27, 1
      %p82 = por %p80, %p81
      %p83 = scmp.ne.s32.totalorder %s75, %s78
      %p84 = scmp.eq.s32.totalorder %s27, 0
      %p85 = por %p83, %p84
      %p86 = scmp.ne.s32.totalorder %s75, %s78
      %p87 = scmp.eq.s32.totalorder %s32, 1
      %p88 = por %p86, %p87
      %p89 = scmp.ne.s32.totalorder %s78, %s79
      %p90 = scmp.eq.s32.totalorder %s32, 0
      %p91 = por %p89, %p90
      %p92 = scmp.ne.s32.totalorder %s78, %s79
      %p93 = scmp.eq.s32.totalorder %s33, 1
      %p94 = por %p92, %p93
      %p96 = scmp.ne.s32.totalorder %s79, %s95
      %p97 = scmp.eq.s32.totalorder %s33, 0
      %p98 = por %p96, %p97
      %s99 = ssub.s32 %s35, %s42
      %p100 = scmp.eq.s32.totalorder %s99, 0
      %s102 = sadd.s32 %s101, 1
      %s103 = scalar_select %p100, %s101, %s102
      %p106 = pneg %p100
      %p107 = scmp.eq.s32.totalorder %s27, 1
      %p108 = por %p106, %p107
      %p109 = scmp.ne.s32.totalorder %s101, %s104
      %p110 = scmp.eq.s32.totalorder %s27, 0
      %p111 = por %p109, %p110
      %p112 = scmp.ne.s32.totalorder %s101, %s104
      %p113 = scmp.eq.s32.totalorder %s32, 1
      %p114 = por %p112, %p113
      %p115 = scmp.ne.s32.totalorder %s104, %s105
      %p116 = scmp.eq.s32.totalorder %s32, 0
      %p117 = por %p115, %p116
      %p118 = scmp.ne.s32.totalorder %s104, %s105
      %p119 = scmp.eq.s32.totalorder %s33, 1
      %p120 = por %p118, %p119
      %p122 = scmp.ne.s32.totalorder %s105, %s121
      %p123 = scmp.eq.s32.totalorder %s33, 0
      %p124 = por %p122, %p123
      %s125 = ssub.s32 %s35, %s42
      %p126 = scmp.eq.s32.totalorder %s125, 0
      %s128 = sadd.s32 %s127, 1
      %s129 = scalar_select %p126, %s127, %s128
      %p132 = pneg %p126
      %p133 = scmp.eq.s32.totalorder %s27, 1
      %p134 = por %p132, %p133
      %p135 = scmp.ne.s32.totalorder %s127, %s130
      %p136 = scmp.eq.s32.totalorder %s27, 0
      %p137 = por %p135, %p136
      %p138 = scmp.ne.s32.totalorder %s127, %s130
      %p139 = scmp.eq.s32.totalorder %s32, 1
      %p140 = por %p138, %p139
      %p141 = scmp.ne.s32.totalorder %s130, %s131
      %p142 = scmp.eq.s32.totalorder %s32, 0
      %p143 = por %p141, %p142
      %p144 = scmp.ne.s32.totalorder %s130, %s131
      %p145 = scmp.eq.s32.totalorder %s33, 1
      %p146 = por %p144, %p145
      %p148 = scmp.ne.s32.totalorder %s131, %s147
      %p149 = scmp.eq.s32.totalorder %s33, 0
      %p150 = por %p148, %p149
      %s151 = ssub.s32 %s35, %s42
      %p152 = scmp.eq.s32.totalorder %s151, 0
      %s154 = sadd.s32 %s153, 1
      %s155 = scalar_select %p152, %s153, %s154
      %p158 = pneg %p152
      %p159 = scmp.eq.s32.totalorder %s27, 1
      %p160 = por %p158, %p159
      %p161 = scmp.ne.s32.totalorder %s153, %s156
      %p162 = scmp.eq.s32.totalorder %s27, 0
      %p163 = por %p161, %p162
      %p164 = scmp.ne.s32.totalorder %s153, %s156
      %p165 = scmp.eq.s32.totalorder %s32, 1
      %p166 = por %p164, %p165
      %p167 = scmp.ne.s32.totalorder %s156, %s157
      %p168 = scmp.eq.s32.totalorder %s32, 0
      %p169 = por %p167, %p168
      %p170 = scmp.ne.s32.totalorder %s156, %s157
      %p171 = scmp.eq.s32.totalorder %s33, 1
      %p172 = por %p170, %p171
      %p174 = scmp.ne.s32.totalorder %s157, %s173
      %p175 = scmp.eq.s32.totalorder %s33, 0
      %p176 = por %p174, %p175
      %s177 = ssub.s32 %s35, %s42
      %p178 = scmp.eq.s32.totalorder %s177, 0
      %s180 = sadd.s32 %s179, 1
      %s181 = scalar_select %p178, %s179, %s180
      %p184 = pneg %p178
      %p185 = scmp.eq.s32.totalorder %s27, 1
      %p186 = por %p184, %p185
      %p187 = scmp.ne.s32.totalorder %s179, %s182
      %p188 = scmp.eq.s32.totalorder %s27, 0
      %p189 = por %p187, %p188
      %p190 = scmp.ne.s32.totalorder %s179, %s182
      %p191 = scmp.eq.s32.totalorder %s32, 1
      %p192 = por %p190, %p191
      %p193 = scmp.ne.s32.totalorder %s182, %s183
      %p194 = scmp.eq.s32.totalorder %s32, 0
      %p195 = por %p193, %p194
      %p196 = scmp.ne.s32.totalorder %s182, %s183
      %p197 = scmp.eq.s32.totalorder %s33, 1
      %p198 = por %p196, %p197
      %p200 = scmp.ne.s32.totalorder %s183, %s199
      %p201 = scmp.eq.s32.totalorder %s33, 0
      %p202 = por %p200, %p201
      %s203 = ssub.s32 %s35, %s42
      %p204 = scmp.eq.s32.totalorder %s203, 0
      %s206 = sadd.s32 %s205, 1
      %s207 = scalar_select %p204, %s205, %s206
      %p210 = pneg %p204
      %p211 = scmp.eq.s32.totalorder %s27, 1
      %p212 = por %p210, %p211
      %p213 = scmp.ne.s32.totalorder %s205, %s208
      %p214 = scmp.eq.s32.totalorder %s27, 0
      %p215 = por %p213, %p214
      %p216 = scmp.ne.s32.totalorder %s205, %s208
      %p217 = scmp.eq.s32.totalorder %s32, 1
      %p218 = por %p216, %p217
      %p219 = scmp.ne.s32.totalorder %s208, %s209
      %p220 = scmp.eq.s32.totalorder %s32, 0
      %p221 = por %p219, %p220
      %p222 = scmp.ne.s32.totalorder %s208, %s209
      %p223 = scmp.eq.s32.totalorder %s33, 1
      %p224 = por %p222, %p223
      %p226 = scmp.ne.s32.totalorder %s209, %s225
      %p227 = scmp.eq.s32.totalorder %s33, 0
      %p228 = por %p226, %p227
      %s229 = ssub.s32 %s35, %s42
      %p230 = scmp.eq.s32.totalorder %s229, 0
      %s232 = sadd.s32 %s231, 1
      %s233 = scalar_select %p230, %s231, %s232
      %p236 = pneg %p230
      %p237 = scmp.eq.s32.totalorder %s27, 1
      %p238 = por %p236, %p237
      %p239 = scmp.ne.s32.totalorder %s231, %s234
      %p240 = scmp.eq.s32.totalorder %s27, 0
      %p241 = por %p239, %p240
      %p242 = scmp.ne.s32.totalorder %s231, %s234
      %p243 = scmp.eq.s32.totalorder %s32, 1
      %p244 = por %p242, %p243
      %p245 = scmp.ne.s32.totalorder %s234, %s235
      %p246 = scmp.eq.s32.totalorder %s32, 0
      %p247 = por %p245, %p246
      %p248 = scmp.ne.s32.totalorder %s234, %s235
      %p249 = scmp.eq.s32.totalorder %s33, 1
      %p250 = por %p248, %p249
      %p252 = scmp.ne.s32.totalorder %s235, %s251
      %p253 = scmp.eq.s32.totalorder %s33, 0
      %p254 = por %p252, %p253
      %s255 = ssub.s32 %s34, %s46
      %p256 = scmp.eq.s32.totalorder %s255, 0
      %s258 = sadd.s32 %s257, 1
      %s259 = scalar_select %p256, %s257, %s258
      %p262 = pneg %p256
      %p263 = scmp.eq.s32.totalorder %s27, 1
      %p264 = por %p262, %p263
      %p265 = scmp.ne.s32.totalorder %s257, %s260
      %p266 = scmp.eq.s32.totalorder %s27, 0
      %p267 = por %p265, %p266
      %p268 = scmp.ne.s32.totalorder %s257, %s260
      %p269 = scmp.eq.s32.totalorder %s32, 1
      %p270 = por %p268, %p269
      %p271 = scmp.ne.s32.totalorder %s260, %s261
      %p272 = scmp.eq.s32.totalorder %s32, 0
      %p273 = por %p271, %p272
      %p274 = scmp.ne.s32.totalorder %s260, %s261
      %p275 = scmp.eq.s32.totalorder %s33, 1
      %p276 = por %p274, %p275
      %p278 = scmp.ne.s32.totalorder %s261, %s277
      %p279 = scmp.eq.s32.totalorder %s33, 0
      %p280 = por %p278, %p279
      %s281 = ssub.s32 %s34, %s46
      %p282 = scmp.eq.s32.totalorder %s281, 0
      %s284 = sadd.s32 %s283, 1
      %s285 = scalar_select %p282, %s283, %s284
      %p288 = pneg %p282
      %p289 = scmp.eq.s32.totalorder %s27, 1
      %p290 = por %p288, %p289
      %p291 = scmp.ne.s32.totalorder %s283, %s286
      %p292 = scmp.eq.s32.totalorder %s27, 0
      %p293 = por %p291, %p292
      %p294 = scmp.ne.s32.totalorder %s283, %s286
      %p295 = scmp.eq.s32.totalorder %s32, 1
      %p296 = por %p294, %p295
      %p297 = scmp.ne.s32.totalorder %s286, %s287
      %p298 = scmp.eq.s32.totalorder %s32, 0
      %p299 = por %p297, %p298
      %p300 = scmp.ne.s32.totalorder %s286, %s287
      %p301 = scmp.eq.s32.totalorder %s33, 1
      %p302 = por %p300, %p301
      %p304 = scmp.ne.s32.totalorder %s287, %s303
      %p305 = scmp.eq.s32.totalorder %s33, 0
      %p306 = por %p304, %p305
      %p307 = scmp.le.s32.totalorder 1, %s27
      %p308 = scmp.lt.s32.totalorder %s27, 3
      %p309 = pnand %p307, %p308
      %p310 = pneg %p309
      // Predicated region
      $region9: #{tpu_custom_call.1} parent=5 // pred_check
        _
      $region10: #{tpu_custom_call.1} parent=5 // pred_check_branch
        %312 = sbr.rel (%p309) target = $region12
      $region11: #{tpu_custom_call.1} parent=5 // pred_region
        %s313 = ssub.s32 %s27, 1
        // Predicated region
        $region13: #{tpu_custom_call.1} parent=11 // pred_check
          %p314 = pneg %p65
        $region14: #{tpu_custom_call.1} parent=11 // pred_check_branch
          %316 = sbr.rel (%p314) target = $region16
        $region15: #{tpu_custom_call.1} parent=11 // pred_region
          %s317 = smul.u32 2, %s36
          %p318 = scmp.lt.s32.totalorder %s317, 1
          %s319 = scalar_select %p318, %s317, 1
          %s320 = smul.addr %s319, 8
          %s321 = scalar_lea.vmem %s0, %s320
          %s322 = smul.u32 2, %s36
        $region16: #{tpu_custom_call.1} parent=11 // pred_fallthru
          _
        // Predicated region
        $region17: #{tpu_custom_call.1} parent=11 // pred_check
          %p323 = pneg %p91
        $region18: #{tpu_custom_call.1} parent=11 // pred_check_branch
          %325 = sbr.rel (%p323) target = $region20
        $region19: #{tpu_custom_call.1} parent=11 // pred_region
          %s326 = smul.u32 2, %s36
          %p327 = scmp.lt.s32.totalorder %s326, 1
          %s328 = scalar_select %p327, %s326, 1
          %s329 = smul.addr %s328, 2
          %s330 = smul.addr %s329, 8
          %s331 = scalar_lea.vmem %s1, %s330
          %s332 = smul.u32 2, %s36
        $region20: #{tpu_custom_call.1} parent=11 // pred_fallthru
          _
      $region12: #{tpu_custom_call.1} parent=5 // pred_fallthru
        _
      %p333 = scmp.lt.s32.totalorder %s27, 2
      // Predicated region
      $region21: #{tpu_custom_call.1} parent=5 // pred_check
        %p334 = pneg %p333
      $region22: #{tpu_custom_call.1} parent=5 // pred_check_branch
        %336 = sbr.rel (%p334) target = $region24
      $region23: #{tpu_custom_call.1} parent=5 // pred_region
        // Predicated region
        $region25: #{tpu_custom_call.1} parent=23 // pred_check
          %p337 = pneg %p111
        $region26: #{tpu_custom_call.1} parent=23 // pred_check_branch
          %339 = sbr.rel (%p337) target = $region28
        $region27: #{tpu_custom_call.1} parent=23 // pred_region
          %p340 = scmp.lt.s32.totalorder %s35, 1
          %s341 = scalar_select %p340, %s35, 1
          %s342 = smul.addr %s341, 2
          %s343 = smul.addr %s342, 8
          %s344 = scalar_lea.vmem %s2, %s343
        $region28: #{tpu_custom_call.1} parent=23 // pred_fallthru
          _
        // Predicated region
        $region29: #{tpu_custom_call.1} parent=23 // pred_check
          %p345 = pneg %p137
        $region30: #{tpu_custom_call.1} parent=23 // pred_check_branch
          %347 = sbr.rel (%p345) target = $region32
        $region31: #{tpu_custom_call.1} parent=23 // pred_region
          %p348 = scmp.lt.s32.totalorder %s35, 1
          %s349 = scalar_select %p348, %s35, 1
          %s350 = smul.addr %s349, 4
          %s351 = scalar_lea.vmem %s3, %s350
        $region32: #{tpu_custom_call.1} parent=23 // pred_fallthru
          _
        // Predicated region
        $region33: #{tpu_custom_call.1} parent=23 // pred_check
          %p352 = pneg %p163
        $region34: #{tpu_custom_call.1} parent=23 // pred_check_branch
          %354 = sbr.rel (%p352) target = $region36
        $region35: #{tpu_custom_call.1} parent=23 // pred_region
          %s355 = sand.u32 %s153, 1
          %s356 = scalar_lea.sflag [#allocation3], %s355
          %s357 = sand.u32 %s153, 1
          %s358 = smul.addr %s357, 192
          %s359 = scalar_lea.vmem [#allocation2], %s358
          %s361 = ssub.s32 3072, 3072
          %362 = vsyncadd %s356, %s361
          %s363 = smul.addr %s35, 48
          %s364 = smul.addr %s363, 64
          %s365 = scalar_lea.hbm %s4, %s364
          %s366 = sshll.u32 %s359, 4
          %s367 = int_to_ptr.vmem [resolvable:$true] %s366
          %372 = dma.hbm_to_vmem [thread:$0]  %s365, 3072, %s367, %s356, 192, 192, 12
        $region36: #{tpu_custom_call.1} parent=23 // pred_fallthru
          _
        // Predicated region
        $region37: #{tpu_custom_call.1} parent=23 // pred_check
          %p373 = pneg %p189
        $region38: #{tpu_custom_call.1} parent=23 // pred_check_branch
          %375 = sbr.rel (%p373) target = $region40
        $region39: #{tpu_custom_call.1} parent=23 // pred_region
          %s376 = sand.u32 %s27, 1
          %s377 = scalar_lea.sflag [#allocation6], %s376
          %s378 = sand.u32 %s179, 1
          %s379 = smul.addr %s378, 64
          %s380 = scalar_lea.vmem [#allocation5], %s379
          %s382 = ssub.s32 1024, 1024
          %383 = vsyncadd %s377, %s382
          %s384 = smul.addr %s35, 16
          %s385 = smul.addr %s384, 64
          %s386 = scalar_lea.hbm %s5, %s385
          %s387 = sshll.u32 %s380, 4
          %s388 = int_to_ptr.vmem [resolvable:$true] %s387
          %393 = dma.hbm_to_vmem [thread:$0]  %s386, 1024, %s388, %s377, 64, 64, 4
        $region40: #{tpu_custom_call.1} parent=23 // pred_fallthru
          _
        // Predicated region
        $region41: #{tpu_custom_call.1} parent=23 // pred_check
          %p394 = pneg %p215
        $region42: #{tpu_custom_call.1} parent=23 // pred_check_branch
          %396 = sbr.rel (%p394) target = $region44
        $region43: #{tpu_custom_call.1} parent=23 // pred_region
          %s397 = sand.u32 %s27, 1
          %s398 = scalar_lea.sflag [#allocation6], %s397
          %s399 = sand.u32 %s205, 1
          %s400 = smul.addr %s399, 256
          %s401 = scalar_lea.vmem [#allocation7], %s400
          %s403 = ssub.s32 4096, 4096
          %404 = vsyncadd %s398, %s403
          %s405 = smul.addr %s35, 64
          %s406 = smul.addr %s405, 64
          %s407 = scalar_lea.hbm %s6, %s406
          %s408 = sshll.u32 %s401, 4
          %s409 = int_to_ptr.vmem [resolvable:$true] %s408
          %414 = dma.hbm_to_vmem [thread:$0]  %s407, 4096, %s409, %s398, 256, 256, 16
        $region44: #{tpu_custom_call.1} parent=23 // pred_fallthru
          _
        // Predicated region
        $region45: #{tpu_custom_call.1} parent=23 // pred_check
          %p415 = pneg %p241
        $region46: #{tpu_custom_call.1} parent=23 // pred_check_branch
          %417 = sbr.rel (%p415) target = $region48
        $region47: #{tpu_custom_call.1} parent=23 // pred_region
          %s418 = sand.u32 %s231, 1
          %s419 = scalar_lea.sflag [#allocation9], %s418
          %s420 = sand.u32 %s231, 1
          %s421 = smul.addr %s420, 256
          %s422 = scalar_lea.vmem [#allocation8], %s421
          %s424 = ssub.s32 4096, 4096
          %425 = vsyncadd %s419, %s424
          %s426 = smul.addr %s35, 64
          %s427 = smul.addr %s426, 64
          %s428 = scalar_lea.hbm %s7, %s427
          %s429 = sshll.u32 %s422, 4
          %s430 = int_to_ptr.vmem [resolvable:$true] %s429
          %435 = dma.hbm_to_vmem [thread:$0]  %s428, 4096, %s430, %s419, 64, 64, 4
        $region48: #{tpu_custom_call.1} parent=23 // pred_fallthru
          _
      $region24: #{tpu_custom_call.1} parent=5 // pred_fallthru
        _
      %p436 = scmp.le.s32.totalorder 1, %s27
      %p437 = scmp.lt.s32.totalorder %s27, 3
      %p438 = pnand %p436, %p437
      %p439 = pneg %p438
      // Predicated region
      $region49: #{tpu_custom_call.1} parent=5 // pred_check
        _
      $region50: #{tpu_custom_call.1} parent=5 // pred_check_branch
        %441 = sbr.rel (%p438) target = $region52
      $region51: #{tpu_custom_call.1} parent=5 // pred_region
        %s442 = ssub.s32 %s27, 1
        %s443 = sand.u32 %s156, 1
        %s444 = scalar_lea.sflag [#allocation3], %s443
        %s445 = sand.u32 %s156, 1
        %s446 = smul.addr %s445, 192
        %s447 = scalar_lea.vmem [#allocation2], %s446
        // Predicated region
        $region53: #{tpu_custom_call.1} parent=51 // pred_check
          %p448 = pneg %p169
        $region54: #{tpu_custom_call.1} parent=51 // pred_check_branch
          %450 = sbr.rel (%p448) target = $region56
        $region55: #{tpu_custom_call.1} parent=51 // pred_region
          %451 = dma.done %s444, 3072
        $region56: #{tpu_custom_call.1} parent=51 // pred_fallthru
          _
        %s452 = sand.u32 %s32, 1
        %s453 = scalar_lea.sflag [#allocation6], %s452
        %s454 = sand.u32 %s182, 1
        %s455 = smul.addr %s454, 64
        %s456 = scalar_lea.vmem [#allocation5], %s455
        // Predicated region
        $region57: #{tpu_custom_call.1} parent=51 // pred_check
          %p457 = pneg %p195
        $region58: #{tpu_custom_call.1} parent=51 // pred_check_branch
          %459 = sbr.rel (%p457) target = $region60
        $region59: #{tpu_custom_call.1} parent=51 // pred_region
          %460 = dma.done %s453, 1024
        $region60: #{tpu_custom_call.1} parent=51 // pred_fallthru
          _
        %s461 = sand.u32 %s32, 1
        %s462 = scalar_lea.sflag [#allocation6], %s461
        %s463 = sand.u32 %s208, 1
        %s464 = smul.addr %s463, 256
        %s465 = scalar_lea.vmem [#allocation7], %s464
        // Predicated region
        $region61: #{tpu_custom_call.1} parent=51 // pred_check
          %p466 = pneg %p221
        $region62: #{tpu_custom_call.1} parent=51 // pred_check_branch
          %468 = sbr.rel (%p466) target = $region64
        $region63: #{tpu_custom_call.1} parent=51 // pred_region
          %469 = dma.done %s462, 4096
        $region64: #{tpu_custom_call.1} parent=51 // pred_fallthru
          _
        %s470 = sand.u32 %s234, 1
        %s471 = scalar_lea.sflag [#allocation9], %s470
        %s472 = sand.u32 %s234, 1
        %s473 = smul.addr %s472, 256
        %s474 = scalar_lea.vmem [#allocation8], %s473
        // Predicated region
        $region65: #{tpu_custom_call.1} parent=51 // pred_check
          %p475 = pneg %p247
        $region66: #{tpu_custom_call.1} parent=51 // pred_check_branch
          %477 = sbr.rel (%p475) target = $region68
        $region67: #{tpu_custom_call.1} parent=51 // pred_region
          %478 = dma.done %s471, 4096
        $region68: #{tpu_custom_call.1} parent=51 // pred_fallthru
          _
        %s479 = smul.u32 2, %s36
        %p480 = scmp.lt.s32.totalorder %s479, 1
        %s481 = scalar_select %p480, %s479, 1
        %s482 = smul.addr %s481, 8
        %s483 = scalar_lea.vmem %s0, %s482
        %p484 = pneg %p65
        %p485 = pneg %p62
        %s486 = smul.u32 2, %s36
        %p487 = scmp.lt.s32.totalorder %s486, 1
        %s488 = scalar_select %p487, %s486, 1
        %s489 = smul.addr %s488, 2
        %s490 = smul.addr %s489, 8
        %s491 = scalar_lea.vmem %s1, %s490
        %p492 = pneg %p91
        %p493 = pneg %p88
        %p494 = scmp.lt.s32.totalorder %s37, 1
        %s495 = scalar_select %p494, %s37, 1
        %s496 = smul.addr %s495, 2
        %s497 = smul.addr %s496, 8
        %s498 = scalar_lea.vmem %s2, %s497
        %p499 = pneg %p117
        %p500 = pneg %p114
        %p501 = scmp.lt.s32.totalorder %s37, 1
        %s502 = scalar_select %p501, %s37, 1
        %s503 = smul.addr %s502, 4
        %s504 = scalar_lea.vmem %s3, %s503
        %p505 = pneg %p143
        %p506 = pneg %p140
        %s507 = sand.u32 %s156, 1
        %s508 = scalar_lea.sflag [#allocation3], %s507
        %s509 = sand.u32 %s156, 1
        %s510 = smul.addr %s509, 192
        %s511 = scalar_lea.vmem [#allocation2], %s510
        %p512 = pneg %p169
        %p513 = pneg %p166
        %s514 = sand.u32 %s32, 1
        %s515 = scalar_lea.sflag [#allocation6], %s514
        %s516 = sand.u32 %s182, 1
        %s517 = smul.addr %s516, 64
        %s518 = scalar_lea.vmem [#allocation5], %s517
        %p519 = pneg %p195
        %p520 = pneg %p192
        %s521 = sand.u32 %s32, 1
        %s522 = scalar_lea.sflag [#allocation6], %s521
        %s523 = sand.u32 %s208, 1
        %s524 = smul.addr %s523, 256
        %s525 = scalar_lea.vmem [#allocation7], %s524
        %p526 = pneg %p221
        %p527 = pneg %p218
        %s528 = sand.u32 %s234, 1
        %s529 = scalar_lea.sflag [#allocation9], %s528
        %s530 = sand.u32 %s234, 1
        %s531 = smul.addr %s530, 256
        %s532 = scalar_lea.vmem [#allocation8], %s531
        %p533 = pneg %p247
        %p534 = pneg %p244
        %p535 = pneg %p273
        %p536 = pneg %p270
        %p537 = pneg %p299
        %p538 = pneg %p296
        %s539 = smul.u32 2, %s36
        %p540 = scmp.lt.s32.totalorder %s539, 1
        %s541 = scalar_select %p540, %s539, 1
        %s542 = smul.addr %s541, 8
        %s543 = scalar_lea.vmem %s0, %s542
        %s544 = smul.u32 2, %s36
        %s545 = smul.u32 2, %s36
        %p546 = scmp.lt.s32.totalorder %s545, 1
        %s547 = scalar_select %p546, %s545, 1
        %s548 = smul.addr %s547, 2
        %s549 = smul.addr %s548, 8
        %s550 = scalar_lea.vmem %s1, %s549
        %s551 = smul.u32 2, %s36
        %p552 = scmp.lt.s32.totalorder %s37, 1
        %s553 = scalar_select %p552, %s37, 1
        %s554 = smul.addr %s553, 2
        %s555 = smul.addr %s554, 8
        %s556 = scalar_lea.vmem %s2, %s555
        %p557 = scmp.lt.s32.totalorder %s37, 1
        %s558 = scalar_select %p557, %s37, 1
        %s559 = smul.addr %s558, 4
        %s560 = scalar_lea.vmem %s3, %s559
        %s561 = smul.u32 2, %s36
        %s562 = smul.u32 2, %s36
        %p564 = scmp.eq.s32.totalorder %s37, 0
        %p565 = scmp.eq.s32.totalorder %s37, 1
        // Predicated region
        $region69: #{tpu_custom_call.1} parent=51 // pred_check
          %p566 = pneg %p564
        $region70: #{tpu_custom_call.1} parent=51 // pred_check_branch
          %568 = sbr.rel (%p566) target = $region72
        $region71: #{tpu_custom_call.1} parent=51 // pred_region
          %v569 = vld [vmem:[%s543] sm:$0xff]
          %v570 = vld [vmem:[%s543 + $0x8] sm:$0xff]
          %571 = vst [vmem:[#allocation10] sm:$0xff] %v569
          %572 = vst [vmem:[#allocation10 + $0x8] sm:$0xff] %v570
        $region72: #{tpu_custom_call.1} parent=51 // pred_fallthru
          _
        %v573 = vld [vmem:[#allocation10] sm:$0xff]
        %v574 = vld [vmem:[#allocation10 + $0x8] sm:$0xff]
        %v575 = vld [vmem:[%s550] sm:$0xff]
        %v576 = vld [vmem:[%s550 + $0x8] sm:$0xff]
        %v577 = vld [vmem:[%s550 + $0x10] sm:$0xff]
        %v578 = vld [vmem:[%s550 + $0x18] sm:$0xff]
        %v579 = vld [vmem:[%s556] sm:$0xff]
        %v580 = vld [vmem:[%s556 + $0x8] sm:$0x1]
        %581 = vadd.xlane.f32.xlu0 %v573
        %v582 = vpop.xlane.xlu0 %581
        %583 = vadd.xlane.f32.xlu0 %v574
        %v584 = vpop.xlane.xlu0 %583
        %v585 = vrcp.pop 128.0
        %v586 = vmul.f32 %v582, %v585
        %v587 = vmul.f32 %v584, %v585
        %v588 = vsub.f32 %v573, %v586
        %v589 = vsub.f32 %v574, %v587
        %v590 = vmul.f32 %v588, %v588
        %v591 = vmul.f32 %v589, %v589
        %592 = vadd.xlane.f32.xlu0 %v590
        %v593 = vpop.xlane.xlu0 %592
        %594 = vadd.xlane.f32.xlu0 %v591
        %v595 = vpop.xlane.xlu0 %594
        %v596 = vmul.f32 %v593, %v585
        %v597 = vmul.f32 %v595, %v585
        %v598 = vadd.f32 %v596, 1e-06
        %v599 = vadd.f32 %v597, 1e-06
        %v600 = vrsqrt.pop %v598
        %v601 = vrsqrt.pop %v599
        %v602 = vmul.f32 %v588, %v600
        %v603 = vmul.f32 %v589, %v601
        %v604 = vlaneseq
        %v605 = vshrl.u32 %v604, 7
        %v606 = vsub.s32 0, %v605
        %v607 = vrot.slane %v579, %v606
        %v608 = vmul.f32 %v602, %v607
        %v609 = vmul.f32 %v603, %v607
        %v610 = vlaneseq
        %v611 = vshrl.u32 %v610, 7
        %v612 = vsub.s32 1, %v611
        %v613 = vrot.slane %v579, %v612
        %v614 = vadd.f32 %v608, %v613
        %v615 = vadd.f32 %v609, %v613
        %616 = vadd.xlane.f32.xlu0 %v575
        %v617 = vpop.xlane.xlu0 %616
        %618 = vadd.xlane.f32.xlu0 %v576
        %v619 = vpop.xlane.xlu0 %618
        %620 = vadd.xlane.f32.xlu0 %v577
        %v621 = vpop.xlane.xlu0 %620
        %622 = vadd.xlane.f32.xlu0 %v578
        %v623 = vpop.xlane.xlu0 %622
        %v624 = vmul.f32 %v617, %v585
        %v625 = vmul.f32 %v619, %v585
        %v626 = vmul.f32 %v621, %v585
        %v627 = vmul.f32 %v623, %v585
        %v628 = vsub.f32 %v575, %v624
        %v629 = vsub.f32 %v576, %v625
        %v630 = vsub.f32 %v577, %v626
        %v631 = vsub.f32 %v578, %v627
        %v632 = vmul.f32 %v628, %v628
        %v633 = vmul.f32 %v629, %v629
        %v634 = vmul.f32 %v630, %v630
        %v635 = vmul.f32 %v631, %v631
        %636 = vadd.xlane.f32.xlu0 %v632
        %v637 = vpop.xlane.xlu0 %636
        %638 = vadd.xlane.f32.xlu0 %v633
        %v639 = vpop.xlane.xlu0 %638
        %640 = vadd.xlane.f32.xlu0 %v634
        %v641 = vpop.xlane.xlu0 %640
        %642 = vadd.xlane.f32.xlu0 %v635
        %v643 = vpop.xlane.xlu0 %642
        %v644 = vmul.f32 %v637, %v585
        %v645 = vmul.f32 %v639, %v585
        %v646 = vmul.f32 %v641, %v585
        %v647 = vmul.f32 %v643, %v585
        %v648 = vadd.f32 %v644, 1e-06
        %v649 = vadd.f32 %v645, 1e-06
        %v650 = vadd.f32 %v646, 1e-06
        %v651 = vadd.f32 %v647, 1e-06
        %v652 = vrsqrt.pop %v648
        %v653 = vrsqrt.pop %v649
        %v654 = vrsqrt.pop %v650
        %v655 = vrsqrt.pop %v651
        %v656 = vmul.f32 %v628, %v652
        %v657 = vmul.f32 %v629, %v653
        %v658 = vmul.f32 %v630, %v654
        %v659 = vmul.f32 %v631, %v655
        %v660 = vmul.f32 %v656, %v607
        %v661 = vmul.f32 %v657, %v607
        %v662 = vmul.f32 %v658, %v607
        %v663 = vmul.f32 %v659, %v607
        %v664 = vadd.f32 %v660, %v613
        %v665 = vadd.f32 %v661, %v613
        %v666 = vadd.f32 %v662, %v613
        %v667 = vadd.f32 %v663, %v613
        %v668 = vld [vmem:[%s447] sm:$0xff]
        %v669 = vld [vmem:[%s447 + $0x8] sm:$0xf]
        %v670 = vld [vmem:[%s447 + $0xc] sm:$0xff]
        %v671 = vld [vmem:[%s447 + $0x14] sm:$0xf]
        %v672 = vld [vmem:[%s447 + $0x18] sm:$0xff]
        %v673 = vld [vmem:[%s447 + $0x20] sm:$0xf]
        %v674 = vld [vmem:[%s447 + $0x24] sm:$0xff]
        %v675 = vld [vmem:[%s447 + $0x2c] sm:$0xf]
        %v676 = vld [vmem:[%s447 + $0x30] sm:$0xff]
        %v677 = vld [vmem:[%s447 + $0x38] sm:$0xf]
        %v678 = vld [vmem:[%s447 + $0x3c] sm:$0xff]
        %v679 = vld [vmem:[%s447 + $0x44] sm:$0xf]
        %v680 = vld [vmem:[%s447 + $0x48] sm:$0xff]
        %v681 = vld [vmem:[%s447 + $0x50] sm:$0xf]
        %v682 = vld [vmem:[%s447 + $0x54] sm:$0xff]
        %v683 = vld [vmem:[%s447 + $0x5c] sm:$0xf]
        %v684 = vld [vmem:[%s447 + $0x60] sm:$0xff]
        %v685 = vld [vmem:[%s447 + $0x68] sm:$0xf]
        %v686 = vld [vmem:[%s447 + $0x6c] sm:$0xff]
        %v687 = vld [vmem:[%s447 + $0x74] sm:$0xf]
        %v688 = vld [vmem:[%s447 + $0x78] sm:$0xff]
        %v689 = vld [vmem:[%s447 + $0x80] sm:$0xf]
        %v690 = vld [vmem:[%s447 + $0x84] sm:$0xff]
        %v691 = vld [vmem:[%s447 + $0x8c] sm:$0xf]
        %v692 = vld [vmem:[%s447 + $0x90] sm:$0xff]
        %v693 = vld [vmem:[%s447 + $0x98] sm:$0xf]
        %v694 = vld [vmem:[%s447 + $0x9c] sm:$0xff]
        %v695 = vld [vmem:[%s447 + $0xa4] sm:$0xf]
        %v696 = vld [vmem:[%s447 + $0xa8] sm:$0xff]
        %v697 = vld [vmem:[%s447 + $0xb0] sm:$0xf]
        %v698 = vld [vmem:[%s447 + $0xb4] sm:$0xff]
        %v699 = vld [vmem:[%s447 + $0xbc] sm:$0xf]
        %v700 = vpack.c.bf16 %v615, %v614
        %v701 = vlaneseq
        %v702 = vshrl.u32 %v701, 7
        %v703 = vsub.s32 2, %v702
        %v704 = vrot.slane %v579, %v703
        %v721 = vunpack.c.l.b16 %v668
        %v722 = vunpack.c.l.b16 %v670
        %v723 = vunpack.c.l.b16 %v672
        %v724 = vunpack.c.l.b16 %v674
        %v725 = vunpack.c.l.b16 %v676
        %v726 = vunpack.c.l.b16 %v678
        %v727 = vunpack.c.l.b16 %v680
        %v728 = vunpack.c.l.b16 %v682
        %v729 = vunpack.c.l.b16 %v684
        %v730 = vunpack.c.l.b16 %v686
        %v731 = vunpack.c.l.b16 %v688
        %v732 = vunpack.c.l.b16 %v690
        %v733 = vunpack.c.l.b16 %v692
        %v734 = vunpack.c.l.b16 %v694
        %v735 = vunpack.c.l.b16 %v696
        %v736 = vunpack.c.l.b16 %v698
        %v737 = vpack.c.b16 %v722, %v721
        %v738 = vpack.c.b16 %v724, %v723
        %v739 = vpack.c.b16 %v726, %v725
        %v740 = vpack.c.b16 %v728, %v727
        %v741 = vpack.c.b16 %v730, %v729
        %v742 = vpack.c.b16 %v732, %v731
        %v743 = vpack.c.b16 %v734, %v733
        %v744 = vpack.c.b16 %v736, %v735
        %753 = vmatprep.subr.bf16.mxu0 0
        %754 = vmatpush1.bf16.msra.mxu0 %v737
        %755 = vmatprep.subr.bf16.mxu0 0
        %756 = vmatpush1.bf16.msra.mxu0 %v738
        %757 = vmatprep.subr.bf16.mxu0 0
        %758 = vmatpush1.bf16.msra.mxu0 %v739
        %759 = vmatprep.subr.bf16.mxu0 0
        %760 = vmatpush1.bf16.msra.mxu0 %v740
        %761 = vmatprep.subr.bf16.mxu0 0
        %762 = vmatpush1.bf16.msra.mxu0 %v741
        %763 = vmatprep.subr.bf16.mxu0 0
        %764 = vmatpush1.bf16.msra.mxu0 %v742
        %765 = vmatprep.subr.bf16.mxu0 0
        %766 = vmatpush1.bf16.msra.mxu0 %v743
        %767 = vmatprep.subr.bf16.mxu0 0
        %768 = vmatpush1.bf16.msra.mxu0 %v744
        %769 = vmatprep.subr.bf16.mxu0 0
        %770 = vmatpush1.bf16.msra.mxu0 0
        %771 = vmatprep.subr.bf16.mxu0 0
        %772 = vmatpush1.bf16.msra.mxu0 0
        %773 = vmatprep.subr.bf16.mxu0 0
        %774 = vmatpush1.bf16.msra.mxu0 0
        %775 = vmatprep.subr.bf16.mxu0 0
        %776 = vmatpush1.bf16.msra.mxu0 0
        %777 = vmatprep.subr.bf16.mxu0 0
        %778 = vmatpush1.bf16.msra.mxu0 0
        %779 = vmatprep.subr.bf16.mxu0 0
        %780 = vmatpush1.bf16.msra.mxu0 0
        %781 = vmatprep.subr.bf16.mxu0 0
        %782 = vmatpush1.bf16.msra.mxu0 0
        %783 = vmatprep.subr.bf16.mxu0 0
        %784 = vmatpush1.bf16.msra.mxu0 0
        %785 = vmatprep.mubr.bf16.mxu0 0
        %786 = vmatmul.mubr.bf16.gmra.mrb[0].mxu0 %v700
        %v787 = vpop.f32.mrb[0].mxu0
        %v788 = vadd.f32 %v704, %v787
        %v789 = vpop.f32.mrb[0].mxu0
        %v790 = vpop.f32.mrb[0].mxu0
        %v791 = vadd.f32 %v704, %v790
        %v792 = vpop.f32.mrb[0].mxu0
        %793 = vdwg.mxu0
        %v794 = vmul.f32 %v788, 0.25
        %v795 = vmul.f32 %v791, 0.25
        %v796 = vpack.c.bf16 %v665, %v664
        %v797 = vpack.c.bf16 %v667, %v666
        %v814 = vunpack.c.h.b16 %v668
        %v815 = vunpack.c.l.b16 %v669
        %v816 = vunpack.c.h.b16 %v670
        %v817 = vunpack.c.l.b16 %v671
        %v818 = vunpack.c.h.b16 %v672
        %v819 = vunpack.c.l.b16 %v673
        %v820 = vunpack.c.h.b16 %v674
        %v821 = vunpack.c.l.b16 %v675
        %v822 = vunpack.c.h.b16 %v676
        %v823 = vunpack.c.l.b16 %v677
        %v824 = vunpack.c.h.b16 %v678
        %v825 = vunpack.c.l.b16 %v679
        %v826 = vunpack.c.h.b16 %v680
        %v827 = vunpack.c.l.b16 %v681
        %v828 = vunpack.c.h.b16 %v682
        %v829 = vunpack.c.l.b16 %v683
        %v830 = vunpack.c.h.b16 %v684
        %v831 = vunpack.c.l.b16 %v685
        %v832 = vunpack.c.h.b16 %v686
        %v833 = vunpack.c.l.b16 %v687
        %v834 = vunpack.c.h.b16 %v688
        %v835 = vunpack.c.l.b16 %v689
        %v836 = vunpack.c.h.b16 %v690
        %v837 = vunpack.c.l.b16 %v691
        %v838 = vunpack.c.h.b16 %v692
        %v839 = vunpack.c.l.b16 %v693
        %v840 = vunpack.c.h.b16 %v694
        %v841 = vunpack.c.l.b16 %v695
        %v842 = vunpack.c.h.b16 %v696
        %v843 = vunpack.c.l.b16 %v697
        %v844 = vunpack.c.h.b16 %v698
        %v845 = vunpack.c.l.b16 %v699
        %v846 = vpack.c.b16 %v816, %v814
        %v847 = vpack.c.b16 %v817, %v815
        %v848 = vpack.c.b16 %v820, %v818
        %v849 = vpack.c.b16 %v821, %v819
        %v850 = vpack.c.b16 %v824, %v822
        %v851 = vpack.c.b16 %v825, %v823
        %v852 = vpack.c.b16 %v828, %v826
        %v853 = vpack.c.b16 %v829, %v827
        %v854 = vpack.c.b16 %v832, %v830
        %v855 = vpack.c.b16 %v833, %v831
        %v856 = vpack.c.b16 %v836, %v834
        %v857 = vpack.c.b16 %v837, %v835
        %v858 = vpack.c.b16 %v840, %v838
        %v859 = vpack.c.b16 %v841, %v839
        %v860 = vpack.c.b16 %v844, %v842
        %v861 = vpack.c.b16 %v845, %v843
        %878 = vmatprep.subr.bf16.mxu0 %v847
        %879 = vmatpush1.bf16.msra.mxu0 %v846
        %880 = vmatprep.subr.bf16.mxu0 %v849
        %881 = vmatpush1.bf16.msra.mxu0 %v848
        %882 = vmatprep.subr.bf16.mxu0 %v851
        %883 = vmatpush1.bf16.msra.mxu0 %v850
        %884 = vmatprep.subr.bf16.mxu0 %v853
        %885 = vmatpush1.bf16.msra.mxu0 %v852
        %886 = vmatprep.subr.bf16.mxu0 %v855
        %887 = vmatpush1.bf16.msra.mxu0 %v854
        %888 = vmatprep.subr.bf16.mxu0 %v857
        %889 = vmatpush1.bf16.msra.mxu0 %v856
        %890 = vmatprep.subr.bf16.mxu0 %v859
        %891 = vmatpush1.bf16.msra.mxu0 %v858
        %892 = vmatprep.subr.bf16.mxu0 %v861
        %893 = vmatpush1.bf16.msra.mxu0 %v860
        %894 = vmatprep.subr.bf16.mxu0 0
        %895 = vmatpush1.bf16.msra.mxu0 0
        %896 = vmatprep.subr.bf16.mxu0 0
        %897 = vmatpush1.bf16.msra.mxu0 0
        %898 = vmatprep.subr.bf16.mxu0 0
        %899 = vmatpush1.bf16.msra.mxu0 0
        %900 = vmatprep.subr.bf16.mxu0 0
        %901 = vmatpush1.bf16.msra.mxu0 0
        %902 = vmatprep.subr.bf16.mxu0 0
        %903 = vmatpush1.bf16.msra.mxu0 0
        %904 = vmatprep.subr.bf16.mxu0 0
        %905 = vmatpush1.bf16.msra.mxu0 0
        %906 = vmatprep.subr.bf16.mxu0 0
        %907 = vmatpush1.bf16.msra.mxu0 0
        %908 = vmatprep.subr.bf16.mxu0 0
        %909 = vmatpush1.bf16.msra.mxu0 0
        %910 = vmatprep.mubr.bf16.mxu0 0
        %911 = vmatmul.mubr.bf16.gmra.mrb[0].mxu0 %v796
        %v912 = vpop.f32.mrb[0].mxu0
        %v913 = vadd.f32 0.0, %v912
        %v914 = vpop.f32.mrb[0].mxu0
        %v915 = vadd.f32 0.0, %v914
        %v916 = vpop.f32.mrb[0].mxu0
        %v917 = vadd.f32 0.0, %v916
        %v918 = vpop.f32.mrb[0].mxu0
        %v919 = vadd.f32 0.0, %v918
        %920 = vmatprep.mubr.bf16.mxu0 0
        %921 = vmatmul.mubr.bf16.gmra.mrb[0].mxu0 %v797
        %v922 = vpop.f32.mrb[0].mxu0
        %v923 = vadd.f32 0.0, %v922
        %v924 = vpop.f32.mrb[0].mxu0
        %v925 = vadd.f32 0.0, %v924
        %v926 = vpop.f32.mrb[0].mxu0
        %v927 = vadd.f32 0.0, %v926
        %v928 = vpop.f32.mrb[0].mxu0
        %v929 = vadd.f32 0.0, %v928
        %930 = vdwg.mxu0
        %v931 = vlaneseq
        %v932 = vshrl.u32 %v931, 7
        %v933 = vsub.s32 3, %v932
        %v934 = vrot.slane %v579, %v933
        %v935 = vadd.f32 %v913, %v934
        %v936 = vadd.f32 %v917, %v934
        %v937 = vadd.f32 %v923, %v934
        %v938 = vadd.f32 %v927, %v934
        %v939 = vlaneseq
        %v940 = vshrl.u32 %v939, 7
        %v941 = vsub.s32 4, %v940
        %v942 = vrot.slane %v579, %v941
        %v943 = vadd.f32 %v915, %v942
        %v944 = vadd.f32 %v919, %v942
        %v945 = vadd.f32 %v925, %v942
        %v946 = vadd.f32 %v929, %v942
        %949 = vrot.lane.b32.xlu0 %v794, 112
        %v950 = vpop.permute.xlu0 %949
        %951 = vrot.lane.b32.xlu0 %v795, 112
        %v952 = vpop.permute.xlu0 %951
        %955 = vrot.lane.b32.xlu0 %v794, 96
        %v956 = vpop.permute.xlu0 %955
        %957 = vrot.lane.b32.xlu0 %v795, 96
        %v958 = vpop.permute.xlu0 %957
        %961 = vrot.lane.b32.xlu0 %v794, 80
        %v962 = vpop.permute.xlu0 %961
        %963 = vrot.lane.b32.xlu0 %v795, 80
        %v964 = vpop.permute.xlu0 %963
        %967 = vrot.lane.b32.xlu0 %v794, 64
        %v968 = vpop.permute.xlu0 %967
        %969 = vrot.lane.b32.xlu0 %v795, 64
        %v970 = vpop.permute.xlu0 %969
        %973 = vrot.lane.b32.xlu0 %v794, 48
        %v974 = vpop.permute.xlu0 %973
        %975 = vrot.lane.b32.xlu0 %v795, 48
        %v976 = vpop.permute.xlu0 %975
        %979 = vrot.lane.b32.xlu0 %v794, 32
        %v980 = vpop.permute.xlu0 %979
        %981 = vrot.lane.b32.xlu0 %v795, 32
        %v982 = vpop.permute.xlu0 %981
        %985 = vrot.lane.b32.xlu0 %v794, 16
        %v986 = vpop.permute.xlu0 %985
        %987 = vrot.lane.b32.xlu0 %v795, 16
        %v988 = vpop.permute.xlu0 %987
        %v991 = vcombine.low %v794, %v956
        %v992 = vcombine.high %v794, %v956
        %v994 = vunpack.c.l.s4 1983009808
        %v995 = vunpack.c.0.s8 %v994
        %v996 = vlaneseq
        %v997 = vshrl.u32 %v996, 7
        %v998 = vsub.s32 %v995, %v997
        %v999 = vrot.slane %v991, %v998
        %v1001 = vunpack.c.l.s4 1983009808
        %v1002 = vunpack.c.0.s8 %v1001
        %v1003 = vlaneseq
        %v1004 = vshrl.u32 %v1003, 7
        %v1005 = vsub.s32 %v1002, %v1004
        %v1006 = vrot.slane %v992, %v1005
        %v1007 = vcombine.low %v950, %v962
        %v1008 = vcombine.high %v950, %v962
        %v1010 = vunpack.c.l.s4 1983009808
        %v1011 = vunpack.c.0.s8 %v1010
        %v1012 = vlaneseq
        %v1013 = vshrl.u32 %v1012, 7
        %v1014 = vsub.s32 %v1011, %v1013
        %v1015 = vrot.slane %v1007, %v1014
        %v1017 = vunpack.c.l.s4 1983009808
        %v1018 = vunpack.c.0.s8 %v1017
        %v1019 = vlaneseq
        %v1020 = vshrl.u32 %v1019, 7
        %v1021 = vsub.s32 %v1018, %v1020
        %v1022 = vrot.slane %v1008, %v1021
        %v1023 = vcombine.low %v968, %v980
        %v1024 = vcombine.high %v968, %v980
        %v1026 = vunpack.c.l.s4 1983009808
        %v1027 = vunpack.c.0.s8 %v1026
        %v1028 = vlaneseq
        %v1029 = vshrl.u32 %v1028, 7
        %v1030 = vsub.s32 %v1027, %v1029
        %v1031 = vrot.slane %v1023, %v1030
        %v1033 = vunpack.c.l.s4 1983009808
        %v1034 = vunpack.c.0.s8 %v1033
        %v1035 = vlaneseq
        %v1036 = vshrl.u32 %v1035, 7
        %v1037 = vsub.s32 %v1034, %v1036
        %v1038 = vrot.slane %v1024, %v1037
        %v1039 = vcombine.low %v974, %v986
        %v1040 = vcombine.high %v974, %v986
        %v1042 = vunpack.c.l.s4 1983009808
        %v1043 = vunpack.c.0.s8 %v1042
        %v1044 = vlaneseq
        %v1045 = vshrl.u32 %v1044, 7
        %v1046 = vsub.s32 %v1043, %v1045
        %v1047 = vrot.slane %v1039, %v1046
        %v1049 = vunpack.c.l.s4 1983009808
        %v1050 = vunpack.c.0.s8 %v1049
        %v1051 = vlaneseq
        %v1052 = vshrl.u32 %v1051, 7
        %v1053 = vsub.s32 %v1050, %v1052
        %v1054 = vrot.slane %v1040, %v1053
        %v1055 = vcombine.low %v999, %v1015
        %v1056 = vcombine.high %v999, %v1015
        %v1058 = vunpack.c.l.s4 1934713408
        %v1059 = vunpack.c.0.s8 %v1058
        %v1060 = vlaneseq
        %v1061 = vshrl.u32 %v1060, 7
        %v1062 = vsub.s32 %v1059, %v1061
        %v1063 = vrot.slane %v1055, %v1062
        %v1065 = vunpack.c.l.s4 1934713408
        %v1066 = vunpack.c.0.s8 %v1065
        %v1067 = vlaneseq
        %v1068 = vshrl.u32 %v1067, 7
        %v1069 = vsub.s32 %v1066, %v1068
        %v1070 = vrot.slane %v1056, %v1069
        %v1071 = vcombine.low %v1006, %v1022
        %v1072 = vcombine.high %v1006, %v1022
        %v1074 = vunpack.c.l.s4 1934713408
        %v1075 = vunpack.c.0.s8 %v1074
        %v1076 = vlaneseq
        %v1077 = vshrl.u32 %v1076, 7
        %v1078 = vsub.s32 %v1075, %v1077
        %v1079 = vrot.slane %v1071, %v1078
        %v1081 = vunpack.c.l.s4 1934713408
        %v1082 = vunpack.c.0.s8 %v1081
        %v1083 = vlaneseq
        %v1084 = vshrl.u32 %v1083, 7
        %v1085 = vsub.s32 %v1082, %v1084
        %v1086 = vrot.slane %v1072, %v1085
        %v1087 = vcombine.low %v1031, %v1047
        %v1088 = vcombine.high %v1031, %v1047
        %v1090 = vunpack.c.l.s4 1934713408
        %v1091 = vunpack.c.0.s8 %v1090
        %v1092 = vlaneseq
        %v1093 = vshrl.u32 %v1092, 7
        %v1094 = vsub.s32 %v1091, %v1093
        %v1095 = vrot.slane %v1087, %v1094
        %v1097 = vunpack.c.l.s4 1934713408
        %v1098 = vunpack.c.0.s8 %v1097
        %v1099 = vlaneseq
        %v1100 = vshrl.u32 %v1099, 7
        %v1101 = vsub.s32 %v1098, %v1100
        %v1102 = vrot.slane %v1088, %v1101
        %v1103 = vcombine.low %v1038, %v1054
        %v1104 = vcombine.high %v1038, %v1054
        %v1106 = vunpack.c.l.s4 1934713408
        %v1107 = vunpack.c.0.s8 %v1106
        %v1108 = vlaneseq
        %v1109 = vshrl.u32 %v1108, 7
        %v1110 = vsub.s32 %v1107, %v1109
        %v1111 = vrot.slane %v1103, %v1110
        %v1113 = vunpack.c.l.s4 1934713408
        %v1114 = vunpack.c.0.s8 %v1113
        %v1115 = vlaneseq
        %v1116 = vshrl.u32 %v1115, 7
        %v1117 = vsub.s32 %v1114, %v1116
        %v1118 = vrot.slane %v1104, %v1117
        %v1119 = vcombine.low %v1063, %v1095
        %v1120 = vcombine.high %v1063, %v1095
        %v1121 = vcombine.low %v1070, %v1102
        %v1122 = vcombine.high %v1070, %v1102
        %v1123 = vcombine.low %v1079, %v1111
        %v1124 = vcombine.high %v1079, %v1111
        %v1125 = vcombine.low %v1086, %v1118
        %v1126 = vcombine.high %v1086, %v1118
        %v1127 = vcombine.low %v795, %v958
        %v1128 = vcombine.high %v795, %v958
        %v1130 = vunpack.c.l.s4 1983009808
        %v1131 = vunpack.c.0.s8 %v1130
        %v1132 = vlaneseq
        %v1133 = vshrl.u32 %v1132, 7
        %v1134 = vsub.s32 %v1131, %v1133
        %v1135 = vrot.slane %v1127, %v1134
        %v1137 = vunpack.c.l.s4 1983009808
        %v1138 = vunpack.c.0.s8 %v1137
        %v1139 = vlaneseq
        %v1140 = vshrl.u32 %v1139, 7
        %v1141 = vsub.s32 %v1138, %v1140
        %v1142 = vrot.slane %v1128, %v1141
        %v1143 = vcombine.low %v952, %v964
        %v1144 = vcombine.high %v952, %v964
        %v1146 = vunpack.c.l.s4 1983009808
        %v1147 = vunpack.c.0.s8 %v1146
        %v1148 = vlaneseq
        %v1149 = vshrl.u32 %v1148, 7
        %v1150 = vsub.s32 %v1147, %v1149
        %v1151 = vrot.slane %v1143, %v1150
        %v1153 = vunpack.c.l.s4 1983009808
        %v1154 = vunpack.c.0.s8 %v1153
        %v1155 = vlaneseq
        %v1156 = vshrl.u32 %v1155, 7
        %v1157 = vsub.s32 %v1154, %v1156
        %v1158 = vrot.slane %v1144, %v1157
        %v1159 = vcombine.low %v970, %v982
        %v1160 = vcombine.high %v970, %v982
        %v1162 = vunpack.c.l.s4 1983009808
        %v1163 = vunpack.c.0.s8 %v1162
        %v1164 = vlaneseq
        %v1165 = vshrl.u32 %v1164, 7
        %v1166 = vsub.s32 %v1163, %v1165
        %v1167 = vrot.slane %v1159, %v1166
        %v1169 = vunpack.c.l.s4 1983009808
        %v1170 = vunpack.c.0.s8 %v1169
        %v1171 = vlaneseq
        %v1172 = vshrl.u32 %v1171, 7
        %v1173 = vsub.s32 %v1170, %v1172
        %v1174 = vrot.slane %v1160, %v1173
        %v1175 = vcombine.low %v976, %v988
        %v1176 = vcombine.high %v976, %v988
        %v1178 = vunpack.c.l.s4 1983009808
        %v1179 = vunpack.c.0.s8 %v1178
        %v1180 = vlaneseq
        %v1181 = vshrl.u32 %v1180, 7
        %v1182 = vsub.s32 %v1179, %v1181
        %v1183 = vrot.slane %v1175, %v1182
        %v1185 = vunpack.c.l.s4 1983009808
        %v1186 = vunpack.c.0.s8 %v1185
        %v1187 = vlaneseq
        %v1188 = vshrl.u32 %v1187, 7
        %v1189 = vsub.s32 %v1186, %v1188
        %v1190 = vrot.slane %v1176, %v1189
        %v1191 = vcombine.low %v1135, %v1151
        %v1192 = vcombine.high %v1135, %v1151
        %v1194 = vunpack.c.l.s4 1934713408
        %v1195 = vunpack.c.0.s8 %v1194
        %v1196 = vlaneseq
        %v1197 = vshrl.u32 %v1196, 7
        %v1198 = vsub.s32 %v1195, %v1197
        %v1199 = vrot.slane %v1191, %v1198
        %v1201 = vunpack.c.l.s4 1934713408
        %v1202 = vunpack.c.0.s8 %v1201
        %v1203 = vlaneseq
        %v1204 = vshrl.u32 %v1203, 7
        %v1205 = vsub.s32 %v1202, %v1204
        %v1206 = vrot.slane %v1192, %v1205
        %v1207 = vcombine.low %v1142, %v1158
        %v1208 = vcombine.high %v1142, %v1158
        %v1210 = vunpack.c.l.s4 1934713408
        %v1211 = vunpack.c.0.s8 %v1210
        %v1212 = vlaneseq
        %v1213 = vshrl.u32 %v1212, 7
        %v1214 = vsub.s32 %v1211, %v1213
        %v1215 = vrot.slane %v1207, %v1214
        %v1217 = vunpack.c.l.s4 1934713408
        %v1218 = vunpack.c.0.s8 %v1217
        %v1219 = vlaneseq
        %v1220 = vshrl.u32 %v1219, 7
        %v1221 = vsub.s32 %v1218, %v1220
        %v1222 = vrot.slane %v1208, %v1221
        %v1223 = vcombine.low %v1167, %v1183
        %v1224 = vcombine.high %v1167, %v1183
        %v1226 = vunpack.c.l.s4 1934713408
        %v1227 = vunpack.c.0.s8 %v1226
        %v1228 = vlaneseq
        %v1229 = vshrl.u32 %v1228, 7
        %v1230 = vsub.s32 %v1227, %v1229
        %v1231 = vrot.slane %v1223, %v1230
        %v1233 = vunpack.c.l.s4 1934713408
        %v1234 = vunpack.c.0.s8 %v1233
        %v1235 = vlaneseq
        %v1236 = vshrl.u32 %v1235, 7
        %v1237 = vsub.s32 %v1234, %v1236
        %v1238 = vrot.slane %v1224, %v1237
        %v1239 = vcombine.low %v1174, %v1190
        %v1240 = vcombine.high %v1174, %v1190
        %v1242 = vunpack.c.l.s4 1934713408
        %v1243 = vunpack.c.0.s8 %v1242
        %v1244 = vlaneseq
        %v1245 = vshrl.u32 %v1244, 7
        %v1246 = vsub.s32 %v1243, %v1245
        %v1247 = vrot.slane %v1239, %v1246
        %v1249 = vunpack.c.l.s4 1934713408
        %v1250 = vunpack.c.0.s8 %v1249
        %v1251 = vlaneseq
        %v1252 = vshrl.u32 %v1251, 7
        %v1253 = vsub.s32 %v1250, %v1252
        %v1254 = vrot.slane %v1240, %v1253
        %v1255 = vcombine.low %v1199, %v1231
        %v1256 = vcombine.high %v1199, %v1231
        %v1257 = vcombine.low %v1206, %v1238
        %v1258 = vcombine.high %v1206, %v1238
        %v1259 = vcombine.low %v1215, %v1247
        %v1260 = vcombine.high %v1215, %v1247
        %v1261 = vcombine.low %v1222, %v1254
        %v1262 = vcombine.high %v1222, %v1254
        %v1263 = vcombine.low %v1119, %v1121
        %v1264 = vcombine.high %v1119, %v1121
        %v1266 = vunpack.c.l.s4 1983009808
        %v1267 = vunpack.c.0.s8 %v1266
        %v1268 = vlaneseq
        %v1269 = vshrl.u32 %v1268, 7
        %v1270 = vsub.s32 %v1267, %v1269
        %v1271 = vrot.slane %v1263, %v1270
        %v1273 = vunpack.c.l.s4 1983009808
        %v1274 = vunpack.c.0.s8 %v1273
        %v1275 = vlaneseq
        %v1276 = vshrl.u32 %v1275, 7
        %v1277 = vsub.s32 %v1274, %v1276
        %v1278 = vrot.slane %v1264, %v1277
        %v1279 = vcombine.low %v1120, %v1122
        %v1280 = vcombine.high %v1120, %v1122
        %v1282 = vunpack.c.l.s4 1983009808
        %v1283 = vunpack.c.0.s8 %v1282
        %v1284 = vlaneseq
        %v1285 = vshrl.u32 %v1284, 7
        %v1286 = vsub.s32 %v1283, %v1285
        %v1287 = vrot.slane %v1279, %v1286
        %v1289 = vunpack.c.l.s4 1983009808
        %v1290 = vunpack.c.0.s8 %v1289
        %v1291 = vlaneseq
        %v1292 = vshrl.u32 %v1291, 7
        %v1293 = vsub.s32 %v1290, %v1292
        %v1294 = vrot.slane %v1280, %v1293
        %v1295 = vcombine.low %v1123, %v1125
        %v1296 = vcombine.high %v1123, %v1125
        %v1298 = vunpack.c.l.s4 1983009808
        %v1299 = vunpack.c.0.s8 %v1298
        %v1300 = vlaneseq
        %v1301 = vshrl.u32 %v1300, 7
        %v1302 = vsub.s32 %v1299, %v1301
        %v1303 = vrot.slane %v1295, %v1302
        %v1305 = vunpack.c.l.s4 1983009808
        %v1306 = vunpack.c.0.s8 %v1305
        %v1307 = vlaneseq
        %v1308 = vshrl.u32 %v1307, 7
        %v1309 = vsub.s32 %v1306, %v1308
        %v1310 = vrot.slane %v1296, %v1309
        %v1311 = vcombine.low %v1124, %v1126
        %v1312 = vcombine.high %v1124, %v1126
        %v1314 = vunpack.c.l.s4 1983009808
        %v1315 = vunpack.c.0.s8 %v1314
        %v1316 = vlaneseq
        %v1317 = vshrl.u32 %v1316, 7
        %v1318 = vsub.s32 %v1315, %v1317
        %v1319 = vrot.slane %v1311, %v1318
        %v1321 = vunpack.c.l.s4 1983009808
        %v1322 = vunpack.c.0.s8 %v1321
        %v1323 = vlaneseq
        %v1324 = vshrl.u32 %v1323, 7
        %v1325 = vsub.s32 %v1322, %v1324
        %v1326 = vrot.slane %v1312, %v1325
        %v1327 = vcombine.low %v1271, %v1287
        %v1328 = vcombine.high %v1271, %v1287
        %v1330 = vunpack.c.l.s4 1934713408
        %v1331 = vunpack.c.0.s8 %v1330
        %v1332 = vlaneseq
        %v1333 = vshrl.u32 %v1332, 7
        %v1334 = vsub.s32 %v1331, %v1333
        %v1335 = vrot.slane %v1327, %v1334
        %v1337 = vunpack.c.l.s4 1934713408
        %v1338 = vunpack.c.0.s8 %v1337
        %v1339 = vlaneseq
        %v1340 = vshrl.u32 %v1339, 7
        %v1341 = vsub.s32 %v1338, %v1340
        %v1342 = vrot.slane %v1328, %v1341
        %v1343 = vcombine.low %v1278, %v1294
        %v1344 = vcombine.high %v1278, %v1294
        %v1346 = vunpack.c.l.s4 1934713408
        %v1347 = vunpack.c.0.s8 %v1346
        %v1348 = vlaneseq
        %v1349 = vshrl.u32 %v1348, 7
        %v1350 = vsub.s32 %v1347, %v1349
        %v1351 = vrot.slane %v1343, %v1350
        %v1353 = vunpack.c.l.s4 1934713408
        %v1354 = vunpack.c.0.s8 %v1353
        %v1355 = vlaneseq
        %v1356 = vshrl.u32 %v1355, 7
        %v1357 = vsub.s32 %v1354, %v1356
        %v1358 = vrot.slane %v1344, %v1357
        %v1359 = vcombine.low %v1303, %v1319
        %v1360 = vcombine.high %v1303, %v1319
        %v1362 = vunpack.c.l.s4 1934713408
        %v1363 = vunpack.c.0.s8 %v1362
        %v1364 = vlaneseq
        %v1365 = vshrl.u32 %v1364, 7
        %v1366 = vsub.s32 %v1363, %v1365
        %v1367 = vrot.slane %v1359, %v1366
        %v1369 = vunpack.c.l.s4 1934713408
        %v1370 = vunpack.c.0.s8 %v1369
        %v1371 = vlaneseq
        %v1372 = vshrl.u32 %v1371, 7
        %v1373 = vsub.s32 %v1370, %v1372
        %v1374 = vrot.slane %v1360, %v1373
        %v1375 = vcombine.low %v1310, %v1326
        %v1376 = vcombine.high %v1310, %v1326
        %v1378 = vunpack.c.l.s4 1934713408
        %v1379 = vunpack.c.0.s8 %v1378
        %v1380 = vlaneseq
        %v1381 = vshrl.u32 %v1380, 7
        %v1382 = vsub.s32 %v1379, %v1381
        %v1383 = vrot.slane %v1375, %v1382
        %v1385 = vunpack.c.l.s4 1934713408
        %v1386 = vunpack.c.0.s8 %v1385
        %v1387 = vlaneseq
        %v1388 = vshrl.u32 %v1387, 7
        %v1389 = vsub.s32 %v1386, %v1388
        %v1390 = vrot.slane %v1376, %v1389
        %v1391 = vcombine.low %v1335, %v1367
        %v1392 = vcombine.high %v1335, %v1367
        %v1393 = vcombine.low %v1342, %v1374
        %v1394 = vcombine.high %v1342, %v1374
        %v1395 = vcombine.low %v1351, %v1383
        %v1396 = vcombine.high %v1351, %v1383
        %v1397 = vcombine.low %v1358, %v1390
        %v1398 = vcombine.high %v1358, %v1390
        %v1399 = vcombine.low %v1255, %v1257
        %v1400 = vcombine.high %v1255, %v1257
        %v1402 = vunpack.c.l.s4 1983009808
        %v1403 = vunpack.c.0.s8 %v1402
        %v1404 = vlaneseq
        %v1405 = vshrl.u32 %v1404, 7
        %v1406 = vsub.s32 %v1403, %v1405
        %v1407 = vrot.slane %v1399, %v1406
        %v1409 = vunpack.c.l.s4 1983009808
        %v1410 = vunpack.c.0.s8 %v1409
        %v1411 = vlaneseq
        %v1412 = vshrl.u32 %v1411, 7
        %v1413 = vsub.s32 %v1410, %v1412
        %v1414 = vrot.slane %v1400, %v1413
        %v1415 = vcombine.low %v1256, %v1258
        %v1416 = vcombine.high %v1256, %v1258
        %v1418 = vunpack.c.l.s4 1983009808
        %v1419 = vunpack.c.0.s8 %v1418
        %v1420 = vlaneseq
        %v1421 = vshrl.u32 %v1420, 7
        %v1422 = vsub.s32 %v1419, %v1421
        %v1423 = vrot.slane %v1415, %v1422
        %v1425 = vunpack.c.l.s4 1983009808
        %v1426 = vunpack.c.0.s8 %v1425
        %v1427 = vlaneseq
        %v1428 = vshrl.u32 %v1427, 7
        %v1429 = vsub.s32 %v1426, %v1428
        %v1430 = vrot.slane %v1416, %v1429
        %v1431 = vcombine.low %v1259, %v1261
        %v1432 = vcombine.high %v1259, %v1261
        %v1434 = vunpack.c.l.s4 1983009808
        %v1435 = vunpack.c.0.s8 %v1434
        %v1436 = vlaneseq
        %v1437 = vshrl.u32 %v1436, 7
        %v1438 = vsub.s32 %v1435, %v1437
        %v1439 = vrot.slane %v1431, %v1438
        %v1441 = vunpack.c.l.s4 1983009808
        %v1442 = vunpack.c.0.s8 %v1441
        %v1443 = vlaneseq
        %v1444 = vshrl.u32 %v1443, 7
        %v1445 = vsub.s32 %v1442, %v1444
        %v1446 = vrot.slane %v1432, %v1445
        %v1447 = vcombine.low %v1260, %v1262
        %v1448 = vcombine.high %v1260, %v1262
        %v1450 = vunpack.c.l.s4 1983009808
        %v1451 = vunpack.c.0.s8 %v1450
        %v1452 = vlaneseq
        %v1453 = vshrl.u32 %v1452, 7
        %v1454 = vsub.s32 %v1451, %v1453
        %v1455 = vrot.slane %v1447, %v1454
        %v1457 = vunpack.c.l.s4 1983009808
        %v1458 = vunpack.c.0.s8 %v1457
        %v1459 = vlaneseq
        %v1460 = vshrl.u32 %v1459, 7
        %v1461 = vsub.s32 %v1458, %v1460
        %v1462 = vrot.slane %v1448, %v1461
        %v1463 = vcombine.low %v1407, %v1423
        %v1464 = vcombine.high %v1407, %v1423
        %v1466 = vunpack.c.l.s4 1934713408
        %v1467 = vunpack.c.0.s8 %v1466
        %v1468 = vlaneseq
        %v1469 = vshrl.u32 %v1468, 7
        %v1470 = vsub.s32 %v1467, %v1469
        %v1471 = vrot.slane %v1463, %v1470
        %v1473 = vunpack.c.l.s4 1934713408
        %v1474 = vunpack.c.0.s8 %v1473
        %v1475 = vlaneseq
        %v1476 = vshrl.u32 %v1475, 7
        %v1477 = vsub.s32 %v1474, %v1476
        %v1478 = vrot.slane %v1464, %v1477
        %v1479 = vcombine.low %v1414, %v1430
        %v1480 = vcombine.high %v1414, %v1430
        %v1482 = vunpack.c.l.s4 1934713408
        %v1483 = vunpack.c.0.s8 %v1482
        %v1484 = vlaneseq
        %v1485 = vshrl.u32 %v1484, 7
        %v1486 = vsub.s32 %v1483, %v1485
        %v1487 = vrot.slane %v1479, %v1486
        %v1489 = vunpack.c.l.s4 1934713408
        %v1490 = vunpack.c.0.s8 %v1489
        %v1491 = vlaneseq
        %v1492 = vshrl.u32 %v1491, 7
        %v1493 = vsub.s32 %v1490, %v1492
        %v1494 = vrot.slane %v1480, %v1493
        %v1495 = vcombine.low %v1439, %v1455
        %v1496 = vcombine.high %v1439, %v1455
        %v1498 = vunpack.c.l.s4 1934713408
        %v1499 = vunpack.c.0.s8 %v1498
        %v1500 = vlaneseq
        %v1501 = vshrl.u32 %v1500, 7
        %v1502 = vsub.s32 %v1499, %v1501
        %v1503 = vrot.slane %v1495, %v1502
        %v1505 = vunpack.c.l.s4 1934713408
        %v1506 = vunpack.c.0.s8 %v1505
        %v1507 = vlaneseq
        %v1508 = vshrl.u32 %v1507, 7
        %v1509 = vsub.s32 %v1506, %v1508
        %v1510 = vrot.slane %v1496, %v1509
        %v1511 = vcombine.low %v1446, %v1462
        %v1512 = vcombine.high %v1446, %v1462
        %v1514 = vunpack.c.l.s4 1934713408
        %v1515 = vunpack.c.0.s8 %v1514
        %v1516 = vlaneseq
        %v1517 = vshrl.u32 %v1516, 7
        %v1518 = vsub.s32 %v1515, %v1517
        %v1519 = vrot.slane %v1511, %v1518
        %v1521 = vunpack.c.l.s4 1934713408
        %v1522 = vunpack.c.0.s8 %v1521
        %v1523 = vlaneseq
        %v1524 = vshrl.u32 %v1523, 7
        %v1525 = vsub.s32 %v1522, %v1524
        %v1526 = vrot.slane %v1512, %v1525
        %v1527 = vcombine.low %v1471, %v1503
        %v1528 = vcombine.high %v1471, %v1503
        %v1529 = vcombine.low %v1478, %v1510
        %v1530 = vcombine.high %v1478, %v1510
        %v1531 = vcombine.low %v1487, %v1519
        %v1532 = vcombine.high %v1487, %v1519
        %v1533 = vcombine.low %v1494, %v1526
        %v1534 = vcombine.high %v1494, %v1526
        %v1535 = vpack.c.bf16 %v1391, %v1391
        %v1536 = vpack.c.bf16 %v1392, %v1392
        %v1537 = vpack.c.bf16 %v1393, %v1393
        %v1538 = vpack.c.bf16 %v1394, %v1394
        %v1539 = vpack.c.bf16 %v1395, %v1395
        %v1540 = vpack.c.bf16 %v1396, %v1396
        %v1541 = vpack.c.bf16 %v1397, %v1397
        %v1542 = vpack.c.bf16 %v1398, %v1398
        %v1543 = vpack.c.bf16 %v1527, %v1527
        %v1544 = vpack.c.bf16 %v1528, %v1528
        %v1545 = vpack.c.bf16 %v1529, %v1529
        %v1546 = vpack.c.bf16 %v1530, %v1530
        %v1547 = vpack.c.bf16 %v1531, %v1531
        %v1548 = vpack.c.bf16 %v1532, %v1532
        %v1549 = vpack.c.bf16 %v1533, %v1533
        %v1550 = vpack.c.bf16 %v1534, %v1534
        %1555 = vrot.lane.b32.xlu0 %v935, 112
        %v1556 = vpop.permute.xlu0 %1555
        %1557 = vrot.lane.b32.xlu0 %v936, 112
        %v1558 = vpop.permute.xlu0 %1557
        %1559 = vrot.lane.b32.xlu0 %v937, 112
        %v1560 = vpop.permute.xlu0 %1559
        %1561 = vrot.lane.b32.xlu0 %v938, 112
        %v1562 = vpop.permute.xlu0 %1561
        %1567 = vrot.lane.b32.xlu0 %v935, 96
        %v1568 = vpop.permute.xlu0 %1567
        %1569 = vrot.lane.b32.xlu0 %v936, 96
        %v1570 = vpop.permute.xlu0 %1569
        %1571 = vrot.lane.b32.xlu0 %v937, 96
        %v1572 = vpop.permute.xlu0 %1571
        %1573 = vrot.lane.b32.xlu0 %v938, 96
        %v1574 = vpop.permute.xlu0 %1573
        %1579 = vrot.lane.b32.xlu0 %v935, 80
        %v1580 = vpop.permute.xlu0 %1579
        %1581 = vrot.lane.b32.xlu0 %v936, 80
        %v1582 = vpop.permute.xlu0 %1581
        %1583 = vrot.lane.b32.xlu0 %v937, 80
        %v1584 = vpop.permute.xlu0 %1583
        %1585 = vrot.lane.b32.xlu0 %v938, 80
        %v1586 = vpop.permute.xlu0 %1585
        %1591 = vrot.lane.b32.xlu0 %v935, 64
        %v1592 = vpop.permute.xlu0 %1591
        %1593 = vrot.lane.b32.xlu0 %v936, 64
        %v1594 = vpop.permute.xlu0 %1593
        %1595 = vrot.lane.b32.xlu0 %v937, 64
        %v1596 = vpop.permute.xlu0 %1595
        %1597 = vrot.lane.b32.xlu0 %v938, 64
        %v1598 = vpop.permute.xlu0 %1597
        %1603 = vrot.lane.b32.xlu0 %v935, 48
        %v1604 = vpop.permute.xlu0 %1603
        %1605 = vrot.lane.b32.xlu0 %v936, 48
        %v1606 = vpop.permute.xlu0 %1605
        %1607 = vrot.lane.b32.xlu0 %v937, 48
        %v1608 = vpop.permute.xlu0 %1607
        %1609 = vrot.lane.b32.xlu0 %v938, 48
        %v1610 = vpop.permute.xlu0 %1609
        %1615 = vrot.lane.b32.xlu0 %v935, 32
        %v1616 = vpop.permute.xlu0 %1615
        %1617 = vrot.lane.b32.xlu0 %v936, 32
        %v1618 = vpop.permute.xlu0 %1617
        %1619 = vrot.lane.b32.xlu0 %v937, 32
        %v1620 = vpop.permute.xlu0 %1619
        %1621 = vrot.lane.b32.xlu0 %v938, 32
        %v1622 = vpop.permute.xlu0 %1621
        %1627 = vrot.lane.b32.xlu0 %v935, 16
        %v1628 = vpop.permute.xlu0 %1627
        %1629 = vrot.lane.b32.xlu0 %v936, 16
        %v1630 = vpop.permute.xlu0 %1629
        %1631 = vrot.lane.b32.xlu0 %v937, 16
        %v1632 = vpop.permute.xlu0 %1631
        %1633 = vrot.lane.b32.xlu0 %v938, 16
        %v1634 = vpop.permute.xlu0 %1633
        %v1639 = vcombine.low %v935, %v1568
        %v1640 = vcombine.high %v935, %v1568
        %v1642 = vunpack.c.l.s4 1983009808
        %v1643 = vunpack.c.0.s8 %v1642
        %v1644 = vlaneseq
        %v1645 = vshrl.u32 %v1644, 7
        %v1646 = vsub.s32 %v1643, %v1645
        %v1647 = vrot.slane %v1639, %v1646
        %v1649 = vunpack.c.l.s4 1983009808
        %v1650 = vunpack.c.0.s8 %v1649
        %v1651 = vlaneseq
        %v1652 = vshrl.u32 %v1651, 7
        %v1653 = vsub.s32 %v1650, %v1652
        %v1654 = vrot.slane %v1640, %v1653
        %v1655 = vcombine.low %v1556, %v1580
        %v1656 = vcombine.high %v1556, %v1580
        %v1658 = vunpack.c.l.s4 1983009808
        %v1659 = vunpack.c.0.s8 %v1658
        %v1660 = vlaneseq
        %v1661 = vshrl.u32 %v1660, 7
        %v1662 = vsub.s32 %v1659, %v1661
        %v1663 = vrot.slane %v1655, %v1662
        %v1665 = vunpack.c.l.s4 1983009808
        %v1666 = vunpack.c.0.s8 %v1665
        %v1667 = vlaneseq
        %v1668 = vshrl.u32 %v1667, 7
        %v1669 = vsub.s32 %v1666, %v1668
        %v1670 = vrot.slane %v1656, %v1669
        %v1671 = vcombine.low %v1592, %v1616
        %v1672 = vcombine.high %v1592, %v1616
        %v1674 = vunpack.c.l.s4 1983009808
        %v1675 = vunpack.c.0.s8 %v1674
        %v1676 = vlaneseq
        %v1677 = vshrl.u32 %v1676, 7
        %v1678 = vsub.s32 %v1675, %v1677
        %v1679 = vrot.slane %v1671, %v1678
        %v1681 = vunpack.c.l.s4 1983009808
        %v1682 = vunpack.c.0.s8 %v1681
        %v1683 = vlaneseq
        %v1684 = vshrl.u32 %v1683, 7
        %v1685 = vsub.s32 %v1682, %v1684
        %v1686 = vrot.slane %v1672, %v1685
        %v1687 = vcombine.low %v1604, %v1628
        %v1688 = vcombine.high %v1604, %v1628
        %v1690 = vunpack.c.l.s4 1983009808
        %v1691 = vunpack.c.0.s8 %v1690
        %v1692 = vlaneseq
        %v1693 = vshrl.u32 %v1692, 7
        %v1694 = vsub.s32 %v1691, %v1693
        %v1695 = vrot.slane %v1687, %v1694
        %v1697 = vunpack.c.l.s4 1983009808
        %v1698 = vunpack.c.0.s8 %v1697
        %v1699 = vlaneseq
        %v1700 = vshrl.u32 %v1699, 7
        %v1701 = vsub.s32 %v1698, %v1700
        %v1702 = vrot.slane %v1688, %v1701
        %v1703 = vcombine.low %v1647, %v1663
        %v1704 = vcombine.high %v1647, %v1663
        %v1706 = vunpack.c.l.s4 1934713408
        %v1707 = vunpack.c.0.s8 %v1706
        %v1708 = vlaneseq
        %v1709 = vshrl.u32 %v1708, 7
        %v1710 = vsub.s32 %v1707, %v1709
        %v1711 = vrot.slane %v1703, %v1710
        %v1713 = vunpack.c.l.s4 1934713408
        %v1714 = vunpack.c.0.s8 %v1713
        %v1715 = vlaneseq
        %v1716 = vshrl.u32 %v1715, 7
        %v1717 = vsub.s32 %v1714, %v1716
        %v1718 = vrot.slane %v1704, %v1717
        %v1719 = vcombine.low %v1654, %v1670
        %v1720 = vcombine.high %v1654, %v1670
        %v1722 = vunpack.c.l.s4 1934713408
        %v1723 = vunpack.c.0.s8 %v1722
        %v1724 = vlaneseq
        %v1725 = vshrl.u32 %v1724, 7
        %v1726 = vsub.s32 %v1723, %v1725
        %v1727 = vrot.slane %v1719, %v1726
        %v1729 = vunpack.c.l.s4 1934713408
        %v1730 = vunpack.c.0.s8 %v1729
        %v1731 = vlaneseq
        %v1732 = vshrl.u32 %v1731, 7
        %v1733 = vsub.s32 %v1730, %v1732
        %v1734 = vrot.slane %v1720, %v1733
        %v1735 = vcombine.low %v1679, %v1695
        %v1736 = vcombine.high %v1679, %v1695
        %v1738 = vunpack.c.l.s4 1934713408
        %v1739 = vunpack.c.0.s8 %v1738
        %v1740 = vlaneseq
        %v1741 = vshrl.u32 %v1740, 7
        %v1742 = vsub.s32 %v1739, %v1741
        %v1743 = vrot.slane %v1735, %v1742
        %v1745 = vunpack.c.l.s4 1934713408
        %v1746 = vunpack.c.0.s8 %v1745
        %v1747 = vlaneseq
        %v1748 = vshrl.u32 %v1747, 7
        %v1749 = vsub.s32 %v1746, %v1748
        %v1750 = vrot.slane %v1736, %v1749
        %v1751 = vcombine.low %v1686, %v1702
        %v1752 = vcombine.high %v1686, %v1702
        %v1754 = vunpack.c.l.s4 1934713408
        %v1755 = vunpack.c.0.s8 %v1754
        %v1756 = vlaneseq
        %v1757 = vshrl.u32 %v1756, 7
        %v1758 = vsub.s32 %v1755, %v1757
        %v1759 = vrot.slane %v1751, %v1758
        %v1761 = vunpack.c.l.s4 1934713408
        %v1762 = vunpack.c.0.s8 %v1761
        %v1763 = vlaneseq
        %v1764 = vshrl.u32 %v1763, 7
        %v1765 = vsub.s32 %v1762, %v1764
        %v1766 = vrot.slane %v1752, %v1765
        %v1767 = vcombine.low %v1711, %v1743
        %v1768 = vcombine.high %v1711, %v1743
        %v1769 = vcombine.low %v1718, %v1750
        %v1770 = vcombine.high %v1718, %v1750
        %v1771 = vcombine.low %v1727, %v1759
        %v1772 = vcombine.high %v1727, %v1759
        %v1773 = vcombine.low %v1734, %v1766
        %v1774 = vcombine.high %v1734, %v1766
        %v1775 = vcombine.low %v936, %v1570
        %v1776 = vcombine.high %v936, %v1570
        %v1778 = vunpack.c.l.s4 1983009808
        %v1779 = vunpack.c.0.s8 %v1778
        %v1780 = vlaneseq
        %v1781 = vshrl.u32 %v1780, 7
        %v1782 = vsub.s32 %v1779, %v1781
        %v1783 = vrot.slane %v1775, %v1782
        %v1785 = vunpack.c.l.s4 1983009808
        %v1786 = vunpack.c.0.s8 %v1785
        %v1787 = vlaneseq
        %v1788 = vshrl.u32 %v1787, 7
        %v1789 = vsub.s32 %v1786, %v1788
        %v1790 = vrot.slane %v1776, %v1789
        %v1791 = vcombine.low %v1558, %v1582
        %v1792 = vcombine.high %v1558, %v1582
        %v1794 = vunpack.c.l.s4 1983009808
        %v1795 = vunpack.c.0.s8 %v1794
        %v1796 = vlaneseq
        %v1797 = vshrl.u32 %v1796, 7
        %v1798 = vsub.s32 %v1795, %v1797
        %v1799 = vrot.slane %v1791, %v1798
        %v1801 = vunpack.c.l.s4 1983009808
        %v1802 = vunpack.c.0.s8 %v1801
        %v1803 = vlaneseq
        %v1804 = vshrl.u32 %v1803, 7
        %v1805 = vsub.s32 %v1802, %v1804
        %v1806 = vrot.slane %v1792, %v1805
        %v1807 = vcombine.low %v1594, %v1618
        %v1808 = vcombine.high %v1594, %v1618
        %v1810 = vunpack.c.l.s4 1983009808
        %v1811 = vunpack.c.0.s8 %v1810
        %v1812 = vlaneseq
        %v1813 = vshrl.u32 %v1812, 7
        %v1814 = vsub.s32 %v1811, %v1813
        %v1815 = vrot.slane %v1807, %v1814
        %v1817 = vunpack.c.l.s4 1983009808
        %v1818 = vunpack.c.0.s8 %v1817
        %v1819 = vlaneseq
        %v1820 = vshrl.u32 %v1819, 7
        %v1821 = vsub.s32 %v1818, %v1820
        %v1822 = vrot.slane %v1808, %v1821
        %v1823 = vcombine.low %v1606, %v1630
        %v1824 = vcombine.high %v1606, %v1630
        %v1826 = vunpack.c.l.s4 1983009808
        %v1827 = vunpack.c.0.s8 %v1826
        %v1828 = vlaneseq
        %v1829 = vshrl.u32 %v1828, 7
        %v1830 = vsub.s32 %v1827, %v1829
        %v1831 = vrot.slane %v1823, %v1830
        %v1833 = vunpack.c.l.s4 1983009808
        %v1834 = vunpack.c.0.s8 %v1833
        %v1835 = vlaneseq
        %v1836 = vshrl.u32 %v1835, 7
        %v1837 = vsub.s32 %v1834, %v1836
        %v1838 = vrot.slane %v1824, %v1837
        %v1839 = vcombine.low %v1783, %v1799
        %v1840 = vcombine.high %v1783, %v1799
        %v1842 = vunpack.c.l.s4 1934713408
        %v1843 = vunpack.c.0.s8 %v1842
        %v1844 = vlaneseq
        %v1845 = vshrl.u32 %v1844, 7
        %v1846 = vsub.s32 %v1843, %v1845
        %v1847 = vrot.slane %v1839, %v1846
        %v1849 = vunpack.c.l.s4 1934713408
        %v1850 = vunpack.c.0.s8 %v1849
        %v1851 = vlaneseq
        %v1852 = vshrl.u32 %v1851, 7
        %v1853 = vsub.s32 %v1850, %v1852
        %v1854 = vrot.slane %v1840, %v1853
        %v1855 = vcombine.low %v1790, %v1806
        %v1856 = vcombine.high %v1790, %v1806
        %v1858 = vunpack.c.l.s4 1934713408
        %v1859 = vunpack.c.0.s8 %v1858
        %v1860 = vlaneseq
        %v1861 = vshrl.u32 %v1860, 7
        %v1862 = vsub.s32 %v1859, %v1861
        %v1863 = vrot.slane %v1855, %v1862
        %v1865 = vunpack.c.l.s4 1934713408
        %v1866 = vunpack.c.0.s8 %v1865
        %v1867 = vlaneseq
        %v1868 = vshrl.u32 %v1867, 7
        %v1869 = vsub.s32 %v1866, %v1868
        %v1870 = vrot.slane %v1856, %v1869
        %v1871 = vcombine.low %v1815, %v1831
        %v1872 = vcombine.high %v1815, %v1831
        %v1874 = vunpack.c.l.s4 1934713408
        %v1875 = vunpack.c.0.s8 %v1874
        %v1876 = vlaneseq
        %v1877 = vshrl.u32 %v1876, 7
        %v1878 = vsub.s32 %v1875, %v1877
        %v1879 = vrot.slane %v1871, %v1878
        %v1881 = vunpack.c.l.s4 1934713408
        %v1882 = vunpack.c.0.s8 %v1881
        %v1883 = vlaneseq
        %v1884 = vshrl.u32 %v1883, 7
        %v1885 = vsub.s32 %v1882, %v1884
        %v1886 = vrot.slane %v1872, %v1885
        %v1887 = vcombine.low %v1822, %v1838
        %v1888 = vcombine.high %v1822, %v1838
        %v1890 = vunpack.c.l.s4 1934713408
        %v1891 = vunpack.c.0.s8 %v1890
        %v1892 = vlaneseq
        %v1893 = vshrl.u32 %v1892, 7
        %v1894 = vsub.s32 %v1891, %v1893
        %v1895 = vrot.slane %v1887, %v1894
        %v1897 = vunpack.c.l.s4 1934713408
        %v1898 = vunpack.c.0.s8 %v1897
        %v1899 = vlaneseq
        %v1900 = vshrl.u32 %v1899, 7
        %v1901 = vsub.s32 %v1898, %v1900
        %v1902 = vrot.slane %v1888, %v1901
        %v1903 = vcombine.low %v1847, %v1879
        %v1904 = vcombine.high %v1847, %v1879
        %v1905 = vcombine.low %v1854, %v1886
        %v1906 = vcombine.high %v1854, %v1886
        %v1907 = vcombine.low %v1863, %v1895
        %v1908 = vcombine.high %v1863, %v1895
        %v1909 = vcombine.low %v1870, %v1902
        %v1910 = vcombine.high %v1870, %v1902
        %v1911 = vcombine.low %v937, %v1572
        %v1912 = vcombine.high %v937, %v1572
        %v1914 = vunpack.c.l.s4 1983009808
        %v1915 = vunpack.c.0.s8 %v1914
        %v1916 = vlaneseq
        %v1917 = vshrl.u32 %v1916, 7
        %v1918 = vsub.s32 %v1915, %v1917
        %v1919 = vrot.slane %v1911, %v1918
        %v1921 = vunpack.c.l.s4 1983009808
        %v1922 = vunpack.c.0.s8 %v1921
        %v1923 = vlaneseq
        %v1924 = vshrl.u32 %v1923, 7
        %v1925 = vsub.s32 %v1922, %v1924
        %v1926 = vrot.slane %v1912, %v1925
        %v1927 = vcombine.low %v1560, %v1584
        %v1928 = vcombine.high %v1560, %v1584
        %v1930 = vunpack.c.l.s4 1983009808
        %v1931 = vunpack.c.0.s8 %v1930
        %v1932 = vlaneseq
        %v1933 = vshrl.u32 %v1932, 7
        %v1934 = vsub.s32 %v1931, %v1933
        %v1935 = vrot.slane %v1927, %v1934
        %v1937 = vunpack.c.l.s4 1983009808
        %v1938 = vunpack.c.0.s8 %v1937
        %v1939 = vlaneseq
        %v1940 = vshrl.u32 %v1939, 7
        %v1941 = vsub.s32 %v1938, %v1940
        %v1942 = vrot.slane %v1928, %v1941
        %v1943 = vcombine.low %v1596, %v1620
        %v1944 = vcombine.high %v1596, %v1620
        %v1946 = vunpack.c.l.s4 1983009808
        %v1947 = vunpack.c.0.s8 %v1946
        %v1948 = vlaneseq
        %v1949 = vshrl.u32 %v1948, 7
        %v1950 = vsub.s32 %v1947, %v1949
        %v1951 = vrot.slane %v1943, %v1950
        %v1953 = vunpack.c.l.s4 1983009808
        %v1954 = vunpack.c.0.s8 %v1953
        %v1955 = vlaneseq
        %v1956 = vshrl.u32 %v1955, 7
        %v1957 = vsub.s32 %v1954, %v1956
        %v1958 = vrot.slane %v1944, %v1957
        %v1959 = vcombine.low %v1608, %v1632
        %v1960 = vcombine.high %v1608, %v1632
        %v1962 = vunpack.c.l.s4 1983009808
        %v1963 = vunpack.c.0.s8 %v1962
        %v1964 = vlaneseq
        %v1965 = vshrl.u32 %v1964, 7
        %v1966 = vsub.s32 %v1963, %v1965
        %v1967 = vrot.slane %v1959, %v1966
        %v1969 = vunpack.c.l.s4 1983009808
        %v1970 = vunpack.c.0.s8 %v1969
        %v1971 = vlaneseq
        %v1972 = vshrl.u32 %v1971, 7
        %v1973 = vsub.s32 %v1970, %v1972
        %v1974 = vrot.slane %v1960, %v1973
        %v1975 = vcombine.low %v1919, %v1935
        %v1976 = vcombine.high %v1919, %v1935
        %v1978 = vunpack.c.l.s4 1934713408
        %v1979 = vunpack.c.0.s8 %v1978
        %v1980 = vlaneseq
        %v1981 = vshrl.u32 %v1980, 7
        %v1982 = vsub.s32 %v1979, %v1981
        %v1983 = vrot.slane %v1975, %v1982
        %v1985 = vunpack.c.l.s4 1934713408
        %v1986 = vunpack.c.0.s8 %v1985
        %v1987 = vlaneseq
        %v1988 = vshrl.u32 %v1987, 7
        %v1989 = vsub.s32 %v1986, %v1988
        %v1990 = vrot.slane %v1976, %v1989
        %v1991 = vcombine.low %v1926, %v1942
        %v1992 = vcombine.high %v1926, %v1942
        %v1994 = vunpack.c.l.s4 1934713408
        %v1995 = vunpack.c.0.s8 %v1994
        %v1996 = vlaneseq
        %v1997 = vshrl.u32 %v1996, 7
        %v1998 = vsub.s32 %v1995, %v1997
        %v1999 = vrot.slane %v1991, %v1998
        %v2001 = vunpack.c.l.s4 1934713408
        %v2002 = vunpack.c.0.s8 %v2001
        %v2003 = vlaneseq
        %v2004 = vshrl.u32 %v2003, 7
        %v2005 = vsub.s32 %v2002, %v2004
        %v2006 = vrot.slane %v1992, %v2005
        %v2007 = vcombine.low %v1951, %v1967
        %v2008 = vcombine.high %v1951, %v1967
        %v2010 = vunpack.c.l.s4 1934713408
        %v2011 = vunpack.c.0.s8 %v2010
        %v2012 = vlaneseq
        %v2013 = vshrl.u32 %v2012, 7
        %v2014 = vsub.s32 %v2011, %v2013
        %v2015 = vrot.slane %v2007, %v2014
        %v2017 = vunpack.c.l.s4 1934713408
        %v2018 = vunpack.c.0.s8 %v2017
        %v2019 = vlaneseq
        %v2020 = vshrl.u32 %v2019, 7
        %v2021 = vsub.s32 %v2018, %v2020
        %v2022 = vrot.slane %v2008, %v2021
        %v2023 = vcombine.low %v1958, %v1974
        %v2024 = vcombine.high %v1958, %v1974
        %v2026 = vunpack.c.l.s4 1934713408
        %v2027 = vunpack.c.0.s8 %v2026
        %v2028 = vlaneseq
        %v2029 = vshrl.u32 %v2028, 7
        %v2030 = vsub.s32 %v2027, %v2029
        %v2031 = vrot.slane %v2023, %v2030
        %v2033 = vunpack.c.l.s4 1934713408
        %v2034 = vunpack.c.0.s8 %v2033
        %v2035 = vlaneseq
        %v2036 = vshrl.u32 %v2035, 7
        %v2037 = vsub.s32 %v2034, %v2036
        %v2038 = vrot.slane %v2024, %v2037
        %v2039 = vcombine.low %v1983, %v2015
        %v2040 = vcombine.high %v1983, %v2015
        %v2041 = vcombine.low %v1990, %v2022
        %v2042 = vcombine.high %v1990, %v2022
        %v2043 = vcombine.low %v1999, %v2031
        %v2044 = vcombine.high %v1999, %v2031
        %v2045 = vcombine.low %v2006, %v2038
        %v2046 = vcombine.high %v2006, %v2038
        %v2047 = vcombine.low %v938, %v1574
        %v2048 = vcombine.high %v938, %v1574
        %v2050 = vunpack.c.l.s4 1983009808
        %v2051 = vunpack.c.0.s8 %v2050
        %v2052 = vlaneseq
        %v2053 = vshrl.u32 %v2052, 7
        %v2054 = vsub.s32 %v2051, %v2053
        %v2055 = vrot.slane %v2047, %v2054
        %v2057 = vunpack.c.l.s4 1983009808
        %v2058 = vunpack.c.0.s8 %v2057
        %v2059 = vlaneseq
        %v2060 = vshrl.u32 %v2059, 7
        %v2061 = vsub.s32 %v2058, %v2060
        %v2062 = vrot.slane %v2048, %v2061
        %v2063 = vcombine.low %v1562, %v1586
        %v2064 = vcombine.high %v1562, %v1586
        %v2066 = vunpack.c.l.s4 1983009808
        %v2067 = vunpack.c.0.s8 %v2066
        %v2068 = vlaneseq
        %v2069 = vshrl.u32 %v2068, 7
        %v2070 = vsub.s32 %v2067, %v2069
        %v2071 = vrot.slane %v2063, %v2070
        %v2073 = vunpack.c.l.s4 1983009808
        %v2074 = vunpack.c.0.s8 %v2073
        %v2075 = vlaneseq
        %v2076 = vshrl.u32 %v2075, 7
        %v2077 = vsub.s32 %v2074, %v2076
        %v2078 = vrot.slane %v2064, %v2077
        %v2079 = vcombine.low %v1598, %v1622
        %v2080 = vcombine.high %v1598, %v1622
        %v2082 = vunpack.c.l.s4 1983009808
        %v2083 = vunpack.c.0.s8 %v2082
        %v2084 = vlaneseq
        %v2085 = vshrl.u32 %v2084, 7
        %v2086 = vsub.s32 %v2083, %v2085
        %v2087 = vrot.slane %v2079, %v2086
        %v2089 = vunpack.c.l.s4 1983009808
        %v2090 = vunpack.c.0.s8 %v2089
        %v2091 = vlaneseq
        %v2092 = vshrl.u32 %v2091, 7
        %v2093 = vsub.s32 %v2090, %v2092
        %v2094 = vrot.slane %v2080, %v2093
        %v2095 = vcombine.low %v1610, %v1634
        %v2096 = vcombine.high %v1610, %v1634
        %v2098 = vunpack.c.l.s4 1983009808
        %v2099 = vunpack.c.0.s8 %v2098
        %v2100 = vlaneseq
        %v2101 = vshrl.u32 %v2100, 7
        %v2102 = vsub.s32 %v2099, %v2101
        %v2103 = vrot.slane %v2095, %v2102
        %v2105 = vunpack.c.l.s4 1983009808
        %v2106 = vunpack.c.0.s8 %v2105
        %v2107 = vlaneseq
        %v2108 = vshrl.u32 %v2107, 7
        %v2109 = vsub.s32 %v2106, %v2108
        %v2110 = vrot.slane %v2096, %v2109
        %v2111 = vcombine.low %v2055, %v2071
        %v2112 = vcombine.high %v2055, %v2071
        %v2114 = vunpack.c.l.s4 1934713408
        %v2115 = vunpack.c.0.s8 %v2114
        %v2116 = vlaneseq
        %v2117 = vshrl.u32 %v2116, 7
        %v2118 = vsub.s32 %v2115, %v2117
        %v2119 = vrot.slane %v2111, %v2118
        %v2121 = vunpack.c.l.s4 1934713408
        %v2122 = vunpack.c.0.s8 %v2121
        %v2123 = vlaneseq
        %v2124 = vshrl.u32 %v2123, 7
        %v2125 = vsub.s32 %v2122, %v2124
        %v2126 = vrot.slane %v2112, %v2125
        %v2127 = vcombine.low %v2062, %v2078
        %v2128 = vcombine.high %v2062, %v2078
        %v2130 = vunpack.c.l.s4 1934713408
        %v2131 = vunpack.c.0.s8 %v2130
        %v2132 = vlaneseq
        %v2133 = vshrl.u32 %v2132, 7
        %v2134 = vsub.s32 %v2131, %v2133
        %v2135 = vrot.slane %v2127, %v2134
        %v2137 = vunpack.c.l.s4 1934713408
        %v2138 = vunpack.c.0.s8 %v2137
        %v2139 = vlaneseq
        %v2140 = vshrl.u32 %v2139, 7
        %v2141 = vsub.s32 %v2138, %v2140
        %v2142 = vrot.slane %v2128, %v2141
        %v2143 = vcombine.low %v2087, %v2103
        %v2144 = vcombine.high %v2087, %v2103
        %v2146 = vunpack.c.l.s4 1934713408
        %v2147 = vunpack.c.0.s8 %v2146
        %v2148 = vlaneseq
        %v2149 = vshrl.u32 %v2148, 7
        %v2150 = vsub.s32 %v2147, %v2149
        %v2151 = vrot.slane %v2143, %v2150
        %v2153 = vunpack.c.l.s4 1934713408
        %v2154 = vunpack.c.0.s8 %v2153
        %v2155 = vlaneseq
        %v2156 = vshrl.u32 %v2155, 7
        %v2157 = vsub.s32 %v2154, %v2156
        %v2158 = vrot.slane %v2144, %v2157
        %v2159 = vcombine.low %v2094, %v2110
        %v2160 = vcombine.high %v2094, %v2110
        %v2162 = vunpack.c.l.s4 1934713408
        %v2163 = vunpack.c.0.s8 %v2162
        %v2164 = vlaneseq
        %v2165 = vshrl.u32 %v2164, 7
        %v2166 = vsub.s32 %v2163, %v2165
        %v2167 = vrot.slane %v2159, %v2166
        %v2169 = vunpack.c.l.s4 1934713408
        %v2170 = vunpack.c.0.s8 %v2169
        %v2171 = vlaneseq
        %v2172 = vshrl.u32 %v2171, 7
        %v2173 = vsub.s32 %v2170, %v2172
        %v2174 = vrot.slane %v2160, %v2173
        %v2175 = vcombine.low %v2119, %v2151
        %v2176 = vcombine.high %v2119, %v2151
        %v2177 = vcombine.low %v2126, %v2158
        %v2178 = vcombine.high %v2126, %v2158
        %v2179 = vcombine.low %v2135, %v2167
        %v2180 = vcombine.high %v2135, %v2167
        %v2181 = vcombine.low %v2142, %v2174
        %v2182 = vcombine.high %v2142, %v2174
        %v2183 = vcombine.low %v1767, %v1769
        %v2184 = vcombine.high %v1767, %v1769
        %v2186 = vunpack.c.l.s4 1983009808
        %v2187 = vunpack.c.0.s8 %v2186
        %v2188 = vlaneseq
        %v2189 = vshrl.u32 %v2188, 7
        %v2190 = vsub.s32 %v2187, %v2189
        %v2191 = vrot.slane %v2183, %v2190
        %v2193 = vunpack.c.l.s4 1983009808
        %v2194 = vunpack.c.0.s8 %v2193
        %v2195 = vlaneseq
        %v2196 = vshrl.u32 %v2195, 7
        %v2197 = vsub.s32 %v2194, %v2196
        %v2198 = vrot.slane %v2184, %v2197
        %v2199 = vcombine.low %v1768, %v1770
        %v2200 = vcombine.high %v1768, %v1770
        %v2202 = vunpack.c.l.s4 1983009808
        %v2203 = vunpack.c.0.s8 %v2202
        %v2204 = vlaneseq
        %v2205 = vshrl.u32 %v2204, 7
        %v2206 = vsub.s32 %v2203, %v2205
        %v2207 = vrot.slane %v2199, %v2206
        %v2209 = vunpack.c.l.s4 1983009808
        %v2210 = vunpack.c.0.s8 %v2209
        %v2211 = vlaneseq
        %v2212 = vshrl.u32 %v2211, 7
        %v2213 = vsub.s32 %v2210, %v2212
        %v2214 = vrot.slane %v2200, %v2213
        %v2215 = vcombine.low %v1771, %v1773
        %v2216 = vcombine.high %v1771, %v1773
        %v2218 = vunpack.c.l.s4 1983009808
        %v2219 = vunpack.c.0.s8 %v2218
        %v2220 = vlaneseq
        %v2221 = vshrl.u32 %v2220, 7
        %v2222 = vsub.s32 %v2219, %v2221
        %v2223 = vrot.slane %v2215, %v2222
        %v2225 = vunpack.c.l.s4 1983009808
        %v2226 = vunpack.c.0.s8 %v2225
        %v2227 = vlaneseq
        %v2228 = vshrl.u32 %v2227, 7
        %v2229 = vsub.s32 %v2226, %v2228
        %v2230 = vrot.slane %v2216, %v2229
        %v2231 = vcombine.low %v1772, %v1774
        %v2232 = vcombine.high %v1772, %v1774
        %v2234 = vunpack.c.l.s4 1983009808
        %v2235 = vunpack.c.0.s8 %v2234
        %v2236 = vlaneseq
        %v2237 = vshrl.u32 %v2236, 7
        %v2238 = vsub.s32 %v2235, %v2237
        %v2239 = vrot.slane %v2231, %v2238
        %v2241 = vunpack.c.l.s4 1983009808
        %v2242 = vunpack.c.0.s8 %v2241
        %v2243 = vlaneseq
        %v2244 = vshrl.u32 %v2243, 7
        %v2245 = vsub.s32 %v2242, %v2244
        %v2246 = vrot.slane %v2232, %v2245
        %v2247 = vcombine.low %v2191, %v2207
        %v2248 = vcombine.high %v2191, %v2207
        %v2250 = vunpack.c.l.s4 1934713408
        %v2251 = vunpack.c.0.s8 %v2250
        %v2252 = vlaneseq
        %v2253 = vshrl.u32 %v2252, 7
        %v2254 = vsub.s32 %v2251, %v2253
        %v2255 = vrot.slane %v2247, %v2254
        %v2257 = vunpack.c.l.s4 1934713408
        %v2258 = vunpack.c.0.s8 %v2257
        %v2259 = vlaneseq
        %v2260 = vshrl.u32 %v2259, 7
        %v2261 = vsub.s32 %v2258, %v2260
        %v2262 = vrot.slane %v2248, %v2261
        %v2263 = vcombine.low %v2198, %v2214
        %v2264 = vcombine.high %v2198, %v2214
        %v2266 = vunpack.c.l.s4 1934713408
        %v2267 = vunpack.c.0.s8 %v2266
        %v2268 = vlaneseq
        %v2269 = vshrl.u32 %v2268, 7
        %v2270 = vsub.s32 %v2267, %v2269
        %v2271 = vrot.slane %v2263, %v2270
        %v2273 = vunpack.c.l.s4 1934713408
        %v2274 = vunpack.c.0.s8 %v2273
        %v2275 = vlaneseq
        %v2276 = vshrl.u32 %v2275, 7
        %v2277 = vsub.s32 %v2274, %v2276
        %v2278 = vrot.slane %v2264, %v2277
        %v2279 = vcombine.low %v2223, %v2239
        %v2280 = vcombine.high %v2223, %v2239
        %v2282 = vunpack.c.l.s4 1934713408
        %v2283 = vunpack.c.0.s8 %v2282
        %v2284 = vlaneseq
        %v2285 = vshrl.u32 %v2284, 7
        %v2286 = vsub.s32 %v2283, %v2285
        %v2287 = vrot.slane %v2279, %v2286
        %v2289 = vunpack.c.l.s4 1934713408
        %v2290 = vunpack.c.0.s8 %v2289
        %v2291 = vlaneseq
        %v2292 = vshrl.u32 %v2291, 7
        %v2293 = vsub.s32 %v2290, %v2292
        %v2294 = vrot.slane %v2280, %v2293
        %v2295 = vcombine.low %v2230, %v2246
        %v2296 = vcombine.high %v2230, %v2246
        %v2298 = vunpack.c.l.s4 1934713408
        %v2299 = vunpack.c.0.s8 %v2298
        %v2300 = vlaneseq
        %v2301 = vshrl.u32 %v2300, 7
        %v2302 = vsub.s32 %v2299, %v2301
        %v2303 = vrot.slane %v2295, %v2302
        %v2305 = vunpack.c.l.s4 1934713408
        %v2306 = vunpack.c.0.s8 %v2305
        %v2307 = vlaneseq
        %v2308 = vshrl.u32 %v2307, 7
        %v2309 = vsub.s32 %v2306, %v2308
        %v2310 = vrot.slane %v2296, %v2309
        %v2311 = vcombine.low %v2255, %v2287
        %v2312 = vcombine.high %v2255, %v2287
        %v2313 = vcombine.low %v2262, %v2294
        %v2314 = vcombine.high %v2262, %v2294
        %v2315 = vcombine.low %v2271, %v2303
        %v2316 = vcombine.high %v2271, %v2303
        %v2317 = vcombine.low %v2278, %v2310
        %v2318 = vcombine.high %v2278, %v2310
        %v2319 = vcombine.low %v1903, %v1905
        %v2320 = vcombine.high %v1903, %v1905
        %v2322 = vunpack.c.l.s4 1983009808
        %v2323 = vunpack.c.0.s8 %v2322
        %v2324 = vlaneseq
        %v2325 = vshrl.u32 %v2324, 7
        %v2326 = vsub.s32 %v2323, %v2325
        %v2327 = vrot.slane %v2319, %v2326
        %v2329 = vunpack.c.l.s4 1983009808
        %v2330 = vunpack.c.0.s8 %v2329
        %v2331 = vlaneseq
        %v2332 = vshrl.u32 %v2331, 7
        %v2333 = vsub.s32 %v2330, %v2332
        %v2334 = vrot.slane %v2320, %v2333
        %v2335 = vcombine.low %v1904, %v1906
        %v2336 = vcombine.high %v1904, %v1906
        %v2338 = vunpack.c.l.s4 1983009808
        %v2339 = vunpack.c.0.s8 %v2338
        %v2340 = vlaneseq
        %v2341 = vshrl.u32 %v2340, 7
        %v2342 = vsub.s32 %v2339, %v2341
        %v2343 = vrot.slane %v2335, %v2342
        %v2345 = vunpack.c.l.s4 1983009808
        %v2346 = vunpack.c.0.s8 %v2345
        %v2347 = vlaneseq
        %v2348 = vshrl.u32 %v2347, 7
        %v2349 = vsub.s32 %v2346, %v2348
        %v2350 = vrot.slane %v2336, %v2349
        %v2351 = vcombine.low %v1907, %v1909
        %v2352 = vcombine.high %v1907, %v1909
        %v2354 = vunpack.c.l.s4 1983009808
        %v2355 = vunpack.c.0.s8 %v2354
        %v2356 = vlaneseq
        %v2357 = vshrl.u32 %v2356, 7
        %v2358 = vsub.s32 %v2355, %v2357
        %v2359 = vrot.slane %v2351, %v2358
        %v2361 = vunpack.c.l.s4 1983009808
        %v2362 = vunpack.c.0.s8 %v2361
        %v2363 = vlaneseq
        %v2364 = vshrl.u32 %v2363, 7
        %v2365 = vsub.s32 %v2362, %v2364
        %v2366 = vrot.slane %v2352, %v2365
        %v2367 = vcombine.low %v1908, %v1910
        %v2368 = vcombine.high %v1908, %v1910
        %v2370 = vunpack.c.l.s4 1983009808
        %v2371 = vunpack.c.0.s8 %v2370
        %v2372 = vlaneseq
        %v2373 = vshrl.u32 %v2372, 7
        %v2374 = vsub.s32 %v2371, %v2373
        %v2375 = vrot.slane %v2367, %v2374
        %v2377 = vunpack.c.l.s4 1983009808
        %v2378 = vunpack.c.0.s8 %v2377
        %v2379 = vlaneseq
        %v2380 = vshrl.u32 %v2379, 7
        %v2381 = vsub.s32 %v2378, %v2380
        %v2382 = vrot.slane %v2368, %v2381
        %v2383 = vcombine.low %v2327, %v2343
        %v2384 = vcombine.high %v2327, %v2343
        %v2386 = vunpack.c.l.s4 1934713408
        %v2387 = vunpack.c.0.s8 %v2386
        %v2388 = vlaneseq
        %v2389 = vshrl.u32 %v2388, 7
        %v2390 = vsub.s32 %v2387, %v2389
        %v2391 = vrot.slane %v2383, %v2390
        %v2393 = vunpack.c.l.s4 1934713408
        %v2394 = vunpack.c.0.s8 %v2393
        %v2395 = vlaneseq
        %v2396 = vshrl.u32 %v2395, 7
        %v2397 = vsub.s32 %v2394, %v2396
        %v2398 = vrot.slane %v2384, %v2397
        %v2399 = vcombine.low %v2334, %v2350
        %v2400 = vcombine.high %v2334, %v2350
        %v2402 = vunpack.c.l.s4 1934713408
        %v2403 = vunpack.c.0.s8 %v2402
        %v2404 = vlaneseq
        %v2405 = vshrl.u32 %v2404, 7
        %v2406 = vsub.s32 %v2403, %v2405
        %v2407 = vrot.slane %v2399, %v2406
        %v2409 = vunpack.c.l.s4 1934713408
        %v2410 = vunpack.c.0.s8 %v2409
        %v2411 = vlaneseq
        %v2412 = vshrl.u32 %v2411, 7
        %v2413 = vsub.s32 %v2410, %v2412
        %v2414 = vrot.slane %v2400, %v2413
        %v2415 = vcombine.low %v2359, %v2375
        %v2416 = vcombine.high %v2359, %v2375
        %v2418 = vunpack.c.l.s4 1934713408
        %v2419 = vunpack.c.0.s8 %v2418
        %v2420 = vlaneseq
        %v2421 = vshrl.u32 %v2420, 7
        %v2422 = vsub.s32 %v2419, %v2421
        %v2423 = vrot.slane %v2415, %v2422
        %v2425 = vunpack.c.l.s4 1934713408
        %v2426 = vunpack.c.0.s8 %v2425
        %v2427 = vlaneseq
        %v2428 = vshrl.u32 %v2427, 7
        %v2429 = vsub.s32 %v2426, %v2428
        %v2430 = vrot.slane %v2416, %v2429
        %v2431 = vcombine.low %v2366, %v2382
        %v2432 = vcombine.high %v2366, %v2382
        %v2434 = vunpack.c.l.s4 1934713408
        %v2435 = vunpack.c.0.s8 %v2434
        %v2436 = vlaneseq
        %v2437 = vshrl.u32 %v2436, 7
        %v2438 = vsub.s32 %v2435, %v2437
        %v2439 = vrot.slane %v2431, %v2438
        %v2441 = vunpack.c.l.s4 1934713408
        %v2442 = vunpack.c.0.s8 %v2441
        %v2443 = vlaneseq
        %v2444 = vshrl.u32 %v2443, 7
        %v2445 = vsub.s32 %v2442, %v2444
        %v2446 = vrot.slane %v2432, %v2445
        %v2447 = vcombine.low %v2391, %v2423
        %v2448 = vcombine.high %v2391, %v2423
        %v2449 = vcombine.low %v2398, %v2430
        %v2450 = vcombine.high %v2398, %v2430
        %v2451 = vcombine.low %v2407, %v2439
        %v2452 = vcombine.high %v2407, %v2439
        %v2453 = vcombine.low %v2414, %v2446
        %v2454 = vcombine.high %v2414, %v2446
        %v2455 = vcombine.low %v2039, %v2041
        %v2456 = vcombine.high %v2039, %v2041
        %v2458 = vunpack.c.l.s4 1983009808
        %v2459 = vunpack.c.0.s8 %v2458
        %v2460 = vlaneseq
        %v2461 = vshrl.u32 %v2460, 7
        %v2462 = vsub.s32 %v2459, %v2461
        %v2463 = vrot.slane %v2455, %v2462
        %v2465 = vunpack.c.l.s4 1983009808
        %v2466 = vunpack.c.0.s8 %v2465
        %v2467 = vlaneseq
        %v2468 = vshrl.u32 %v2467, 7
        %v2469 = vsub.s32 %v2466, %v2468
        %v2470 = vrot.slane %v2456, %v2469
        %v2471 = vcombine.low %v2040, %v2042
        %v2472 = vcombine.high %v2040, %v2042
        %v2474 = vunpack.c.l.s4 1983009808
        %v2475 = vunpack.c.0.s8 %v2474
        %v2476 = vlaneseq
        %v2477 = vshrl.u32 %v2476, 7
        %v2478 = vsub.s32 %v2475, %v2477
        %v2479 = vrot.slane %v2471, %v2478
        %v2481 = vunpack.c.l.s4 1983009808
        %v2482 = vunpack.c.0.s8 %v2481
        %v2483 = vlaneseq
        %v2484 = vshrl.u32 %v2483, 7
        %v2485 = vsub.s32 %v2482, %v2484
        %v2486 = vrot.slane %v2472, %v2485
        %v2487 = vcombine.low %v2043, %v2045
        %v2488 = vcombine.high %v2043, %v2045
        %v2490 = vunpack.c.l.s4 1983009808
        %v2491 = vunpack.c.0.s8 %v2490
        %v2492 = vlaneseq
        %v2493 = vshrl.u32 %v2492, 7
        %v2494 = vsub.s32 %v2491, %v2493
        %v2495 = vrot.slane %v2487, %v2494
        %v2497 = vunpack.c.l.s4 1983009808
        %v2498 = vunpack.c.0.s8 %v2497
        %v2499 = vlaneseq
        %v2500 = vshrl.u32 %v2499, 7
        %v2501 = vsub.s32 %v2498, %v2500
        %v2502 = vrot.slane %v2488, %v2501
        %v2503 = vcombine.low %v2044, %v2046
        %v2504 = vcombine.high %v2044, %v2046
        %v2506 = vunpack.c.l.s4 1983009808
        %v2507 = vunpack.c.0.s8 %v2506
        %v2508 = vlaneseq
        %v2509 = vshrl.u32 %v2508, 7
        %v2510 = vsub.s32 %v2507, %v2509
        %v2511 = vrot.slane %v2503, %v2510
        %v2513 = vunpack.c.l.s4 1983009808
        %v2514 = vunpack.c.0.s8 %v2513
        %v2515 = vlaneseq
        %v2516 = vshrl.u32 %v2515, 7
        %v2517 = vsub.s32 %v2514, %v2516
        %v2518 = vrot.slane %v2504, %v2517
        %v2519 = vcombine.low %v2463, %v2479
        %v2520 = vcombine.high %v2463, %v2479
        %v2522 = vunpack.c.l.s4 1934713408
        %v2523 = vunpack.c.0.s8 %v2522
        %v2524 = vlaneseq
        %v2525 = vshrl.u32 %v2524, 7
        %v2526 = vsub.s32 %v2523, %v2525
        %v2527 = vrot.slane %v2519, %v2526
        %v2529 = vunpack.c.l.s4 1934713408
        %v2530 = vunpack.c.0.s8 %v2529
        %v2531 = vlaneseq
        %v2532 = vshrl.u32 %v2531, 7
        %v2533 = vsub.s32 %v2530, %v2532
        %v2534 = vrot.slane %v2520, %v2533
        %v2535 = vcombine.low %v2470, %v2486
        %v2536 = vcombine.high %v2470, %v2486
        %v2538 = vunpack.c.l.s4 1934713408
        %v2539 = vunpack.c.0.s8 %v2538
        %v2540 = vlaneseq
        %v2541 = vshrl.u32 %v2540, 7
        %v2542 = vsub.s32 %v2539, %v2541
        %v2543 = vrot.slane %v2535, %v2542
        %v2545 = vunpack.c.l.s4 1934713408
        %v2546 = vunpack.c.0.s8 %v2545
        %v2547 = vlaneseq
        %v2548 = vshrl.u32 %v2547, 7
        %v2549 = vsub.s32 %v2546, %v2548
        %v2550 = vrot.slane %v2536, %v2549
        %v2551 = vcombine.low %v2495, %v2511
        %v2552 = vcombine.high %v2495, %v2511
        %v2554 = vunpack.c.l.s4 1934713408
        %v2555 = vunpack.c.0.s8 %v2554
        %v2556 = vlaneseq
        %v2557 = vshrl.u32 %v2556, 7
        %v2558 = vsub.s32 %v2555, %v2557
        %v2559 = vrot.slane %v2551, %v2558
        %v2561 = vunpack.c.l.s4 1934713408
        %v2562 = vunpack.c.0.s8 %v2561
        %v2563 = vlaneseq
        %v2564 = vshrl.u32 %v2563, 7
        %v2565 = vsub.s32 %v2562, %v2564
        %v2566 = vrot.slane %v2552, %v2565
        %v2567 = vcombine.low %v2502, %v2518
        %v2568 = vcombine.high %v2502, %v2518
        %v2570 = vunpack.c.l.s4 1934713408
        %v2571 = vunpack.c.0.s8 %v2570
        %v2572 = vlaneseq
        %v2573 = vshrl.u32 %v2572, 7
        %v2574 = vsub.s32 %v2571, %v2573
        %v2575 = vrot.slane %v2567, %v2574
        %v2577 = vunpack.c.l.s4 1934713408
        %v2578 = vunpack.c.0.s8 %v2577
        %v2579 = vlaneseq
        %v2580 = vshrl.u32 %v2579, 7
        %v2581 = vsub.s32 %v2578, %v2580
        %v2582 = vrot.slane %v2568, %v2581
        %v2583 = vcombine.low %v2527, %v2559
        %v2584 = vcombine.high %v2527, %v2559
        %v2585 = vcombine.low %v2534, %v2566
        %v2586 = vcombine.high %v2534, %v2566
        %v2587 = vcombine.low %v2543, %v2575
        %v2588 = vcombine.high %v2543, %v2575
        %v2589 = vcombine.low %v2550, %v2582
        %v2590 = vcombine.high %v2550, %v2582
        %v2591 = vcombine.low %v2175, %v2177
        %v2592 = vcombine.high %v2175, %v2177
        %v2594 = vunpack.c.l.s4 1983009808
        %v2595 = vunpack.c.0.s8 %v2594
        %v2596 = vlaneseq
        %v2597 = vshrl.u32 %v2596, 7
        %v2598 = vsub.s32 %v2595, %v2597
        %v2599 = vrot.slane %v2591, %v2598
        %v2601 = vunpack.c.l.s4 1983009808
        %v2602 = vunpack.c.0.s8 %v2601
        %v2603 = vlaneseq
        %v2604 = vshrl.u32 %v2603, 7
        %v2605 = vsub.s32 %v2602, %v2604
        %v2606 = vrot.slane %v2592, %v2605
        %v2607 = vcombine.low %v2176, %v2178
        %v2608 = vcombine.high %v2176, %v2178
        %v2610 = vunpack.c.l.s4 1983009808
        %v2611 = vunpack.c.0.s8 %v2610
        %v2612 = vlaneseq
        %v2613 = vshrl.u32 %v2612, 7
        %v2614 = vsub.s32 %v2611, %v2613
        %v2615 = vrot.slane %v2607, %v2614
        %v2617 = vunpack.c.l.s4 1983009808
        %v2618 = vunpack.c.0.s8 %v2617
        %v2619 = vlaneseq
        %v2620 = vshrl.u32 %v2619, 7
        %v2621 = vsub.s32 %v2618, %v2620
        %v2622 = vrot.slane %v2608, %v2621
        %v2623 = vcombine.low %v2179, %v2181
        %v2624 = vcombine.high %v2179, %v2181
        %v2626 = vunpack.c.l.s4 1983009808
        %v2627 = vunpack.c.0.s8 %v2626
        %v2628 = vlaneseq
        %v2629 = vshrl.u32 %v2628, 7
        %v2630 = vsub.s32 %v2627, %v2629
        %v2631 = vrot.slane %v2623, %v2630
        %v2633 = vunpack.c.l.s4 1983009808
        %v2634 = vunpack.c.0.s8 %v2633
        %v2635 = vlaneseq
        %v2636 = vshrl.u32 %v2635, 7
        %v2637 = vsub.s32 %v2634, %v2636
        %v2638 = vrot.slane %v2624, %v2637
        %v2639 = vcombine.low %v2180, %v2182
        %v2640 = vcombine.high %v2180, %v2182
        %v2642 = vunpack.c.l.s4 1983009808
        %v2643 = vunpack.c.0.s8 %v2642
        %v2644 = vlaneseq
        %v2645 = vshrl.u32 %v2644, 7
        %v2646 = vsub.s32 %v2643, %v2645
        %v2647 = vrot.slane %v2639, %v2646
        %v2649 = vunpack.c.l.s4 1983009808
        %v2650 = vunpack.c.0.s8 %v2649
        %v2651 = vlaneseq
        %v2652 = vshrl.u32 %v2651, 7
        %v2653 = vsub.s32 %v2650, %v2652
        %v2654 = vrot.slane %v2640, %v2653
        %v2655 = vcombine.low %v2599, %v2615
        %v2656 = vcombine.high %v2599, %v2615
        %v2658 = vunpack.c.l.s4 1934713408
        %v2659 = vunpack.c.0.s8 %v2658
        %v2660 = vlaneseq
        %v2661 = vshrl.u32 %v2660, 7
        %v2662 = vsub.s32 %v2659, %v2661
        %v2663 = vrot.slane %v2655, %v2662
        %v2665 = vunpack.c.l.s4 1934713408
        %v2666 = vunpack.c.0.s8 %v2665
        %v2667 = vlaneseq
        %v2668 = vshrl.u32 %v2667, 7
        %v2669 = vsub.s32 %v2666, %v2668
        %v2670 = vrot.slane %v2656, %v2669
        %v2671 = vcombine.low %v2606, %v2622
        %v2672 = vcombine.high %v2606, %v2622
        %v2674 = vunpack.c.l.s4 1934713408
        %v2675 = vunpack.c.0.s8 %v2674
        %v2676 = vlaneseq
        %v2677 = vshrl.u32 %v2676, 7
        %v2678 = vsub.s32 %v2675, %v2677
        %v2679 = vrot.slane %v2671, %v2678
        %v2681 = vunpack.c.l.s4 1934713408
        %v2682 = vunpack.c.0.s8 %v2681
        %v2683 = vlaneseq
        %v2684 = vshrl.u32 %v2683, 7
        %v2685 = vsub.s32 %v2682, %v2684
        %v2686 = vrot.slane %v2672, %v2685
        %v2687 = vcombine.low %v2631, %v2647
        %v2688 = vcombine.high %v2631, %v2647
        %v2690 = vunpack.c.l.s4 1934713408
        %v2691 = vunpack.c.0.s8 %v2690
        %v2692 = vlaneseq
        %v2693 = vshrl.u32 %v2692, 7
        %v2694 = vsub.s32 %v2691, %v2693
        %v2695 = vrot.slane %v2687, %v2694
        %v2697 = vunpack.c.l.s4 1934713408
        %v2698 = vunpack.c.0.s8 %v2697
        %v2699 = vlaneseq
        %v2700 = vshrl.u32 %v2699, 7
        %v2701 = vsub.s32 %v2698, %v2700
        %v2702 = vrot.slane %v2688, %v2701
        %v2703 = vcombine.low %v2638, %v2654
        %v2704 = vcombine.high %v2638, %v2654
        %v2706 = vunpack.c.l.s4 1934713408
        %v2707 = vunpack.c.0.s8 %v2706
        %v2708 = vlaneseq
        %v2709 = vshrl.u32 %v2708, 7
        %v2710 = vsub.s32 %v2707, %v2709
        %v2711 = vrot.slane %v2703, %v2710
        %v2713 = vunpack.c.l.s4 1934713408
        %v2714 = vunpack.c.0.s8 %v2713
        %v2715 = vlaneseq
        %v2716 = vshrl.u32 %v2715, 7
        %v2717 = vsub.s32 %v2714, %v2716
        %v2718 = vrot.slane %v2704, %v2717
        %v2719 = vcombine.low %v2663, %v2695
        %v2720 = vcombine.high %v2663, %v2695
        %v2721 = vcombine.low %v2670, %v2702
        %v2722 = vcombine.high %v2670, %v2702
        %v2723 = vcombine.low %v2679, %v2711
        %v2724 = vcombine.high %v2679, %v2711
        %v2725 = vcombine.low %v2686, %v2718
        %v2726 = vcombine.high %v2686, %v2718
        %v2727 = vpack.c.bf16 %v2447, %v2311
        %v2728 = vpack.c.bf16 %v2448, %v2312
        %v2729 = vpack.c.bf16 %v2449, %v2313
        %v2730 = vpack.c.bf16 %v2450, %v2314
        %v2731 = vpack.c.bf16 %v2451, %v2315
        %v2732 = vpack.c.bf16 %v2452, %v2316
        %v2733 = vpack.c.bf16 %v2453, %v2317
        %v2734 = vpack.c.bf16 %v2454, %v2318
        %v2735 = vpack.c.bf16 %v2719, %v2583
        %v2736 = vpack.c.bf16 %v2720, %v2584
        %v2737 = vpack.c.bf16 %v2721, %v2585
        %v2738 = vpack.c.bf16 %v2722, %v2586
        %v2739 = vpack.c.bf16 %v2723, %v2587
        %v2740 = vpack.c.bf16 %v2724, %v2588
        %v2741 = vpack.c.bf16 %v2725, %v2589
        %v2742 = vpack.c.bf16 %v2726, %v2590
        %2747 = vrot.lane.b32.xlu0 %v943, 112
        %v2748 = vpop.permute.xlu0 %2747
        %2749 = vrot.lane.b32.xlu0 %v944, 112
        %v2750 = vpop.permute.xlu0 %2749
        %2751 = vrot.lane.b32.xlu0 %v945, 112
        %v2752 = vpop.permute.xlu0 %2751
        %2753 = vrot.lane.b32.xlu0 %v946, 112
        %v2754 = vpop.permute.xlu0 %2753
        %2759 = vrot.lane.b32.xlu0 %v943, 96
        %v2760 = vpop.permute.xlu0 %2759
        %2761 = vrot.lane.b32.xlu0 %v944, 96
        %v2762 = vpop.permute.xlu0 %2761
        %2763 = vrot.lane.b32.xlu0 %v945, 96
        %v2764 = vpop.permute.xlu0 %2763
        %2765 = vrot.lane.b32.xlu0 %v946, 96
        %v2766 = vpop.permute.xlu0 %2765
        %2771 = vrot.lane.b32.xlu0 %v943, 80
        %v2772 = vpop.permute.xlu0 %2771
        %2773 = vrot.lane.b32.xlu0 %v944, 80
        %v2774 = vpop.permute.xlu0 %2773
        %2775 = vrot.lane.b32.xlu0 %v945, 80
        %v2776 = vpop.permute.xlu0 %2775
        %2777 = vrot.lane.b32.xlu0 %v946, 80
        %v2778 = vpop.permute.xlu0 %2777
        %2783 = vrot.lane.b32.xlu0 %v943, 64
        %v2784 = vpop.permute.xlu0 %2783
        %2785 = vrot.lane.b32.xlu0 %v944, 64
        %v2786 = vpop.permute.xlu0 %2785
        %2787 = vrot.lane.b32.xlu0 %v945, 64
        %v2788 = vpop.permute.xlu0 %2787
        %2789 = vrot.lane.b32.xlu0 %v946, 64
        %v2790 = vpop.permute.xlu0 %2789
        %2795 = vrot.lane.b32.xlu0 %v943, 48
        %v2796 = vpop.permute.xlu0 %2795
        %2797 = vrot.lane.b32.xlu0 %v944, 48
        %v2798 = vpop.permute.xlu0 %2797
        %2799 = vrot.lane.b32.xlu0 %v945, 48
        %v2800 = vpop.permute.xlu0 %2799
        %2801 = vrot.lane.b32.xlu0 %v946, 48
        %v2802 = vpop.permute.xlu0 %2801
        %2807 = vrot.lane.b32.xlu0 %v943, 32
        %v2808 = vpop.permute.xlu0 %2807
        %2809 = vrot.lane.b32.xlu0 %v944, 32
        %v2810 = vpop.permute.xlu0 %2809
        %2811 = vrot.lane.b32.xlu0 %v945, 32
        %v2812 = vpop.permute.xlu0 %2811
        %2813 = vrot.lane.b32.xlu0 %v946, 32
        %v2814 = vpop.permute.xlu0 %2813
        %2819 = vrot.lane.b32.xlu0 %v943, 16
        %v2820 = vpop.permute.xlu0 %2819
        %2821 = vrot.lane.b32.xlu0 %v944, 16
        %v2822 = vpop.permute.xlu0 %2821
        %2823 = vrot.lane.b32.xlu0 %v945, 16
        %v2824 = vpop.permute.xlu0 %2823
        %2825 = vrot.lane.b32.xlu0 %v946, 16
        %v2826 = vpop.permute.xlu0 %2825
        %v2831 = vcombine.low %v943, %v2760
        %v2832 = vcombine.high %v943, %v2760
        %v2834 = vunpack.c.l.s4 1983009808
        %v2835 = vunpack.c.0.s8 %v2834
        %v2836 = vlaneseq
        %v2837 = vshrl.u32 %v2836, 7
        %v2838 = vsub.s32 %v2835, %v2837
        %v2839 = vrot.slane %v2831, %v2838
        %v2841 = vunpack.c.l.s4 1983009808
        %v2842 = vunpack.c.0.s8 %v2841
        %v2843 = vlaneseq
        %v2844 = vshrl.u32 %v2843, 7
        %v2845 = vsub.s32 %v2842, %v2844
        %v2846 = vrot.slane %v2832, %v2845
        %v2847 = vcombine.low %v2748, %v2772
        %v2848 = vcombine.high %v2748, %v2772
        %v2850 = vunpack.c.l.s4 1983009808
        %v2851 = vunpack.c.0.s8 %v2850
        %v2852 = vlaneseq
        %v2853 = vshrl.u32 %v2852, 7
        %v2854 = vsub.s32 %v2851, %v2853
        %v2855 = vrot.slane %v2847, %v2854
        %v2857 = vunpack.c.l.s4 1983009808
        %v2858 = vunpack.c.0.s8 %v2857
        %v2859 = vlaneseq
        %v2860 = vshrl.u32 %v2859, 7
        %v2861 = vsub.s32 %v2858, %v2860
        %v2862 = vrot.slane %v2848, %v2861
        %v2863 = vcombine.low %v2784, %v2808
        %v2864 = vcombine.high %v2784, %v2808
        %v2866 = vunpack.c.l.s4 1983009808
        %v2867 = vunpack.c.0.s8 %v2866
        %v2868 = vlaneseq
        %v2869 = vshrl.u32 %v2868, 7
        %v2870 = vsub.s32 %v2867, %v2869
        %v2871 = vrot.slane %v2863, %v2870
        %v2873 = vunpack.c.l.s4 1983009808
        %v2874 = vunpack.c.0.s8 %v2873
        %v2875 = vlaneseq
        %v2876 = vshrl.u32 %v2875, 7
        %v2877 = vsub.s32 %v2874, %v2876
        %v2878 = vrot.slane %v2864, %v2877
        %v2879 = vcombine.low %v2796, %v2820
        %v2880 = vcombine.high %v2796, %v2820
        %v2882 = vunpack.c.l.s4 1983009808
        %v2883 = vunpack.c.0.s8 %v2882
        %v2884 = vlaneseq
        %v2885 = vshrl.u32 %v2884, 7
        %v2886 = vsub.s32 %v2883, %v2885
        %v2887 = vrot.slane %v2879, %v2886
        %v2889 = vunpack.c.l.s4 1983009808
        %v2890 = vunpack.c.0.s8 %v2889
        %v2891 = vlaneseq
        %v2892 = vshrl.u32 %v2891, 7
        %v2893 = vsub.s32 %v2890, %v2892
        %v2894 = vrot.slane %v2880, %v2893
        %v2895 = vcombine.low %v2839, %v2855
        %v2896 = vcombine.high %v2839, %v2855
        %v2898 = vunpack.c.l.s4 1934713408
        %v2899 = vunpack.c.0.s8 %v2898
        %v2900 = vlaneseq
        %v2901 = vshrl.u32 %v2900, 7
        %v2902 = vsub.s32 %v2899, %v2901
        %v2903 = vrot.slane %v2895, %v2902
        %v2905 = vunpack.c.l.s4 1934713408
        %v2906 = vunpack.c.0.s8 %v2905
        %v2907 = vlaneseq
        %v2908 = vshrl.u32 %v2907, 7
        %v2909 = vsub.s32 %v2906, %v2908
        %v2910 = vrot.slane %v2896, %v2909
        %v2911 = vcombine.low %v2846, %v2862
        %v2912 = vcombine.high %v2846, %v2862
        %v2914 = vunpack.c.l.s4 1934713408
        %v2915 = vunpack.c.0.s8 %v2914
        %v2916 = vlaneseq
        %v2917 = vshrl.u32 %v2916, 7
        %v2918 = vsub.s32 %v2915, %v2917
        %v2919 = vrot.slane %v2911, %v2918
        %v2921 = vunpack.c.l.s4 1934713408
        %v2922 = vunpack.c.0.s8 %v2921
        %v2923 = vlaneseq
        %v2924 = vshrl.u32 %v2923, 7
        %v2925 = vsub.s32 %v2922, %v2924
        %v2926 = vrot.slane %v2912, %v2925
        %v2927 = vcombine.low %v2871, %v2887
        %v2928 = vcombine.high %v2871, %v2887
        %v2930 = vunpack.c.l.s4 1934713408
        %v2931 = vunpack.c.0.s8 %v2930
        %v2932 = vlaneseq
        %v2933 = vshrl.u32 %v2932, 7
        %v2934 = vsub.s32 %v2931, %v2933
        %v2935 = vrot.slane %v2927, %v2934
        %v2937 = vunpack.c.l.s4 1934713408
        %v2938 = vunpack.c.0.s8 %v2937
        %v2939 = vlaneseq
        %v2940 = vshrl.u32 %v2939, 7
        %v2941 = vsub.s32 %v2938, %v2940
        %v2942 = vrot.slane %v2928, %v2941
        %v2943 = vcombine.low %v2878, %v2894
        %v2944 = vcombine.high %v2878, %v2894
        %v2946 = vunpack.c.l.s4 1934713408
        %v2947 = vunpack.c.0.s8 %v2946
        %v2948 = vlaneseq
        %v2949 = vshrl.u32 %v2948, 7
        %v2950 = vsub.s32 %v2947, %v2949
        %v2951 = vrot.slane %v2943, %v2950
        %v2953 = vunpack.c.l.s4 1934713408
        %v2954 = vunpack.c.0.s8 %v2953
        %v2955 = vlaneseq
        %v2956 = vshrl.u32 %v2955, 7
        %v2957 = vsub.s32 %v2954, %v2956
        %v2958 = vrot.slane %v2944, %v2957
        %v2959 = vcombine.low %v2903, %v2935
        %v2960 = vcombine.high %v2903, %v2935
        %v2961 = vcombine.low %v2910, %v2942
        %v2962 = vcombine.high %v2910, %v2942
        %v2963 = vcombine.low %v2919, %v2951
        %v2964 = vcombine.high %v2919, %v2951
        %v2965 = vcombine.low %v2926, %v2958
        %v2966 = vcombine.high %v2926, %v2958
        %v2967 = vcombine.low %v944, %v2762
        %v2968 = vcombine.high %v944, %v2762
        %v2970 = vunpack.c.l.s4 1983009808
        %v2971 = vunpack.c.0.s8 %v2970
        %v2972 = vlaneseq
        %v2973 = vshrl.u32 %v2972, 7
        %v2974 = vsub.s32 %v2971, %v2973
        %v2975 = vrot.slane %v2967, %v2974
        %v2977 = vunpack.c.l.s4 1983009808
        %v2978 = vunpack.c.0.s8 %v2977
        %v2979 = vlaneseq
        %v2980 = vshrl.u32 %v2979, 7
        %v2981 = vsub.s32 %v2978, %v2980
        %v2982 = vrot.slane %v2968, %v2981
        %v2983 = vcombine.low %v2750, %v2774
        %v2984 = vcombine.high %v2750, %v2774
        %v2986 = vunpack.c.l.s4 1983009808
        %v2987 = vunpack.c.0.s8 %v2986
        %v2988 = vlaneseq
        %v2989 = vshrl.u32 %v2988, 7
        %v2990 = vsub.s32 %v2987, %v2989
        %v2991 = vrot.slane %v2983, %v2990
        %v2993 = vunpack.c.l.s4 1983009808
        %v2994 = vunpack.c.0.s8 %v2993
        %v2995 = vlaneseq
        %v2996 = vshrl.u32 %v2995, 7
        %v2997 = vsub.s32 %v2994, %v2996
        %v2998 = vrot.slane %v2984, %v2997
        %v2999 = vcombine.low %v2786, %v2810
        %v3000 = vcombine.high %v2786, %v2810
        %v3002 = vunpack.c.l.s4 1983009808
        %v3003 = vunpack.c.0.s8 %v3002
        %v3004 = vlaneseq
        %v3005 = vshrl.u32 %v3004, 7
        %v3006 = vsub.s32 %v3003, %v3005
        %v3007 = vrot.slane %v2999, %v3006
        %v3009 = vunpack.c.l.s4 1983009808
        %v3010 = vunpack.c.0.s8 %v3009
        %v3011 = vlaneseq
        %v3012 = vshrl.u32 %v3011, 7
        %v3013 = vsub.s32 %v3010, %v3012
        %v3014 = vrot.slane %v3000, %v3013
        %v3015 = vcombine.low %v2798, %v2822
        %v3016 = vcombine.high %v2798, %v2822
        %v3018 = vunpack.c.l.s4 1983009808
        %v3019 = vunpack.c.0.s8 %v3018
        %v3020 = vlaneseq
        %v3021 = vshrl.u32 %v3020, 7
        %v3022 = vsub.s32 %v3019, %v3021
        %v3023 = vrot.slane %v3015, %v3022
        %v3025 = vunpack.c.l.s4 1983009808
        %v3026 = vunpack.c.0.s8 %v3025
        %v3027 = vlaneseq
        %v3028 = vshrl.u32 %v3027, 7
        %v3029 = vsub.s32 %v3026, %v3028
        %v3030 = vrot.slane %v3016, %v3029
        %v3031 = vcombine.low %v2975, %v2991
        %v3032 = vcombine.high %v2975, %v2991
        %v3034 = vunpack.c.l.s4 1934713408
        %v3035 = vunpack.c.0.s8 %v3034
        %v3036 = vlaneseq
        %v3037 = vshrl.u32 %v3036, 7
        %v3038 = vsub.s32 %v3035, %v3037
        %v3039 = vrot.slane %v3031, %v3038
        %v3041 = vunpack.c.l.s4 1934713408
        %v3042 = vunpack.c.0.s8 %v3041
        %v3043 = vlaneseq
        %v3044 = vshrl.u32 %v3043, 7
        %v3045 = vsub.s32 %v3042, %v3044
        %v3046 = vrot.slane %v3032, %v3045
        %v3047 = vcombine.low %v2982, %v2998
        %v3048 = vcombine.high %v2982, %v2998
        %v3050 = vunpack.c.l.s4 1934713408
        %v3051 = vunpack.c.0.s8 %v3050
        %v3052 = vlaneseq
        %v3053 = vshrl.u32 %v3052, 7
        %v3054 = vsub.s32 %v3051, %v3053
        %v3055 = vrot.slane %v3047, %v3054
        %v3057 = vunpack.c.l.s4 1934713408
        %v3058 = vunpack.c.0.s8 %v3057
        %v3059 = vlaneseq
        %v3060 = vshrl.u32 %v3059, 7
        %v3061 = vsub.s32 %v3058, %v3060
        %v3062 = vrot.slane %v3048, %v3061
        %v3063 = vcombine.low %v3007, %v3023
        %v3064 = vcombine.high %v3007, %v3023
        %v3066 = vunpack.c.l.s4 1934713408
        %v3067 = vunpack.c.0.s8 %v3066
        %v3068 = vlaneseq
        %v3069 = vshrl.u32 %v3068, 7
        %v3070 = vsub.s32 %v3067, %v3069
        %v3071 = vrot.slane %v3063, %v3070
        %v3073 = vunpack.c.l.s4 1934713408
        %v3074 = vunpack.c.0.s8 %v3073
        %v3075 = vlaneseq
        %v3076 = vshrl.u32 %v3075, 7
        %v3077 = vsub.s32 %v3074, %v3076
        %v3078 = vrot.slane %v3064, %v3077
        %v3079 = vcombine.low %v3014, %v3030
        %v3080 = vcombine.high %v3014, %v3030
        %v3082 = vunpack.c.l.s4 1934713408
        %v3083 = vunpack.c.0.s8 %v3082
        %v3084 = vlaneseq
        %v3085 = vshrl.u32 %v3084, 7
        %v3086 = vsub.s32 %v3083, %v3085
        %v3087 = vrot.slane %v3079, %v3086
        %v3089 = vunpack.c.l.s4 1934713408
        %v3090 = vunpack.c.0.s8 %v3089
        %v3091 = vlaneseq
        %v3092 = vshrl.u32 %v3091, 7
        %v3093 = vsub.s32 %v3090, %v3092
        %v3094 = vrot.slane %v3080, %v3093
        %v3095 = vcombine.low %v3039, %v3071
        %v3096 = vcombine.high %v3039, %v3071
        %v3097 = vcombine.low %v3046, %v3078
        %v3098 = vcombine.high %v3046, %v3078
        %v3099 = vcombine.low %v3055, %v3087
        %v3100 = vcombine.high %v3055, %v3087
        %v3101 = vcombine.low %v3062, %v3094
        %v3102 = vcombine.high %v3062, %v3094
        %v3103 = vcombine.low %v945, %v2764
        %v3104 = vcombine.high %v945, %v2764
        %v3106 = vunpack.c.l.s4 1983009808
        %v3107 = vunpack.c.0.s8 %v3106
        %v3108 = vlaneseq
        %v3109 = vshrl.u32 %v3108, 7
        %v3110 = vsub.s32 %v3107, %v3109
        %v3111 = vrot.slane %v3103, %v3110
        %v3113 = vunpack.c.l.s4 1983009808
        %v3114 = vunpack.c.0.s8 %v3113
        %v3115 = vlaneseq
        %v3116 = vshrl.u32 %v3115, 7
        %v3117 = vsub.s32 %v3114, %v3116
        %v3118 = vrot.slane %v3104, %v3117
        %v3119 = vcombine.low %v2752, %v2776
        %v3120 = vcombine.high %v2752, %v2776
        %v3122 = vunpack.c.l.s4 1983009808
        %v3123 = vunpack.c.0.s8 %v3122
        %v3124 = vlaneseq
        %v3125 = vshrl.u32 %v3124, 7
        %v3126 = vsub.s32 %v3123, %v3125
        %v3127 = vrot.slane %v3119, %v3126
        %v3129 = vunpack.c.l.s4 1983009808
        %v3130 = vunpack.c.0.s8 %v3129
        %v3131 = vlaneseq
        %v3132 = vshrl.u32 %v3131, 7
        %v3133 = vsub.s32 %v3130, %v3132
        %v3134 = vrot.slane %v3120, %v3133
        %v3135 = vcombine.low %v2788, %v2812
        %v3136 = vcombine.high %v2788, %v2812
        %v3138 = vunpack.c.l.s4 1983009808
        %v3139 = vunpack.c.0.s8 %v3138
        %v3140 = vlaneseq
        %v3141 = vshrl.u32 %v3140, 7
        %v3142 = vsub.s32 %v3139, %v3141
        %v3143 = vrot.slane %v3135, %v3142
        %v3145 = vunpack.c.l.s4 1983009808
        %v3146 = vunpack.c.0.s8 %v3145
        %v3147 = vlaneseq
        %v3148 = vshrl.u32 %v3147, 7
        %v3149 = vsub.s32 %v3146, %v3148
        %v3150 = vrot.slane %v3136, %v3149
        %v3151 = vcombine.low %v2800, %v2824
        %v3152 = vcombine.high %v2800, %v2824
        %v3154 = vunpack.c.l.s4 1983009808
        %v3155 = vunpack.c.0.s8 %v3154
        %v3156 = vlaneseq
        %v3157 = vshrl.u32 %v3156, 7
        %v3158 = vsub.s32 %v3155, %v3157
        %v3159 = vrot.slane %v3151, %v3158
        %v3161 = vunpack.c.l.s4 1983009808
        %v3162 = vunpack.c.0.s8 %v3161
        %v3163 = vlaneseq
        %v3164 = vshrl.u32 %v3163, 7
        %v3165 = vsub.s32 %v3162, %v3164
        %v3166 = vrot.slane %v3152, %v3165
        %v3167 = vcombine.low %v3111, %v3127
        %v3168 = vcombine.high %v3111, %v3127
        %v3170 = vunpack.c.l.s4 1934713408
        %v3171 = vunpack.c.0.s8 %v3170
        %v3172 = vlaneseq
        %v3173 = vshrl.u32 %v3172, 7
        %v3174 = vsub.s32 %v3171, %v3173
        %v3175 = vrot.slane %v3167, %v3174
        %v3177 = vunpack.c.l.s4 1934713408
        %v3178 = vunpack.c.0.s8 %v3177
        %v3179 = vlaneseq
        %v3180 = vshrl.u32 %v3179, 7
        %v3181 = vsub.s32 %v3178, %v3180
        %v3182 = vrot.slane %v3168, %v3181
        %v3183 = vcombine.low %v3118, %v3134
        %v3184 = vcombine.high %v3118, %v3134
        %v3186 = vunpack.c.l.s4 1934713408
        %v3187 = vunpack.c.0.s8 %v3186
        %v3188 = vlaneseq
        %v3189 = vshrl.u32 %v3188, 7
        %v3190 = vsub.s32 %v3187, %v3189
        %v3191 = vrot.slane %v3183, %v3190
        %v3193 = vunpack.c.l.s4 1934713408
        %v3194 = vunpack.c.0.s8 %v3193
        %v3195 = vlaneseq
        %v3196 = vshrl.u32 %v3195, 7
        %v3197 = vsub.s32 %v3194, %v3196
        %v3198 = vrot.slane %v3184, %v3197
        %v3199 = vcombine.low %v3143, %v3159
        %v3200 = vcombine.high %v3143, %v3159
        %v3202 = vunpack.c.l.s4 1934713408
        %v3203 = vunpack.c.0.s8 %v3202
        %v3204 = vlaneseq
        %v3205 = vshrl.u32 %v3204, 7
        %v3206 = vsub.s32 %v3203, %v3205
        %v3207 = vrot.slane %v3199, %v3206
        %v3209 = vunpack.c.l.s4 1934713408
        %v3210 = vunpack.c.0.s8 %v3209
        %v3211 = vlaneseq
        %v3212 = vshrl.u32 %v3211, 7
        %v3213 = vsub.s32 %v3210, %v3212
        %v3214 = vrot.slane %v3200, %v3213
        %v3215 = vcombine.low %v3150, %v3166
        %v3216 = vcombine.high %v3150, %v3166
        %v3218 = vunpack.c.l.s4 1934713408
        %v3219 = vunpack.c.0.s8 %v3218
        %v3220 = vlaneseq
        %v3221 = vshrl.u32 %v3220, 7
        %v3222 = vsub.s32 %v3219, %v3221
        %v3223 = vrot.slane %v3215, %v3222
        %v3225 = vunpack.c.l.s4 1934713408
        %v3226 = vunpack.c.0.s8 %v3225
        %v3227 = vlaneseq
        %v3228 = vshrl.u32 %v3227, 7
        %v3229 = vsub.s32 %v3226, %v3228
        %v3230 = vrot.slane %v3216, %v3229
        %v3231 = vcombine.low %v3175, %v3207
        %v3232 = vcombine.high %v3175, %v3207
        %v3233 = vcombine.low %v3182, %v3214
        %v3234 = vcombine.high %v3182, %v3214
        %v3235 = vcombine.low %v3191, %v3223
        %v3236 = vcombine.high %v3191, %v3223
        %v3237 = vcombine.low %v3198, %v3230
        %v3238 = vcombine.high %v3198, %v3230
        %v3239 = vcombine.low %v946, %v2766
        %v3240 = vcombine.high %v946, %v2766
        %v3242 = vunpack.c.l.s4 1983009808
        %v3243 = vunpack.c.0.s8 %v3242
        %v3244 = vlaneseq
        %v3245 = vshrl.u32 %v3244, 7
        %v3246 = vsub.s32 %v3243, %v3245
        %v3247 = vrot.slane %v3239, %v3246
        %v3249 = vunpack.c.l.s4 1983009808
        %v3250 = vunpack.c.0.s8 %v3249
        %v3251 = vlaneseq
        %v3252 = vshrl.u32 %v3251, 7
        %v3253 = vsub.s32 %v3250, %v3252
        %v3254 = vrot.slane %v3240, %v3253
        %v3255 = vcombine.low %v2754, %v2778
        %v3256 = vcombine.high %v2754, %v2778
        %v3258 = vunpack.c.l.s4 1983009808
        %v3259 = vunpack.c.0.s8 %v3258
        %v3260 = vlaneseq
        %v3261 = vshrl.u32 %v3260, 7
        %v3262 = vsub.s32 %v3259, %v3261
        %v3263 = vrot.slane %v3255, %v3262
        %v3265 = vunpack.c.l.s4 1983009808
        %v3266 = vunpack.c.0.s8 %v3265
        %v3267 = vlaneseq
        %v3268 = vshrl.u32 %v3267, 7
        %v3269 = vsub.s32 %v3266, %v3268
        %v3270 = vrot.slane %v3256, %v3269
        %v3271 = vcombine.low %v2790, %v2814
        %v3272 = vcombine.high %v2790, %v2814
        %v3274 = vunpack.c.l.s4 1983009808
        %v3275 = vunpack.c.0.s8 %v3274
        %v3276 = vlaneseq
        %v3277 = vshrl.u32 %v3276, 7
        %v3278 = vsub.s32 %v3275, %v3277
        %v3279 = vrot.slane %v3271, %v3278
        %v3281 = vunpack.c.l.s4 1983009808
        %v3282 = vunpack.c.0.s8 %v3281
        %v3283 = vlaneseq
        %v3284 = vshrl.u32 %v3283, 7
        %v3285 = vsub.s32 %v3282, %v3284
        %v3286 = vrot.slane %v3272, %v3285
        %v3287 = vcombine.low %v2802, %v2826
        %v3288 = vcombine.high %v2802, %v2826
        %v3290 = vunpack.c.l.s4 1983009808
        %v3291 = vunpack.c.0.s8 %v3290
        %v3292 = vlaneseq
        %v3293 = vshrl.u32 %v3292, 7
        %v3294 = vsub.s32 %v3291, %v3293
        %v3295 = vrot.slane %v3287, %v3294
        %v3297 = vunpack.c.l.s4 1983009808
        %v3298 = vunpack.c.0.s8 %v3297
        %v3299 = vlaneseq
        %v3300 = vshrl.u32 %v3299, 7
        %v3301 = vsub.s32 %v3298, %v3300
        %v3302 = vrot.slane %v3288, %v3301
        %v3303 = vcombine.low %v3247, %v3263
        %v3304 = vcombine.high %v3247, %v3263
        %v3306 = vunpack.c.l.s4 1934713408
        %v3307 = vunpack.c.0.s8 %v3306
        %v3308 = vlaneseq
        %v3309 = vshrl.u32 %v3308, 7
        %v3310 = vsub.s32 %v3307, %v3309
        %v3311 = vrot.slane %v3303, %v3310
        %v3313 = vunpack.c.l.s4 1934713408
        %v3314 = vunpack.c.0.s8 %v3313
        %v3315 = vlaneseq
        %v3316 = vshrl.u32 %v3315, 7
        %v3317 = vsub.s32 %v3314, %v3316
        %v3318 = vrot.slane %v3304, %v3317
        %v3319 = vcombine.low %v3254, %v3270
        %v3320 = vcombine.high %v3254, %v3270
        %v3322 = vunpack.c.l.s4 1934713408
        %v3323 = vunpack.c.0.s8 %v3322
        %v3324 = vlaneseq
        %v3325 = vshrl.u32 %v3324, 7
        %v3326 = vsub.s32 %v3323, %v3325
        %v3327 = vrot.slane %v3319, %v3326
        %v3329 = vunpack.c.l.s4 1934713408
        %v3330 = vunpack.c.0.s8 %v3329
        %v3331 = vlaneseq
        %v3332 = vshrl.u32 %v3331, 7
        %v3333 = vsub.s32 %v3330, %v3332
        %v3334 = vrot.slane %v3320, %v3333
        %v3335 = vcombine.low %v3279, %v3295
        %v3336 = vcombine.high %v3279, %v3295
        %v3338 = vunpack.c.l.s4 1934713408
        %v3339 = vunpack.c.0.s8 %v3338
        %v3340 = vlaneseq
        %v3341 = vshrl.u32 %v3340, 7
        %v3342 = vsub.s32 %v3339, %v3341
        %v3343 = vrot.slane %v3335, %v3342
        %v3345 = vunpack.c.l.s4 1934713408
        %v3346 = vunpack.c.0.s8 %v3345
        %v3347 = vlaneseq
        %v3348 = vshrl.u32 %v3347, 7
        %v3349 = vsub.s32 %v3346, %v3348
        %v3350 = vrot.slane %v3336, %v3349
        %v3351 = vcombine.low %v3286, %v3302
        %v3352 = vcombine.high %v3286, %v3302
        %v3354 = vunpack.c.l.s4 1934713408
        %v3355 = vunpack.c.0.s8 %v3354
        %v3356 = vlaneseq
        %v3357 = vshrl.u32 %v3356, 7
        %v3358 = vsub.s32 %v3355, %v3357
        %v3359 = vrot.slane %v3351, %v3358
        %v3361 = vunpack.c.l.s4 1934713408
        %v3362 = vunpack.c.0.s8 %v3361
        %v3363 = vlaneseq
        %v3364 = vshrl.u32 %v3363, 7
        %v3365 = vsub.s32 %v3362, %v3364
        %v3366 = vrot.slane %v3352, %v3365
        %v3367 = vcombine.low %v3311, %v3343
        %v3368 = vcombine.high %v3311, %v3343
        %v3369 = vcombine.low %v3318, %v3350
        %v3370 = vcombine.high %v3318, %v3350
        %v3371 = vcombine.low %v3327, %v3359
        %v3372 = vcombine.high %v3327, %v3359
        %v3373 = vcombine.low %v3334, %v3366
        %v3374 = vcombine.high %v3334, %v3366
        %v3375 = vcombine.low %v2959, %v2961
        %v3376 = vcombine.high %v2959, %v2961
        %v3378 = vunpack.c.l.s4 1983009808
        %v3379 = vunpack.c.0.s8 %v3378
        %v3380 = vlaneseq
        %v3381 = vshrl.u32 %v3380, 7
        %v3382 = vsub.s32 %v3379, %v3381
        %v3383 = vrot.slane %v3375, %v3382
        %v3385 = vunpack.c.l.s4 1983009808
        %v3386 = vunpack.c.0.s8 %v3385
        %v3387 = vlaneseq
        %v3388 = vshrl.u32 %v3387, 7
        %v3389 = vsub.s32 %v3386, %v3388
        %v3390 = vrot.slane %v3376, %v3389
        %v3391 = vcombine.low %v2960, %v2962
        %v3392 = vcombine.high %v2960, %v2962
        %v3394 = vunpack.c.l.s4 1983009808
        %v3395 = vunpack.c.0.s8 %v3394
        %v3396 = vlaneseq
        %v3397 = vshrl.u32 %v3396, 7
        %v3398 = vsub.s32 %v3395, %v3397
        %v3399 = vrot.slane %v3391, %v3398
        %v3401 = vunpack.c.l.s4 1983009808
        %v3402 = vunpack.c.0.s8 %v3401
        %v3403 = vlaneseq
        %v3404 = vshrl.u32 %v3403, 7
        %v3405 = vsub.s32 %v3402, %v3404
        %v3406 = vrot.slane %v3392, %v3405
        %v3407 = vcombine.low %v2963, %v2965
        %v3408 = vcombine.high %v2963, %v2965
        %v3410 = vunpack.c.l.s4 1983009808
        %v3411 = vunpack.c.0.s8 %v3410
        %v3412 = vlaneseq
        %v3413 = vshrl.u32 %v3412, 7
        %v3414 = vsub.s32 %v3411, %v3413
        %v3415 = vrot.slane %v3407, %v3414
        %v3417 = vunpack.c.l.s4 1983009808
        %v3418 = vunpack.c.0.s8 %v3417
        %v3419 = vlaneseq
        %v3420 = vshrl.u32 %v3419, 7
        %v3421 = vsub.s32 %v3418, %v3420
        %v3422 = vrot.slane %v3408, %v3421
        %v3423 = vcombine.low %v2964, %v2966
        %v3424 = vcombine.high %v2964, %v2966
        %v3426 = vunpack.c.l.s4 1983009808
        %v3427 = vunpack.c.0.s8 %v3426
        %v3428 = vlaneseq
        %v3429 = vshrl.u32 %v3428, 7
        %v3430 = vsub.s32 %v3427, %v3429
        %v3431 = vrot.slane %v3423, %v3430
        %v3433 = vunpack.c.l.s4 1983009808
        %v3434 = vunpack.c.0.s8 %v3433
        %v3435 = vlaneseq
        %v3436 = vshrl.u32 %v3435, 7
        %v3437 = vsub.s32 %v3434, %v3436
        %v3438 = vrot.slane %v3424, %v3437
        %v3439 = vcombine.low %v3383, %v3399
        %v3440 = vcombine.high %v3383, %v3399
        %v3442 = vunpack.c.l.s4 1934713408
        %v3443 = vunpack.c.0.s8 %v3442
        %v3444 = vlaneseq
        %v3445 = vshrl.u32 %v3444, 7
        %v3446 = vsub.s32 %v3443, %v3445
        %v3447 = vrot.slane %v3439, %v3446
        %v3449 = vunpack.c.l.s4 1934713408
        %v3450 = vunpack.c.0.s8 %v3449
        %v3451 = vlaneseq
        %v3452 = vshrl.u32 %v3451, 7
        %v3453 = vsub.s32 %v3450, %v3452
        %v3454 = vrot.slane %v3440, %v3453
        %v3455 = vcombine.low %v3390, %v3406
        %v3456 = vcombine.high %v3390, %v3406
        %v3458 = vunpack.c.l.s4 1934713408
        %v3459 = vunpack.c.0.s8 %v3458
        %v3460 = vlaneseq
        %v3461 = vshrl.u32 %v3460, 7
        %v3462 = vsub.s32 %v3459, %v3461
        %v3463 = vrot.slane %v3455, %v3462
        %v3465 = vunpack.c.l.s4 1934713408
        %v3466 = vunpack.c.0.s8 %v3465
        %v3467 = vlaneseq
        %v3468 = vshrl.u32 %v3467, 7
        %v3469 = vsub.s32 %v3466, %v3468
        %v3470 = vrot.slane %v3456, %v3469
        %v3471 = vcombine.low %v3415, %v3431
        %v3472 = vcombine.high %v3415, %v3431
        %v3474 = vunpack.c.l.s4 1934713408
        %v3475 = vunpack.c.0.s8 %v3474
        %v3476 = vlaneseq
        %v3477 = vshrl.u32 %v3476, 7
        %v3478 = vsub.s32 %v3475, %v3477
        %v3479 = vrot.slane %v3471, %v3478
        %v3481 = vunpack.c.l.s4 1934713408
        %v3482 = vunpack.c.0.s8 %v3481
        %v3483 = vlaneseq
        %v3484 = vshrl.u32 %v3483, 7
        %v3485 = vsub.s32 %v3482, %v3484
        %v3486 = vrot.slane %v3472, %v3485
        %v3487 = vcombine.low %v3422, %v3438
        %v3488 = vcombine.high %v3422, %v3438
        %v3490 = vunpack.c.l.s4 1934713408
        %v3491 = vunpack.c.0.s8 %v3490
        %v3492 = vlaneseq
        %v3493 = vshrl.u32 %v3492, 7
        %v3494 = vsub.s32 %v3491, %v3493
        %v3495 = vrot.slane %v3487, %v3494
        %v3497 = vunpack.c.l.s4 1934713408
        %v3498 = vunpack.c.0.s8 %v3497
        %v3499 = vlaneseq
        %v3500 = vshrl.u32 %v3499, 7
        %v3501 = vsub.s32 %v3498, %v3500
        %v3502 = vrot.slane %v3488, %v3501
        %v3503 = vcombine.low %v3447, %v3479
        %v3504 = vcombine.high %v3447, %v3479
        %v3505 = vcombine.low %v3454, %v3486
        %v3506 = vcombine.high %v3454, %v3486
        %v3507 = vcombine.low %v3463, %v3495
        %v3508 = vcombine.high %v3463, %v3495
        %v3509 = vcombine.low %v3470, %v3502
        %v3510 = vcombine.high %v3470, %v3502
        %v3511 = vcombine.low %v3095, %v3097
        %v3512 = vcombine.high %v3095, %v3097
        %v3514 = vunpack.c.l.s4 1983009808
        %v3515 = vunpack.c.0.s8 %v3514
        %v3516 = vlaneseq
        %v3517 = vshrl.u32 %v3516, 7
        %v3518 = vsub.s32 %v3515, %v3517
        %v3519 = vrot.slane %v3511, %v3518
        %v3521 = vunpack.c.l.s4 1983009808
        %v3522 = vunpack.c.0.s8 %v3521
        %v3523 = vlaneseq
        %v3524 = vshrl.u32 %v3523, 7
        %v3525 = vsub.s32 %v3522, %v3524
        %v3526 = vrot.slane %v3512, %v3525
        %v3527 = vcombine.low %v3096, %v3098
        %v3528 = vcombine.high %v3096, %v3098
        %v3530 = vunpack.c.l.s4 1983009808
        %v3531 = vunpack.c.0.s8 %v3530
        %v3532 = vlaneseq
        %v3533 = vshrl.u32 %v3532, 7
        %v3534 = vsub.s32 %v3531, %v3533
        %v3535 = vrot.slane %v3527, %v3534
        %v3537 = vunpack.c.l.s4 1983009808
        %v3538 = vunpack.c.0.s8 %v3537
        %v3539 = vlaneseq
        %v3540 = vshrl.u32 %v3539, 7
        %v3541 = vsub.s32 %v3538, %v3540
        %v3542 = vrot.slane %v3528, %v3541
        %v3543 = vcombine.low %v3099, %v3101
        %v3544 = vcombine.high %v3099, %v3101
        %v3546 = vunpack.c.l.s4 1983009808
        %v3547 = vunpack.c.0.s8 %v3546
        %v3548 = vlaneseq
        %v3549 = vshrl.u32 %v3548, 7
        %v3550 = vsub.s32 %v3547, %v3549
        %v3551 = vrot.slane %v3543, %v3550
        %v3553 = vunpack.c.l.s4 1983009808
        %v3554 = vunpack.c.0.s8 %v3553
        %v3555 = vlaneseq
        %v3556 = vshrl.u32 %v3555, 7
        %v3557 = vsub.s32 %v3554, %v3556
        %v3558 = vrot.slane %v3544, %v3557
        %v3559 = vcombine.low %v3100, %v3102
        %v3560 = vcombine.high %v3100, %v3102
        %v3562 = vunpack.c.l.s4 1983009808
        %v3563 = vunpack.c.0.s8 %v3562
        %v3564 = vlaneseq
        %v3565 = vshrl.u32 %v3564, 7
        %v3566 = vsub.s32 %v3563, %v3565
        %v3567 = vrot.slane %v3559, %v3566
        %v3569 = vunpack.c.l.s4 1983009808
        %v3570 = vunpack.c.0.s8 %v3569
        %v3571 = vlaneseq
        %v3572 = vshrl.u32 %v3571, 7
        %v3573 = vsub.s32 %v3570, %v3572
        %v3574 = vrot.slane %v3560, %v3573
        %v3575 = vcombine.low %v3519, %v3535
        %v3576 = vcombine.high %v3519, %v3535
        %v3578 = vunpack.c.l.s4 1934713408
        %v3579 = vunpack.c.0.s8 %v3578
        %v3580 = vlaneseq
        %v3581 = vshrl.u32 %v3580, 7
        %v3582 = vsub.s32 %v3579, %v3581
        %v3583 = vrot.slane %v3575, %v3582
        %v3585 = vunpack.c.l.s4 1934713408
        %v3586 = vunpack.c.0.s8 %v3585
        %v3587 = vlaneseq
        %v3588 = vshrl.u32 %v3587, 7
        %v3589 = vsub.s32 %v3586, %v3588
        %v3590 = vrot.slane %v3576, %v3589
        %v3591 = vcombine.low %v3526, %v3542
        %v3592 = vcombine.high %v3526, %v3542
        %v3594 = vunpack.c.l.s4 1934713408
        %v3595 = vunpack.c.0.s8 %v3594
        %v3596 = vlaneseq
        %v3597 = vshrl.u32 %v3596, 7
        %v3598 = vsub.s32 %v3595, %v3597
        %v3599 = vrot.slane %v3591, %v3598
        %v3601 = vunpack.c.l.s4 1934713408
        %v3602 = vunpack.c.0.s8 %v3601
        %v3603 = vlaneseq
        %v3604 = vshrl.u32 %v3603, 7
        %v3605 = vsub.s32 %v3602, %v3604
        %v3606 = vrot.slane %v3592, %v3605
        %v3607 = vcombine.low %v3551, %v3567
        %v3608 = vcombine.high %v3551, %v3567
        %v3610 = vunpack.c.l.s4 1934713408
        %v3611 = vunpack.c.0.s8 %v3610
        %v3612 = vlaneseq
        %v3613 = vshrl.u32 %v3612, 7
        %v3614 = vsub.s32 %v3611, %v3613
        %v3615 = vrot.slane %v3607, %v3614
        %v3617 = vunpack.c.l.s4 1934713408
        %v3618 = vunpack.c.0.s8 %v3617
        %v3619 = vlaneseq
        %v3620 = vshrl.u32 %v3619, 7
        %v3621 = vsub.s32 %v3618, %v3620
        %v3622 = vrot.slane %v3608, %v3621
        %v3623 = vcombine.low %v3558, %v3574
        %v3624 = vcombine.high %v3558, %v3574
        %v3626 = vunpack.c.l.s4 1934713408
        %v3627 = vunpack.c.0.s8 %v3626
        %v3628 = vlaneseq
        %v3629 = vshrl.u32 %v3628, 7
        %v3630 = vsub.s32 %v3627, %v3629
        %v3631 = vrot.slane %v3623, %v3630
        %v3633 = vunpack.c.l.s4 1934713408
        %v3634 = vunpack.c.0.s8 %v3633
        %v3635 = vlaneseq
        %v3636 = vshrl.u32 %v3635, 7
        %v3637 = vsub.s32 %v3634, %v3636
        %v3638 = vrot.slane %v3624, %v3637
        %v3639 = vcombine.low %v3583, %v3615
        %v3640 = vcombine.high %v3583, %v3615
        %v3641 = vcombine.low %v3590, %v3622
        %v3642 = vcombine.high %v3590, %v3622
        %v3643 = vcombine.low %v3599, %v3631
        %v3644 = vcombine.high %v3599, %v3631
        %v3645 = vcombine.low %v3606, %v3638
        %v3646 = vcombine.high %v3606, %v3638
        %v3647 = vcombine.low %v3231, %v3233
        %v3648 = vcombine.high %v3231, %v3233
        %v3650 = vunpack.c.l.s4 1983009808
        %v3651 = vunpack.c.0.s8 %v3650
        %v3652 = vlaneseq
        %v3653 = vshrl.u32 %v3652, 7
        %v3654 = vsub.s32 %v3651, %v3653
        %v3655 = vrot.slane %v3647, %v3654
        %v3657 = vunpack.c.l.s4 1983009808
        %v3658 = vunpack.c.0.s8 %v3657
        %v3659 = vlaneseq
        %v3660 = vshrl.u32 %v3659, 7
        %v3661 = vsub.s32 %v3658, %v3660
        %v3662 = vrot.slane %v3648, %v3661
        %v3663 = vcombine.low %v3232, %v3234
        %v3664 = vcombine.high %v3232, %v3234
        %v3666 = vunpack.c.l.s4 1983009808
        %v3667 = vunpack.c.0.s8 %v3666
        %v3668 = vlaneseq
        %v3669 = vshrl.u32 %v3668, 7
        %v3670 = vsub.s32 %v3667, %v3669
        %v3671 = vrot.slane %v3663, %v3670
        %v3673 = vunpack.c.l.s4 1983009808
        %v3674 = vunpack.c.0.s8 %v3673
        %v3675 = vlaneseq
        %v3676 = vshrl.u32 %v3675, 7
        %v3677 = vsub.s32 %v3674, %v3676
        %v3678 = vrot.slane %v3664, %v3677
        %v3679 = vcombine.low %v3235, %v3237
        %v3680 = vcombine.high %v3235, %v3237
        %v3682 = vunpack.c.l.s4 1983009808
        %v3683 = vunpack.c.0.s8 %v3682
        %v3684 = vlaneseq
        %v3685 = vshrl.u32 %v3684, 7
        %v3686 = vsub.s32 %v3683, %v3685
        %v3687 = vrot.slane %v3679, %v3686
        %v3689 = vunpack.c.l.s4 1983009808
        %v3690 = vunpack.c.0.s8 %v3689
        %v3691 = vlaneseq
        %v3692 = vshrl.u32 %v3691, 7
        %v3693 = vsub.s32 %v3690, %v3692
        %v3694 = vrot.slane %v3680, %v3693
        %v3695 = vcombine.low %v3236, %v3238
        %v3696 = vcombine.high %v3236, %v3238
        %v3698 = vunpack.c.l.s4 1983009808
        %v3699 = vunpack.c.0.s8 %v3698
        %v3700 = vlaneseq
        %v3701 = vshrl.u32 %v3700, 7
        %v3702 = vsub.s32 %v3699, %v3701
        %v3703 = vrot.slane %v3695, %v3702
        %v3705 = vunpack.c.l.s4 1983009808
        %v3706 = vunpack.c.0.s8 %v3705
        %v3707 = vlaneseq
        %v3708 = vshrl.u32 %v3707, 7
        %v3709 = vsub.s32 %v3706, %v3708
        %v3710 = vrot.slane %v3696, %v3709
        %v3711 = vcombine.low %v3655, %v3671
        %v3712 = vcombine.high %v3655, %v3671
        %v3714 = vunpack.c.l.s4 1934713408
        %v3715 = vunpack.c.0.s8 %v3714
        %v3716 = vlaneseq
        %v3717 = vshrl.u32 %v3716, 7
        %v3718 = vsub.s32 %v3715, %v3717
        %v3719 = vrot.slane %v3711, %v3718
        %v3721 = vunpack.c.l.s4 1934713408
        %v3722 = vunpack.c.0.s8 %v3721
        %v3723 = vlaneseq
        %v3724 = vshrl.u32 %v3723, 7
        %v3725 = vsub.s32 %v3722, %v3724
        %v3726 = vrot.slane %v3712, %v3725
        %v3727 = vcombine.low %v3662, %v3678
        %v3728 = vcombine.high %v3662, %v3678
        %v3730 = vunpack.c.l.s4 1934713408
        %v3731 = vunpack.c.0.s8 %v3730
        %v3732 = vlaneseq
        %v3733 = vshrl.u32 %v3732, 7
        %v3734 = vsub.s32 %v3731, %v3733
        %v3735 = vrot.slane %v3727, %v3734
        %v3737 = vunpack.c.l.s4 1934713408
        %v3738 = vunpack.c.0.s8 %v3737
        %v3739 = vlaneseq
        %v3740 = vshrl.u32 %v3739, 7
        %v3741 = vsub.s32 %v3738, %v3740
        %v3742 = vrot.slane %v3728, %v3741
        %v3743 = vcombine.low %v3687, %v3703
        %v3744 = vcombine.high %v3687, %v3703
        %v3746 = vunpack.c.l.s4 1934713408
        %v3747 = vunpack.c.0.s8 %v3746
        %v3748 = vlaneseq
        %v3749 = vshrl.u32 %v3748, 7
        %v3750 = vsub.s32 %v3747, %v3749
        %v3751 = vrot.slane %v3743, %v3750
        %v3753 = vunpack.c.l.s4 1934713408
        %v3754 = vunpack.c.0.s8 %v3753
        %v3755 = vlaneseq
        %v3756 = vshrl.u32 %v3755, 7
        %v3757 = vsub.s32 %v3754, %v3756
        %v3758 = vrot.slane %v3744, %v3757
        %v3759 = vcombine.low %v3694, %v3710
        %v3760 = vcombine.high %v3694, %v3710
        %v3762 = vunpack.c.l.s4 1934713408
        %v3763 = vunpack.c.0.s8 %v3762
        %v3764 = vlaneseq
        %v3765 = vshrl.u32 %v3764, 7
        %v3766 = vsub.s32 %v3763, %v3765
        %v3767 = vrot.slane %v3759, %v3766
        %v3769 = vunpack.c.l.s4 1934713408
        %v3770 = vunpack.c.0.s8 %v3769
        %v3771 = vlaneseq
        %v3772 = vshrl.u32 %v3771, 7
        %v3773 = vsub.s32 %v3770, %v3772
        %v3774 = vrot.slane %v3760, %v3773
        %v3775 = vcombine.low %v3719, %v3751
        %v3776 = vcombine.high %v3719, %v3751
        %v3777 = vcombine.low %v3726, %v3758
        %v3778 = vcombine.high %v3726, %v3758
        %v3779 = vcombine.low %v3735, %v3767
        %v3780 = vcombine.high %v3735, %v3767
        %v3781 = vcombine.low %v3742, %v3774
        %v3782 = vcombine.high %v3742, %v3774
        %v3783 = vcombine.low %v3367, %v3369
        %v3784 = vcombine.high %v3367, %v3369
        %v3786 = vunpack.c.l.s4 1983009808
        %v3787 = vunpack.c.0.s8 %v3786
        %v3788 = vlaneseq
        %v3789 = vshrl.u32 %v3788, 7
        %v3790 = vsub.s32 %v3787, %v3789
        %v3791 = vrot.slane %v3783, %v3790
        %v3793 = vunpack.c.l.s4 1983009808
        %v3794 = vunpack.c.0.s8 %v3793
        %v3795 = vlaneseq
        %v3796 = vshrl.u32 %v3795, 7
        %v3797 = vsub.s32 %v3794, %v3796
        %v3798 = vrot.slane %v3784, %v3797
        %v3799 = vcombine.low %v3368, %v3370
        %v3800 = vcombine.high %v3368, %v3370
        %v3802 = vunpack.c.l.s4 1983009808
        %v3803 = vunpack.c.0.s8 %v3802
        %v3804 = vlaneseq
        %v3805 = vshrl.u32 %v3804, 7
        %v3806 = vsub.s32 %v3803, %v3805
        %v3807 = vrot.slane %v3799, %v3806
        %v3809 = vunpack.c.l.s4 1983009808
        %v3810 = vunpack.c.0.s8 %v3809
        %v3811 = vlaneseq
        %v3812 = vshrl.u32 %v3811, 7
        %v3813 = vsub.s32 %v3810, %v3812
        %v3814 = vrot.slane %v3800, %v3813
        %v3815 = vcombine.low %v3371, %v3373
        %v3816 = vcombine.high %v3371, %v3373
        %v3818 = vunpack.c.l.s4 1983009808
        %v3819 = vunpack.c.0.s8 %v3818
        %v3820 = vlaneseq
        %v3821 = vshrl.u32 %v3820, 7
        %v3822 = vsub.s32 %v3819, %v3821
        %v3823 = vrot.slane %v3815, %v3822
        %v3825 = vunpack.c.l.s4 1983009808
        %v3826 = vunpack.c.0.s8 %v3825
        %v3827 = vlaneseq
        %v3828 = vshrl.u32 %v3827, 7
        %v3829 = vsub.s32 %v3826, %v3828
        %v3830 = vrot.slane %v3816, %v3829
        %v3831 = vcombine.low %v3372, %v3374
        %v3832 = vcombine.high %v3372, %v3374
        %v3834 = vunpack.c.l.s4 1983009808
        %v3835 = vunpack.c.0.s8 %v3834
        %v3836 = vlaneseq
        %v3837 = vshrl.u32 %v3836, 7
        %v3838 = vsub.s32 %v3835, %v3837
        %v3839 = vrot.slane %v3831, %v3838
        %v3841 = vunpack.c.l.s4 1983009808
        %v3842 = vunpack.c.0.s8 %v3841
        %v3843 = vlaneseq
        %v3844 = vshrl.u32 %v3843, 7
        %v3845 = vsub.s32 %v3842, %v3844
        %v3846 = vrot.slane %v3832, %v3845
        %v3847 = vcombine.low %v3791, %v3807
        %v3848 = vcombine.high %v3791, %v3807
        %v3850 = vunpack.c.l.s4 1934713408
        %v3851 = vunpack.c.0.s8 %v3850
        %v3852 = vlaneseq
        %v3853 = vshrl.u32 %v3852, 7
        %v3854 = vsub.s32 %v3851, %v3853
        %v3855 = vrot.slane %v3847, %v3854
        %v3857 = vunpack.c.l.s4 1934713408
        %v3858 = vunpack.c.0.s8 %v3857
        %v3859 = vlaneseq
        %v3860 = vshrl.u32 %v3859, 7
        %v3861 = vsub.s32 %v3858, %v3860
        %v3862 = vrot.slane %v3848, %v3861
        %v3863 = vcombine.low %v3798, %v3814
        %v3864 = vcombine.high %v3798, %v3814
        %v3866 = vunpack.c.l.s4 1934713408
        %v3867 = vunpack.c.0.s8 %v3866
        %v3868 = vlaneseq
        %v3869 = vshrl.u32 %v3868, 7
        %v3870 = vsub.s32 %v3867, %v3869
        %v3871 = vrot.slane %v3863, %v3870
        %v3873 = vunpack.c.l.s4 1934713408
        %v3874 = vunpack.c.0.s8 %v3873
        %v3875 = vlaneseq
        %v3876 = vshrl.u32 %v3875, 7
        %v3877 = vsub.s32 %v3874, %v3876
        %v3878 = vrot.slane %v3864, %v3877
        %v3879 = vcombine.low %v3823, %v3839
        %v3880 = vcombine.high %v3823, %v3839
        %v3882 = vunpack.c.l.s4 1934713408
        %v3883 = vunpack.c.0.s8 %v3882
        %v3884 = vlaneseq
        %v3885 = vshrl.u32 %v3884, 7
        %v3886 = vsub.s32 %v3883, %v3885
        %v3887 = vrot.slane %v3879, %v3886
        %v3889 = vunpack.c.l.s4 1934713408
        %v3890 = vunpack.c.0.s8 %v3889
        %v3891 = vlaneseq
        %v3892 = vshrl.u32 %v3891, 7
        %v3893 = vsub.s32 %v3890, %v3892
        %v3894 = vrot.slane %v3880, %v3893
        %v3895 = vcombine.low %v3830, %v3846
        %v3896 = vcombine.high %v3830, %v3846
        %v3898 = vunpack.c.l.s4 1934713408
        %v3899 = vunpack.c.0.s8 %v3898
        %v3900 = vlaneseq
        %v3901 = vshrl.u32 %v3900, 7
        %v3902 = vsub.s32 %v3899, %v3901
        %v3903 = vrot.slane %v3895, %v3902
        %v3905 = vunpack.c.l.s4 1934713408
        %v3906 = vunpack.c.0.s8 %v3905
        %v3907 = vlaneseq
        %v3908 = vshrl.u32 %v3907, 7
        %v3909 = vsub.s32 %v3906, %v3908
        %v3910 = vrot.slane %v3896, %v3909
        %v3911 = vcombine.low %v3855, %v3887
        %v3912 = vcombine.high %v3855, %v3887
        %v3913 = vcombine.low %v3862, %v3894
        %v3914 = vcombine.high %v3862, %v3894
        %v3915 = vcombine.low %v3871, %v3903
        %v3916 = vcombine.high %v3871, %v3903
        %v3917 = vcombine.low %v3878, %v3910
        %v3918 = vcombine.high %v3878, %v3910
        %v3919 = vpack.c.bf16 %v3639, %v3503
        %v3920 = vpack.c.bf16 %v3640, %v3504
        %v3921 = vpack.c.bf16 %v3641, %v3505
        %v3922 = vpack.c.bf16 %v3642, %v3506
        %v3923 = vpack.c.bf16 %v3643, %v3507
        %v3924 = vpack.c.bf16 %v3644, %v3508
        %v3925 = vpack.c.bf16 %v3645, %v3509
        %v3926 = vpack.c.bf16 %v3646, %v3510
        %v3927 = vpack.c.bf16 %v3911, %v3775
        %v3928 = vpack.c.bf16 %v3912, %v3776
        %v3929 = vpack.c.bf16 %v3913, %v3777
        %v3930 = vpack.c.bf16 %v3914, %v3778
        %v3931 = vpack.c.bf16 %v3915, %v3779
        %v3932 = vpack.c.bf16 %v3916, %v3780
        %v3933 = vpack.c.bf16 %v3917, %v3781
        %v3934 = vpack.c.bf16 %v3918, %v3782
        %vm3935 = vcmask 130048
        %v3937 = vsel %vm3935, %v1535, 0
        %v3940 = vsel %vm3935, %v2727, 0
        %3942 = vmatprep.subr.bf16.mxu0 0
        %3943 = vmatpush1.bf16.xpose.msra.mxu0 %v3940
        %3944 = vmatprep.subr.bf16.mxu0 0
        %3945 = vmatpush1.bf16.xpose.msra.mxu0 0
        %3946 = vmatprep.subr.bf16.mxu0 0
        %3947 = vmatpush1.bf16.xpose.msra.mxu0 0
        %3948 = vmatprep.subr.bf16.mxu0 0
        %3949 = vmatpush1.bf16.xpose.msra.mxu0 0
        %3950 = vmatprep.subr.bf16.mxu0 0
        %3951 = vmatpush1.bf16.xpose.msra.mxu0 0
        %3952 = vmatprep.subr.bf16.mxu0 0
        %3953 = vmatpush1.bf16.xpose.msra.mxu0 0
        %3954 = vmatprep.subr.bf16.mxu0 0
        %3955 = vmatpush1.bf16.xpose.msra.mxu0 0
        %3956 = vmatprep.subr.bf16.mxu0 0
        %3957 = vmatpush1.bf16.xpose.msra.mxu0 0
        %3958 = vmatprep.subr.bf16.mxu0 0
        %3959 = vmatpush1.bf16.xpose.msra.mxu0 0
        %3960 = vmatprep.subr.bf16.mxu0 0
        %3961 = vmatpush1.bf16.xpose.msra.mxu0 0
        %3962 = vmatprep.subr.bf16.mxu0 0
        %3963 = vmatpush1.bf16.xpose.msra.mxu0 0
        %3964 = vmatprep.subr.bf16.mxu0 0
        %3965 = vmatpush1.bf16.xpose.msra.mxu0 0
        %3966 = vmatprep.subr.bf16.mxu0 0
        %3967 = vmatpush1.bf16.xpose.msra.mxu0 0
        %3968 = vmatprep.subr.bf16.mxu0 0
        %3969 = vmatpush1.bf16.xpose.msra.mxu0 0
        %3970 = vmatprep.subr.bf16.mxu0 0
        %3971 = vmatpush1.bf16.xpose.msra.mxu0 0
        %3972 = vmatprep.subr.bf16.mxu0 0
        %3973 = vmatpush1.bf16.xpose.msra.mxu0 0
        %3974 = vmatprep.mubr.bf16.mxu0 0
        %3975 = vmatmul.mubr.bf16.gmra.mrb[0].mxu0 %v3937
        %v3976 = vpop.f32.mrb[0].mxu0
        %v3977 = vadd.f32 0.0, %v3976
        %v3978 = vpop.f32.mrb[0].mxu0
        %v3979 = vpop.f32.mrb[0].mxu0
        %v3980 = vpop.f32.mrb[0].mxu0
        %3981 = vdwg.mxu0
        %v3983 = vsel %vm3935, %v1536, 0
        %v3986 = vsel %vm3935, %v2728, 0
        %3988 = vmatprep.subr.bf16.mxu0 0
        %3989 = vmatpush1.bf16.xpose.msra.mxu0 %v3986
        %3990 = vmatprep.subr.bf16.mxu0 0
        %3991 = vmatpush1.bf16.xpose.msra.mxu0 0
        %3992 = vmatprep.subr.bf16.mxu0 0
        %3993 = vmatpush1.bf16.xpose.msra.mxu0 0
        %3994 = vmatprep.subr.bf16.mxu0 0
        %3995 = vmatpush1.bf16.xpose.msra.mxu0 0
        %3996 = vmatprep.subr.bf16.mxu0 0
        %3997 = vmatpush1.bf16.xpose.msra.mxu0 0
        %3998 = vmatprep.subr.bf16.mxu0 0
        %3999 = vmatpush1.bf16.xpose.msra.mxu0 0
        %4000 = vmatprep.subr.bf16.mxu0 0
        %4001 = vmatpush1.bf16.xpose.msra.mxu0 0
        %4002 = vmatprep.subr.bf16.mxu0 0
        %4003 = vmatpush1.bf16.xpose.msra.mxu0 0
        %4004 = vmatprep.subr.bf16.mxu0 0
        %4005 = vmatpush1.bf16.xpose.msra.mxu0 0
        %4006 = vmatprep.subr.bf16.mxu0 0
        %4007 = vmatpush1.bf16.xpose.msra.mxu0 0
        %4008 = vmatprep.subr.bf16.mxu0 0
        %4009 = vmatpush1.bf16.xpose.msra.mxu0 0
        %4010 = vmatprep.subr.bf16.mxu0 0
        %4011 = vmatpush1.bf16.xpose.msra.mxu0 0
        %4012 = vmatprep.subr.bf16.mxu0 0
        %4013 = vmatpush1.bf16.xpose.msra.mxu0 0
        %4014 = vmatprep.subr.bf16.mxu0 0
        %4015 = vmatpush1.bf16.xpose.msra.mxu0 0
        %4016 = vmatprep.subr.bf16.mxu0 0
        %4017 = vmatpush1.bf16.xpose.msra.mxu0 0
        %4018 = vmatprep.subr.bf16.mxu0 0
        %4019 = vmatpush1.bf16.xpose.msra.mxu0 0
        %4020 = vmatprep.mubr.bf16.mxu0 0
        %4021 = vmatmul.mubr.bf16.gmra.mrb[0].mxu0 %v3983
        %v4022 = vpop.f32.mrb[0].mxu0
        %v4023 = vadd.f32 0.0, %v4022
        %v4024 = vpop.f32.mrb[0].mxu0
        %v4025 = vpop.f32.mrb[0].mxu0
        %v4026 = vpop.f32.mrb[0].mxu0
        %4027 = vdwg.mxu0
        %v4029 = vsel %vm3935, %v1537, 0
        %v4032 = vsel %vm3935, %v2729, 0
        %4034 = vmatprep.subr.bf16.mxu0 0
        %4035 = vmatpush1.bf16.xpose.msra.mxu0 %v4032
        %4036 = vmatprep.subr.bf16.mxu0 0
        %4037 = vmatpush1.bf16.xpose.msra.mxu0 0
        %4038 = vmatprep.subr.bf16.mxu0 0
        %4039 = vmatpush1.bf16.xpose.msra.mxu0 0
        %4040 = vmatprep.subr.bf16.mxu0 0
        %4041 = vmatpush1.bf16.xpose.msra.mxu0 0
        %4042 = vmatprep.subr.bf16.mxu0 0
        %4043 = vmatpush1.bf16.xpose.msra.mxu0 0
        %4044 = vmatprep.subr.bf16.mxu0 0
        %4045 = vmatpush1.bf16.xpose.msra.mxu0 0
        %4046 = vmatprep.subr.bf16.mxu0 0
        %4047 = vmatpush1.bf16.xpose.msra.mxu0 0
        %4048 = vmatprep.subr.bf16.mxu0 0
        %4049 = vmatpush1.bf16.xpose.msra.mxu0 0
        %4050 = vmatprep.subr.bf16.mxu0 0
        %4051 = vmatpush1.bf16.xpose.msra.mxu0 0
        %4052 = vmatprep.subr.bf16.mxu0 0
        %4053 = vmatpush1.bf16.xpose.msra.mxu0 0
        %4054 = vmatprep.subr.bf16.mxu0 0
        %4055 = vmatpush1.bf16.xpose.msra.mxu0 0
        %4056 = vmatprep.subr.bf16.mxu0 0
        %4057 = vmatpush1.bf16.xpose.msra.mxu0 0
        %4058 = vmatprep.subr.bf16.mxu0 0
        %4059 = vmatpush1.bf16.xpose.msra.mxu0 0
        %4060 = vmatprep.subr.bf16.mxu0 0
        %4061 = vmatpush1.bf16.xpose.msra.mxu0 0
        %4062 = vmatprep.subr.bf16.mxu0 0
        %4063 = vmatpush1.bf16.xpose.msra.mxu0 0
        %4064 = vmatprep.subr.bf16.mxu0 0
        %4065 = vmatpush1.bf16.xpose.msra.mxu0 0
        %4066 = vmatprep.mubr.bf16.mxu0 0
        %4067 = vmatmul.mubr.bf16.gmra.mrb[0].mxu0 %v4029
        %v4068 = vpop.f32.mrb[0].mxu0
        %v4069 = vadd.f32 0.0, %v4068
        %v4070 = vpop.f32.mrb[0].mxu0
        %v4071 = vpop.f32.mrb[0].mxu0
        %v4072 = vpop.f32.mrb[0].mxu0
        %4073 = vdwg.mxu0
        %v4075 = vsel %vm3935, %v1538, 0
        %v4078 = vsel %vm3935, %v2730, 0
        %4080 = vmatprep.subr.bf16.mxu0 0
        %4081 = vmatpush1.bf16.xpose.msra.mxu0 %v4078
        %4082 = vmatprep.subr.bf16.mxu0 0
        %4083 = vmatpush1.bf16.xpose.msra.mxu0 0
        %4084 = vmatprep.subr.bf16.mxu0 0
        %4085 = vmatpush1.bf16.xpose.msra.mxu0 0
        %4086 = vmatprep.subr.bf16.mxu0 0
        %4087 = vmatpush1.bf16.xpose.msra.mxu0 0
        %4088 = vmatprep.subr.bf16.mxu0 0
        %4089 = vmatpush1.bf16.xpose.msra.mxu0 0
        %4090 = vmatprep.subr.bf16.mxu0 0
        %4091 = vmatpush1.bf16.xpose.msra.mxu0 0
        %4092 = vmatprep.subr.bf16.mxu0 0
        %4093 = vmatpush1.bf16.xpose.msra.mxu0 0
        %4094 = vmatprep.subr.bf16.mxu0 0
        %4095 = vmatpush1.bf16.xpose.msra.mxu0 0
        %4096 = vmatprep.subr.bf16.mxu0 0
        %4097 = vmatpush1.bf16.xpose.msra.mxu0 0
        %4098 = vmatprep.subr.bf16.mxu0 0
        %4099 = vmatpush1.bf16.xpose.msra.mxu0 0
        %4100 = vmatprep.subr.bf16.mxu0 0
        %4101 = vmatpush1.bf16.xpose.msra.mxu0 0
        %4102 = vmatprep.subr.bf16.mxu0 0
        %4103 = vmatpush1.bf16.xpose.msra.mxu0 0
        %4104 = vmatprep.subr.bf16.mxu0 0
        %4105 = vmatpush1.bf16.xpose.msra.mxu0 0
        %4106 = vmatprep.subr.bf16.mxu0 0
        %4107 = vmatpush1.bf16.xpose.msra.mxu0 0
        %4108 = vmatprep.subr.bf16.mxu0 0
        %4109 = vmatpush1.bf16.xpose.msra.mxu0 0
        %4110 = vmatprep.subr.bf16.mxu0 0
        %4111 = vmatpush1.bf16.xpose.msra.mxu0 0
        %4112 = vmatprep.mubr.bf16.mxu0 0
        %4113 = vmatmul.mubr.bf16.gmra.mrb[0].mxu0 %v4075
        %v4114 = vpop.f32.mrb[0].mxu0
        %v4115 = vadd.f32 0.0, %v4114
        %v4116 = vpop.f32.mrb[0].mxu0
        %v4117 = vpop.f32.mrb[0].mxu0
        %v4118 = vpop.f32.mrb[0].mxu0
        %4119 = vdwg.mxu0
        %v4121 = vsel %vm3935, %v1539, 0
        %v4124 = vsel %vm3935, %v2731, 0
        %4126 = vmatprep.subr.bf16.mxu0 0
        %4127 = vmatpush1.bf16.xpose.msra.mxu0 %v4124
        %4128 = vmatprep.subr.bf16.mxu0 0
        %4129 = vmatpush1.bf16.xpose.msra.mxu0 0
        %4130 = vmatprep.subr.bf16.mxu0 0
        %4131 = vmatpush1.bf16.xpose.msra.mxu0 0
        %4132 = vmatprep.subr.bf16.mxu0 0
        %4133 = vmatpush1.bf16.xpose.msra.mxu0 0
        %4134 = vmatprep.subr.bf16.mxu0 0
        %4135 = vmatpush1.bf16.xpose.msra.mxu0 0
        %4136 = vmatprep.subr.bf16.mxu0 0
        %4137 = vmatpush1.bf16.xpose.msra.mxu0 0
        %4138 = vmatprep.subr.bf16.mxu0 0
        %4139 = vmatpush1.bf16.xpose.msra.mxu0 0
        %4140 = vmatprep.subr.bf16.mxu0 0
        %4141 = vmatpush1.bf16.xpose.msra.mxu0 0
        %4142 = vmatprep.subr.bf16.mxu0 0
        %4143 = vmatpush1.bf16.xpose.msra.mxu0 0
        %4144 = vmatprep.subr.bf16.mxu0 0
        %4145 = vmatpush1.bf16.xpose.msra.mxu0 0
        %4146 = vmatprep.subr.bf16.mxu0 0
        %4147 = vmatpush1.bf16.xpose.msra.mxu0 0
        %4148 = vmatprep.subr.bf16.mxu0 0
        %4149 = vmatpush1.bf16.xpose.msra.mxu0 0
        %4150 = vmatprep.subr.bf16.mxu0 0
        %4151 = vmatpush1.bf16.xpose.msra.mxu0 0
        %4152 = vmatprep.subr.bf16.mxu0 0
        %4153 = vmatpush1.bf16.xpose.msra.mxu0 0
        %4154 = vmatprep.subr.bf16.mxu0 0
        %4155 = vmatpush1.bf16.xpose.msra.mxu0 0
        %4156 = vmatprep.subr.bf16.mxu0 0
        %4157 = vmatpush1.bf16.xpose.msra.mxu0 0
        %4158 = vmatprep.mubr.bf16.mxu0 0
        %4159 = vmatmul.mubr.bf16.gmra.mrb[0].mxu0 %v4121
        %v4160 = vpop.f32.mrb[0].mxu0
        %v4161 = vadd.f32 0.0, %v4160
        %v4162 = vpop.f32.mrb[0].mxu0
        %v4163 = vpop.f32.mrb[0].mxu0
        %v4164 = vpop.f32.mrb[0].mxu0
        %4165 = vdwg.mxu0
        %v4167 = vsel %vm3935, %v1540, 0
        %v4170 = vsel %vm3935, %v2732, 0
        %4172 = vmatprep.subr.bf16.mxu0 0
        %4173 = vmatpush1.bf16.xpose.msra.mxu0 %v4170
        %4174 = vmatprep.subr.bf16.mxu0 0
        %4175 = vmatpush1.bf16.xpose.msra.mxu0 0
        %4176 = vmatprep.subr.bf16.mxu0 0
        %4177 = vmatpush1.bf16.xpose.msra.mxu0 0
        %4178 = vmatprep.subr.bf16.mxu0 0
        %4179 = vmatpush1.bf16.xpose.msra.mxu0 0
        %4180 = vmatprep.subr.bf16.mxu0 0
        %4181 = vmatpush1.bf16.xpose.msra.mxu0 0
        %4182 = vmatprep.subr.bf16.mxu0 0
        %4183 = vmatpush1.bf16.xpose.msra.mxu0 0
        %4184 = vmatprep.subr.bf16.mxu0 0
        %4185 = vmatpush1.bf16.xpose.msra.mxu0 0
        %4186 = vmatprep.subr.bf16.mxu0 0
        %4187 = vmatpush1.bf16.xpose.msra.mxu0 0
        %4188 = vmatprep.subr.bf16.mxu0 0
        %4189 = vmatpush1.bf16.xpose.msra.mxu0 0
        %4190 = vmatprep.subr.bf16.mxu0 0
        %4191 = vmatpush1.bf16.xpose.msra.mxu0 0
        %4192 = vmatprep.subr.bf16.mxu0 0
        %4193 = vmatpush1.bf16.xpose.msra.mxu0 0
        %4194 = vmatprep.subr.bf16.mxu0 0
        %4195 = vmatpush1.bf16.xpose.msra.mxu0 0
        %4196 = vmatprep.subr.bf16.mxu0 0
        %4197 = vmatpush1.bf16.xpose.msra.mxu0 0
        %4198 = vmatprep.subr.bf16.mxu0 0
        %4199 = vmatpush1.bf16.xpose.msra.mxu0 0
        %4200 = vmatprep.subr.bf16.mxu0 0
        %4201 = vmatpush1.bf16.xpose.msra.mxu0 0
        %4202 = vmatprep.subr.bf16.mxu0 0
        %4203 = vmatpush1.bf16.xpose.msra.mxu0 0
        %4204 = vmatprep.mubr.bf16.mxu0 0
        %4205 = vmatmul.mubr.bf16.gmra.mrb[0].mxu0 %v4167
        %v4206 = vpop.f32.mrb[0].mxu0
        %v4207 = vadd.f32 0.0, %v4206
        %v4208 = vpop.f32.mrb[0].mxu0
        %v4209 = vpop.f32.mrb[0].mxu0
        %v4210 = vpop.f32.mrb[0].mxu0
        %4211 = vdwg.mxu0
        %v4213 = vsel %vm3935, %v1541, 0
        %v4216 = vsel %vm3935, %v2733, 0
        %4218 = vmatprep.subr.bf16.mxu0 0
        %4219 = vmatpush1.bf16.xpose.msra.mxu0 %v4216
        %4220 = vmatprep.subr.bf16.mxu0 0
        %4221 = vmatpush1.bf16.xpose.msra.mxu0 0
        %4222 = vmatprep.subr.bf16.mxu0 0
        %4223 = vmatpush1.bf16.xpose.msra.mxu0 0
        %4224 = vmatprep.subr.bf16.mxu0 0
        %4225 = vmatpush1.bf16.xpose.msra.mxu0 0
        %4226 = vmatprep.subr.bf16.mxu0 0
        %4227 = vmatpush1.bf16.xpose.msra.mxu0 0
        %4228 = vmatprep.subr.bf16.mxu0 0
        %4229 = vmatpush1.bf16.xpose.msra.mxu0 0
        %4230 = vmatprep.subr.bf16.mxu0 0
        %4231 = vmatpush1.bf16.xpose.msra.mxu0 0
        %4232 = vmatprep.subr.bf16.mxu0 0
        %4233 = vmatpush1.bf16.xpose.msra.mxu0 0
        %4234 = vmatprep.subr.bf16.mxu0 0
        %4235 = vmatpush1.bf16.xpose.msra.mxu0 0
        %4236 = vmatprep.subr.bf16.mxu0 0
        %4237 = vmatpush1.bf16.xpose.msra.mxu0 0
        %4238 = vmatprep.subr.bf16.mxu0 0
        %4239 = vmatpush1.bf16.xpose.msra.mxu0 0
        %4240 = vmatprep.subr.bf16.mxu0 0
        %4241 = vmatpush1.bf16.xpose.msra.mxu0 0
        %4242 = vmatprep.subr.bf16.mxu0 0
        %4243 = vmatpush1.bf16.xpose.msra.mxu0 0
        %4244 = vmatprep.subr.bf16.mxu0 0
        %4245 = vmatpush1.bf16.xpose.msra.mxu0 0
        %4246 = vmatprep.subr.bf16.mxu0 0
        %4247 = vmatpush1.bf16.xpose.msra.mxu0 0
        %4248 = vmatprep.subr.bf16.mxu0 0
        %4249 = vmatpush1.bf16.xpose.msra.mxu0 0
        %4250 = vmatprep.mubr.bf16.mxu0 0
        %4251 = vmatmul.mubr.bf16.gmra.mrb[0].mxu0 %v4213
        %v4252 = vpop.f32.mrb[0].mxu0
        %v4253 = vadd.f32 0.0, %v4252
        %v4254 = vpop.f32.mrb[0].mxu0
        %v4255 = vpop.f32.mrb[0].mxu0
        %v4256 = vpop.f32.mrb[0].mxu0
        %4257 = vdwg.mxu0
        %v4259 = vsel %vm3935, %v1542, 0
        %v4262 = vsel %vm3935, %v2734, 0
        %4264 = vmatprep.subr.bf16.mxu0 0
        %4265 = vmatpush1.bf16.xpose.msra.mxu0 %v4262
        %4266 = vmatprep.subr.bf16.mxu0 0
        %4267 = vmatpush1.bf16.xpose.msra.mxu0 0
        %4268 = vmatprep.subr.bf16.mxu0 0
        %4269 = vmatpush1.bf16.xpose.msra.mxu0 0
        %4270 = vmatprep.subr.bf16.mxu0 0
        %4271 = vmatpush1.bf16.xpose.msra.mxu0 0
        %4272 = vmatprep.subr.bf16.mxu0 0
        %4273 = vmatpush1.bf16.xpose.msra.mxu0 0
        %4274 = vmatprep.subr.bf16.mxu0 0
        %4275 = vmatpush1.bf16.xpose.msra.mxu0 0
        %4276 = vmatprep.subr.bf16.mxu0 0
        %4277 = vmatpush1.bf16.xpose.msra.mxu0 0
        %4278 = vmatprep.subr.bf16.mxu0 0
        %4279 = vmatpush1.bf16.xpose.msra.mxu0 0
        %4280 = vmatprep.subr.bf16.mxu0 0
        %4281 = vmatpush1.bf16.xpose.msra.mxu0 0
        %4282 = vmatprep.subr.bf16.mxu0 0
        %4283 = vmatpush1.bf16.xpose.msra.mxu0 0
        %4284 = vmatprep.subr.bf16.mxu0 0
        %4285 = vmatpush1.bf16.xpose.msra.mxu0 0
        %4286 = vmatprep.subr.bf16.mxu0 0
        %4287 = vmatpush1.bf16.xpose.msra.mxu0 0
        %4288 = vmatprep.subr.bf16.mxu0 0
        %4289 = vmatpush1.bf16.xpose.msra.mxu0 0
        %4290 = vmatprep.subr.bf16.mxu0 0
        %4291 = vmatpush1.bf16.xpose.msra.mxu0 0
        %4292 = vmatprep.subr.bf16.mxu0 0
        %4293 = vmatpush1.bf16.xpose.msra.mxu0 0
        %4294 = vmatprep.subr.bf16.mxu0 0
        %4295 = vmatpush1.bf16.xpose.msra.mxu0 0
        %4296 = vmatprep.mubr.bf16.mxu0 0
        %4297 = vmatmul.mubr.bf16.gmra.mrb[0].mxu0 %v4259
        %v4298 = vpop.f32.mrb[0].mxu0
        %v4299 = vadd.f32 0.0, %v4298
        %v4300 = vpop.f32.mrb[0].mxu0
        %v4301 = vpop.f32.mrb[0].mxu0
        %v4302 = vpop.f32.mrb[0].mxu0
        %4303 = vdwg.mxu0
        %v4305 = vsel %vm3935, %v1543, 0
        %v4308 = vsel %vm3935, %v2735, 0
        %4310 = vmatprep.subr.bf16.mxu0 0
        %4311 = vmatpush1.bf16.xpose.msra.mxu0 %v4308
        %4312 = vmatprep.subr.bf16.mxu0 0
        %4313 = vmatpush1.bf16.xpose.msra.mxu0 0
        %4314 = vmatprep.subr.bf16.mxu0 0
        %4315 = vmatpush1.bf16.xpose.msra.mxu0 0
        %4316 = vmatprep.subr.bf16.mxu0 0
        %4317 = vmatpush1.bf16.xpose.msra.mxu0 0
        %4318 = vmatprep.subr.bf16.mxu0 0
        %4319 = vmatpush1.bf16.xpose.msra.mxu0 0
        %4320 = vmatprep.subr.bf16.mxu0 0
        %4321 = vmatpush1.bf16.xpose.msra.mxu0 0
        %4322 = vmatprep.subr.bf16.mxu0 0
        %4323 = vmatpush1.bf16.xpose.msra.mxu0 0
        %4324 = vmatprep.subr.bf16.mxu0 0
        %4325 = vmatpush1.bf16.xpose.msra.mxu0 0
        %4326 = vmatprep.subr.bf16.mxu0 0
        %4327 = vmatpush1.bf16.xpose.msra.mxu0 0
        %4328 = vmatprep.subr.bf16.mxu0 0
        %4329 = vmatpush1.bf16.xpose.msra.mxu0 0
        %4330 = vmatprep.subr.bf16.mxu0 0
        %4331 = vmatpush1.bf16.xpose.msra.mxu0 0
        %4332 = vmatprep.subr.bf16.mxu0 0
        %4333 = vmatpush1.bf16.xpose.msra.mxu0 0
        %4334 = vmatprep.subr.bf16.mxu0 0
        %4335 = vmatpush1.bf16.xpose.msra.mxu0 0
        %4336 = vmatprep.subr.bf16.mxu0 0
        %4337 = vmatpush1.bf16.xpose.msra.mxu0 0
        %4338 = vmatprep.subr.bf16.mxu0 0
        %4339 = vmatpush1.bf16.xpose.msra.mxu0 0
        %4340 = vmatprep.subr.bf16.mxu0 0
        %4341 = vmatpush1.bf16.xpose.msra.mxu0 0
        %4342 = vmatprep.mubr.bf16.mxu0 0
        %4343 = vmatmul.mubr.bf16.gmra.mrb[0].mxu0 %v4305
        %v4344 = vpop.f32.mrb[0].mxu0
        %v4345 = vadd.f32 0.0, %v4344
        %v4346 = vpop.f32.mrb[0].mxu0
        %v4347 = vpop.f32.mrb[0].mxu0
        %v4348 = vpop.f32.mrb[0].mxu0
        %4349 = vdwg.mxu0
        %v4351 = vsel %vm3935, %v1544, 0
        %v4354 = vsel %vm3935, %v2736, 0
        %4356 = vmatprep.subr.bf16.mxu0 0
        %4357 = vmatpush1.bf16.xpose.msra.mxu0 %v4354
        %4358 = vmatprep.subr.bf16.mxu0 0
        %4359 = vmatpush1.bf16.xpose.msra.mxu0 0
        %4360 = vmatprep.subr.bf16.mxu0 0
        %4361 = vmatpush1.bf16.xpose.msra.mxu0 0
        %4362 = vmatprep.subr.bf16.mxu0 0
        %4363 = vmatpush1.bf16.xpose.msra.mxu0 0
        %4364 = vmatprep.subr.bf16.mxu0 0
        %4365 = vmatpush1.bf16.xpose.msra.mxu0 0
        %4366 = vmatprep.subr.bf16.mxu0 0
        %4367 = vmatpush1.bf16.xpose.msra.mxu0 0
        %4368 = vmatprep.subr.bf16.mxu0 0
        %4369 = vmatpush1.bf16.xpose.msra.mxu0 0
        %4370 = vmatprep.subr.bf16.mxu0 0
        %4371 = vmatpush1.bf16.xpose.msra.mxu0 0
        %4372 = vmatprep.subr.bf16.mxu0 0
        %4373 = vmatpush1.bf16.xpose.msra.mxu0 0
        %4374 = vmatprep.subr.bf16.mxu0 0
        %4375 = vmatpush1.bf16.xpose.msra.mxu0 0
        %4376 = vmatprep.subr.bf16.mxu0 0
        %4377 = vmatpush1.bf16.xpose.msra.mxu0 0
        %4378 = vmatprep.subr.bf16.mxu0 0
        %4379 = vmatpush1.bf16.xpose.msra.mxu0 0
        %4380 = vmatprep.subr.bf16.mxu0 0
        %4381 = vmatpush1.bf16.xpose.msra.mxu0 0
        %4382 = vmatprep.subr.bf16.mxu0 0
        %4383 = vmatpush1.bf16.xpose.msra.mxu0 0
        %4384 = vmatprep.subr.bf16.mxu0 0
        %4385 = vmatpush1.bf16.xpose.msra.mxu0 0
        %4386 = vmatprep.subr.bf16.mxu0 0
        %4387 = vmatpush1.bf16.xpose.msra.mxu0 0
        %4388 = vmatprep.mubr.bf16.mxu0 0
        %4389 = vmatmul.mubr.bf16.gmra.mrb[0].mxu0 %v4351
        %v4390 = vpop.f32.mrb[0].mxu0
        %v4391 = vadd.f32 0.0, %v4390
        %v4392 = vpop.f32.mrb[0].mxu0
        %v4393 = vpop.f32.mrb[0].mxu0
        %v4394 = vpop.f32.mrb[0].mxu0
        %4395 = vdwg.mxu0
        %v4397 = vsel %vm3935, %v1545, 0
        %v4400 = vsel %vm3935, %v2737, 0
        %4402 = vmatprep.subr.bf16.mxu0 0
        %4403 = vmatpush1.bf16.xpose.msra.mxu0 %v4400
        %4404 = vmatprep.subr.bf16.mxu0 0
        %4405 = vmatpush1.bf16.xpose.msra.mxu0 0
        %4406 = vmatprep.subr.bf16.mxu0 0
        %4407 = vmatpush1.bf16.xpose.msra.mxu0 0
        %4408 = vmatprep.subr.bf16.mxu0 0
        %4409 = vmatpush1.bf16.xpose.msra.mxu0 0
        %4410 = vmatprep.subr.bf16.mxu0 0
        %4411 = vmatpush1.bf16.xpose.msra.mxu0 0
        %4412 = vmatprep.subr.bf16.mxu0 0
        %4413 = vmatpush1.bf16.xpose.msra.mxu0 0
        %4414 = vmatprep.subr.bf16.mxu0 0
        %4415 = vmatpush1.bf16.xpose.msra.mxu0 0
        %4416 = vmatprep.subr.bf16.mxu0 0
        %4417 = vmatpush1.bf16.xpose.msra.mxu0 0
        %4418 = vmatprep.subr.bf16.mxu0 0
        %4419 = vmatpush1.bf16.xpose.msra.mxu0 0
        %4420 = vmatprep.subr.bf16.mxu0 0
        %4421 = vmatpush1.bf16.xpose.msra.mxu0 0
        %4422 = vmatprep.subr.bf16.mxu0 0
        %4423 = vmatpush1.bf16.xpose.msra.mxu0 0
        %4424 = vmatprep.subr.bf16.mxu0 0
        %4425 = vmatpush1.bf16.xpose.msra.mxu0 0
        %4426 = vmatprep.subr.bf16.mxu0 0
        %4427 = vmatpush1.bf16.xpose.msra.mxu0 0
        %4428 = vmatprep.subr.bf16.mxu0 0
        %4429 = vmatpush1.bf16.xpose.msra.mxu0 0
        %4430 = vmatprep.subr.bf16.mxu0 0
        %4431 = vmatpush1.bf16.xpose.msra.mxu0 0
        %4432 = vmatprep.subr.bf16.mxu0 0
        %4433 = vmatpush1.bf16.xpose.msra.mxu0 0
        %4434 = vmatprep.mubr.bf16.mxu0 0
        %4435 = vmatmul.mubr.bf16.gmra.mrb[0].mxu0 %v4397
        %v4436 = vpop.f32.mrb[0].mxu0
        %v4437 = vadd.f32 0.0, %v4436
        %v4438 = vpop.f32.mrb[0].mxu0
        %v4439 = vpop.f32.mrb[0].mxu0
        %v4440 = vpop.f32.mrb[0].mxu0
        %4441 = vdwg.mxu0
        %v4443 = vsel %vm3935, %v1546, 0
        %v4446 = vsel %vm3935, %v2738, 0
        %4448 = vmatprep.subr.bf16.mxu0 0
        %4449 = vmatpush1.bf16.xpose.msra.mxu0 %v4446
        %4450 = vmatprep.subr.bf16.mxu0 0
        %4451 = vmatpush1.bf16.xpose.msra.mxu0 0
        %4452 = vmatprep.subr.bf16.mxu0 0
        %4453 = vmatpush1.bf16.xpose.msra.mxu0 0
        %4454 = vmatprep.subr.bf16.mxu0 0
        %4455 = vmatpush1.bf16.xpose.msra.mxu0 0
        %4456 = vmatprep.subr.bf16.mxu0 0
        %4457 = vmatpush1.bf16.xpose.msra.mxu0 0
        %4458 = vmatprep.subr.bf16.mxu0 0
        %4459 = vmatpush1.bf16.xpose.msra.mxu0 0
        %4460 = vmatprep.subr.bf16.mxu0 0
        %4461 = vmatpush1.bf16.xpose.msra.mxu0 0
        %4462 = vmatprep.subr.bf16.mxu0 0
        %4463 = vmatpush1.bf16.xpose.msra.mxu0 0
        %4464 = vmatprep.subr.bf16.mxu0 0
        %4465 = vmatpush1.bf16.xpose.msra.mxu0 0
        %4466 = vmatprep.subr.bf16.mxu0 0
        %4467 = vmatpush1.bf16.xpose.msra.mxu0 0
        %4468 = vmatprep.subr.bf16.mxu0 0
        %4469 = vmatpush1.bf16.xpose.msra.mxu0 0
        %4470 = vmatprep.subr.bf16.mxu0 0
        %4471 = vmatpush1.bf16.xpose.msra.mxu0 0
        %4472 = vmatprep.subr.bf16.mxu0 0
        %4473 = vmatpush1.bf16.xpose.msra.mxu0 0
        %4474 = vmatprep.subr.bf16.mxu0 0
        %4475 = vmatpush1.bf16.xpose.msra.mxu0 0
        %4476 = vmatprep.subr.bf16.mxu0 0
        %4477 = vmatpush1.bf16.xpose.msra.mxu0 0
        %4478 = vmatprep.subr.bf16.mxu0 0
        %4479 = vmatpush1.bf16.xpose.msra.mxu0 0
        %4480 = vmatprep.mubr.bf16.mxu0 0
        %4481 = vmatmul.mubr.bf16.gmra.mrb[0].mxu0 %v4443
        %v4482 = vpop.f32.mrb[0].mxu0
        %v4483 = vadd.f32 0.0, %v4482
        %v4484 = vpop.f32.mrb[0].mxu0
        %v4485 = vpop.f32.mrb[0].mxu0
        %v4486 = vpop.f32.mrb[0].mxu0
        %4487 = vdwg.mxu0
        %v4489 = vsel %vm3935, %v1547, 0
        %v4492 = vsel %vm3935, %v2739, 0
        %4494 = vmatprep.subr.bf16.mxu0 0
        %4495 = vmatpush1.bf16.xpose.msra.mxu0 %v4492
        %4496 = vmatprep.subr.bf16.mxu0 0
        %4497 = vmatpush1.bf16.xpose.msra.mxu0 0
        %4498 = vmatprep.subr.bf16.mxu0 0
        %4499 = vmatpush1.bf16.xpose.msra.mxu0 0
        %4500 = vmatprep.subr.bf16.mxu0 0
        %4501 = vmatpush1.bf16.xpose.msra.mxu0 0
        %4502 = vmatprep.subr.bf16.mxu0 0
        %4503 = vmatpush1.bf16.xpose.msra.mxu0 0
        %4504 = vmatprep.subr.bf16.mxu0 0
        %4505 = vmatpush1.bf16.xpose.msra.mxu0 0
        %4506 = vmatprep.subr.bf16.mxu0 0
        %4507 = vmatpush1.bf16.xpose.msra.mxu0 0
        %4508 = vmatprep.subr.bf16.mxu0 0
        %4509 = vmatpush1.bf16.xpose.msra.mxu0 0
        %4510 = vmatprep.subr.bf16.mxu0 0
        %4511 = vmatpush1.bf16.xpose.msra.mxu0 0
        %4512 = vmatprep.subr.bf16.mxu0 0
        %4513 = vmatpush1.bf16.xpose.msra.mxu0 0
        %4514 = vmatprep.subr.bf16.mxu0 0
        %4515 = vmatpush1.bf16.xpose.msra.mxu0 0
        %4516 = vmatprep.subr.bf16.mxu0 0
        %4517 = vmatpush1.bf16.xpose.msra.mxu0 0
        %4518 = vmatprep.subr.bf16.mxu0 0
        %4519 = vmatpush1.bf16.xpose.msra.mxu0 0
        %4520 = vmatprep.subr.bf16.mxu0 0
        %4521 = vmatpush1.bf16.xpose.msra.mxu0 0
        %4522 = vmatprep.subr.bf16.mxu0 0
        %4523 = vmatpush1.bf16.xpose.msra.mxu0 0
        %4524 = vmatprep.subr.bf16.mxu0 0
        %4525 = vmatpush1.bf16.xpose.msra.mxu0 0
        %4526 = vmatprep.mubr.bf16.mxu0 0
        %4527 = vmatmul.mubr.bf16.gmra.mrb[0].mxu0 %v4489
        %v4528 = vpop.f32.mrb[0].mxu0
        %v4529 = vadd.f32 0.0, %v4528
        %v4530 = vpop.f32.mrb[0].mxu0
        %v4531 = vpop.f32.mrb[0].mxu0
        %v4532 = vpop.f32.mrb[0].mxu0
        %4533 = vdwg.mxu0
        %v4535 = vsel %vm3935, %v1548, 0
        %v4538 = vsel %vm3935, %v2740, 0
        %4540 = vmatprep.subr.bf16.mxu0 0
        %4541 = vmatpush1.bf16.xpose.msra.mxu0 %v4538
        %4542 = vmatprep.subr.bf16.mxu0 0
        %4543 = vmatpush1.bf16.xpose.msra.mxu0 0
        %4544 = vmatprep.subr.bf16.mxu0 0
        %4545 = vmatpush1.bf16.xpose.msra.mxu0 0
        %4546 = vmatprep.subr.bf16.mxu0 0
        %4547 = vmatpush1.bf16.xpose.msra.mxu0 0
        %4548 = vmatprep.subr.bf16.mxu0 0
        %4549 = vmatpush1.bf16.xpose.msra.mxu0 0
        %4550 = vmatprep.subr.bf16.mxu0 0
        %4551 = vmatpush1.bf16.xpose.msra.mxu0 0
        %4552 = vmatprep.subr.bf16.mxu0 0
        %4553 = vmatpush1.bf16.xpose.msra.mxu0 0
        %4554 = vmatprep.subr.bf16.mxu0 0
        %4555 = vmatpush1.bf16.xpose.msra.mxu0 0
        %4556 = vmatprep.subr.bf16.mxu0 0
        %4557 = vmatpush1.bf16.xpose.msra.mxu0 0
        %4558 = vmatprep.subr.bf16.mxu0 0
        %4559 = vmatpush1.bf16.xpose.msra.mxu0 0
        %4560 = vmatprep.subr.bf16.mxu0 0
        %4561 = vmatpush1.bf16.xpose.msra.mxu0 0
        %4562 = vmatprep.subr.bf16.mxu0 0
        %4563 = vmatpush1.bf16.xpose.msra.mxu0 0
        %4564 = vmatprep.subr.bf16.mxu0 0
        %4565 = vmatpush1.bf16.xpose.msra.mxu0 0
        %4566 = vmatprep.subr.bf16.mxu0 0
        %4567 = vmatpush1.bf16.xpose.msra.mxu0 0
        %4568 = vmatprep.subr.bf16.mxu0 0
        %4569 = vmatpush1.bf16.xpose.msra.mxu0 0
        %4570 = vmatprep.subr.bf16.mxu0 0
        %4571 = vmatpush1.bf16.xpose.msra.mxu0 0
        %4572 = vmatprep.mubr.bf16.mxu0 0
        %4573 = vmatmul.mubr.bf16.gmra.mrb[0].mxu0 %v4535
        %v4574 = vpop.f32.mrb[0].mxu0
        %v4575 = vadd.f32 0.0, %v4574
        %v4576 = vpop.f32.mrb[0].mxu0
        %v4577 = vpop.f32.mrb[0].mxu0
        %v4578 = vpop.f32.mrb[0].mxu0
        %4579 = vdwg.mxu0
        %v4581 = vsel %vm3935, %v1549, 0
        %v4584 = vsel %vm3935, %v2741, 0
        %4586 = vmatprep.subr.bf16.mxu0 0
        %4587 = vmatpush1.bf16.xpose.msra.mxu0 %v4584
        %4588 = vmatprep.subr.bf16.mxu0 0
        %4589 = vmatpush1.bf16.xpose.msra.mxu0 0
        %4590 = vmatprep.subr.bf16.mxu0 0
        %4591 = vmatpush1.bf16.xpose.msra.mxu0 0
        %4592 = vmatprep.subr.bf16.mxu0 0
        %4593 = vmatpush1.bf16.xpose.msra.mxu0 0
        %4594 = vmatprep.subr.bf16.mxu0 0
        %4595 = vmatpush1.bf16.xpose.msra.mxu0 0
        %4596 = vmatprep.subr.bf16.mxu0 0
        %4597 = vmatpush1.bf16.xpose.msra.mxu0 0
        %4598 = vmatprep.subr.bf16.mxu0 0
        %4599 = vmatpush1.bf16.xpose.msra.mxu0 0
        %4600 = vmatprep.subr.bf16.mxu0 0
        %4601 = vmatpush1.bf16.xpose.msra.mxu0 0
        %4602 = vmatprep.subr.bf16.mxu0 0
        %4603 = vmatpush1.bf16.xpose.msra.mxu0 0
        %4604 = vmatprep.subr.bf16.mxu0 0
        %4605 = vmatpush1.bf16.xpose.msra.mxu0 0
        %4606 = vmatprep.subr.bf16.mxu0 0
        %4607 = vmatpush1.bf16.xpose.msra.mxu0 0
        %4608 = vmatprep.subr.bf16.mxu0 0
        %4609 = vmatpush1.bf16.xpose.msra.mxu0 0
        %4610 = vmatprep.subr.bf16.mxu0 0
        %4611 = vmatpush1.bf16.xpose.msra.mxu0 0
        %4612 = vmatprep.subr.bf16.mxu0 0
        %4613 = vmatpush1.bf16.xpose.msra.mxu0 0
        %4614 = vmatprep.subr.bf16.mxu0 0
        %4615 = vmatpush1.bf16.xpose.msra.mxu0 0
        %4616 = vmatprep.subr.bf16.mxu0 0
        %4617 = vmatpush1.bf16.xpose.msra.mxu0 0
        %4618 = vmatprep.mubr.bf16.mxu0 0
        %4619 = vmatmul.mubr.bf16.gmra.mrb[0].mxu0 %v4581
        %v4620 = vpop.f32.mrb[0].mxu0
        %v4621 = vadd.f32 0.0, %v4620
        %v4622 = vpop.f32.mrb[0].mxu0
        %v4623 = vpop.f32.mrb[0].mxu0
        %v4624 = vpop.f32.mrb[0].mxu0
        %4625 = vdwg.mxu0
        %v4627 = vsel %vm3935, %v1550, 0
        %v4630 = vsel %vm3935, %v2742, 0
        %4632 = vmatprep.subr.bf16.mxu0 0
        %4633 = vmatpush1.bf16.xpose.msra.mxu0 %v4630
        %4634 = vmatprep.subr.bf16.mxu0 0
        %4635 = vmatpush1.bf16.xpose.msra.mxu0 0
        %4636 = vmatprep.subr.bf16.mxu0 0
        %4637 = vmatpush1.bf16.xpose.msra.mxu0 0
        %4638 = vmatprep.subr.bf16.mxu0 0
        %4639 = vmatpush1.bf16.xpose.msra.mxu0 0
        %4640 = vmatprep.subr.bf16.mxu0 0
        %4641 = vmatpush1.bf16.xpose.msra.mxu0 0
        %4642 = vmatprep.subr.bf16.mxu0 0
        %4643 = vmatpush1.bf16.xpose.msra.mxu0 0
        %4644 = vmatprep.subr.bf16.mxu0 0
        %4645 = vmatpush1.bf16.xpose.msra.mxu0 0
        %4646 = vmatprep.subr.bf16.mxu0 0
        %4647 = vmatpush1.bf16.xpose.msra.mxu0 0
        %4648 = vmatprep.subr.bf16.mxu0 0
        %4649 = vmatpush1.bf16.xpose.msra.mxu0 0
        %4650 = vmatprep.subr.bf16.mxu0 0
        %4651 = vmatpush1.bf16.xpose.msra.mxu0 0
        %4652 = vmatprep.subr.bf16.mxu0 0
        %4653 = vmatpush1.bf16.xpose.msra.mxu0 0
        %4654 = vmatprep.subr.bf16.mxu0 0
        %4655 = vmatpush1.bf16.xpose.msra.mxu0 0
        %4656 = vmatprep.subr.bf16.mxu0 0
        %4657 = vmatpush1.bf16.xpose.msra.mxu0 0
        %4658 = vmatprep.subr.bf16.mxu0 0
        %4659 = vmatpush1.bf16.xpose.msra.mxu0 0
        %4660 = vmatprep.subr.bf16.mxu0 0
        %4661 = vmatpush1.bf16.xpose.msra.mxu0 0
        %4662 = vmatprep.subr.bf16.mxu0 0
        %4663 = vmatpush1.bf16.xpose.msra.mxu0 0
        %4664 = vmatprep.mubr.bf16.mxu0 0
        %4665 = vmatmul.mubr.bf16.gmra.mrb[0].mxu0 %v4627
        %v4666 = vpop.f32.mrb[0].mxu0
        %v4667 = vadd.f32 0.0, %v4666
        %v4668 = vpop.f32.mrb[0].mxu0
        %v4669 = vpop.f32.mrb[0].mxu0
        %v4670 = vpop.f32.mrb[0].mxu0
        %4671 = vdwg.mxu0
        %v4672 = vsel %vm3935, %v3977, -inf
        %4673 = vmax.xlane.f32.xlu0 %v4672
        %v4674 = vpop.xlane.xlu0 %4673
        %v4675 = vsel %vm3935, %v4023, -inf
        %4676 = vmax.xlane.f32.xlu0 %v4675
        %v4677 = vpop.xlane.xlu0 %4676
        %v4678 = vsel %vm3935, %v4069, -inf
        %4679 = vmax.xlane.f32.xlu0 %v4678
        %v4680 = vpop.xlane.xlu0 %4679
        %v4681 = vsel %vm3935, %v4115, -inf
        %4682 = vmax.xlane.f32.xlu0 %v4681
        %v4683 = vpop.xlane.xlu0 %4682
        %v4684 = vsel %vm3935, %v4161, -inf
        %4685 = vmax.xlane.f32.xlu0 %v4684
        %v4686 = vpop.xlane.xlu0 %4685
        %v4687 = vsel %vm3935, %v4207, -inf
        %4688 = vmax.xlane.f32.xlu0 %v4687
        %v4689 = vpop.xlane.xlu0 %4688
        %v4690 = vsel %vm3935, %v4253, -inf
        %4691 = vmax.xlane.f32.xlu0 %v4690
        %v4692 = vpop.xlane.xlu0 %4691
        %v4693 = vsel %vm3935, %v4299, -inf
        %4694 = vmax.xlane.f32.xlu0 %v4693
        %v4695 = vpop.xlane.xlu0 %4694
        %v4696 = vsel %vm3935, %v4345, -inf
        %4697 = vmax.xlane.f32.xlu0 %v4696
        %v4698 = vpop.xlane.xlu0 %4697
        %v4699 = vsel %vm3935, %v4391, -inf
        %4700 = vmax.xlane.f32.xlu0 %v4699
        %v4701 = vpop.xlane.xlu0 %4700
        %v4702 = vsel %vm3935, %v4437, -inf
        %4703 = vmax.xlane.f32.xlu0 %v4702
        %v4704 = vpop.xlane.xlu0 %4703
        %v4705 = vsel %vm3935, %v4483, -inf
        %4706 = vmax.xlane.f32.xlu0 %v4705
        %v4707 = vpop.xlane.xlu0 %4706
        %v4708 = vsel %vm3935, %v4529, -inf
        %4709 = vmax.xlane.f32.xlu0 %v4708
        %v4710 = vpop.xlane.xlu0 %4709
        %v4711 = vsel %vm3935, %v4575, -inf
        %4712 = vmax.xlane.f32.xlu0 %v4711
        %v4713 = vpop.xlane.xlu0 %4712
        %v4714 = vsel %vm3935, %v4621, -inf
        %4715 = vmax.xlane.f32.xlu0 %v4714
        %v4716 = vpop.xlane.xlu0 %4715
        %v4717 = vsel %vm3935, %v4667, -inf
        %4718 = vmax.xlane.f32.xlu0 %v4717
        %v4719 = vpop.xlane.xlu0 %4718
        %v4720 = vsub.f32 %v3977, %v4674
        %v4721 = vsub.f32 %v4023, %v4677
        %v4722 = vsub.f32 %v4069, %v4680
        %v4723 = vsub.f32 %v4115, %v4683
        %v4724 = vsub.f32 %v4161, %v4686
        %v4725 = vsub.f32 %v4207, %v4689
        %v4726 = vsub.f32 %v4253, %v4692
        %v4727 = vsub.f32 %v4299, %v4695
        %v4728 = vsub.f32 %v4345, %v4698
        %v4729 = vsub.f32 %v4391, %v4701
        %v4730 = vsub.f32 %v4437, %v4704
        %v4731 = vsub.f32 %v4483, %v4707
        %v4732 = vsub.f32 %v4529, %v4710
        %v4733 = vsub.f32 %v4575, %v4713
        %v4734 = vsub.f32 %v4621, %v4716
        %v4735 = vsub.f32 %v4667, %v4719
        %v4736 = vmul.f32 %v4720, 1.442695
        %v4737 = vpow.pop %v4736
        %v4738 = vmul.f32 %v4721, 1.442695
        %v4739 = vpow.pop %v4738
        %v4740 = vmul.f32 %v4722, 1.442695
        %v4741 = vpow.pop %v4740
        %v4742 = vmul.f32 %v4723, 1.442695
        %v4743 = vpow.pop %v4742
        %v4744 = vmul.f32 %v4724, 1.442695
        %v4745 = vpow.pop %v4744
        %v4746 = vmul.f32 %v4725, 1.442695
        %v4747 = vpow.pop %v4746
        %v4748 = vmul.f32 %v4726, 1.442695
        %v4749 = vpow.pop %v4748
        %v4750 = vmul.f32 %v4727, 1.442695
        %v4751 = vpow.pop %v4750
        %v4752 = vmul.f32 %v4728, 1.442695
        %v4753 = vpow.pop %v4752
        %v4754 = vmul.f32 %v4729, 1.442695
        %v4755 = vpow.pop %v4754
        %v4756 = vmul.f32 %v4730, 1.442695
        %v4757 = vpow.pop %v4756
        %v4758 = vmul.f32 %v4731, 1.442695
        %v4759 = vpow.pop %v4758
        %v4760 = vmul.f32 %v4732, 1.442695
        %v4761 = vpow.pop %v4760
        %v4762 = vmul.f32 %v4733, 1.442695
        %v4763 = vpow.pop %v4762
        %v4764 = vmul.f32 %v4734, 1.442695
        %v4765 = vpow.pop %v4764
        %v4766 = vmul.f32 %v4735, 1.442695
        %v4767 = vpow.pop %v4766
        %v4768 = vsel %vm3935, %v4737, 0.0
        %4769 = vadd.xlane.f32.xlu0 %v4768
        %v4770 = vpop.xlane.xlu0 %4769
        %v4771 = vsel %vm3935, %v4739, 0.0
        %4772 = vadd.xlane.f32.xlu0 %v4771
        %v4773 = vpop.xlane.xlu0 %4772
        %v4774 = vsel %vm3935, %v4741, 0.0
        %4775 = vadd.xlane.f32.xlu0 %v4774
        %v4776 = vpop.xlane.xlu0 %4775
        %v4777 = vsel %vm3935, %v4743, 0.0
        %4778 = vadd.xlane.f32.xlu0 %v4777
        %v4779 = vpop.xlane.xlu0 %4778
        %v4780 = vsel %vm3935, %v4745, 0.0
        %4781 = vadd.xlane.f32.xlu0 %v4780
        %v4782 = vpop.xlane.xlu0 %4781
        %v4783 = vsel %vm3935, %v4747, 0.0
        %4784 = vadd.xlane.f32.xlu0 %v4783
        %v4785 = vpop.xlane.xlu0 %4784
        %v4786 = vsel %vm3935, %v4749, 0.0
        %4787 = vadd.xlane.f32.xlu0 %v4786
        %v4788 = vpop.xlane.xlu0 %4787
        %v4789 = vsel %vm3935, %v4751, 0.0
        %4790 = vadd.xlane.f32.xlu0 %v4789
        %v4791 = vpop.xlane.xlu0 %4790
        %v4792 = vsel %vm3935, %v4753, 0.0
        %4793 = vadd.xlane.f32.xlu0 %v4792
        %v4794 = vpop.xlane.xlu0 %4793
        %v4795 = vsel %vm3935, %v4755, 0.0
        %4796 = vadd.xlane.f32.xlu0 %v4795
        %v4797 = vpop.xlane.xlu0 %4796
        %v4798 = vsel %vm3935, %v4757, 0.0
        %4799 = vadd.xlane.f32.xlu0 %v4798
        %v4800 = vpop.xlane.xlu0 %4799
        %v4801 = vsel %vm3935, %v4759, 0.0
        %4802 = vadd.xlane.f32.xlu0 %v4801
        %v4803 = vpop.xlane.xlu0 %4802
        %v4804 = vsel %vm3935, %v4761, 0.0
        %4805 = vadd.xlane.f32.xlu0 %v4804
        %v4806 = vpop.xlane.xlu0 %4805
        %v4807 = vsel %vm3935, %v4763, 0.0
        %4808 = vadd.xlane.f32.xlu0 %v4807
        %v4809 = vpop.xlane.xlu0 %4808
        %v4810 = vsel %vm3935, %v4765, 0.0
        %4811 = vadd.xlane.f32.xlu0 %v4810
        %v4812 = vpop.xlane.xlu0 %4811
        %v4813 = vsel %vm3935, %v4767, 0.0
        %4814 = vadd.xlane.f32.xlu0 %v4813
        %v4815 = vpop.xlane.xlu0 %4814
        %v4816 = vrcp.pop %v4770
        %v4817 = vrcp.pop %v4773
        %v4818 = vrcp.pop %v4776
        %v4819 = vrcp.pop %v4779
        %v4820 = vrcp.pop %v4782
        %v4821 = vrcp.pop %v4785
        %v4822 = vrcp.pop %v4788
        %v4823 = vrcp.pop %v4791
        %v4824 = vrcp.pop %v4794
        %v4825 = vrcp.pop %v4797
        %v4826 = vrcp.pop %v4800
        %v4827 = vrcp.pop %v4803
        %v4828 = vrcp.pop %v4806
        %v4829 = vrcp.pop %v4809
        %v4830 = vrcp.pop %v4812
        %v4831 = vrcp.pop %v4815
        %v4832 = vmul.f32 %v4737, %v4816
        %v4833 = vmul.f32 %v4739, %v4817
        %v4834 = vmul.f32 %v4741, %v4818
        %v4835 = vmul.f32 %v4743, %v4819
        %v4836 = vmul.f32 %v4745, %v4820
        %v4837 = vmul.f32 %v4747, %v4821
        %v4838 = vmul.f32 %v4749, %v4822
        %v4839 = vmul.f32 %v4751, %v4823
        %v4840 = vmul.f32 %v4753, %v4824
        %v4841 = vmul.f32 %v4755, %v4825
        %v4842 = vmul.f32 %v4757, %v4826
        %v4843 = vmul.f32 %v4759, %v4827
        %v4844 = vmul.f32 %v4761, %v4828
        %v4845 = vmul.f32 %v4763, %v4829
        %v4846 = vmul.f32 %v4765, %v4830
        %v4847 = vmul.f32 %v4767, %v4831
        %v4848 = vpack.c.bf16 %v4832, %v4832
        %v4849 = vpack.c.bf16 %v4833, %v4833
        %v4850 = vpack.c.bf16 %v4834, %v4834
        %v4851 = vpack.c.bf16 %v4835, %v4835
        %v4852 = vpack.c.bf16 %v4836, %v4836
        %v4853 = vpack.c.bf16 %v4837, %v4837
        %v4854 = vpack.c.bf16 %v4838, %v4838
        %v4855 = vpack.c.bf16 %v4839, %v4839
        %v4856 = vpack.c.bf16 %v4840, %v4840
        %v4857 = vpack.c.bf16 %v4841, %v4841
        %v4858 = vpack.c.bf16 %v4842, %v4842
        %v4859 = vpack.c.bf16 %v4843, %v4843
        %v4860 = vpack.c.bf16 %v4844, %v4844
        %v4861 = vpack.c.bf16 %v4845, %v4845
        %v4862 = vpack.c.bf16 %v4846, %v4846
        %v4863 = vpack.c.bf16 %v4847, %v4847
        %v4865 = vsel %vm3935, %v4848, 0
        %4867 = vmatprep.subr.bf16.mxu0 0
        %4868 = vmatpush1.bf16.msra.mxu0 %v3919
        %4869 = vmatprep.subr.bf16.mxu0 0
        %4870 = vmatpush1.bf16.msra.mxu0 0
        %4871 = vmatprep.subr.bf16.mxu0 0
        %4872 = vmatpush1.bf16.msra.mxu0 0
        %4873 = vmatprep.subr.bf16.mxu0 0
        %4874 = vmatpush1.bf16.msra.mxu0 0
        %4875 = vmatprep.subr.bf16.mxu0 0
        %4876 = vmatpush1.bf16.msra.mxu0 0
        %4877 = vmatprep.subr.bf16.mxu0 0
        %4878 = vmatpush1.bf16.msra.mxu0 0
        %4879 = vmatprep.subr.bf16.mxu0 0
        %4880 = vmatpush1.bf16.msra.mxu0 0
        %4881 = vmatprep.subr.bf16.mxu0 0
        %4882 = vmatpush1.bf16.msra.mxu0 0
        %4883 = vmatprep.subr.bf16.mxu0 0
        %4884 = vmatpush1.bf16.msra.mxu0 0
        %4885 = vmatprep.subr.bf16.mxu0 0
        %4886 = vmatpush1.bf16.msra.mxu0 0
        %4887 = vmatprep.subr.bf16.mxu0 0
        %4888 = vmatpush1.bf16.msra.mxu0 0
        %4889 = vmatprep.subr.bf16.mxu0 0
        %4890 = vmatpush1.bf16.msra.mxu0 0
        %4891 = vmatprep.subr.bf16.mxu0 0
        %4892 = vmatpush1.bf16.msra.mxu0 0
        %4893 = vmatprep.subr.bf16.mxu0 0
        %4894 = vmatpush1.bf16.msra.mxu0 0
        %4895 = vmatprep.subr.bf16.mxu0 0
        %4896 = vmatpush1.bf16.msra.mxu0 0
        %4897 = vmatprep.subr.bf16.mxu0 0
        %4898 = vmatpush1.bf16.msra.mxu0 0
        %4899 = vmatprep.mubr.bf16.mxu0 0
        %4900 = vmatmul.mubr.bf16.gmra.mrb[0].mxu0 %v4865
        %v4901 = vpop.f32.mrb[0].mxu0
        %v4902 = vadd.f32 0.0, %v4901
        %v4903 = vpop.f32.mrb[0].mxu0
        %v4904 = vpop.f32.mrb[0].mxu0
        %v4905 = vpop.f32.mrb[0].mxu0
        %4906 = vdwg.mxu0
        %v4908 = vsel %vm3935, %v4849, 0
        %4910 = vmatprep.subr.bf16.mxu0 0
        %4911 = vmatpush1.bf16.msra.mxu0 %v3920
        %4912 = vmatprep.subr.bf16.mxu0 0
        %4913 = vmatpush1.bf16.msra.mxu0 0
        %4914 = vmatprep.subr.bf16.mxu0 0
        %4915 = vmatpush1.bf16.msra.mxu0 0
        %4916 = vmatprep.subr.bf16.mxu0 0
        %4917 = vmatpush1.bf16.msra.mxu0 0
        %4918 = vmatprep.subr.bf16.mxu0 0
        %4919 = vmatpush1.bf16.msra.mxu0 0
        %4920 = vmatprep.subr.bf16.mxu0 0
        %4921 = vmatpush1.bf16.msra.mxu0 0
        %4922 = vmatprep.subr.bf16.mxu0 0
        %4923 = vmatpush1.bf16.msra.mxu0 0
        %4924 = vmatprep.subr.bf16.mxu0 0
        %4925 = vmatpush1.bf16.msra.mxu0 0
        %4926 = vmatprep.subr.bf16.mxu0 0
        %4927 = vmatpush1.bf16.msra.mxu0 0
        %4928 = vmatprep.subr.bf16.mxu0 0
        %4929 = vmatpush1.bf16.msra.mxu0 0
        %4930 = vmatprep.subr.bf16.mxu0 0
        %4931 = vmatpush1.bf16.msra.mxu0 0
        %4932 = vmatprep.subr.bf16.mxu0 0
        %4933 = vmatpush1.bf16.msra.mxu0 0
        %4934 = vmatprep.subr.bf16.mxu0 0
        %4935 = vmatpush1.bf16.msra.mxu0 0
        %4936 = vmatprep.subr.bf16.mxu0 0
        %4937 = vmatpush1.bf16.msra.mxu0 0
        %4938 = vmatprep.subr.bf16.mxu0 0
        %4939 = vmatpush1.bf16.msra.mxu0 0
        %4940 = vmatprep.subr.bf16.mxu0 0
        %4941 = vmatpush1.bf16.msra.mxu0 0
        %4942 = vmatprep.mubr.bf16.mxu0 0
        %4943 = vmatmul.mubr.bf16.gmra.mrb[0].mxu0 %v4908
        %v4944 = vpop.f32.mrb[0].mxu0
        %v4945 = vadd.f32 0.0, %v4944
        %v4946 = vpop.f32.mrb[0].mxu0
        %v4947 = vpop.f32.mrb[0].mxu0
        %v4948 = vpop.f32.mrb[0].mxu0
        %4949 = vdwg.mxu0
        %v4951 = vsel %vm3935, %v4850, 0
        %4953 = vmatprep.subr.bf16.mxu0 0
        %4954 = vmatpush1.bf16.msra.mxu0 %v3921
        %4955 = vmatprep.subr.bf16.mxu0 0
        %4956 = vmatpush1.bf16.msra.mxu0 0
        %4957 = vmatprep.subr.bf16.mxu0 0
        %4958 = vmatpush1.bf16.msra.mxu0 0
        %4959 = vmatprep.subr.bf16.mxu0 0
        %4960 = vmatpush1.bf16.msra.mxu0 0
        %4961 = vmatprep.subr.bf16.mxu0 0
        %4962 = vmatpush1.bf16.msra.mxu0 0
        %4963 = vmatprep.subr.bf16.mxu0 0
        %4964 = vmatpush1.bf16.msra.mxu0 0
        %4965 = vmatprep.subr.bf16.mxu0 0
        %4966 = vmatpush1.bf16.msra.mxu0 0
        %4967 = vmatprep.subr.bf16.mxu0 0
        %4968 = vmatpush1.bf16.msra.mxu0 0
        %4969 = vmatprep.subr.bf16.mxu0 0
        %4970 = vmatpush1.bf16.msra.mxu0 0
        %4971 = vmatprep.subr.bf16.mxu0 0
        %4972 = vmatpush1.bf16.msra.mxu0 0
        %4973 = vmatprep.subr.bf16.mxu0 0
        %4974 = vmatpush1.bf16.msra.mxu0 0
        %4975 = vmatprep.subr.bf16.mxu0 0
        %4976 = vmatpush1.bf16.msra.mxu0 0
        %4977 = vmatprep.subr.bf16.mxu0 0
        %4978 = vmatpush1.bf16.msra.mxu0 0
        %4979 = vmatprep.subr.bf16.mxu0 0
        %4980 = vmatpush1.bf16.msra.mxu0 0
        %4981 = vmatprep.subr.bf16.mxu0 0
        %4982 = vmatpush1.bf16.msra.mxu0 0
        %4983 = vmatprep.subr.bf16.mxu0 0
        %4984 = vmatpush1.bf16.msra.mxu0 0
        %4985 = vmatprep.mubr.bf16.mxu0 0
        %4986 = vmatmul.mubr.bf16.gmra.mrb[0].mxu0 %v4951
        %v4987 = vpop.f32.mrb[0].mxu0
        %v4988 = vadd.f32 0.0, %v4987
        %v4989 = vpop.f32.mrb[0].mxu0
        %v4990 = vpop.f32.mrb[0].mxu0
        %v4991 = vpop.f32.mrb[0].mxu0
        %4992 = vdwg.mxu0
        %v4994 = vsel %vm3935, %v4851, 0
        %4996 = vmatprep.subr.bf16.mxu0 0
        %4997 = vmatpush1.bf16.msra.mxu0 %v3922
        %4998 = vmatprep.subr.bf16.mxu0 0
        %4999 = vmatpush1.bf16.msra.mxu0 0
        %5000 = vmatprep.subr.bf16.mxu0 0
        %5001 = vmatpush1.bf16.msra.mxu0 0
        %5002 = vmatprep.subr.bf16.mxu0 0
        %5003 = vmatpush1.bf16.msra.mxu0 0
        %5004 = vmatprep.subr.bf16.mxu0 0
        %5005 = vmatpush1.bf16.msra.mxu0 0
        %5006 = vmatprep.subr.bf16.mxu0 0
        %5007 = vmatpush1.bf16.msra.mxu0 0
        %5008 = vmatprep.subr.bf16.mxu0 0
        %5009 = vmatpush1.bf16.msra.mxu0 0
        %5010 = vmatprep.subr.bf16.mxu0 0
        %5011 = vmatpush1.bf16.msra.mxu0 0
        %5012 = vmatprep.subr.bf16.mxu0 0
        %5013 = vmatpush1.bf16.msra.mxu0 0
        %5014 = vmatprep.subr.bf16.mxu0 0
        %5015 = vmatpush1.bf16.msra.mxu0 0
        %5016 = vmatprep.subr.bf16.mxu0 0
        %5017 = vmatpush1.bf16.msra.mxu0 0
        %5018 = vmatprep.subr.bf16.mxu0 0
        %5019 = vmatpush1.bf16.msra.mxu0 0
        %5020 = vmatprep.subr.bf16.mxu0 0
        %5021 = vmatpush1.bf16.msra.mxu0 0
        %5022 = vmatprep.subr.bf16.mxu0 0
        %5023 = vmatpush1.bf16.msra.mxu0 0
        %5024 = vmatprep.subr.bf16.mxu0 0
        %5025 = vmatpush1.bf16.msra.mxu0 0
        %5026 = vmatprep.subr.bf16.mxu0 0
        %5027 = vmatpush1.bf16.msra.mxu0 0
        %5028 = vmatprep.mubr.bf16.mxu0 0
        %5029 = vmatmul.mubr.bf16.gmra.mrb[0].mxu0 %v4994
        %v5030 = vpop.f32.mrb[0].mxu0
        %v5031 = vadd.f32 0.0, %v5030
        %v5032 = vpop.f32.mrb[0].mxu0
        %v5033 = vpop.f32.mrb[0].mxu0
        %v5034 = vpop.f32.mrb[0].mxu0
        %5035 = vdwg.mxu0
        %v5037 = vsel %vm3935, %v4852, 0
        %5039 = vmatprep.subr.bf16.mxu0 0
        %5040 = vmatpush1.bf16.msra.mxu0 %v3923
        %5041 = vmatprep.subr.bf16.mxu0 0
        %5042 = vmatpush1.bf16.msra.mxu0 0
        %5043 = vmatprep.subr.bf16.mxu0 0
        %5044 = vmatpush1.bf16.msra.mxu0 0
        %5045 = vmatprep.subr.bf16.mxu0 0
        %5046 = vmatpush1.bf16.msra.mxu0 0
        %5047 = vmatprep.subr.bf16.mxu0 0
        %5048 = vmatpush1.bf16.msra.mxu0 0
        %5049 = vmatprep.subr.bf16.mxu0 0
        %5050 = vmatpush1.bf16.msra.mxu0 0
        %5051 = vmatprep.subr.bf16.mxu0 0
        %5052 = vmatpush1.bf16.msra.mxu0 0
        %5053 = vmatprep.subr.bf16.mxu0 0
        %5054 = vmatpush1.bf16.msra.mxu0 0
        %5055 = vmatprep.subr.bf16.mxu0 0
        %5056 = vmatpush1.bf16.msra.mxu0 0
        %5057 = vmatprep.subr.bf16.mxu0 0
        %5058 = vmatpush1.bf16.msra.mxu0 0
        %5059 = vmatprep.subr.bf16.mxu0 0
        %5060 = vmatpush1.bf16.msra.mxu0 0
        %5061 = vmatprep.subr.bf16.mxu0 0
        %5062 = vmatpush1.bf16.msra.mxu0 0
        %5063 = vmatprep.subr.bf16.mxu0 0
        %5064 = vmatpush1.bf16.msra.mxu0 0
        %5065 = vmatprep.subr.bf16.mxu0 0
        %5066 = vmatpush1.bf16.msra.mxu0 0
        %5067 = vmatprep.subr.bf16.mxu0 0
        %5068 = vmatpush1.bf16.msra.mxu0 0
        %5069 = vmatprep.subr.bf16.mxu0 0
        %5070 = vmatpush1.bf16.msra.mxu0 0
        %5071 = vmatprep.mubr.bf16.mxu0 0
        %5072 = vmatmul.mubr.bf16.gmra.mrb[0].mxu0 %v5037
        %v5073 = vpop.f32.mrb[0].mxu0
        %v5074 = vadd.f32 0.0, %v5073
        %v5075 = vpop.f32.mrb[0].mxu0
        %v5076 = vpop.f32.mrb[0].mxu0
        %v5077 = vpop.f32.mrb[0].mxu0
        %5078 = vdwg.mxu0
        %v5080 = vsel %vm3935, %v4853, 0
        %5082 = vmatprep.subr.bf16.mxu0 0
        %5083 = vmatpush1.bf16.msra.mxu0 %v3924
        %5084 = vmatprep.subr.bf16.mxu0 0
        %5085 = vmatpush1.bf16.msra.mxu0 0
        %5086 = vmatprep.subr.bf16.mxu0 0
        %5087 = vmatpush1.bf16.msra.mxu0 0
        %5088 = vmatprep.subr.bf16.mxu0 0
        %5089 = vmatpush1.bf16.msra.mxu0 0
        %5090 = vmatprep.subr.bf16.mxu0 0
        %5091 = vmatpush1.bf16.msra.mxu0 0
        %5092 = vmatprep.subr.bf16.mxu0 0
        %5093 = vmatpush1.bf16.msra.mxu0 0
        %5094 = vmatprep.subr.bf16.mxu0 0
        %5095 = vmatpush1.bf16.msra.mxu0 0
        %5096 = vmatprep.subr.bf16.mxu0 0
        %5097 = vmatpush1.bf16.msra.mxu0 0
        %5098 = vmatprep.subr.bf16.mxu0 0
        %5099 = vmatpush1.bf16.msra.mxu0 0
        %5100 = vmatprep.subr.bf16.mxu0 0
        %5101 = vmatpush1.bf16.msra.mxu0 0
        %5102 = vmatprep.subr.bf16.mxu0 0
        %5103 = vmatpush1.bf16.msra.mxu0 0
        %5104 = vmatprep.subr.bf16.mxu0 0
        %5105 = vmatpush1.bf16.msra.mxu0 0
        %5106 = vmatprep.subr.bf16.mxu0 0
        %5107 = vmatpush1.bf16.msra.mxu0 0
        %5108 = vmatprep.subr.bf16.mxu0 0
        %5109 = vmatpush1.bf16.msra.mxu0 0
        %5110 = vmatprep.subr.bf16.mxu0 0
        %5111 = vmatpush1.bf16.msra.mxu0 0
        %5112 = vmatprep.subr.bf16.mxu0 0
        %5113 = vmatpush1.bf16.msra.mxu0 0
        %5114 = vmatprep.mubr.bf16.mxu0 0
        %5115 = vmatmul.mubr.bf16.gmra.mrb[0].mxu0 %v5080
        %v5116 = vpop.f32.mrb[0].mxu0
        %v5117 = vadd.f32 0.0, %v5116
        %v5118 = vpop.f32.mrb[0].mxu0
        %v5119 = vpop.f32.mrb[0].mxu0
        %v5120 = vpop.f32.mrb[0].mxu0
        %5121 = vdwg.mxu0
        %v5123 = vsel %vm3935, %v4854, 0
        %5125 = vmatprep.subr.bf16.mxu0 0
        %5126 = vmatpush1.bf16.msra.mxu0 %v3925
        %5127 = vmatprep.subr.bf16.mxu0 0
        %5128 = vmatpush1.bf16.msra.mxu0 0
        %5129 = vmatprep.subr.bf16.mxu0 0
        %5130 = vmatpush1.bf16.msra.mxu0 0
        %5131 = vmatprep.subr.bf16.mxu0 0
        %5132 = vmatpush1.bf16.msra.mxu0 0
        %5133 = vmatprep.subr.bf16.mxu0 0
        %5134 = vmatpush1.bf16.msra.mxu0 0
        %5135 = vmatprep.subr.bf16.mxu0 0
        %5136 = vmatpush1.bf16.msra.mxu0 0
        %5137 = vmatprep.subr.bf16.mxu0 0
        %5138 = vmatpush1.bf16.msra.mxu0 0
        %5139 = vmatprep.subr.bf16.mxu0 0
        %5140 = vmatpush1.bf16.msra.mxu0 0
        %5141 = vmatprep.subr.bf16.mxu0 0
        %5142 = vmatpush1.bf16.msra.mxu0 0
        %5143 = vmatprep.subr.bf16.mxu0 0
        %5144 = vmatpush1.bf16.msra.mxu0 0
        %5145 = vmatprep.subr.bf16.mxu0 0
        %5146 = vmatpush1.bf16.msra.mxu0 0
        %5147 = vmatprep.subr.bf16.mxu0 0
        %5148 = vmatpush1.bf16.msra.mxu0 0
        %5149 = vmatprep.subr.bf16.mxu0 0
        %5150 = vmatpush1.bf16.msra.mxu0 0
        %5151 = vmatprep.subr.bf16.mxu0 0
        %5152 = vmatpush1.bf16.msra.mxu0 0
        %5153 = vmatprep.subr.bf16.mxu0 0
        %5154 = vmatpush1.bf16.msra.mxu0 0
        %5155 = vmatprep.subr.bf16.mxu0 0
        %5156 = vmatpush1.bf16.msra.mxu0 0
        %5157 = vmatprep.mubr.bf16.mxu0 0
        %5158 = vmatmul.mubr.bf16.gmra.mrb[0].mxu0 %v5123
        %v5159 = vpop.f32.mrb[0].mxu0
        %v5160 = vadd.f32 0.0, %v5159
        %v5161 = vpop.f32.mrb[0].mxu0
        %v5162 = vpop.f32.mrb[0].mxu0
        %v5163 = vpop.f32.mrb[0].mxu0
        %5164 = vdwg.mxu0
        %v5166 = vsel %vm3935, %v4855, 0
        %5168 = vmatprep.subr.bf16.mxu0 0
        %5169 = vmatpush1.bf16.msra.mxu0 %v3926
        %5170 = vmatprep.subr.bf16.mxu0 0
        %5171 = vmatpush1.bf16.msra.mxu0 0
        %5172 = vmatprep.subr.bf16.mxu0 0
        %5173 = vmatpush1.bf16.msra.mxu0 0
        %5174 = vmatprep.subr.bf16.mxu0 0
        %5175 = vmatpush1.bf16.msra.mxu0 0
        %5176 = vmatprep.subr.bf16.mxu0 0
        %5177 = vmatpush1.bf16.msra.mxu0 0
        %5178 = vmatprep.subr.bf16.mxu0 0
        %5179 = vmatpush1.bf16.msra.mxu0 0
        %5180 = vmatprep.subr.bf16.mxu0 0
        %5181 = vmatpush1.bf16.msra.mxu0 0
        %5182 = vmatprep.subr.bf16.mxu0 0
        %5183 = vmatpush1.bf16.msra.mxu0 0
        %5184 = vmatprep.subr.bf16.mxu0 0
        %5185 = vmatpush1.bf16.msra.mxu0 0
        %5186 = vmatprep.subr.bf16.mxu0 0
        %5187 = vmatpush1.bf16.msra.mxu0 0
        %5188 = vmatprep.subr.bf16.mxu0 0
        %5189 = vmatpush1.bf16.msra.mxu0 0
        %5190 = vmatprep.subr.bf16.mxu0 0
        %5191 = vmatpush1.bf16.msra.mxu0 0
        %5192 = vmatprep.subr.bf16.mxu0 0
        %5193 = vmatpush1.bf16.msra.mxu0 0
        %5194 = vmatprep.subr.bf16.mxu0 0
        %5195 = vmatpush1.bf16.msra.mxu0 0
        %5196 = vmatprep.subr.bf16.mxu0 0
        %5197 = vmatpush1.bf16.msra.mxu0 0
        %5198 = vmatprep.subr.bf16.mxu0 0
        %5199 = vmatpush1.bf16.msra.mxu0 0
        %5200 = vmatprep.mubr.bf16.mxu0 0
        %5201 = vmatmul.mubr.bf16.gmra.mrb[0].mxu0 %v5166
        %v5202 = vpop.f32.mrb[0].mxu0
        %v5203 = vadd.f32 0.0, %v5202
        %v5204 = vpop.f32.mrb[0].mxu0
        %v5205 = vpop.f32.mrb[0].mxu0
        %v5206 = vpop.f32.mrb[0].mxu0
        %5207 = vdwg.mxu0
        %v5209 = vsel %vm3935, %v4856, 0
        %5211 = vmatprep.subr.bf16.mxu0 0
        %5212 = vmatpush1.bf16.msra.mxu0 %v3927
        %5213 = vmatprep.subr.bf16.mxu0 0
        %5214 = vmatpush1.bf16.msra.mxu0 0
        %5215 = vmatprep.subr.bf16.mxu0 0
        %5216 = vmatpush1.bf16.msra.mxu0 0
        %5217 = vmatprep.subr.bf16.mxu0 0
        %5218 = vmatpush1.bf16.msra.mxu0 0
        %5219 = vmatprep.subr.bf16.mxu0 0
        %5220 = vmatpush1.bf16.msra.mxu0 0
        %5221 = vmatprep.subr.bf16.mxu0 0
        %5222 = vmatpush1.bf16.msra.mxu0 0
        %5223 = vmatprep.subr.bf16.mxu0 0
        %5224 = vmatpush1.bf16.msra.mxu0 0
        %5225 = vmatprep.subr.bf16.mxu0 0
        %5226 = vmatpush1.bf16.msra.mxu0 0
        %5227 = vmatprep.subr.bf16.mxu0 0
        %5228 = vmatpush1.bf16.msra.mxu0 0
        %5229 = vmatprep.subr.bf16.mxu0 0
        %5230 = vmatpush1.bf16.msra.mxu0 0
        %5231 = vmatprep.subr.bf16.mxu0 0
        %5232 = vmatpush1.bf16.msra.mxu0 0
        %5233 = vmatprep.subr.bf16.mxu0 0
        %5234 = vmatpush1.bf16.msra.mxu0 0
        %5235 = vmatprep.subr.bf16.mxu0 0
        %5236 = vmatpush1.bf16.msra.mxu0 0
        %5237 = vmatprep.subr.bf16.mxu0 0
        %5238 = vmatpush1.bf16.msra.mxu0 0
        %5239 = vmatprep.subr.bf16.mxu0 0
        %5240 = vmatpush1.bf16.msra.mxu0 0
        %5241 = vmatprep.subr.bf16.mxu0 0
        %5242 = vmatpush1.bf16.msra.mxu0 0
        %5243 = vmatprep.mubr.bf16.mxu0 0
        %5244 = vmatmul.mubr.bf16.gmra.mrb[0].mxu0 %v5209
        %v5245 = vpop.f32.mrb[0].mxu0
        %v5246 = vadd.f32 0.0, %v5245
        %v5247 = vpop.f32.mrb[0].mxu0
        %v5248 = vpop.f32.mrb[0].mxu0
        %v5249 = vpop.f32.mrb[0].mxu0
        %5250 = vdwg.mxu0
        %v5252 = vsel %vm3935, %v4857, 0
        %5254 = vmatprep.subr.bf16.mxu0 0
        %5255 = vmatpush1.bf16.msra.mxu0 %v3928
        %5256 = vmatprep.subr.bf16.mxu0 0
        %5257 = vmatpush1.bf16.msra.mxu0 0
        %5258 = vmatprep.subr.bf16.mxu0 0
        %5259 = vmatpush1.bf16.msra.mxu0 0
        %5260 = vmatprep.subr.bf16.mxu0 0
        %5261 = vmatpush1.bf16.msra.mxu0 0
        %5262 = vmatprep.subr.bf16.mxu0 0
        %5263 = vmatpush1.bf16.msra.mxu0 0
        %5264 = vmatprep.subr.bf16.mxu0 0
        %5265 = vmatpush1.bf16.msra.mxu0 0
        %5266 = vmatprep.subr.bf16.mxu0 0
        %5267 = vmatpush1.bf16.msra.mxu0 0
        %5268 = vmatprep.subr.bf16.mxu0 0
        %5269 = vmatpush1.bf16.msra.mxu0 0
        %5270 = vmatprep.subr.bf16.mxu0 0
        %5271 = vmatpush1.bf16.msra.mxu0 0
        %5272 = vmatprep.subr.bf16.mxu0 0
        %5273 = vmatpush1.bf16.msra.mxu0 0
        %5274 = vmatprep.subr.bf16.mxu0 0
        %5275 = vmatpush1.bf16.msra.mxu0 0
        %5276 = vmatprep.subr.bf16.mxu0 0
        %5277 = vmatpush1.bf16.msra.mxu0 0
        %5278 = vmatprep.subr.bf16.mxu0 0
        %5279 = vmatpush1.bf16.msra.mxu0 0
        %5280 = vmatprep.subr.bf16.mxu0 0
        %5281 = vmatpush1.bf16.msra.mxu0 0
        %5282 = vmatprep.subr.bf16.mxu0 0
        %5283 = vmatpush1.bf16.msra.mxu0 0
        %5284 = vmatprep.subr.bf16.mxu0 0
        %5285 = vmatpush1.bf16.msra.mxu0 0
        %5286 = vmatprep.mubr.bf16.mxu0 0
        %5287 = vmatmul.mubr.bf16.gmra.mrb[0].mxu0 %v5252
        %v5288 = vpop.f32.mrb[0].mxu0
        %v5289 = vadd.f32 0.0, %v5288
        %v5290 = vpop.f32.mrb[0].mxu0
        %v5291 = vpop.f32.mrb[0].mxu0
        %v5292 = vpop.f32.mrb[0].mxu0
        %5293 = vdwg.mxu0
        %v5295 = vsel %vm3935, %v4858, 0
        %5297 = vmatprep.subr.bf16.mxu0 0
        %5298 = vmatpush1.bf16.msra.mxu0 %v3929
        %5299 = vmatprep.subr.bf16.mxu0 0
        %5300 = vmatpush1.bf16.msra.mxu0 0
        %5301 = vmatprep.subr.bf16.mxu0 0
        %5302 = vmatpush1.bf16.msra.mxu0 0
        %5303 = vmatprep.subr.bf16.mxu0 0
        %5304 = vmatpush1.bf16.msra.mxu0 0
        %5305 = vmatprep.subr.bf16.mxu0 0
        %5306 = vmatpush1.bf16.msra.mxu0 0
        %5307 = vmatprep.subr.bf16.mxu0 0
        %5308 = vmatpush1.bf16.msra.mxu0 0
        %5309 = vmatprep.subr.bf16.mxu0 0
        %5310 = vmatpush1.bf16.msra.mxu0 0
        %5311 = vmatprep.subr.bf16.mxu0 0
        %5312 = vmatpush1.bf16.msra.mxu0 0
        %5313 = vmatprep.subr.bf16.mxu0 0
        %5314 = vmatpush1.bf16.msra.mxu0 0
        %5315 = vmatprep.subr.bf16.mxu0 0
        %5316 = vmatpush1.bf16.msra.mxu0 0
        %5317 = vmatprep.subr.bf16.mxu0 0
        %5318 = vmatpush1.bf16.msra.mxu0 0
        %5319 = vmatprep.subr.bf16.mxu0 0
        %5320 = vmatpush1.bf16.msra.mxu0 0
        %5321 = vmatprep.subr.bf16.mxu0 0
        %5322 = vmatpush1.bf16.msra.mxu0 0
        %5323 = vmatprep.subr.bf16.mxu0 0
        %5324 = vmatpush1.bf16.msra.mxu0 0
        %5325 = vmatprep.subr.bf16.mxu0 0
        %5326 = vmatpush1.bf16.msra.mxu0 0
        %5327 = vmatprep.subr.bf16.mxu0 0
        %5328 = vmatpush1.bf16.msra.mxu0 0
        %5329 = vmatprep.mubr.bf16.mxu0 0
        %5330 = vmatmul.mubr.bf16.gmra.mrb[0].mxu0 %v5295
        %v5331 = vpop.f32.mrb[0].mxu0
        %v5332 = vadd.f32 0.0, %v5331
        %v5333 = vpop.f32.mrb[0].mxu0
        %v5334 = vpop.f32.mrb[0].mxu0
        %v5335 = vpop.f32.mrb[0].mxu0
        %5336 = vdwg.mxu0
        %v5338 = vsel %vm3935, %v4859, 0
        %5340 = vmatprep.subr.bf16.mxu0 0
        %5341 = vmatpush1.bf16.msra.mxu0 %v3930
        %5342 = vmatprep.subr.bf16.mxu0 0
        %5343 = vmatpush1.bf16.msra.mxu0 0
        %5344 = vmatprep.subr.bf16.mxu0 0
        %5345 = vmatpush1.bf16.msra.mxu0 0
        %5346 = vmatprep.subr.bf16.mxu0 0
        %5347 = vmatpush1.bf16.msra.mxu0 0
        %5348 = vmatprep.subr.bf16.mxu0 0
        %5349 = vmatpush1.bf16.msra.mxu0 0
        %5350 = vmatprep.subr.bf16.mxu0 0
        %5351 = vmatpush1.bf16.msra.mxu0 0
        %5352 = vmatprep.subr.bf16.mxu0 0
        %5353 = vmatpush1.bf16.msra.mxu0 0
        %5354 = vmatprep.subr.bf16.mxu0 0
        %5355 = vmatpush1.bf16.msra.mxu0 0
        %5356 = vmatprep.subr.bf16.mxu0 0
        %5357 = vmatpush1.bf16.msra.mxu0 0
        %5358 = vmatprep.subr.bf16.mxu0 0
        %5359 = vmatpush1.bf16.msra.mxu0 0
        %5360 = vmatprep.subr.bf16.mxu0 0
        %5361 = vmatpush1.bf16.msra.mxu0 0
        %5362 = vmatprep.subr.bf16.mxu0 0
        %5363 = vmatpush1.bf16.msra.mxu0 0
        %5364 = vmatprep.subr.bf16.mxu0 0
        %5365 = vmatpush1.bf16.msra.mxu0 0
        %5366 = vmatprep.subr.bf16.mxu0 0
        %5367 = vmatpush1.bf16.msra.mxu0 0
        %5368 = vmatprep.subr.bf16.mxu0 0
        %5369 = vmatpush1.bf16.msra.mxu0 0
        %5370 = vmatprep.subr.bf16.mxu0 0
        %5371 = vmatpush1.bf16.msra.mxu0 0
        %5372 = vmatprep.mubr.bf16.mxu0 0
        %5373 = vmatmul.mubr.bf16.gmra.mrb[0].mxu0 %v5338
        %v5374 = vpop.f32.mrb[0].mxu0
        %v5375 = vadd.f32 0.0, %v5374
        %v5376 = vpop.f32.mrb[0].mxu0
        %v5377 = vpop.f32.mrb[0].mxu0
        %v5378 = vpop.f32.mrb[0].mxu0
        %5379 = vdwg.mxu0
        %v5381 = vsel %vm3935, %v4860, 0
        %5383 = vmatprep.subr.bf16.mxu0 0
        %5384 = vmatpush1.bf16.msra.mxu0 %v3931
        %5385 = vmatprep.subr.bf16.mxu0 0
        %5386 = vmatpush1.bf16.msra.mxu0 0
        %5387 = vmatprep.subr.bf16.mxu0 0
        %5388 = vmatpush1.bf16.msra.mxu0 0
        %5389 = vmatprep.subr.bf16.mxu0 0
        %5390 = vmatpush1.bf16.msra.mxu0 0
        %5391 = vmatprep.subr.bf16.mxu0 0
        %5392 = vmatpush1.bf16.msra.mxu0 0
        %5393 = vmatprep.subr.bf16.mxu0 0
        %5394 = vmatpush1.bf16.msra.mxu0 0
        %5395 = vmatprep.subr.bf16.mxu0 0
        %5396 = vmatpush1.bf16.msra.mxu0 0
        %5397 = vmatprep.subr.bf16.mxu0 0
        %5398 = vmatpush1.bf16.msra.mxu0 0
        %5399 = vmatprep.subr.bf16.mxu0 0
        %5400 = vmatpush1.bf16.msra.mxu0 0
        %5401 = vmatprep.subr.bf16.mxu0 0
        %5402 = vmatpush1.bf16.msra.mxu0 0
        %5403 = vmatprep.subr.bf16.mxu0 0
        %5404 = vmatpush1.bf16.msra.mxu0 0
        %5405 = vmatprep.subr.bf16.mxu0 0
        %5406 = vmatpush1.bf16.msra.mxu0 0
        %5407 = vmatprep.subr.bf16.mxu0 0
        %5408 = vmatpush1.bf16.msra.mxu0 0
        %5409 = vmatprep.subr.bf16.mxu0 0
        %5410 = vmatpush1.bf16.msra.mxu0 0
        %5411 = vmatprep.subr.bf16.mxu0 0
        %5412 = vmatpush1.bf16.msra.mxu0 0
        %5413 = vmatprep.subr.bf16.mxu0 0
        %5414 = vmatpush1.bf16.msra.mxu0 0
        %5415 = vmatprep.mubr.bf16.mxu0 0
        %5416 = vmatmul.mubr.bf16.gmra.mrb[0].mxu0 %v5381
        %v5417 = vpop.f32.mrb[0].mxu0
        %v5418 = vadd.f32 0.0, %v5417
        %v5419 = vpop.f32.mrb[0].mxu0
        %v5420 = vpop.f32.mrb[0].mxu0
        %v5421 = vpop.f32.mrb[0].mxu0
        %5422 = vdwg.mxu0
        %v5424 = vsel %vm3935, %v4861, 0
        %5426 = vmatprep.subr.bf16.mxu0 0
        %5427 = vmatpush1.bf16.msra.mxu0 %v3932
        %5428 = vmatprep.subr.bf16.mxu0 0
        %5429 = vmatpush1.bf16.msra.mxu0 0
        %5430 = vmatprep.subr.bf16.mxu0 0
        %5431 = vmatpush1.bf16.msra.mxu0 0
        %5432 = vmatprep.subr.bf16.mxu0 0
        %5433 = vmatpush1.bf16.msra.mxu0 0
        %5434 = vmatprep.subr.bf16.mxu0 0
        %5435 = vmatpush1.bf16.msra.mxu0 0
        %5436 = vmatprep.subr.bf16.mxu0 0
        %5437 = vmatpush1.bf16.msra.mxu0 0
        %5438 = vmatprep.subr.bf16.mxu0 0
        %5439 = vmatpush1.bf16.msra.mxu0 0
        %5440 = vmatprep.subr.bf16.mxu0 0
        %5441 = vmatpush1.bf16.msra.mxu0 0
        %5442 = vmatprep.subr.bf16.mxu0 0
        %5443 = vmatpush1.bf16.msra.mxu0 0
        %5444 = vmatprep.subr.bf16.mxu0 0
        %5445 = vmatpush1.bf16.msra.mxu0 0
        %5446 = vmatprep.subr.bf16.mxu0 0
        %5447 = vmatpush1.bf16.msra.mxu0 0
        %5448 = vmatprep.subr.bf16.mxu0 0
        %5449 = vmatpush1.bf16.msra.mxu0 0
        %5450 = vmatprep.subr.bf16.mxu0 0
        %5451 = vmatpush1.bf16.msra.mxu0 0
        %5452 = vmatprep.subr.bf16.mxu0 0
        %5453 = vmatpush1.bf16.msra.mxu0 0
        %5454 = vmatprep.subr.bf16.mxu0 0
        %5455 = vmatpush1.bf16.msra.mxu0 0
        %5456 = vmatprep.subr.bf16.mxu0 0
        %5457 = vmatpush1.bf16.msra.mxu0 0
        %5458 = vmatprep.mubr.bf16.mxu0 0
        %5459 = vmatmul.mubr.bf16.gmra.mrb[0].mxu0 %v5424
        %v5460 = vpop.f32.mrb[0].mxu0
        %v5461 = vadd.f32 0.0, %v5460
        %v5462 = vpop.f32.mrb[0].mxu0
        %v5463 = vpop.f32.mrb[0].mxu0
        %v5464 = vpop.f32.mrb[0].mxu0
        %5465 = vdwg.mxu0
        %v5467 = vsel %vm3935, %v4862, 0
        %5469 = vmatprep.subr.bf16.mxu0 0
        %5470 = vmatpush1.bf16.msra.mxu0 %v3933
        %5471 = vmatprep.subr.bf16.mxu0 0
        %5472 = vmatpush1.bf16.msra.mxu0 0
        %5473 = vmatprep.subr.bf16.mxu0 0
        %5474 = vmatpush1.bf16.msra.mxu0 0
        %5475 = vmatprep.subr.bf16.mxu0 0
        %5476 = vmatpush1.bf16.msra.mxu0 0
        %5477 = vmatprep.subr.bf16.mxu0 0
        %5478 = vmatpush1.bf16.msra.mxu0 0
        %5479 = vmatprep.subr.bf16.mxu0 0
        %5480 = vmatpush1.bf16.msra.mxu0 0
        %5481 = vmatprep.subr.bf16.mxu0 0
        %5482 = vmatpush1.bf16.msra.mxu0 0
        %5483 = vmatprep.subr.bf16.mxu0 0
        %5484 = vmatpush1.bf16.msra.mxu0 0
        %5485 = vmatprep.subr.bf16.mxu0 0
        %5486 = vmatpush1.bf16.msra.mxu0 0
        %5487 = vmatprep.subr.bf16.mxu0 0
        %5488 = vmatpush1.bf16.msra.mxu0 0
        %5489 = vmatprep.subr.bf16.mxu0 0
        %5490 = vmatpush1.bf16.msra.mxu0 0
        %5491 = vmatprep.subr.bf16.mxu0 0
        %5492 = vmatpush1.bf16.msra.mxu0 0
        %5493 = vmatprep.subr.bf16.mxu0 0
        %5494 = vmatpush1.bf16.msra.mxu0 0
        %5495 = vmatprep.subr.bf16.mxu0 0
        %5496 = vmatpush1.bf16.msra.mxu0 0
        %5497 = vmatprep.subr.bf16.mxu0 0
        %5498 = vmatpush1.bf16.msra.mxu0 0
        %5499 = vmatprep.subr.bf16.mxu0 0
        %5500 = vmatpush1.bf16.msra.mxu0 0
        %5501 = vmatprep.mubr.bf16.mxu0 0
        %5502 = vmatmul.mubr.bf16.gmra.mrb[0].mxu0 %v5467
        %v5503 = vpop.f32.mrb[0].mxu0
        %v5504 = vadd.f32 0.0, %v5503
        %v5505 = vpop.f32.mrb[0].mxu0
        %v5506 = vpop.f32.mrb[0].mxu0
        %v5507 = vpop.f32.mrb[0].mxu0
        %5508 = vdwg.mxu0
        %v5510 = vsel %vm3935, %v4863, 0
        %5512 = vmatprep.subr.bf16.mxu0 0
        %5513 = vmatpush1.bf16.msra.mxu0 %v3934
        %5514 = vmatprep.subr.bf16.mxu0 0
        %5515 = vmatpush1.bf16.msra.mxu0 0
        %5516 = vmatprep.subr.bf16.mxu0 0
        %5517 = vmatpush1.bf16.msra.mxu0 0
        %5518 = vmatprep.subr.bf16.mxu0 0
        %5519 = vmatpush1.bf16.msra.mxu0 0
        %5520 = vmatprep.subr.bf16.mxu0 0
        %5521 = vmatpush1.bf16.msra.mxu0 0
        %5522 = vmatprep.subr.bf16.mxu0 0
        %5523 = vmatpush1.bf16.msra.mxu0 0
        %5524 = vmatprep.subr.bf16.mxu0 0
        %5525 = vmatpush1.bf16.msra.mxu0 0
        %5526 = vmatprep.subr.bf16.mxu0 0
        %5527 = vmatpush1.bf16.msra.mxu0 0
        %5528 = vmatprep.subr.bf16.mxu0 0
        %5529 = vmatpush1.bf16.msra.mxu0 0
        %5530 = vmatprep.subr.bf16.mxu0 0
        %5531 = vmatpush1.bf16.msra.mxu0 0
        %5532 = vmatprep.subr.bf16.mxu0 0
        %5533 = vmatpush1.bf16.msra.mxu0 0
        %5534 = vmatprep.subr.bf16.mxu0 0
        %5535 = vmatpush1.bf16.msra.mxu0 0
        %5536 = vmatprep.subr.bf16.mxu0 0
        %5537 = vmatpush1.bf16.msra.mxu0 0
        %5538 = vmatprep.subr.bf16.mxu0 0
        %5539 = vmatpush1.bf16.msra.mxu0 0
        %5540 = vmatprep.subr.bf16.mxu0 0
        %5541 = vmatpush1.bf16.msra.mxu0 0
        %5542 = vmatprep.subr.bf16.mxu0 0
        %5543 = vmatpush1.bf16.msra.mxu0 0
        %5544 = vmatprep.mubr.bf16.mxu0 0
        %5545 = vmatmul.mubr.bf16.gmra.mrb[0].mxu0 %v5510
        %v5546 = vpop.f32.mrb[0].mxu0
        %v5547 = vadd.f32 0.0, %v5546
        %v5548 = vpop.f32.mrb[0].mxu0
        %v5549 = vpop.f32.mrb[0].mxu0
        %v5550 = vpop.f32.mrb[0].mxu0
        %5551 = vdwg.mxu0
        %v5552 = vcombine.low %v4902, %v4988
        %v5553 = vcombine.high %v4902, %v4988
        %v5555 = vunpack.c.l.s4 1983009808
        %v5556 = vunpack.c.0.s8 %v5555
        %v5557 = vlaneseq
        %v5558 = vshrl.u32 %v5557, 7
        %v5559 = vsub.s32 %v5556, %v5558
        %v5560 = vrot.slane %v5552, %v5559
        %v5562 = vunpack.c.l.s4 1983009808
        %v5563 = vunpack.c.0.s8 %v5562
        %v5564 = vlaneseq
        %v5565 = vshrl.u32 %v5564, 7
        %v5566 = vsub.s32 %v5563, %v5565
        %v5567 = vrot.slane %v5553, %v5566
        %v5568 = vcombine.low %v4945, %v5031
        %v5569 = vcombine.high %v4945, %v5031
        %v5571 = vunpack.c.l.s4 1983009808
        %v5572 = vunpack.c.0.s8 %v5571
        %v5573 = vlaneseq
        %v5574 = vshrl.u32 %v5573, 7
        %v5575 = vsub.s32 %v5572, %v5574
        %v5576 = vrot.slane %v5568, %v5575
        %v5578 = vunpack.c.l.s4 1983009808
        %v5579 = vunpack.c.0.s8 %v5578
        %v5580 = vlaneseq
        %v5581 = vshrl.u32 %v5580, 7
        %v5582 = vsub.s32 %v5579, %v5581
        %v5583 = vrot.slane %v5569, %v5582
        %v5584 = vcombine.low %v5074, %v5160
        %v5585 = vcombine.high %v5074, %v5160
        %v5587 = vunpack.c.l.s4 1983009808
        %v5588 = vunpack.c.0.s8 %v5587
        %v5589 = vlaneseq
        %v5590 = vshrl.u32 %v5589, 7
        %v5591 = vsub.s32 %v5588, %v5590
        %v5592 = vrot.slane %v5584, %v5591
        %v5594 = vunpack.c.l.s4 1983009808
        %v5595 = vunpack.c.0.s8 %v5594
        %v5596 = vlaneseq
        %v5597 = vshrl.u32 %v5596, 7
        %v5598 = vsub.s32 %v5595, %v5597
        %v5599 = vrot.slane %v5585, %v5598
        %v5600 = vcombine.low %v5117, %v5203
        %v5601 = vcombine.high %v5117, %v5203
        %v5603 = vunpack.c.l.s4 1983009808
        %v5604 = vunpack.c.0.s8 %v5603
        %v5605 = vlaneseq
        %v5606 = vshrl.u32 %v5605, 7
        %v5607 = vsub.s32 %v5604, %v5606
        %v5608 = vrot.slane %v5600, %v5607
        %v5610 = vunpack.c.l.s4 1983009808
        %v5611 = vunpack.c.0.s8 %v5610
        %v5612 = vlaneseq
        %v5613 = vshrl.u32 %v5612, 7
        %v5614 = vsub.s32 %v5611, %v5613
        %v5615 = vrot.slane %v5601, %v5614
        %v5616 = vcombine.low %v5560, %v5576
        %v5617 = vcombine.high %v5560, %v5576
        %v5619 = vunpack.c.l.s4 1934713408
        %v5620 = vunpack.c.0.s8 %v5619
        %v5621 = vlaneseq
        %v5622 = vshrl.u32 %v5621, 7
        %v5623 = vsub.s32 %v5620, %v5622
        %v5624 = vrot.slane %v5616, %v5623
        %v5626 = vunpack.c.l.s4 1934713408
        %v5627 = vunpack.c.0.s8 %v5626
        %v5628 = vlaneseq
        %v5629 = vshrl.u32 %v5628, 7
        %v5630 = vsub.s32 %v5627, %v5629
        %v5631 = vrot.slane %v5617, %v5630
        %v5632 = vcombine.low %v5567, %v5583
        %v5633 = vcombine.high %v5567, %v5583
        %v5635 = vunpack.c.l.s4 1934713408
        %v5636 = vunpack.c.0.s8 %v5635
        %v5637 = vlaneseq
        %v5638 = vshrl.u32 %v5637, 7
        %v5639 = vsub.s32 %v5636, %v5638
        %v5640 = vrot.slane %v5632, %v5639
        %v5642 = vunpack.c.l.s4 1934713408
        %v5643 = vunpack.c.0.s8 %v5642
        %v5644 = vlaneseq
        %v5645 = vshrl.u32 %v5644, 7
        %v5646 = vsub.s32 %v5643, %v5645
        %v5647 = vrot.slane %v5633, %v5646
        %v5648 = vcombine.low %v5592, %v5608
        %v5649 = vcombine.high %v5592, %v5608
        %v5651 = vunpack.c.l.s4 1934713408
        %v5652 = vunpack.c.0.s8 %v5651
        %v5653 = vlaneseq
        %v5654 = vshrl.u32 %v5653, 7
        %v5655 = vsub.s32 %v5652, %v5654
        %v5656 = vrot.slane %v5648, %v5655
        %v5658 = vunpack.c.l.s4 1934713408
        %v5659 = vunpack.c.0.s8 %v5658
        %v5660 = vlaneseq
        %v5661 = vshrl.u32 %v5660, 7
        %v5662 = vsub.s32 %v5659, %v5661
        %v5663 = vrot.slane %v5649, %v5662
        %v5664 = vcombine.low %v5599, %v5615
        %v5665 = vcombine.high %v5599, %v5615
        %v5667 = vunpack.c.l.s4 1934713408
        %v5668 = vunpack.c.0.s8 %v5667
        %v5669 = vlaneseq
        %v5670 = vshrl.u32 %v5669, 7
        %v5671 = vsub.s32 %v5668, %v5670
        %v5672 = vrot.slane %v5664, %v5671
        %v5674 = vunpack.c.l.s4 1934713408
        %v5675 = vunpack.c.0.s8 %v5674
        %v5676 = vlaneseq
        %v5677 = vshrl.u32 %v5676, 7
        %v5678 = vsub.s32 %v5675, %v5677
        %v5679 = vrot.slane %v5665, %v5678
        %v5680 = vcombine.low %v5624, %v5656
        %v5681 = vcombine.high %v5624, %v5656
        %v5682 = vcombine.low %v5631, %v5663
        %v5683 = vcombine.high %v5631, %v5663
        %v5684 = vcombine.low %v5640, %v5672
        %v5685 = vcombine.high %v5640, %v5672
        %v5686 = vcombine.low %v5647, %v5679
        %v5687 = vcombine.high %v5647, %v5679
        %v5688 = vcombine.low %v5246, %v5332
        %v5689 = vcombine.high %v5246, %v5332
        %v5691 = vunpack.c.l.s4 1983009808
        %v5692 = vunpack.c.0.s8 %v5691
        %v5693 = vlaneseq
        %v5694 = vshrl.u32 %v5693, 7
        %v5695 = vsub.s32 %v5692, %v5694
        %v5696 = vrot.slane %v5688, %v5695
        %v5698 = vunpack.c.l.s4 1983009808
        %v5699 = vunpack.c.0.s8 %v5698
        %v5700 = vlaneseq
        %v5701 = vshrl.u32 %v5700, 7
        %v5702 = vsub.s32 %v5699, %v5701
        %v5703 = vrot.slane %v5689, %v5702
        %v5704 = vcombine.low %v5289, %v5375
        %v5705 = vcombine.high %v5289, %v5375
        %v5707 = vunpack.c.l.s4 1983009808
        %v5708 = vunpack.c.0.s8 %v5707
        %v5709 = vlaneseq
        %v5710 = vshrl.u32 %v5709, 7
        %v5711 = vsub.s32 %v5708, %v5710
        %v5712 = vrot.slane %v5704, %v5711
        %v5714 = vunpack.c.l.s4 1983009808
        %v5715 = vunpack.c.0.s8 %v5714
        %v5716 = vlaneseq
        %v5717 = vshrl.u32 %v5716, 7
        %v5718 = vsub.s32 %v5715, %v5717
        %v5719 = vrot.slane %v5705, %v5718
        %v5720 = vcombine.low %v5418, %v5504
        %v5721 = vcombine.high %v5418, %v5504
        %v5723 = vunpack.c.l.s4 1983009808
        %v5724 = vunpack.c.0.s8 %v5723
        %v5725 = vlaneseq
        %v5726 = vshrl.u32 %v5725, 7
        %v5727 = vsub.s32 %v5724, %v5726
        %v5728 = vrot.slane %v5720, %v5727
        %v5730 = vunpack.c.l.s4 1983009808
        %v5731 = vunpack.c.0.s8 %v5730
        %v5732 = vlaneseq
        %v5733 = vshrl.u32 %v5732, 7
        %v5734 = vsub.s32 %v5731, %v5733
        %v5735 = vrot.slane %v5721, %v5734
        %v5736 = vcombine.low %v5461, %v5547
        %v5737 = vcombine.high %v5461, %v5547
        %v5739 = vunpack.c.l.s4 1983009808
        %v5740 = vunpack.c.0.s8 %v5739
        %v5741 = vlaneseq
        %v5742 = vshrl.u32 %v5741, 7
        %v5743 = vsub.s32 %v5740, %v5742
        %v5744 = vrot.slane %v5736, %v5743
        %v5746 = vunpack.c.l.s4 1983009808
        %v5747 = vunpack.c.0.s8 %v5746
        %v5748 = vlaneseq
        %v5749 = vshrl.u32 %v5748, 7
        %v5750 = vsub.s32 %v5747, %v5749
        %v5751 = vrot.slane %v5737, %v5750
        %v5752 = vcombine.low %v5696, %v5712
        %v5753 = vcombine.high %v5696, %v5712
        %v5755 = vunpack.c.l.s4 1934713408
        %v5756 = vunpack.c.0.s8 %v5755
        %v5757 = vlaneseq
        %v5758 = vshrl.u32 %v5757, 7
        %v5759 = vsub.s32 %v5756, %v5758
        %v5760 = vrot.slane %v5752, %v5759
        %v5762 = vunpack.c.l.s4 1934713408
        %v5763 = vunpack.c.0.s8 %v5762
        %v5764 = vlaneseq
        %v5765 = vshrl.u32 %v5764, 7
        %v5766 = vsub.s32 %v5763, %v5765
        %v5767 = vrot.slane %v5753, %v5766
        %v5768 = vcombine.low %v5703, %v5719
        %v5769 = vcombine.high %v5703, %v5719
        %v5771 = vunpack.c.l.s4 1934713408
        %v5772 = vunpack.c.0.s8 %v5771
        %v5773 = vlaneseq
        %v5774 = vshrl.u32 %v5773, 7
        %v5775 = vsub.s32 %v5772, %v5774
        %v5776 = vrot.slane %v5768, %v5775
        %v5778 = vunpack.c.l.s4 1934713408
        %v5779 = vunpack.c.0.s8 %v5778
        %v5780 = vlaneseq
        %v5781 = vshrl.u32 %v5780, 7
        %v5782 = vsub.s32 %v5779, %v5781
        %v5783 = vrot.slane %v5769, %v5782
        %v5784 = vcombine.low %v5728, %v5744
        %v5785 = vcombine.high %v5728, %v5744
        %v5787 = vunpack.c.l.s4 1934713408
        %v5788 = vunpack.c.0.s8 %v5787
        %v5789 = vlaneseq
        %v5790 = vshrl.u32 %v5789, 7
        %v5791 = vsub.s32 %v5788, %v5790
        %v5792 = vrot.slane %v5784, %v5791
        %v5794 = vunpack.c.l.s4 1934713408
        %v5795 = vunpack.c.0.s8 %v5794
        %v5796 = vlaneseq
        %v5797 = vshrl.u32 %v5796, 7
        %v5798 = vsub.s32 %v5795, %v5797
        %v5799 = vrot.slane %v5785, %v5798
        %v5800 = vcombine.low %v5735, %v5751
        %v5801 = vcombine.high %v5735, %v5751
        %v5803 = vunpack.c.l.s4 1934713408
        %v5804 = vunpack.c.0.s8 %v5803
        %v5805 = vlaneseq
        %v5806 = vshrl.u32 %v5805, 7
        %v5807 = vsub.s32 %v5804, %v5806
        %v5808 = vrot.slane %v5800, %v5807
        %v5810 = vunpack.c.l.s4 1934713408
        %v5811 = vunpack.c.0.s8 %v5810
        %v5812 = vlaneseq
        %v5813 = vshrl.u32 %v5812, 7
        %v5814 = vsub.s32 %v5811, %v5813
        %v5815 = vrot.slane %v5801, %v5814
        %v5816 = vcombine.low %v5760, %v5792
        %v5817 = vcombine.high %v5760, %v5792
        %v5818 = vcombine.low %v5767, %v5799
        %v5819 = vcombine.high %v5767, %v5799
        %v5820 = vcombine.low %v5776, %v5808
        %v5821 = vcombine.high %v5776, %v5808
        %v5822 = vcombine.low %v5783, %v5815
        %v5823 = vcombine.high %v5783, %v5815
        %v5824 = vcombine.low %v5680, %v5682
        %v5825 = vcombine.high %v5680, %v5682
        %v5827 = vunpack.c.l.s4 1983009808
        %v5828 = vunpack.c.0.s8 %v5827
        %v5829 = vlaneseq
        %v5830 = vshrl.u32 %v5829, 7
        %v5831 = vsub.s32 %v5828, %v5830
        %v5832 = vrot.slane %v5824, %v5831
        %v5834 = vunpack.c.l.s4 1983009808
        %v5835 = vunpack.c.0.s8 %v5834
        %v5836 = vlaneseq
        %v5837 = vshrl.u32 %v5836, 7
        %v5838 = vsub.s32 %v5835, %v5837
        %v5839 = vrot.slane %v5825, %v5838
        %v5840 = vcombine.low %v5681, %v5683
        %v5841 = vcombine.high %v5681, %v5683
        %v5843 = vunpack.c.l.s4 1983009808
        %v5844 = vunpack.c.0.s8 %v5843
        %v5845 = vlaneseq
        %v5846 = vshrl.u32 %v5845, 7
        %v5847 = vsub.s32 %v5844, %v5846
        %v5848 = vrot.slane %v5840, %v5847
        %v5850 = vunpack.c.l.s4 1983009808
        %v5851 = vunpack.c.0.s8 %v5850
        %v5852 = vlaneseq
        %v5853 = vshrl.u32 %v5852, 7
        %v5854 = vsub.s32 %v5851, %v5853
        %v5855 = vrot.slane %v5841, %v5854
        %v5856 = vcombine.low %v5684, %v5686
        %v5857 = vcombine.high %v5684, %v5686
        %v5859 = vunpack.c.l.s4 1983009808
        %v5860 = vunpack.c.0.s8 %v5859
        %v5861 = vlaneseq
        %v5862 = vshrl.u32 %v5861, 7
        %v5863 = vsub.s32 %v5860, %v5862
        %v5864 = vrot.slane %v5856, %v5863
        %v5866 = vunpack.c.l.s4 1983009808
        %v5867 = vunpack.c.0.s8 %v5866
        %v5868 = vlaneseq
        %v5869 = vshrl.u32 %v5868, 7
        %v5870 = vsub.s32 %v5867, %v5869
        %v5871 = vrot.slane %v5857, %v5870
        %v5872 = vcombine.low %v5685, %v5687
        %v5873 = vcombine.high %v5685, %v5687
        %v5875 = vunpack.c.l.s4 1983009808
        %v5876 = vunpack.c.0.s8 %v5875
        %v5877 = vlaneseq
        %v5878 = vshrl.u32 %v5877, 7
        %v5879 = vsub.s32 %v5876, %v5878
        %v5880 = vrot.slane %v5872, %v5879
        %v5882 = vunpack.c.l.s4 1983009808
        %v5883 = vunpack.c.0.s8 %v5882
        %v5884 = vlaneseq
        %v5885 = vshrl.u32 %v5884, 7
        %v5886 = vsub.s32 %v5883, %v5885
        %v5887 = vrot.slane %v5873, %v5886
        %v5888 = vcombine.low %v5832, %v5848
        %v5889 = vcombine.high %v5832, %v5848
        %v5891 = vunpack.c.l.s4 1934713408
        %v5892 = vunpack.c.0.s8 %v5891
        %v5893 = vlaneseq
        %v5894 = vshrl.u32 %v5893, 7
        %v5895 = vsub.s32 %v5892, %v5894
        %v5896 = vrot.slane %v5888, %v5895
        %v5898 = vunpack.c.l.s4 1934713408
        %v5899 = vunpack.c.0.s8 %v5898
        %v5900 = vlaneseq
        %v5901 = vshrl.u32 %v5900, 7
        %v5902 = vsub.s32 %v5899, %v5901
        %v5903 = vrot.slane %v5889, %v5902
        %v5904 = vcombine.low %v5839, %v5855
        %v5905 = vcombine.high %v5839, %v5855
        %v5907 = vunpack.c.l.s4 1934713408
        %v5908 = vunpack.c.0.s8 %v5907
        %v5909 = vlaneseq
        %v5910 = vshrl.u32 %v5909, 7
        %v5911 = vsub.s32 %v5908, %v5910
        %v5912 = vrot.slane %v5904, %v5911
        %v5914 = vunpack.c.l.s4 1934713408
        %v5915 = vunpack.c.0.s8 %v5914
        %v5916 = vlaneseq
        %v5917 = vshrl.u32 %v5916, 7
        %v5918 = vsub.s32 %v5915, %v5917
        %v5919 = vrot.slane %v5905, %v5918
        %v5920 = vcombine.low %v5864, %v5880
        %v5921 = vcombine.high %v5864, %v5880
        %v5923 = vunpack.c.l.s4 1934713408
        %v5924 = vunpack.c.0.s8 %v5923
        %v5925 = vlaneseq
        %v5926 = vshrl.u32 %v5925, 7
        %v5927 = vsub.s32 %v5924, %v5926
        %v5928 = vrot.slane %v5920, %v5927
        %v5930 = vunpack.c.l.s4 1934713408
        %v5931 = vunpack.c.0.s8 %v5930
        %v5932 = vlaneseq
        %v5933 = vshrl.u32 %v5932, 7
        %v5934 = vsub.s32 %v5931, %v5933
        %v5935 = vrot.slane %v5921, %v5934
        %v5936 = vcombine.low %v5871, %v5887
        %v5937 = vcombine.high %v5871, %v5887
        %v5939 = vunpack.c.l.s4 1934713408
        %v5940 = vunpack.c.0.s8 %v5939
        %v5941 = vlaneseq
        %v5942 = vshrl.u32 %v5941, 7
        %v5943 = vsub.s32 %v5940, %v5942
        %v5944 = vrot.slane %v5936, %v5943
        %v5946 = vunpack.c.l.s4 1934713408
        %v5947 = vunpack.c.0.s8 %v5946
        %v5948 = vlaneseq
        %v5949 = vshrl.u32 %v5948, 7
        %v5950 = vsub.s32 %v5947, %v5949
        %v5951 = vrot.slane %v5937, %v5950
        %v5952 = vcombine.low %v5896, %v5928
        %v5953 = vcombine.high %v5896, %v5928
        %v5954 = vcombine.low %v5903, %v5935
        %v5955 = vcombine.high %v5903, %v5935
        %v5956 = vcombine.low %v5912, %v5944
        %v5957 = vcombine.high %v5912, %v5944
        %v5958 = vcombine.low %v5919, %v5951
        %v5959 = vcombine.high %v5919, %v5951
        %v5960 = vcombine.low %v5816, %v5818
        %v5961 = vcombine.high %v5816, %v5818
        %v5963 = vunpack.c.l.s4 1983009808
        %v5964 = vunpack.c.0.s8 %v5963
        %v5965 = vlaneseq
        %v5966 = vshrl.u32 %v5965, 7
        %v5967 = vsub.s32 %v5964, %v5966
        %v5968 = vrot.slane %v5960, %v5967
        %v5970 = vunpack.c.l.s4 1983009808
        %v5971 = vunpack.c.0.s8 %v5970
        %v5972 = vlaneseq
        %v5973 = vshrl.u32 %v5972, 7
        %v5974 = vsub.s32 %v5971, %v5973
        %v5975 = vrot.slane %v5961, %v5974
        %v5976 = vcombine.low %v5817, %v5819
        %v5977 = vcombine.high %v5817, %v5819
        %v5979 = vunpack.c.l.s4 1983009808
        %v5980 = vunpack.c.0.s8 %v5979
        %v5981 = vlaneseq
        %v5982 = vshrl.u32 %v5981, 7
        %v5983 = vsub.s32 %v5980, %v5982
        %v5984 = vrot.slane %v5976, %v5983
        %v5986 = vunpack.c.l.s4 1983009808
        %v5987 = vunpack.c.0.s8 %v5986
        %v5988 = vlaneseq
        %v5989 = vshrl.u32 %v5988, 7
        %v5990 = vsub.s32 %v5987, %v5989
        %v5991 = vrot.slane %v5977, %v5990
        %v5992 = vcombine.low %v5820, %v5822
        %v5993 = vcombine.high %v5820, %v5822
        %v5995 = vunpack.c.l.s4 1983009808
        %v5996 = vunpack.c.0.s8 %v5995
        %v5997 = vlaneseq
        %v5998 = vshrl.u32 %v5997, 7
        %v5999 = vsub.s32 %v5996, %v5998
        %v6000 = vrot.slane %v5992, %v5999
        %v6002 = vunpack.c.l.s4 1983009808
        %v6003 = vunpack.c.0.s8 %v6002
        %v6004 = vlaneseq
        %v6005 = vshrl.u32 %v6004, 7
        %v6006 = vsub.s32 %v6003, %v6005
        %v6007 = vrot.slane %v5993, %v6006
        %v6008 = vcombine.low %v5821, %v5823
        %v6009 = vcombine.high %v5821, %v5823
        %v6011 = vunpack.c.l.s4 1983009808
        %v6012 = vunpack.c.0.s8 %v6011
        %v6013 = vlaneseq
        %v6014 = vshrl.u32 %v6013, 7
        %v6015 = vsub.s32 %v6012, %v6014
        %v6016 = vrot.slane %v6008, %v6015
        %v6018 = vunpack.c.l.s4 1983009808
        %v6019 = vunpack.c.0.s8 %v6018
        %v6020 = vlaneseq
        %v6021 = vshrl.u32 %v6020, 7
        %v6022 = vsub.s32 %v6019, %v6021
        %v6023 = vrot.slane %v6009, %v6022
        %v6024 = vcombine.low %v5968, %v5984
        %v6025 = vcombine.high %v5968, %v5984
        %v6027 = vunpack.c.l.s4 1934713408
        %v6028 = vunpack.c.0.s8 %v6027
        %v6029 = vlaneseq
        %v6030 = vshrl.u32 %v6029, 7
        %v6031 = vsub.s32 %v6028, %v6030
        %v6032 = vrot.slane %v6024, %v6031
        %v6034 = vunpack.c.l.s4 1934713408
        %v6035 = vunpack.c.0.s8 %v6034
        %v6036 = vlaneseq
        %v6037 = vshrl.u32 %v6036, 7
        %v6038 = vsub.s32 %v6035, %v6037
        %v6039 = vrot.slane %v6025, %v6038
        %v6040 = vcombine.low %v5975, %v5991
        %v6041 = vcombine.high %v5975, %v5991
        %v6043 = vunpack.c.l.s4 1934713408
        %v6044 = vunpack.c.0.s8 %v6043
        %v6045 = vlaneseq
        %v6046 = vshrl.u32 %v6045, 7
        %v6047 = vsub.s32 %v6044, %v6046
        %v6048 = vrot.slane %v6040, %v6047
        %v6050 = vunpack.c.l.s4 1934713408
        %v6051 = vunpack.c.0.s8 %v6050
        %v6052 = vlaneseq
        %v6053 = vshrl.u32 %v6052, 7
        %v6054 = vsub.s32 %v6051, %v6053
        %v6055 = vrot.slane %v6041, %v6054
        %v6056 = vcombine.low %v6000, %v6016
        %v6057 = vcombine.high %v6000, %v6016
        %v6059 = vunpack.c.l.s4 1934713408
        %v6060 = vunpack.c.0.s8 %v6059
        %v6061 = vlaneseq
        %v6062 = vshrl.u32 %v6061, 7
        %v6063 = vsub.s32 %v6060, %v6062
        %v6064 = vrot.slane %v6056, %v6063
        %v6066 = vunpack.c.l.s4 1934713408
        %v6067 = vunpack.c.0.s8 %v6066
        %v6068 = vlaneseq
        %v6069 = vshrl.u32 %v6068, 7
        %v6070 = vsub.s32 %v6067, %v6069
        %v6071 = vrot.slane %v6057, %v6070
        %v6072 = vcombine.low %v6007, %v6023
        %v6073 = vcombine.high %v6007, %v6023
        %v6075 = vunpack.c.l.s4 1934713408
        %v6076 = vunpack.c.0.s8 %v6075
        %v6077 = vlaneseq
        %v6078 = vshrl.u32 %v6077, 7
        %v6079 = vsub.s32 %v6076, %v6078
        %v6080 = vrot.slane %v6072, %v6079
        %v6082 = vunpack.c.l.s4 1934713408
        %v6083 = vunpack.c.0.s8 %v6082
        %v6084 = vlaneseq
        %v6085 = vshrl.u32 %v6084, 7
        %v6086 = vsub.s32 %v6083, %v6085
        %v6087 = vrot.slane %v6073, %v6086
        %v6088 = vcombine.low %v6032, %v6064
        %v6089 = vcombine.high %v6032, %v6064
        %v6090 = vcombine.low %v6039, %v6071
        %v6091 = vcombine.high %v6039, %v6071
        %v6092 = vcombine.low %v6048, %v6080
        %v6093 = vcombine.high %v6048, %v6080
        %v6094 = vcombine.low %v6055, %v6087
        %v6095 = vcombine.high %v6055, %v6087
        %6098 = vrot.lane.b32.xlu0 %v5953, 16
        %v6099 = vpop.permute.xlu0 %6098
        %6100 = vrot.lane.b32.xlu0 %v6089, 16
        %v6101 = vpop.permute.xlu0 %6100
        %6106 = vrot.lane.b32.xlu0 %v5954, 32
        %v6107 = vpop.permute.xlu0 %6106
        %6108 = vrot.lane.b32.xlu0 %v6090, 32
        %v6109 = vpop.permute.xlu0 %6108
        %6114 = vrot.lane.b32.xlu0 %v5955, 48
        %v6115 = vpop.permute.xlu0 %6114
        %6116 = vrot.lane.b32.xlu0 %v6091, 48
        %v6117 = vpop.permute.xlu0 %6116
        %6122 = vrot.lane.b32.xlu0 %v5956, 64
        %v6123 = vpop.permute.xlu0 %6122
        %6124 = vrot.lane.b32.xlu0 %v6092, 64
        %v6125 = vpop.permute.xlu0 %6124
        %6130 = vrot.lane.b32.xlu0 %v5957, 80
        %v6131 = vpop.permute.xlu0 %6130
        %6132 = vrot.lane.b32.xlu0 %v6093, 80
        %v6133 = vpop.permute.xlu0 %6132
        %6138 = vrot.lane.b32.xlu0 %v5958, 96
        %v6139 = vpop.permute.xlu0 %6138
        %6140 = vrot.lane.b32.xlu0 %v6094, 96
        %v6141 = vpop.permute.xlu0 %6140
        %6146 = vrot.lane.b32.xlu0 %v5959, 112
        %v6147 = vpop.permute.xlu0 %6146
        %6148 = vrot.lane.b32.xlu0 %v6095, 112
        %v6149 = vpop.permute.xlu0 %6148
        %v6152 = vsel %vm3935, %v5952, %v6099
        %v6153 = vsel %vm3935, %v6088, %v6101
        %vm6154 = vcmask 261120
        %v6155 = vsel %vm6154, %v6152, %v6107
        %v6156 = vsel %vm6154, %v6153, %v6109
        %vm6157 = vcmask 392192
        %v6158 = vsel %vm6157, %v6155, %v6115
        %v6159 = vsel %vm6157, %v6156, %v6117
        %vm6160 = vcmask 523264
        %v6161 = vsel %vm6160, %v6158, %v6123
        %v6162 = vsel %vm6160, %v6159, %v6125
        %vm6163 = vcmask 654336
        %v6164 = vsel %vm6163, %v6161, %v6131
        %v6165 = vsel %vm6163, %v6162, %v6133
        %vm6166 = vcmask 785408
        %v6167 = vsel %vm6166, %v6164, %v6139
        %v6168 = vsel %vm6166, %v6165, %v6141
        %vm6169 = vcmask 916480
        %v6170 = vsel %vm6169, %v6167, %v6147
        %v6171 = vsel %vm6169, %v6168, %v6149
        %v6172 = vpack.c.bf16 %v6171, %v6170
        %v6173 = vld [vmem:[%s456] sm:$0xf]
        %v6174 = vld [vmem:[%s456 + $0x4] sm:$0xf]
        %v6175 = vld [vmem:[%s456 + $0x8] sm:$0xf]
        %v6176 = vld [vmem:[%s456 + $0xc] sm:$0xf]
        %v6177 = vld [vmem:[%s456 + $0x10] sm:$0xf]
        %v6178 = vld [vmem:[%s456 + $0x14] sm:$0xf]
        %v6179 = vld [vmem:[%s456 + $0x18] sm:$0xf]
        %v6180 = vld [vmem:[%s456 + $0x1c] sm:$0xf]
        %v6181 = vld [vmem:[%s456 + $0x20] sm:$0xf]
        %v6182 = vld [vmem:[%s456 + $0x24] sm:$0xf]
        %v6183 = vld [vmem:[%s456 + $0x28] sm:$0xf]
        %v6184 = vld [vmem:[%s456 + $0x2c] sm:$0xf]
        %v6185 = vld [vmem:[%s456 + $0x30] sm:$0xf]
        %v6186 = vld [vmem:[%s456 + $0x34] sm:$0xf]
        %v6187 = vld [vmem:[%s456 + $0x38] sm:$0xf]
        %v6188 = vld [vmem:[%s456 + $0x3c] sm:$0xf]
        %v6205 = vunpack.c.l.b16 %v6173
        %v6206 = vunpack.c.l.b16 %v6174
        %v6207 = vunpack.c.l.b16 %v6175
        %v6208 = vunpack.c.l.b16 %v6176
        %v6209 = vunpack.c.l.b16 %v6177
        %v6210 = vunpack.c.l.b16 %v6178
        %v6211 = vunpack.c.l.b16 %v6179
        %v6212 = vunpack.c.l.b16 %v6180
        %v6213 = vunpack.c.l.b16 %v6181
        %v6214 = vunpack.c.l.b16 %v6182
        %v6215 = vunpack.c.l.b16 %v6183
        %v6216 = vunpack.c.l.b16 %v6184
        %v6217 = vunpack.c.l.b16 %v6185
        %v6218 = vunpack.c.l.b16 %v6186
        %v6219 = vunpack.c.l.b16 %v6187
        %v6220 = vunpack.c.l.b16 %v6188
        %v6221 = vpack.c.b16 %v6206, %v6205
        %v6222 = vpack.c.b16 %v6208, %v6207
        %v6223 = vpack.c.b16 %v6210, %v6209
        %v6224 = vpack.c.b16 %v6212, %v6211
        %v6225 = vpack.c.b16 %v6214, %v6213
        %v6226 = vpack.c.b16 %v6216, %v6215
        %v6227 = vpack.c.b16 %v6218, %v6217
        %v6228 = vpack.c.b16 %v6220, %v6219
        %6237 = vmatprep.subr.bf16.mxu0 0
        %6238 = vmatpush1.bf16.msra.mxu0 %v6221
        %6239 = vmatprep.subr.bf16.mxu0 0
        %6240 = vmatpush1.bf16.msra.mxu0 %v6222
        %6241 = vmatprep.subr.bf16.mxu0 0
        %6242 = vmatpush1.bf16.msra.mxu0 %v6223
        %6243 = vmatprep.subr.bf16.mxu0 0
        %6244 = vmatpush1.bf16.msra.mxu0 %v6224
        %6245 = vmatprep.subr.bf16.mxu0 0
        %6246 = vmatpush1.bf16.msra.mxu0 %v6225
        %6247 = vmatprep.subr.bf16.mxu0 0
        %6248 = vmatpush1.bf16.msra.mxu0 %v6226
        %6249 = vmatprep.subr.bf16.mxu0 0
        %6250 = vmatpush1.bf16.msra.mxu0 %v6227
        %6251 = vmatprep.subr.bf16.mxu0 0
        %6252 = vmatpush1.bf16.msra.mxu0 %v6228
        %6253 = vmatprep.subr.bf16.mxu0 0
        %6254 = vmatpush1.bf16.msra.mxu0 0
        %6255 = vmatprep.subr.bf16.mxu0 0
        %6256 = vmatpush1.bf16.msra.mxu0 0
        %6257 = vmatprep.subr.bf16.mxu0 0
        %6258 = vmatpush1.bf16.msra.mxu0 0
        %6259 = vmatprep.subr.bf16.mxu0 0
        %6260 = vmatpush1.bf16.msra.mxu0 0
        %6261 = vmatprep.subr.bf16.mxu0 0
        %6262 = vmatpush1.bf16.msra.mxu0 0
        %6263 = vmatprep.subr.bf16.mxu0 0
        %6264 = vmatpush1.bf16.msra.mxu0 0
        %6265 = vmatprep.subr.bf16.mxu0 0
        %6266 = vmatpush1.bf16.msra.mxu0 0
        %6267 = vmatprep.subr.bf16.mxu0 0
        %6268 = vmatpush1.bf16.msra.mxu0 0
        %6269 = vmatprep.mubr.bf16.mxu0 0
        %6270 = vmatmul.mubr.bf16.gmra.mrb[0].mxu0 %v6172
        %v6271 = vpop.f32.mrb[0].mxu0
        %v6272 = vadd.f32 0.0, %v6271
        %v6273 = vpop.f32.mrb[0].mxu0
        %v6274 = vpop.f32.mrb[0].mxu0
        %v6275 = vadd.f32 0.0, %v6274
        %v6276 = vpop.f32.mrb[0].mxu0
        %6277 = vdwg.mxu0
        // Predicated region
        $region73: #{tpu_custom_call.1} parent=51 // pred_check
          %p6278 = pneg %p565
        $region74: #{tpu_custom_call.1} parent=51 // pred_check_branch
          %6280 = sbr.rel (%p6278) target = $region76
        $region75: #{tpu_custom_call.1} parent=51 // pred_region
          %v6281 = vrcp.pop %v4770
          %v6282 = vmul.f32 %v4737, %v6281
          %v6283 = vrcp.pop %v4773
          %v6284 = vmul.f32 %v4739, %v6283
          %v6285 = vrcp.pop %v4776
          %v6286 = vmul.f32 %v4741, %v6285
          %v6287 = vrcp.pop %v4779
          %v6288 = vmul.f32 %v4743, %v6287
          %v6289 = vrcp.pop %v4782
          %v6290 = vmul.f32 %v4745, %v6289
          %v6291 = vrcp.pop %v4785
          %v6292 = vmul.f32 %v4747, %v6291
          %v6293 = vrcp.pop %v4788
          %v6294 = vmul.f32 %v4749, %v6293
          %v6295 = vrcp.pop %v4791
          %v6296 = vmul.f32 %v4751, %v6295
          %v6297 = vrcp.pop %v4794
          %v6298 = vmul.f32 %v4753, %v6297
          %v6299 = vrcp.pop %v4797
          %v6300 = vmul.f32 %v4755, %v6299
          %v6301 = vrcp.pop %v4800
          %v6302 = vmul.f32 %v4757, %v6301
          %v6303 = vrcp.pop %v4803
          %v6304 = vmul.f32 %v4759, %v6303
          %v6305 = vrcp.pop %v4806
          %v6306 = vmul.f32 %v4761, %v6305
          %v6307 = vrcp.pop %v4809
          %v6308 = vmul.f32 %v4763, %v6307
          %v6309 = vrcp.pop %v4812
          %v6310 = vmul.f32 %v4765, %v6309
          %v6311 = vrcp.pop %v4815
          %v6312 = vmul.f32 %v4767, %v6311
          %v6313 = vsel %vm3935, %v6282, 0.0
          %v6314 = vsel %vm3935, %v6284, 0.0
          %v6315 = vadd.f32 %v6313, %v6314
          %v6316 = vsel %vm3935, %v6286, 0.0
          %v6317 = vadd.f32 %v6315, %v6316
          %v6318 = vsel %vm3935, %v6288, 0.0
          %v6319 = vadd.f32 %v6317, %v6318
          %v6320 = vsel %vm3935, %v6290, 0.0
          %v6321 = vadd.f32 %v6319, %v6320
          %v6322 = vsel %vm3935, %v6292, 0.0
          %v6323 = vadd.f32 %v6321, %v6322
          %v6324 = vsel %vm3935, %v6294, 0.0
          %v6325 = vadd.f32 %v6323, %v6324
          %v6326 = vsel %vm3935, %v6296, 0.0
          %v6327 = vadd.f32 %v6325, %v6326
          %v6328 = vsel %vm3935, %v6298, 0.0
          %v6329 = vsel %vm3935, %v6300, 0.0
          %v6330 = vadd.f32 %v6328, %v6329
          %v6331 = vsel %vm3935, %v6302, 0.0
          %v6332 = vadd.f32 %v6330, %v6331
          %v6333 = vsel %vm3935, %v6304, 0.0
          %v6334 = vadd.f32 %v6332, %v6333
          %v6335 = vsel %vm3935, %v6306, 0.0
          %v6336 = vadd.f32 %v6334, %v6335
          %v6337 = vsel %vm3935, %v6308, 0.0
          %v6338 = vadd.f32 %v6336, %v6337
          %v6339 = vsel %vm3935, %v6310, 0.0
          %v6340 = vadd.f32 %v6338, %v6339
          %v6341 = vsel %vm3935, %v6312, 0.0
          %v6342 = vadd.f32 %v6340, %v6341
          %v6343 = vmul.f32 %v6327, 0.125
          %v6344 = vmul.f32 %v6342, 0.125
          %6345 = vst.msk [vmem:[#allocation11] sm:$0xff] %vm3935, %v6343
          %6346 = vst.msk [vmem:[#allocation11 + $0x8] sm:$0xff] %vm3935, %v6344
        $region76: #{tpu_custom_call.1} parent=51 // pred_fallthru
          _
        %v6347 = vadd.f32 %v573, %v6272
        %v6348 = vadd.f32 %v574, %v6275
        %v6349 = vlaneseq
        %v6350 = vshrl.u32 %v6349, 7
        %v6351 = vsub.s32 5, %v6350
        %v6352 = vrot.slane %v579, %v6351
        %v6353 = vadd.f32 %v6347, %v6352
        %v6354 = vadd.f32 %v6348, %v6352
        %6355 = vadd.xlane.f32.xlu0 %v6353
        %v6356 = vpop.xlane.xlu0 %6355
        %6357 = vadd.xlane.f32.xlu0 %v6354
        %v6358 = vpop.xlane.xlu0 %6357
        %v6359 = vmul.f32 %v6356, %v585
        %v6360 = vmul.f32 %v6358, %v585
        %v6361 = vsub.f32 %v6353, %v6359
        %v6362 = vsub.f32 %v6354, %v6360
        %v6363 = vmul.f32 %v6361, %v6361
        %v6364 = vmul.f32 %v6362, %v6362
        %6365 = vadd.xlane.f32.xlu0 %v6363
        %v6366 = vpop.xlane.xlu0 %6365
        %6367 = vadd.xlane.f32.xlu0 %v6364
        %v6368 = vpop.xlane.xlu0 %6367
        %v6369 = vmul.f32 %v6366, %v585
        %v6370 = vmul.f32 %v6368, %v585
        %v6371 = vadd.f32 %v6369, 1e-06
        %v6372 = vadd.f32 %v6370, 1e-06
        %v6373 = vrsqrt.pop %v6371
        %v6374 = vrsqrt.pop %v6372
        %v6375 = vmul.f32 %v6361, %v6373
        %v6376 = vmul.f32 %v6362, %v6374
        %v6377 = vlaneseq
        %v6378 = vshrl.u32 %v6377, 7
        %v6379 = vsub.s32 6, %v6378
        %v6380 = vrot.slane %v579, %v6379
        %v6381 = vmul.f32 %v6375, %v6380
        %v6382 = vmul.f32 %v6376, %v6380
        %v6383 = vlaneseq
        %v6384 = vshrl.u32 %v6383, 7
        %v6385 = vsub.s32 7, %v6384
        %v6386 = vrot.slane %v579, %v6385
        %v6387 = vadd.f32 %v6381, %v6386
        %v6388 = vadd.f32 %v6382, %v6386
        %v6389 = vpack.c.bf16 %v6388, %v6387
        %v6390 = vld [vmem:[%s465] sm:$0xff]
        %v6391 = vld [vmem:[%s465 + $0x8] sm:$0xff]
        %v6392 = vld [vmem:[%s465 + $0x10] sm:$0xff]
        %v6393 = vld [vmem:[%s465 + $0x18] sm:$0xff]
        %v6394 = vld [vmem:[%s465 + $0x20] sm:$0xff]
        %v6395 = vld [vmem:[%s465 + $0x28] sm:$0xff]
        %v6396 = vld [vmem:[%s465 + $0x30] sm:$0xff]
        %v6397 = vld [vmem:[%s465 + $0x38] sm:$0xff]
        %v6398 = vld [vmem:[%s465 + $0x40] sm:$0xff]
        %v6399 = vld [vmem:[%s465 + $0x48] sm:$0xff]
        %v6400 = vld [vmem:[%s465 + $0x50] sm:$0xff]
        %v6401 = vld [vmem:[%s465 + $0x58] sm:$0xff]
        %v6402 = vld [vmem:[%s465 + $0x60] sm:$0xff]
        %v6403 = vld [vmem:[%s465 + $0x68] sm:$0xff]
        %v6404 = vld [vmem:[%s465 + $0x70] sm:$0xff]
        %v6405 = vld [vmem:[%s465 + $0x78] sm:$0xff]
        %v6406 = vld [vmem:[%s465 + $0x80] sm:$0xff]
        %v6407 = vld [vmem:[%s465 + $0x88] sm:$0xff]
        %v6408 = vld [vmem:[%s465 + $0x90] sm:$0xff]
        %v6409 = vld [vmem:[%s465 + $0x98] sm:$0xff]
        %v6410 = vld [vmem:[%s465 + $0xa0] sm:$0xff]
        %v6411 = vld [vmem:[%s465 + $0xa8] sm:$0xff]
        %v6412 = vld [vmem:[%s465 + $0xb0] sm:$0xff]
        %v6413 = vld [vmem:[%s465 + $0xb8] sm:$0xff]
        %v6414 = vld [vmem:[%s465 + $0xc0] sm:$0xff]
        %v6415 = vld [vmem:[%s465 + $0xc8] sm:$0xff]
        %v6416 = vld [vmem:[%s465 + $0xd0] sm:$0xff]
        %v6417 = vld [vmem:[%s465 + $0xd8] sm:$0xff]
        %v6418 = vld [vmem:[%s465 + $0xe0] sm:$0xff]
        %v6419 = vld [vmem:[%s465 + $0xe8] sm:$0xff]
        %v6420 = vld [vmem:[%s465 + $0xf0] sm:$0xff]
        %v6421 = vld [vmem:[%s465 + $0xf8] sm:$0xff]
        %v6422 = vld [vmem:[%s560] sm:$0xf]
        %v6424 = vlaneseq
        %v6425 = vshrl.u32 %v6424, 7
        %v6426 = vsub.s32 0, %v6425
        %v6427 = vrot.slane %v6422, %v6426
        %v6428 = vlaneseq
        %v6429 = vshrl.u32 %v6428, 7
        %v6430 = vsub.s32 1, %v6429
        %v6431 = vrot.slane %v6422, %v6430
        %v6432 = vlaneseq
        %v6433 = vshrl.u32 %v6432, 7
        %v6434 = vsub.s32 2, %v6433
        %v6435 = vrot.slane %v6422, %v6434
        %v6436 = vlaneseq
        %v6437 = vshrl.u32 %v6436, 7
        %v6438 = vsub.s32 3, %v6437
        %v6439 = vrot.slane %v6422, %v6438
        %v6476 = vunpack.c.l.b16 %v6390
        %v6477 = vunpack.c.h.b16 %v6390
        %v6478 = vunpack.c.l.b16 %v6391
        %v6479 = vunpack.c.h.b16 %v6391
        %v6480 = vunpack.c.l.b16 %v6392
        %v6481 = vunpack.c.h.b16 %v6392
        %v6482 = vunpack.c.l.b16 %v6393
        %v6483 = vunpack.c.h.b16 %v6393
        %v6484 = vunpack.c.l.b16 %v6394
        %v6485 = vunpack.c.h.b16 %v6394
        %v6486 = vunpack.c.l.b16 %v6395
        %v6487 = vunpack.c.h.b16 %v6395
        %v6488 = vunpack.c.l.b16 %v6396
        %v6489 = vunpack.c.h.b16 %v6396
        %v6490 = vunpack.c.l.b16 %v6397
        %v6491 = vunpack.c.h.b16 %v6397
        %v6492 = vunpack.c.l.b16 %v6398
        %v6493 = vunpack.c.h.b16 %v6398
        %v6494 = vunpack.c.l.b16 %v6399
        %v6495 = vunpack.c.h.b16 %v6399
        %v6496 = vunpack.c.l.b16 %v6400
        %v6497 = vunpack.c.h.b16 %v6400
        %v6498 = vunpack.c.l.b16 %v6401
        %v6499 = vunpack.c.h.b16 %v6401
        %v6500 = vunpack.c.l.b16 %v6402
        %v6501 = vunpack.c.h.b16 %v6402
        %v6502 = vunpack.c.l.b16 %v6403
        %v6503 = vunpack.c.h.b16 %v6403
        %v6504 = vunpack.c.l.b16 %v6404
        %v6505 = vunpack.c.h.b16 %v6404
        %v6506 = vunpack.c.l.b16 %v6405
        %v6507 = vunpack.c.h.b16 %v6405
        %v6508 = vunpack.c.l.b16 %v6406
        %v6509 = vunpack.c.h.b16 %v6406
        %v6510 = vunpack.c.l.b16 %v6407
        %v6511 = vunpack.c.h.b16 %v6407
        %v6512 = vunpack.c.l.b16 %v6408
        %v6513 = vunpack.c.h.b16 %v6408
        %v6514 = vunpack.c.l.b16 %v6409
        %v6515 = vunpack.c.h.b16 %v6409
        %v6516 = vunpack.c.l.b16 %v6410
        %v6517 = vunpack.c.h.b16 %v6410
        %v6518 = vunpack.c.l.b16 %v6411
        %v6519 = vunpack.c.h.b16 %v6411
        %v6520 = vunpack.c.l.b16 %v6412
        %v6521 = vunpack.c.h.b16 %v6412
        %v6522 = vunpack.c.l.b16 %v6413
        %v6523 = vunpack.c.h.b16 %v6413
        %v6524 = vunpack.c.l.b16 %v6414
        %v6525 = vunpack.c.h.b16 %v6414
        %v6526 = vunpack.c.l.b16 %v6415
        %v6527 = vunpack.c.h.b16 %v6415
        %v6528 = vunpack.c.l.b16 %v6416
        %v6529 = vunpack.c.h.b16 %v6416
        %v6530 = vunpack.c.l.b16 %v6417
        %v6531 = vunpack.c.h.b16 %v6417
        %v6532 = vunpack.c.l.b16 %v6418
        %v6533 = vunpack.c.h.b16 %v6418
        %v6534 = vunpack.c.l.b16 %v6419
        %v6535 = vunpack.c.h.b16 %v6419
        %v6536 = vunpack.c.l.b16 %v6420
        %v6537 = vunpack.c.h.b16 %v6420
        %v6538 = vunpack.c.l.b16 %v6421
        %v6539 = vunpack.c.h.b16 %v6421
        %v6540 = vpack.c.b16 %v6480, %v6476
        %v6541 = vpack.c.b16 %v6481, %v6477
        %v6542 = vpack.c.b16 %v6482, %v6478
        %v6543 = vpack.c.b16 %v6483, %v6479
        %v6544 = vpack.c.b16 %v6488, %v6484
        %v6545 = vpack.c.b16 %v6489, %v6485
        %v6546 = vpack.c.b16 %v6490, %v6486
        %v6547 = vpack.c.b16 %v6491, %v6487
        %v6548 = vpack.c.b16 %v6496, %v6492
        %v6549 = vpack.c.b16 %v6497, %v6493
        %v6550 = vpack.c.b16 %v6498, %v6494
        %v6551 = vpack.c.b16 %v6499, %v6495
        %v6552 = vpack.c.b16 %v6504, %v6500
        %v6553 = vpack.c.b16 %v6505, %v6501
        %v6554 = vpack.c.b16 %v6506, %v6502
        %v6555 = vpack.c.b16 %v6507, %v6503
        %v6556 = vpack.c.b16 %v6512, %v6508
        %v6557 = vpack.c.b16 %v6513, %v6509
        %v6558 = vpack.c.b16 %v6514, %v6510
        %v6559 = vpack.c.b16 %v6515, %v6511
        %v6560 = vpack.c.b16 %v6520, %v6516
        %v6561 = vpack.c.b16 %v6521, %v6517
        %v6562 = vpack.c.b16 %v6522, %v6518
        %v6563 = vpack.c.b16 %v6523, %v6519
        %v6564 = vpack.c.b16 %v6528, %v6524
        %v6565 = vpack.c.b16 %v6529, %v6525
        %v6566 = vpack.c.b16 %v6530, %v6526
        %v6567 = vpack.c.b16 %v6531, %v6527
        %v6568 = vpack.c.b16 %v6536, %v6532
        %v6569 = vpack.c.b16 %v6537, %v6533
        %v6570 = vpack.c.b16 %v6538, %v6534
        %v6571 = vpack.c.b16 %v6539, %v6535
        %6604 = vmatprep.subr.bf16.mxu0 %v6541
        %6605 = vmatpush1.bf16.msra.mxu0 %v6540
        %6606 = vmatprep.subr.bf16.mxu0 %v6545
        %6607 = vmatpush1.bf16.msra.mxu0 %v6544
        %6608 = vmatprep.subr.bf16.mxu0 %v6549
        %6609 = vmatpush1.bf16.msra.mxu0 %v6548
        %6610 = vmatprep.subr.bf16.mxu0 %v6553
        %6611 = vmatpush1.bf16.msra.mxu0 %v6552
        %6612 = vmatprep.subr.bf16.mxu0 %v6557
        %6613 = vmatpush1.bf16.msra.mxu0 %v6556
        %6614 = vmatprep.subr.bf16.mxu0 %v6561
        %6615 = vmatpush1.bf16.msra.mxu0 %v6560
        %6616 = vmatprep.subr.bf16.mxu0 %v6565
        %6617 = vmatpush1.bf16.msra.mxu0 %v6564
        %6618 = vmatprep.subr.bf16.mxu0 %v6569
        %6619 = vmatpush1.bf16.msra.mxu0 %v6568
        %6620 = vmatprep.subr.bf16.mxu0 0
        %6621 = vmatpush1.bf16.msra.mxu0 0
        %6622 = vmatprep.subr.bf16.mxu0 0
        %6623 = vmatpush1.bf16.msra.mxu0 0
        %6624 = vmatprep.subr.bf16.mxu0 0
        %6625 = vmatpush1.bf16.msra.mxu0 0
        %6626 = vmatprep.subr.bf16.mxu0 0
        %6627 = vmatpush1.bf16.msra.mxu0 0
        %6628 = vmatprep.subr.bf16.mxu0 0
        %6629 = vmatpush1.bf16.msra.mxu0 0
        %6630 = vmatprep.subr.bf16.mxu0 0
        %6631 = vmatpush1.bf16.msra.mxu0 0
        %6632 = vmatprep.subr.bf16.mxu0 0
        %6633 = vmatpush1.bf16.msra.mxu0 0
        %6634 = vmatprep.subr.bf16.mxu0 0
        %6635 = vmatpush1.bf16.msra.mxu0 0
        %6636 = vmatprep.mubr.bf16.mxu0 0
        %6637 = vmatmul.mubr.bf16.gmra.mrb[0].mxu0 %v6389
        %v6638 = vpop.f32.mrb[0].mxu0
        %v6639 = vadd.f32 %v6427, %v6638
        %v6640 = vpop.f32.mrb[0].mxu0
        %v6641 = vadd.f32 %v6431, %v6640
        %v6642 = vpop.f32.mrb[0].mxu0
        %v6643 = vadd.f32 %v6427, %v6642
        %v6644 = vpop.f32.mrb[0].mxu0
        %v6645 = vadd.f32 %v6431, %v6644
        %6646 = vdwg.mxu0
        %6647 = vmatprep.subr.bf16.mxu0 %v6543
        %6648 = vmatpush1.bf16.msra.mxu0 %v6542
        %6649 = vmatprep.subr.bf16.mxu0 %v6547
        %6650 = vmatpush1.bf16.msra.mxu0 %v6546
        %6651 = vmatprep.subr.bf16.mxu0 %v6551
        %6652 = vmatpush1.bf16.msra.mxu0 %v6550
        %6653 = vmatprep.subr.bf16.mxu0 %v6555
        %6654 = vmatpush1.bf16.msra.mxu0 %v6554
        %6655 = vmatprep.subr.bf16.mxu0 %v6559
        %6656 = vmatpush1.bf16.msra.mxu0 %v6558
        %6657 = vmatprep.subr.bf16.mxu0 %v6563
        %6658 = vmatpush1.bf16.msra.mxu0 %v6562
        %6659 = vmatprep.subr.bf16.mxu0 %v6567
        %6660 = vmatpush1.bf16.msra.mxu0 %v6566
        %6661 = vmatprep.subr.bf16.mxu0 %v6571
        %6662 = vmatpush1.bf16.msra.mxu0 %v6570
        %6663 = vmatprep.subr.bf16.mxu0 0
        %6664 = vmatpush1.bf16.msra.mxu0 0
        %6665 = vmatprep.subr.bf16.mxu0 0
        %6666 = vmatpush1.bf16.msra.mxu0 0
        %6667 = vmatprep.subr.bf16.mxu0 0
        %6668 = vmatpush1.bf16.msra.mxu0 0
        %6669 = vmatprep.subr.bf16.mxu0 0
        %6670 = vmatpush1.bf16.msra.mxu0 0
        %6671 = vmatprep.subr.bf16.mxu0 0
        %6672 = vmatpush1.bf16.msra.mxu0 0
        %6673 = vmatprep.subr.bf16.mxu0 0
        %6674 = vmatpush1.bf16.msra.mxu0 0
        %6675 = vmatprep.subr.bf16.mxu0 0
        %6676 = vmatpush1.bf16.msra.mxu0 0
        %6677 = vmatprep.subr.bf16.mxu0 0
        %6678 = vmatpush1.bf16.msra.mxu0 0
        %6679 = vmatprep.mubr.bf16.mxu0 0
        %6680 = vmatmul.mubr.bf16.gmra.mrb[0].mxu0 %v6389
        %v6681 = vpop.f32.mrb[0].mxu0
        %v6682 = vadd.f32 %v6435, %v6681
        %v6683 = vpop.f32.mrb[0].mxu0
        %v6684 = vadd.f32 %v6439, %v6683
        %v6685 = vpop.f32.mrb[0].mxu0
        %v6686 = vadd.f32 %v6435, %v6685
        %v6687 = vpop.f32.mrb[0].mxu0
        %v6688 = vadd.f32 %v6439, %v6687
        %6689 = vdwg.mxu0
        %v6690 = vmax.f32 %v6639, 0.0
        %v6691 = vmax.f32 %v6641, 0.0
        %v6692 = vmax.f32 %v6682, 0.0
        %v6693 = vmax.f32 %v6684, 0.0
        %v6694 = vmax.f32 %v6643, 0.0
        %v6695 = vmax.f32 %v6645, 0.0
        %v6696 = vmax.f32 %v6686, 0.0
        %v6697 = vmax.f32 %v6688, 0.0
        %v6698 = vpack.c.bf16 %v6694, %v6690
        %v6699 = vpack.c.bf16 %v6695, %v6691
        %v6700 = vpack.c.bf16 %v6696, %v6692
        %v6701 = vpack.c.bf16 %v6697, %v6693
        %v6702 = vld [vmem:[%s474] sm:$0xf]
        %v6703 = vld [vmem:[%s474 + $0x4] sm:$0xf]
        %v6704 = vld [vmem:[%s474 + $0x8] sm:$0xf]
        %v6705 = vld [vmem:[%s474 + $0xc] sm:$0xf]
        %v6706 = vld [vmem:[%s474 + $0x10] sm:$0xf]
        %v6707 = vld [vmem:[%s474 + $0x14] sm:$0xf]
        %v6708 = vld [vmem:[%s474 + $0x18] sm:$0xf]
        %v6709 = vld [vmem:[%s474 + $0x1c] sm:$0xf]
        %v6710 = vld [vmem:[%s474 + $0x20] sm:$0xf]
        %v6711 = vld [vmem:[%s474 + $0x24] sm:$0xf]
        %v6712 = vld [vmem:[%s474 + $0x28] sm:$0xf]
        %v6713 = vld [vmem:[%s474 + $0x2c] sm:$0xf]
        %v6714 = vld [vmem:[%s474 + $0x30] sm:$0xf]
        %v6715 = vld [vmem:[%s474 + $0x34] sm:$0xf]
        %v6716 = vld [vmem:[%s474 + $0x38] sm:$0xf]
        %v6717 = vld [vmem:[%s474 + $0x3c] sm:$0xf]
        %v6718 = vld [vmem:[%s474 + $0x40] sm:$0xf]
        %v6719 = vld [vmem:[%s474 + $0x44] sm:$0xf]
        %v6720 = vld [vmem:[%s474 + $0x48] sm:$0xf]
        %v6721 = vld [vmem:[%s474 + $0x4c] sm:$0xf]
        %v6722 = vld [vmem:[%s474 + $0x50] sm:$0xf]
        %v6723 = vld [vmem:[%s474 + $0x54] sm:$0xf]
        %v6724 = vld [vmem:[%s474 + $0x58] sm:$0xf]
        %v6725 = vld [vmem:[%s474 + $0x5c] sm:$0xf]
        %v6726 = vld [vmem:[%s474 + $0x60] sm:$0xf]
        %v6727 = vld [vmem:[%s474 + $0x64] sm:$0xf]
        %v6728 = vld [vmem:[%s474 + $0x68] sm:$0xf]
        %v6729 = vld [vmem:[%s474 + $0x6c] sm:$0xf]
        %v6730 = vld [vmem:[%s474 + $0x70] sm:$0xf]
        %v6731 = vld [vmem:[%s474 + $0x74] sm:$0xf]
        %v6732 = vld [vmem:[%s474 + $0x78] sm:$0xf]
        %v6733 = vld [vmem:[%s474 + $0x7c] sm:$0xf]
        %v6734 = vld [vmem:[%s474 + $0x80] sm:$0xf]
        %v6735 = vld [vmem:[%s474 + $0x84] sm:$0xf]
        %v6736 = vld [vmem:[%s474 + $0x88] sm:$0xf]
        %v6737 = vld [vmem:[%s474 + $0x8c] sm:$0xf]
        %v6738 = vld [vmem:[%s474 + $0x90] sm:$0xf]
        %v6739 = vld [vmem:[%s474 + $0x94] sm:$0xf]
        %v6740 = vld [vmem:[%s474 + $0x98] sm:$0xf]
        %v6741 = vld [vmem:[%s474 + $0x9c] sm:$0xf]
        %v6742 = vld [vmem:[%s474 + $0xa0] sm:$0xf]
        %v6743 = vld [vmem:[%s474 + $0xa4] sm:$0xf]
        %v6744 = vld [vmem:[%s474 + $0xa8] sm:$0xf]
        %v6745 = vld [vmem:[%s474 + $0xac] sm:$0xf]
        %v6746 = vld [vmem:[%s474 + $0xb0] sm:$0xf]
        %v6747 = vld [vmem:[%s474 + $0xb4] sm:$0xf]
        %v6748 = vld [vmem:[%s474 + $0xb8] sm:$0xf]
        %v6749 = vld [vmem:[%s474 + $0xbc] sm:$0xf]
        %v6750 = vld [vmem:[%s474 + $0xc0] sm:$0xf]
        %v6751 = vld [vmem:[%s474 + $0xc4] sm:$0xf]
        %v6752 = vld [vmem:[%s474 + $0xc8] sm:$0xf]
        %v6753 = vld [vmem:[%s474 + $0xcc] sm:$0xf]
        %v6754 = vld [vmem:[%s474 + $0xd0] sm:$0xf]
        %v6755 = vld [vmem:[%s474 + $0xd4] sm:$0xf]
        %v6756 = vld [vmem:[%s474 + $0xd8] sm:$0xf]
        %v6757 = vld [vmem:[%s474 + $0xdc] sm:$0xf]
        %v6758 = vld [vmem:[%s474 + $0xe0] sm:$0xf]
        %v6759 = vld [vmem:[%s474 + $0xe4] sm:$0xf]
        %v6760 = vld [vmem:[%s474 + $0xe8] sm:$0xf]
        %v6761 = vld [vmem:[%s474 + $0xec] sm:$0xf]
        %v6762 = vld [vmem:[%s474 + $0xf0] sm:$0xf]
        %v6763 = vld [vmem:[%s474 + $0xf4] sm:$0xf]
        %v6764 = vld [vmem:[%s474 + $0xf8] sm:$0xf]
        %v6765 = vld [vmem:[%s474 + $0xfc] sm:$0xf]
        %v6766 = vlaneseq
        %v6767 = vshrl.u32 %v6766, 7
        %v6768 = vsub.s32 0, %v6767
        %v6769 = vrot.slane %v580, %v6768
        %v6834 = vunpack.c.l.b16 %v6702
        %v6835 = vunpack.c.l.b16 %v6703
        %v6836 = vunpack.c.l.b16 %v6704
        %v6837 = vunpack.c.l.b16 %v6705
        %v6838 = vunpack.c.l.b16 %v6706
        %v6839 = vunpack.c.l.b16 %v6707
        %v6840 = vunpack.c.l.b16 %v6708
        %v6841 = vunpack.c.l.b16 %v6709
        %v6842 = vunpack.c.l.b16 %v6710
        %v6843 = vunpack.c.l.b16 %v6711
        %v6844 = vunpack.c.l.b16 %v6712
        %v6845 = vunpack.c.l.b16 %v6713
        %v6846 = vunpack.c.l.b16 %v6714
        %v6847 = vunpack.c.l.b16 %v6715
        %v6848 = vunpack.c.l.b16 %v6716
        %v6849 = vunpack.c.l.b16 %v6717
        %v6850 = vunpack.c.l.b16 %v6718
        %v6851 = vunpack.c.l.b16 %v6719
        %v6852 = vunpack.c.l.b16 %v6720
        %v6853 = vunpack.c.l.b16 %v6721
        %v6854 = vunpack.c.l.b16 %v6722
        %v6855 = vunpack.c.l.b16 %v6723
        %v6856 = vunpack.c.l.b16 %v6724
        %v6857 = vunpack.c.l.b16 %v6725
        %v6858 = vunpack.c.l.b16 %v6726
        %v6859 = vunpack.c.l.b16 %v6727
        %v6860 = vunpack.c.l.b16 %v6728
        %v6861 = vunpack.c.l.b16 %v6729
        %v6862 = vunpack.c.l.b16 %v6730
        %v6863 = vunpack.c.l.b16 %v6731
        %v6864 = vunpack.c.l.b16 %v6732
        %v6865 = vunpack.c.l.b16 %v6733
        %v6866 = vunpack.c.l.b16 %v6734
        %v6867 = vunpack.c.l.b16 %v6735
        %v6868 = vunpack.c.l.b16 %v6736
        %v6869 = vunpack.c.l.b16 %v6737
        %v6870 = vunpack.c.l.b16 %v6738
        %v6871 = vunpack.c.l.b16 %v6739
        %v6872 = vunpack.c.l.b16 %v6740
        %v6873 = vunpack.c.l.b16 %v6741
        %v6874 = vunpack.c.l.b16 %v6742
        %v6875 = vunpack.c.l.b16 %v6743
        %v6876 = vunpack.c.l.b16 %v6744
        %v6877 = vunpack.c.l.b16 %v6745
        %v6878 = vunpack.c.l.b16 %v6746
        %v6879 = vunpack.c.l.b16 %v6747
        %v6880 = vunpack.c.l.b16 %v6748
        %v6881 = vunpack.c.l.b16 %v6749
        %v6882 = vunpack.c.l.b16 %v6750
        %v6883 = vunpack.c.l.b16 %v6751
        %v6884 = vunpack.c.l.b16 %v6752
        %v6885 = vunpack.c.l.b16 %v6753
        %v6886 = vunpack.c.l.b16 %v6754
        %v6887 = vunpack.c.l.b16 %v6755
        %v6888 = vunpack.c.l.b16 %v6756
        %v6889 = vunpack.c.l.b16 %v6757
        %v6890 = vunpack.c.l.b16 %v6758
        %v6891 = vunpack.c.l.b16 %v6759
        %v6892 = vunpack.c.l.b16 %v6760
        %v6893 = vunpack.c.l.b16 %v6761
        %v6894 = vunpack.c.l.b16 %v6762
        %v6895 = vunpack.c.l.b16 %v6763
        %v6896 = vunpack.c.l.b16 %v6764
        %v6897 = vunpack.c.l.b16 %v6765
        %v6898 = vpack.c.b16 %v6835, %v6834
        %v6899 = vpack.c.b16 %v6837, %v6836
        %v6900 = vpack.c.b16 %v6839, %v6838
        %v6901 = vpack.c.b16 %v6841, %v6840
        %v6902 = vpack.c.b16 %v6843, %v6842
        %v6903 = vpack.c.b16 %v6845, %v6844
        %v6904 = vpack.c.b16 %v6847, %v6846
        %v6905 = vpack.c.b16 %v6849, %v6848
        %v6906 = vpack.c.b16 %v6851, %v6850
        %v6907 = vpack.c.b16 %v6853, %v6852
        %v6908 = vpack.c.b16 %v6855, %v6854
        %v6909 = vpack.c.b16 %v6857, %v6856
        %v6910 = vpack.c.b16 %v6859, %v6858
        %v6911 = vpack.c.b16 %v6861, %v6860
        %v6912 = vpack.c.b16 %v6863, %v6862
        %v6913 = vpack.c.b16 %v6865, %v6864
        %v6914 = vpack.c.b16 %v6867, %v6866
        %v6915 = vpack.c.b16 %v6869, %v6868
        %v6916 = vpack.c.b16 %v6871, %v6870
        %v6917 = vpack.c.b16 %v6873, %v6872
        %v6918 = vpack.c.b16 %v6875, %v6874
        %v6919 = vpack.c.b16 %v6877, %v6876
        %v6920 = vpack.c.b16 %v6879, %v6878
        %v6921 = vpack.c.b16 %v6881, %v6880
        %v6922 = vpack.c.b16 %v6883, %v6882
        %v6923 = vpack.c.b16 %v6885, %v6884
        %v6924 = vpack.c.b16 %v6887, %v6886
        %v6925 = vpack.c.b16 %v6889, %v6888
        %v6926 = vpack.c.b16 %v6891, %v6890
        %v6927 = vpack.c.b16 %v6893, %v6892
        %v6928 = vpack.c.b16 %v6895, %v6894
        %v6929 = vpack.c.b16 %v6897, %v6896
        %6962 = vmatprep.subr.bf16.mxu0 0
        %6963 = vmatpush1.bf16.msra.mxu0 %v6898
        %6964 = vmatprep.subr.bf16.mxu0 0
        %6965 = vmatpush1.bf16.msra.mxu0 %v6899
        %6966 = vmatprep.subr.bf16.mxu0 0
        %6967 = vmatpush1.bf16.msra.mxu0 %v6900
        %6968 = vmatprep.subr.bf16.mxu0 0
        %6969 = vmatpush1.bf16.msra.mxu0 %v6901
        %6970 = vmatprep.subr.bf16.mxu0 0
        %6971 = vmatpush1.bf16.msra.mxu0 %v6902
        %6972 = vmatprep.subr.bf16.mxu0 0
        %6973 = vmatpush1.bf16.msra.mxu0 %v6903
        %6974 = vmatprep.subr.bf16.mxu0 0
        %6975 = vmatpush1.bf16.msra.mxu0 %v6904
        %6976 = vmatprep.subr.bf16.mxu0 0
        %6977 = vmatpush1.bf16.msra.mxu0 %v6905
        %6978 = vmatprep.subr.bf16.mxu0 0
        %6979 = vmatpush1.bf16.msra.mxu0 %v6906
        %6980 = vmatprep.subr.bf16.mxu0 0
        %6981 = vmatpush1.bf16.msra.mxu0 %v6907
        %6982 = vmatprep.subr.bf16.mxu0 0
        %6983 = vmatpush1.bf16.msra.mxu0 %v6908
        %6984 = vmatprep.subr.bf16.mxu0 0
        %6985 = vmatpush1.bf16.msra.mxu0 %v6909
        %6986 = vmatprep.subr.bf16.mxu0 0
        %6987 = vmatpush1.bf16.msra.mxu0 %v6910
        %6988 = vmatprep.subr.bf16.mxu0 0
        %6989 = vmatpush1.bf16.msra.mxu0 %v6911
        %6990 = vmatprep.subr.bf16.mxu0 0
        %6991 = vmatpush1.bf16.msra.mxu0 %v6912
        %6992 = vmatprep.subr.bf16.mxu0 0
        %6993 = vmatpush1.bf16.msra.mxu0 %v6913
        %6994 = vmatprep.mubr.bf16.mxu0 %v6699
        %6995 = vmatmul.mubr.bf16.gmra.mrb[0].mxu0 %v6698
        %v6996 = vpop.f32.mrb[0].mxu0
        %v6997 = vadd.f32 %v6769, %v6996
        %v6998 = vpop.f32.mrb[0].mxu0
        %v6999 = vpop.f32.mrb[0].mxu0
        %v7000 = vadd.f32 %v6769, %v6999
        %v7001 = vpop.f32.mrb[0].mxu0
        %7002 = vdwg.mxu0
        %7003 = vmatprep.subr.bf16.mxu0 0
        %7004 = vmatpush1.bf16.msra.mxu0 %v6914
        %7005 = vmatprep.subr.bf16.mxu0 0
        %7006 = vmatpush1.bf16.msra.mxu0 %v6915
        %7007 = vmatprep.subr.bf16.mxu0 0
        %7008 = vmatpush1.bf16.msra.mxu0 %v6916
        %7009 = vmatprep.subr.bf16.mxu0 0
        %7010 = vmatpush1.bf16.msra.mxu0 %v6917
        %7011 = vmatprep.subr.bf16.mxu0 0
        %7012 = vmatpush1.bf16.msra.mxu0 %v6918
        %7013 = vmatprep.subr.bf16.mxu0 0
        %7014 = vmatpush1.bf16.msra.mxu0 %v6919
        %7015 = vmatprep.subr.bf16.mxu0 0
        %7016 = vmatpush1.bf16.msra.mxu0 %v6920
        %7017 = vmatprep.subr.bf16.mxu0 0
        %7018 = vmatpush1.bf16.msra.mxu0 %v6921
        %7019 = vmatprep.subr.bf16.mxu0 0
        %7020 = vmatpush1.bf16.msra.mxu0 %v6922
        %7021 = vmatprep.subr.bf16.mxu0 0
        %7022 = vmatpush1.bf16.msra.mxu0 %v6923
        %7023 = vmatprep.subr.bf16.mxu0 0
        %7024 = vmatpush1.bf16.msra.mxu0 %v6924
        %7025 = vmatprep.subr.bf16.mxu0 0
        %7026 = vmatpush1.bf16.msra.mxu0 %v6925
        %7027 = vmatprep.subr.bf16.mxu0 0
        %7028 = vmatpush1.bf16.msra.mxu0 %v6926
        %7029 = vmatprep.subr.bf16.mxu0 0
        %7030 = vmatpush1.bf16.msra.mxu0 %v6927
        %7031 = vmatprep.subr.bf16.mxu0 0
        %7032 = vmatpush1.bf16.msra.mxu0 %v6928
        %7033 = vmatprep.subr.bf16.mxu0 0
        %7034 = vmatpush1.bf16.msra.mxu0 %v6929
        %7035 = vmatprep.mubr.bf16.mxu0 %v6701
        %7036 = vmatmul.mubr.bf16.gmra.mrb[0].mxu0 %v6700
        %v7037 = vpop.f32.mrb[0].mxu0
        %v7038 = vadd.f32 %v6997, %v7037
        %v7039 = vpop.f32.mrb[0].mxu0
        %v7040 = vpop.f32.mrb[0].mxu0
        %v7041 = vadd.f32 %v7000, %v7040
        %v7042 = vpop.f32.mrb[0].mxu0
        %7043 = vdwg.mxu0
        %v7044 = vadd.f32 %v6353, %v7038
        %v7045 = vadd.f32 %v6354, %v7041
        %7046 = vst [vmem:[#allocation10] sm:$0xff] %v7044
        %7047 = vst [vmem:[#allocation10 + $0x8] sm:$0xff] %v7045
        // Predicated region
        $region77: #{tpu_custom_call.1} parent=51 // pred_check
          %p7048 = pneg %p270
        $region78: #{tpu_custom_call.1} parent=51 // pred_check_branch
          %7050 = sbr.rel (%p7048) target = $region80
        $region79: #{tpu_custom_call.1} parent=51 // pred_region
          %s7051 = smul.u32 2, %s36
          %s7053 = ssub.s32 256, 256
          %7054 = vsyncadd [#allocation4], %s7053
          %s7055 = smul.addr %s7051, 128
          %s7056 = scalar_lea.hbm %s8, %s7055
          %s7057 = sshll.u32 [#allocation10], 4
          %s7058 = int_to_ptr.vmem [resolvable:$true] %s7057
          %7063 = dma.vmem_to_hbm [thread:$0]  %s7058, 256, %s7056, [#allocation4], 128, 128, 8
        $region80: #{tpu_custom_call.1} parent=51 // pred_fallthru
          _
        // Predicated region
        $region81: #{tpu_custom_call.1} parent=51 // pred_check
          %p7064 = pneg %p296
        $region82: #{tpu_custom_call.1} parent=51 // pred_check_branch
          %7066 = sbr.rel (%p7064) target = $region84
        $region83: #{tpu_custom_call.1} parent=51 // pred_region
          %s7067 = smul.u32 2, %s36
          %s7069 = ssub.s32 256, 256
          %7070 = vsyncadd [#allocation12], %s7069
          %s7071 = smul.addr %s7067, 128
          %s7072 = scalar_lea.hbm %s9, %s7071
          %s7073 = sshll.u32 [#allocation11], 4
          %s7074 = int_to_ptr.vmem [resolvable:$true] %s7073
          %7079 = dma.vmem_to_hbm [thread:$0]  %s7074, 256, %s7072, [#allocation12], 128, 128, 8
        $region84: #{tpu_custom_call.1} parent=51 // pred_fallthru
          _
        // Predicated region
        $region85: #{tpu_custom_call.1} parent=51 // pred_check
          %p7080 = pneg %p270
        $region86: #{tpu_custom_call.1} parent=51 // pred_check_branch
          %7082 = sbr.rel (%p7080) target = $region88
        $region87: #{tpu_custom_call.1} parent=51 // pred_region
          %7083 = dma.done [#allocation4], 256
        $region88: #{tpu_custom_call.1} parent=51 // pred_fallthru
          _
        // Predicated region
        $region89: #{tpu_custom_call.1} parent=51 // pred_check
          %p7084 = pneg %p296
        $region90: #{tpu_custom_call.1} parent=51 // pred_check_branch
          %7086 = sbr.rel (%p7084) target = $region92
        $region91: #{tpu_custom_call.1} parent=51 // pred_region
          %7087 = dma.done [#allocation12], 256
        $region92: #{tpu_custom_call.1} parent=51 // pred_fallthru
          _
      $region52: #{tpu_custom_call.1} parent=5 // pred_fallthru
        _
      %p7088 = scmp.le.s32.totalorder 2, %s27
      // Predicated region
      $region93: #{tpu_custom_call.1} parent=5 // pred_check
        %p7089 = pneg %p7088
      $region94: #{tpu_custom_call.1} parent=5 // pred_check_branch
        %7091 = sbr.rel (%p7089) target = $region96
      $region95: #{tpu_custom_call.1} parent=5 // pred_region
        %s7092 = ssub.s32 %s27, 2
      $region96: #{tpu_custom_call.1} parent=5 // pred_fallthru
        _
    $region6: #{tpu_custom_call.1} parent=1 // loop_footer
      %s31 = sadd.s32 1, %s27
    $region7: #{tpu_custom_call.1} parent=1 // loop_footer_branch
      %26 = sbr.rel target = $region3
    $region8: #{tpu_custom_call.1} parent=1 // loop_exit
      _
    %7093 = vsyncpa [#allocation3], 1
    %s7094 = scalar_lea.sflag [#allocation3], 1
    %7095 = vsyncpa %s7094, 1
    %7096 = vsyncpa [#allocation6], 1
    %s7097 = scalar_lea.sflag [#allocation6], 1
    %7098 = vsyncpa %s7097, 1
    %7099 = vsyncpa [#allocation9], 1
    %s7100 = scalar_lea.sflag [#allocation9], 1
    %7101 = vsyncpa %s7100, 1
    %7102 = vsyncpa [#allocation4], 1
    %s7103 = scalar_lea.sflag [#allocation4], 1
    %7104 = vsyncpa %s7103, 1
    %7105 = vsyncpa [#allocation12], 1

</llo_original>
